<compile_context>
chip_gen: v7x
topology: tpu7x:2x2x1
jax: 0.10.0
libtpu: 0.0.40
codegen_flags: <defaults>
</compile_context>

<pallas_src>
import jax
import jax.numpy as jnp
from jax import lax
from jax.experimental import pallas as pl
from jax.experimental.pallas import tpu as pltpu

HIDDEN = 128
NUM_LAYERS = 2
EMBED_DIM = 2
NUM_CONT = 2
BIDIR = True
NUM_DIR = 2 if BIDIR else 1
D0_PAD = 16     # layer-0 input dim (4) zero-padded to a clean bf16 sublane tile


# ----------------------------- Pallas kernel ------------------------------- #

def _sigmoid(x):
    # sigmoid(x) == 0.5 * (tanh(0.5 * x) + 1): one EUP push + cheap VPU scaling
    # instead of exp + add + reciprocal.
    return 0.5 * jnp.tanh(0.5 * x) + 0.5


def _lstm_cell(gates, c_prev):
    """gates: (B, 4H) fp32 pre-activations in PyTorch order (i, f, g, o)."""
    H = HIDDEN
    i = _sigmoid(gates[:, 0 * H:1 * H])
    f = _sigmoid(gates[:, 1 * H:2 * H])
    g = jnp.tanh(gates[:, 2 * H:3 * H])
    o = _sigmoid(gates[:, 3 * H:4 * H])
    c = f * c_prev + i * g
    h = o * jnp.tanh(c)
    return h, c


def _lstm_model_kernel(
        # ---- VMEM inputs (needed immediately / tiny) ----
        x_ref,                                   # (T*B, 16)   bf16  layer-0 input
        wih0f_ref, b0f_ref, whh0f_ref,           # (16,4H)bf16 (1,4H)f32 (H,4H)bf16
        wih0b_ref, b0b_ref, whh0b_ref,
        b1f_ref, b1b_ref,                        # (1, 4H) f32
        fcwf_ref, fcwb_ref, fcb_ref,             # (H,1)bf16 (H,1)bf16 (1,1)f32
        # ---- HBM inputs (layer-1 weights, manually prefetched) ----
        wih1ff_hbm, wih1fb_hbm, whh1f_hbm,       # (H, 4H) bf16
        wih1bf_hbm, wih1bb_hbm,                  # (H, 4H) bf16
        # ---- output ----
        out_ref,                                 # (B, 1) f32
        # ---- scratch ----
        xp0f, xp0b,                              # (T*B, 4H) f32
        seqf, seqb,                              # (T*B, H)  f32
        xp1,                                     # (T*B, 4H) f32
        wih1ff_v, wih1fb_v, whh1f_v,             # (H, 4H) bf16 prefetch dst
        wih1bf_v, wih1bb_v,
        dma_sems):                               # DMA (5,)
    TB = x_ref.shape[0]
    B = out_ref.shape[0]
    T = TB // B
    H = HIDDEN
    f32 = jnp.float32
    bf16 = jnp.bfloat16

    # ---- kick off layer-1 weight prefetch: hidden behind layer-0 compute.
    copies = [
        pltpu.make_async_copy(wih1ff_hbm, wih1ff_v, dma_sems.at[0]),
        pltpu.make_async_copy(wih1fb_hbm, wih1fb_v, dma_sems.at[1]),
        pltpu.make_async_copy(whh1f_hbm, whh1f_v, dma_sems.at[2]),
        pltpu.make_async_copy(wih1bf_hbm, wih1bf_v, dma_sems.at[3]),
        pltpu.make_async_copy(wih1bb_hbm, wih1bb_v, dma_sems.at[4]),
    ]
    for cp in copies:
        cp.start()

    # ---- layer-0 input projections: one batched matmul per direction,
    #      fully off the serial recurrence chain (bias added once, not per step).
    x = x_ref[...]
    xp0f[...] = (jnp.dot(x, wih0f_ref[...], preferred_element_type=f32)
                 + b0f_ref[...])
    xp0b[...] = (jnp.dot(x, wih0b_ref[...], preferred_element_type=f32)
                 + b0b_ref[...])

    zeros = jnp.zeros((B, H), f32)

    # ---- layer 0: forward + backward recurrences fused into one unrolled loop.
    # Per-step serial work per direction: one (B,H)x(H,4H) bf16 matmul + cell.
    def l0_body(t, carry):
        hf, cf, hb, cb = carry
        rf = t * B
        rb = (T - 1 - t) * B
        gf = xp0f[pl.ds(rf, B), :] + jnp.dot(
            hf.astype(bf16), whh0f_ref[...], preferred_element_type=f32)
        gb = xp0b[pl.ds(rb, B), :] + jnp.dot(
            hb.astype(bf16), whh0b_ref[...], preferred_element_type=f32)
        hf, cf = _lstm_cell(gf, cf)
        hb, cb = _lstm_cell(gb, cb)
        seqf[pl.ds(rf, B), :] = hf      # layer-0 fwd output, time order
        seqb[pl.ds(rb, B), :] = hb      # layer-0 bwd output, time order
        return hf, cf, hb, cb

    lax.fori_loop(0, T, l0_body, (zeros, zeros, zeros, zeros), unroll=True)

    # ---- layer-1 weights must be resident from here on.
    for cp in copies:
        cp.wait()

    # ---- layer-1 input projection for ALL steps: one batched matmul pair.
    # Weight split into [:H] / [H:] halves avoids any lane-dim concat.
    sf = seqf[...].astype(bf16)
    sb = seqb[...].astype(bf16)
    xp1[...] = (jnp.dot(sf, wih1ff_v[...], preferred_element_type=f32)
                + jnp.dot(sb, wih1fb_v[...], preferred_element_type=f32)
                + b1f_ref[...])

    # ---- layer-1 forward recurrence; only h(T-1) is consumed downstream.
    def l1_body(t, carry):
        h, c = carry
        g = xp1[pl.ds(t * B, B), :] + jnp.dot(
            h.astype(bf16), whh1f_v[...], preferred_element_type=f32)
        return _lstm_cell(g, c)

    h1f, _ = lax.fori_loop(0, T, l1_body, (zeros, zeros), unroll=True)

    # ---- layer-1 backward: its output at position T-1 is exactly one step
    # from the zero state (remaining T-1 reverse steps are dead work).
    last = (T - 1) * B
    g1b = (jnp.dot(seqf[pl.ds(last, B), :].astype(bf16), wih1bf_v[...],
                   preferred_element_type=f32)
           + jnp.dot(seqb[pl.ds(last, B), :].astype(bf16), wih1bb_v[...],
                     preferred_element_type=f32)
           + b1b_ref[...])
    h1b, _ = _lstm_cell(g1b, zeros)

    # ---- fused FC head on the last time step only (split weight, no concat).
    out_ref[...] = (jnp.dot(h1f.astype(bf16), fcwf_ref[...],
                            preferred_element_type=f32)
                    + jnp.dot(h1b.astype(bf16), fcwb_ref[...],
                              preferred_element_type=f32)
                    + fcb_ref[...])


def fused_lstm(x_flat, wih0f, b0f, whh0f, wih0b, b0b, whh0b,
               b1f, b1b, fcwf, fcwb, fcb,
               wih1ff, wih1fb, whh1f, wih1bf, wih1bb, *, batch):
    TB = x_flat.shape[0]
    H = HIDDEN
    vmem = pl.BlockSpec(memory_space=pltpu.MemorySpace.VMEM)
    hbm = pl.BlockSpec(memory_space=pl.ANY)
    return pl.pallas_call(
        _lstm_model_kernel,
        out_shape=jax.ShapeDtypeStruct((batch, 1), jnp.float32),
        in_specs=[vmem] * 12 + [hbm] * 5,
        out_specs=vmem,
        scratch_shapes=[
            pltpu.VMEM((TB, 4 * H), jnp.float32),     # xp0f
            pltpu.VMEM((TB, 4 * H), jnp.float32),     # xp0b
            pltpu.VMEM((TB, H), jnp.float32),         # seqf (layer-0 fwd out)
            pltpu.VMEM((TB, H), jnp.float32),         # seqb (layer-0 bwd out)
            pltpu.VMEM((TB, 4 * H), jnp.float32),     # xp1  (layer-1 proj)
            pltpu.VMEM((H, 4 * H), jnp.bfloat16),     # wih1ff prefetch dst
            pltpu.VMEM((H, 4 * H), jnp.bfloat16),     # wih1fb
            pltpu.VMEM((H, 4 * H), jnp.bfloat16),     # whh1f
            pltpu.VMEM((H, 4 * H), jnp.bfloat16),     # wih1bf
            pltpu.VMEM((H, 4 * H), jnp.bfloat16),     # wih1bb
            pltpu.SemaphoreType.DMA((5,)),
        ],
    )(x_flat, wih0f, b0f, whh0f, wih0b, b0b, whh0b,
      b1f, b1b, fcwf, fcwb, fcb,
      wih1ff, wih1fb, whh1f, wih1bf, wih1bb)


# ------------------------------ model wrapper ------------------------------ #

def init_params(key):
    """Deterministic synthetic parameters mirroring nn.LSTM / nn.Embedding / nn.Linear."""
    H = HIDDEN
    ks = list(jax.random.split(key, 4 + NUM_LAYERS * NUM_DIR * 4))
    ki = iter(ks)
    params = {}
    params['embed'] = jax.random.normal(next(ki), (7, EMBED_DIM), jnp.float32)
    k = 1.0 / (H ** 0.5)
    for layer in range(NUM_LAYERS):
        d_in = (NUM_CONT + EMBED_DIM) if layer == 0 else NUM_DIR * H
        for d in range(NUM_DIR):
            wih = jax.random.uniform(next(ki), (4 * H, d_in), jnp.float32, -k, k)
            whh = jax.random.uniform(next(ki), (4 * H, H), jnp.float32, -k, k)
            bih = jax.random.uniform(next(ki), (4 * H,), jnp.float32, -k, k)
            bhh = jax.random.uniform(next(ki), (4 * H,), jnp.float32, -k, k)
            params[f'l{layer}_d{d}'] = dict(
                wih_t=wih.T,                       # (d_in, 4H)
                whh_t=whh.T,                       # (H, 4H)
                bias=(bih + bhh).reshape(1, 4 * H))
    kf = 1.0 / ((NUM_DIR * H) ** 0.5)
    params['fc_w_t'] = jax.random.uniform(next(ki), (NUM_DIR * H, 1), jnp.float32, -kf, kf)
    params['fc_b'] = jax.random.uniform(next(ki), (1,), jnp.float32, -kf, kf)
    return params


@jax.jit
def lstm_model(params, x_cont, x_cat):
    # revin=False in the reference default, so no RevIN branch.
    B, T, _ = x_cont.shape
    H = HIDDEN
    f32, bf16 = jnp.float32, jnp.bfloat16

    # TODO(synk): embedding gather stays as XLA glue (data-dependent gather at
    # this tiny size has no cheaper in-kernel equivalent).
    dow = x_cat[:, :, 0].astype(jnp.int32)                          # (B, T)
    emb = jnp.take(params['embed'], dow, axis=0)                    # (B, T, E)
    x = jnp.concatenate([x_cont.astype(f32), emb], axis=2)          # (B, T, D0)
    seq = jnp.transpose(x, (1, 0, 2)).reshape(T * B, -1)            # (T*B, D0)
    d0 = seq.shape[1]
    x_flat = jnp.pad(seq, ((0, 0), (0, D0_PAD - d0))).astype(bf16)  # (T*B, 16)

    def pad_wih0(w):  # (D0, 4H) -> (16, 4H) bf16, zero rows keep result exact
        return jnp.pad(w, ((0, D0_PAD - w.shape[0]), (0, 0))).astype(bf16)

    p0f, p0b = params['l0_d0'], params['l0_d1']
    p1f, p1b = params['l1_d0'], params['l1_d1']

    out = fused_lstm(
        x_flat,
        pad_wih0(p0f['wih_t']), p0f['bias'], p0f['whh_t'].astype(bf16),
        pad_wih0(p0b['wih_t']), p0b['bias'], p0b['whh_t'].astype(bf16),
        p1f['bias'], p1b['bias'],
        params['fc_w_t'][:H].astype(bf16), params['fc_w_t'][H:].astype(bf16),
        params['fc_b'].reshape(1, 1),
        p1f['wih_t'][:H].astype(bf16), p1f['wih_t'][H:].astype(bf16),
        p1f['whh_t'].astype(bf16),
        p1b['wih_t'][:H].astype(bf16), p1b['wih_t'][H:].astype(bf16),
        batch=B,
    )                                                                # (B, 1)
    return out[:, None, :]                                           # (B, 1, 1)


if __name__ == "__main__":
    key = jax.random.PRNGKey(0)
    kp, k1, k2 = jax.random.split(key, 3)
    params = init_params(kp)

    B, T = 2, 8
    x_cont = jax.random.normal(k1, (B, T, NUM_CONT), jnp.float32)     # (2, 8, 2)
    x_cat = jax.random.randint(k2, (B, T, 1), 0, 7, dtype=jnp.int32)  # (2, 8, 1)

    out = lstm_model(params, x_cont, x_cat)
    jax.block_until_ready(out)
    assert out.shape == (B, 1, 1), out.shape
    print("KERNEL_OK")
</pallas_src>

<mosaic_0001>
module attributes {stable_mosaic.version = 11 : i64} {
  func.func @_lstm_model_kernel(%arg0: memref<16x16xbf16, #tpu.memory_space<vmem>>, %arg1: memref<16x512xbf16, #tpu.memory_space<vmem>>, %arg2: memref<1x512xf32, #tpu.memory_space<vmem>>, %arg3: memref<128x512xbf16, #tpu.memory_space<vmem>>, %arg4: memref<16x512xbf16, #tpu.memory_space<vmem>>, %arg5: memref<1x512xf32, #tpu.memory_space<vmem>>, %arg6: memref<128x512xbf16, #tpu.memory_space<vmem>>, %arg7: memref<1x512xf32, #tpu.memory_space<vmem>>, %arg8: memref<1x512xf32, #tpu.memory_space<vmem>>, %arg9: memref<128x1xbf16, #tpu.memory_space<vmem>>, %arg10: memref<128x1xbf16, #tpu.memory_space<vmem>>, %arg11: memref<1x1xf32, #tpu.memory_space<vmem>>, %arg12: memref<128x512xbf16, #tpu.memory_space<any>>, %arg13: memref<128x512xbf16, #tpu.memory_space<any>>, %arg14: memref<128x512xbf16, #tpu.memory_space<any>>, %arg15: memref<128x512xbf16, #tpu.memory_space<any>>, %arg16: memref<128x512xbf16, #tpu.memory_space<any>>, %arg17: memref<2x1xf32, #tpu.memory_space<vmem>>, %arg18: memref<16x512xf32, #tpu.memory_space<vmem>>, %arg19: memref<16x512xf32, #tpu.memory_space<vmem>>, %arg20: memref<16x128xf32, #tpu.memory_space<vmem>>, %arg21: memref<16x128xf32, #tpu.memory_space<vmem>>, %arg22: memref<16x512xf32, #tpu.memory_space<vmem>>, %arg23: memref<128x512xbf16, #tpu.memory_space<vmem>>, %arg24: memref<128x512xbf16, #tpu.memory_space<vmem>>, %arg25: memref<128x512xbf16, #tpu.memory_space<vmem>>, %arg26: memref<128x512xbf16, #tpu.memory_space<vmem>>, %arg27: memref<128x512xbf16, #tpu.memory_space<vmem>>, %arg28: memref<5x!tpu.dma_semaphore, #tpu.memory_space<semaphore_mem>>) attributes {dimension_semantics = [], scalar_prefetch = 0 : i64, scratch_operands = 11 : i64, tpu.core_type = #tpu.core_type<tc>} {
    %c0_i32 = arith.constant 0 : i32
    %0 = tpu.memref_slice %arg28[%c0_i32] : memref<5x!tpu.dma_semaphore, #tpu.memory_space<semaphore_mem>> -> memref<1x!tpu.dma_semaphore, #tpu.memory_space<semaphore_mem>>
    %1 = tpu.memref_squeeze %0 : memref<1x!tpu.dma_semaphore, #tpu.memory_space<semaphore_mem>> -> memref<!tpu.dma_semaphore, #tpu.memory_space<semaphore_mem>>
    tpu.enqueue_dma source(%arg12 : memref<128x512xbf16, #tpu.memory_space<any>>) target(%arg23 : memref<128x512xbf16, #tpu.memory_space<vmem>>) target_semaphore(%1 : memref<!tpu.dma_semaphore, #tpu.memory_space<semaphore_mem>>)
    %c1_i32 = arith.constant 1 : i32
    %2 = tpu.memref_slice %arg28[%c1_i32] : memref<5x!tpu.dma_semaphore, #tpu.memory_space<semaphore_mem>> -> memref<1x!tpu.dma_semaphore, #tpu.memory_space<semaphore_mem>>
    %3 = tpu.memref_squeeze %2 : memref<1x!tpu.dma_semaphore, #tpu.memory_space<semaphore_mem>> -> memref<!tpu.dma_semaphore, #tpu.memory_space<semaphore_mem>>
    tpu.enqueue_dma source(%arg13 : memref<128x512xbf16, #tpu.memory_space<any>>) target(%arg24 : memref<128x512xbf16, #tpu.memory_space<vmem>>) target_semaphore(%3 : memref<!tpu.dma_semaphore, #tpu.memory_space<semaphore_mem>>)
    %c2_i32 = arith.constant 2 : i32
    %4 = tpu.memref_slice %arg28[%c2_i32] : memref<5x!tpu.dma_semaphore, #tpu.memory_space<semaphore_mem>> -> memref<1x!tpu.dma_semaphore, #tpu.memory_space<semaphore_mem>>
    %5 = tpu.memref_squeeze %4 : memref<1x!tpu.dma_semaphore, #tpu.memory_space<semaphore_mem>> -> memref<!tpu.dma_semaphore, #tpu.memory_space<semaphore_mem>>
    tpu.enqueue_dma source(%arg14 : memref<128x512xbf16, #tpu.memory_space<any>>) target(%arg25 : memref<128x512xbf16, #tpu.memory_space<vmem>>) target_semaphore(%5 : memref<!tpu.dma_semaphore, #tpu.memory_space<semaphore_mem>>)
    %c3_i32 = arith.constant 3 : i32
    %6 = tpu.memref_slice %arg28[%c3_i32] : memref<5x!tpu.dma_semaphore, #tpu.memory_space<semaphore_mem>> -> memref<1x!tpu.dma_semaphore, #tpu.memory_space<semaphore_mem>>
    %7 = tpu.memref_squeeze %6 : memref<1x!tpu.dma_semaphore, #tpu.memory_space<semaphore_mem>> -> memref<!tpu.dma_semaphore, #tpu.memory_space<semaphore_mem>>
    tpu.enqueue_dma source(%arg15 : memref<128x512xbf16, #tpu.memory_space<any>>) target(%arg26 : memref<128x512xbf16, #tpu.memory_space<vmem>>) target_semaphore(%7 : memref<!tpu.dma_semaphore, #tpu.memory_space<semaphore_mem>>)
    %c4_i32 = arith.constant 4 : i32
    %8 = tpu.memref_slice %arg28[%c4_i32] : memref<5x!tpu.dma_semaphore, #tpu.memory_space<semaphore_mem>> -> memref<1x!tpu.dma_semaphore, #tpu.memory_space<semaphore_mem>>
    %9 = tpu.memref_squeeze %8 : memref<1x!tpu.dma_semaphore, #tpu.memory_space<semaphore_mem>> -> memref<!tpu.dma_semaphore, #tpu.memory_space<semaphore_mem>>
    tpu.enqueue_dma source(%arg16 : memref<128x512xbf16, #tpu.memory_space<any>>) target(%arg27 : memref<128x512xbf16, #tpu.memory_space<vmem>>) target_semaphore(%9 : memref<!tpu.dma_semaphore, #tpu.memory_space<semaphore_mem>>)
    %c0 = arith.constant 0 : index
    %c0_0 = arith.constant 0 : index
    %10 = vector.load %arg0[%c0, %c0_0] : memref<16x16xbf16, #tpu.memory_space<vmem>>, vector<16x16xbf16>
    %c0_1 = arith.constant 0 : index
    %c0_2 = arith.constant 0 : index
    %11 = vector.load %arg1[%c0_1, %c0_2] : memref<16x512xbf16, #tpu.memory_space<vmem>>, vector<16x512xbf16>
    %cst = arith.constant dense<0.000000e+00> : vector<16x512xf32>
    %12 = tpu.matmul %10, %11, %cst {dimension_numbers = #tpu.dot_dimension_numbers<[1], [0], [0], [1], [0, 0, 1, 1], [], []>} : vector<16x16xbf16>, vector<16x512xbf16>, vector<16x512xf32> -> vector<16x512xf32>
    %c0_3 = arith.constant 0 : index
    %c0_4 = arith.constant 0 : index
    %13 = vector.load %arg2[%c0_3, %c0_4] : memref<1x512xf32, #tpu.memory_space<vmem>>, vector<1x512xf32>
    %14 = vector.broadcast %13 : vector<1x512xf32> to vector<16x512xf32>
    %15 = arith.addf %12, %14 : vector<16x512xf32>
    %c0_5 = arith.constant 0 : index
    %c0_6 = arith.constant 0 : index
    %16 = vector.load %arg18[%c0_5, %c0_6] : memref<16x512xf32, #tpu.memory_space<vmem>>, vector<16x512xf32>
    tpu.vector_store %arg18[%c0_5, %c0_6], %15 {strides = array<i32>} : memref<16x512xf32, #tpu.memory_space<vmem>>, vector<16x512xf32>,
    %c0_7 = arith.constant 0 : index
    %c0_8 = arith.constant 0 : index
    %17 = vector.load %arg4[%c0_7, %c0_8] : memref<16x512xbf16, #tpu.memory_space<vmem>>, vector<16x512xbf16>
    %cst_9 = arith.constant dense<0.000000e+00> : vector<16x512xf32>
    %18 = tpu.matmul %10, %17, %cst_9 {dimension_numbers = #tpu.dot_dimension_numbers<[1], [0], [0], [1], [0, 0, 1, 1], [], []>} : vector<16x16xbf16>, vector<16x512xbf16>, vector<16x512xf32> -> vector<16x512xf32>
    %c0_10 = arith.constant 0 : index
    %c0_11 = arith.constant 0 : index
    %19 = vector.load %arg5[%c0_10, %c0_11] : memref<1x512xf32, #tpu.memory_space<vmem>>, vector<1x512xf32>
    %20 = vector.broadcast %19 : vector<1x512xf32> to vector<16x512xf32>
    %21 = arith.addf %18, %20 : vector<16x512xf32>
    %c0_12 = arith.constant 0 : index
    %c0_13 = arith.constant 0 : index
    %22 = vector.load %arg19[%c0_12, %c0_13] : memref<16x512xf32, #tpu.memory_space<vmem>>, vector<16x512xf32>
    tpu.vector_store %arg19[%c0_12, %c0_13], %21 {strides = array<i32>} : memref<16x512xf32, #tpu.memory_space<vmem>>, vector<16x512xf32>,
    %cst_14 = arith.constant 0.000000e+00 : f32
    %23 = vector.broadcast %cst_14 : f32 to vector<2x128xf32>
    %c0_i32_15 = arith.constant 0 : i32
    %c2_i32_16 = arith.constant 2 : i32
    %24 = arith.muli %c0_i32_15, %c2_i32_16 : i32
    %c7_i32 = arith.constant 7 : i32
    %25 = arith.subi %c7_i32, %c0_i32_15 : i32
    %c2_i32_17 = arith.constant 2 : i32
    %26 = arith.muli %25, %c2_i32_17 : i32
    %27 = arith.index_cast %24 : i32 to index
    %c0_18 = arith.constant 0 : index
    %28 = vector.load %arg18[%27, %c0_18] : memref<16x512xf32, #tpu.memory_space<vmem>>, vector<2x512xf32>
    %29 = arith.truncf %23 : vector<2x128xf32> to vector<2x128xbf16>
    %c0_19 = arith.constant 0 : index
    %c0_20 = arith.constant 0 : index
    %30 = vector.load %arg3[%c0_19, %c0_20] : memref<128x512xbf16, #tpu.memory_space<vmem>>, vector<128x512xbf16>
    %cst_21 = arith.constant dense<0.000000e+00> : vector<2x512xf32>
    %31 = tpu.matmul %29, %30, %cst_21 {dimension_numbers = #tpu.dot_dimension_numbers<[1], [0], [0], [1], [0, 0, 1, 1], [], []>} : vector<2x128xbf16>, vector<128x512xbf16>, vector<2x512xf32> -> vector<2x512xf32>
    %32 = arith.addf %28, %31 : vector<2x512xf32>
    %33 = arith.index_cast %26 : i32 to index
    %c0_22 = arith.constant 0 : index
    %34 = vector.load %arg19[%33, %c0_22] : memref<16x512xf32, #tpu.memory_space<vmem>>, vector<2x512xf32>
    %35 = arith.truncf %23 : vector<2x128xf32> to vector<2x128xbf16>
    %c0_23 = arith.constant 0 : index
    %c0_24 = arith.constant 0 : index
    %36 = vector.load %arg6[%c0_23, %c0_24] : memref<128x512xbf16, #tpu.memory_space<vmem>>, vector<128x512xbf16>
    %cst_25 = arith.constant dense<0.000000e+00> : vector<2x512xf32>
    %37 = tpu.matmul %35, %36, %cst_25 {dimension_numbers = #tpu.dot_dimension_numbers<[1], [0], [0], [1], [0, 0, 1, 1], [], []>} : vector<2x128xbf16>, vector<128x512xbf16>, vector<2x512xf32> -> vector<2x512xf32>
    %38 = arith.addf %34, %37 : vector<2x512xf32>
    %39 = vector.extract_strided_slice %32 {offsets = [0, 0], sizes = [2, 128], strides = [1, 1]} : vector<2x512xf32> to vector<2x128xf32>
    %cst_26 = arith.constant 5.000000e-01 : f32
    %40 = vector.broadcast %cst_26 : f32 to vector<2x128xf32>
    %41 = arith.mulf %40, %39 : vector<2x128xf32>
    %42 = math.tanh %41 : vector<2x128xf32>
    %cst_27 = arith.constant 5.000000e-01 : f32
    %43 = vector.broadcast %cst_27 : f32 to vector<2x128xf32>
    %44 = arith.mulf %43, %42 : vector<2x128xf32>
    %cst_28 = arith.constant 5.000000e-01 : f32
    %45 = vector.broadcast %cst_28 : f32 to vector<2x128xf32>
    %46 = arith.addf %44, %45 : vector<2x128xf32>
    %47 = vector.extract_strided_slice %32 {offsets = [0, 128], sizes = [2, 128], strides = [1, 1]} : vector<2x512xf32> to vector<2x128xf32>
    %cst_29 = arith.constant 5.000000e-01 : f32
    %48 = vector.broadcast %cst_29 : f32 to vector<2x128xf32>
    %49 = arith.mulf %48, %47 : vector<2x128xf32>
    %50 = math.tanh %49 : vector<2x128xf32>
    %cst_30 = arith.constant 5.000000e-01 : f32
    %51 = vector.broadcast %cst_30 : f32 to vector<2x128xf32>
    %52 = arith.mulf %51, %50 : vector<2x128xf32>
    %cst_31 = arith.constant 5.000000e-01 : f32
    %53 = vector.broadcast %cst_31 : f32 to vector<2x128xf32>
    %54 = arith.addf %52, %53 : vector<2x128xf32>
    %55 = vector.extract_strided_slice %32 {offsets = [0, 256], sizes = [2, 128], strides = [1, 1]} : vector<2x512xf32> to vector<2x128xf32>
    %56 = math.tanh %55 : vector<2x128xf32>
    %57 = vector.extract_strided_slice %32 {offsets = [0, 384], sizes = [2, 128], strides = [1, 1]} : vector<2x512xf32> to vector<2x128xf32>
    %cst_32 = arith.constant 5.000000e-01 : f32
    %58 = vector.broadcast %cst_32 : f32 to vector<2x128xf32>
    %59 = arith.mulf %58, %57 : vector<2x128xf32>
    %60 = math.tanh %59 : vector<2x128xf32>
    %cst_33 = arith.constant 5.000000e-01 : f32
    %61 = vector.broadcast %cst_33 : f32 to vector<2x128xf32>
    %62 = arith.mulf %61, %60 : vector<2x128xf32>
    %cst_34 = arith.constant 5.000000e-01 : f32
    %63 = vector.broadcast %cst_34 : f32 to vector<2x128xf32>
    %64 = arith.addf %62, %63 : vector<2x128xf32>
    %65 = arith.mulf %54, %23 : vector<2x128xf32>
    %66 = arith.mulf %46, %56 : vector<2x128xf32>
    %67 = arith.addf %65, %66 : vector<2x128xf32>
    %68 = math.tanh %67 : vector<2x128xf32>
    %69 = arith.mulf %64, %68 : vector<2x128xf32>
    %70 = vector.extract_strided_slice %38 {offsets = [0, 0], sizes = [2, 128], strides = [1, 1]} : vector<2x512xf32> to vector<2x128xf32>
    %cst_35 = arith.constant 5.000000e-01 : f32
    %71 = vector.broadcast %cst_35 : f32 to vector<2x128xf32>
    %72 = arith.mulf %71, %70 : vector<2x128xf32>
    %73 = math.tanh %72 : vector<2x128xf32>
    %cst_36 = arith.constant 5.000000e-01 : f32
    %74 = vector.broadcast %cst_36 : f32 to vector<2x128xf32>
    %75 = arith.mulf %74, %73 : vector<2x128xf32>
    %cst_37 = arith.constant 5.000000e-01 : f32
    %76 = vector.broadcast %cst_37 : f32 to vector<2x128xf32>
    %77 = arith.addf %75, %76 : vector<2x128xf32>
    %78 = vector.extract_strided_slice %38 {offsets = [0, 128], sizes = [2, 128], strides = [1, 1]} : vector<2x512xf32> to vector<2x128xf32>
    %cst_38 = arith.constant 5.000000e-01 : f32
    %79 = vector.broadcast %cst_38 : f32 to vector<2x128xf32>
    %80 = arith.mulf %79, %78 : vector<2x128xf32>
    %81 = math.tanh %80 : vector<2x128xf32>
    %cst_39 = arith.constant 5.000000e-01 : f32
    %82 = vector.broadcast %cst_39 : f32 to vector<2x128xf32>
    %83 = arith.mulf %82, %81 : vector<2x128xf32>
    %cst_40 = arith.constant 5.000000e-01 : f32
    %84 = vector.broadcast %cst_40 : f32 to vector<2x128xf32>
    %85 = arith.addf %83, %84 : vector<2x128xf32>
    %86 = vector.extract_strided_slice %38 {offsets = [0, 256], sizes = [2, 128], strides = [1, 1]} : vector<2x512xf32> to vector<2x128xf32>
    %87 = math.tanh %86 : vector<2x128xf32>
    %88 = vector.extract_strided_slice %38 {offsets = [0, 384], sizes = [2, 128], strides = [1, 1]} : vector<2x512xf32> to vector<2x128xf32>
    %cst_41 = arith.constant 5.000000e-01 : f32
    %89 = vector.broadcast %cst_41 : f32 to vector<2x128xf32>
    %90 = arith.mulf %89, %88 : vector<2x128xf32>
    %91 = math.tanh %90 : vector<2x128xf32>
    %cst_42 = arith.constant 5.000000e-01 : f32
    %92 = vector.broadcast %cst_42 : f32 to vector<2x128xf32>
    %93 = arith.mulf %92, %91 : vector<2x128xf32>
    %cst_43 = arith.constant 5.000000e-01 : f32
    %94 = vector.broadcast %cst_43 : f32 to vector<2x128xf32>
    %95 = arith.addf %93, %94 : vector<2x128xf32>
    %96 = arith.mulf %85, %23 : vector<2x128xf32>
    %97 = arith.mulf %77, %87 : vector<2x128xf32>
    %98 = arith.addf %96, %97 : vector<2x128xf32>
    %99 = math.tanh %98 : vector<2x128xf32>
    %100 = arith.mulf %95, %99 : vector<2x128xf32>
    %101 = arith.index_cast %24 : i32 to index
    %c0_44 = arith.constant 0 : index
    %102 = vector.load %arg20[%101, %c0_44] : memref<16x128xf32, #tpu.memory_space<vmem>>, vector<2x128xf32>
    tpu.vector_store %arg20[%101, %c0_44], %69 {strides = array<i32>} : memref<16x128xf32, #tpu.memory_space<vmem>>, vector<2x128xf32>,
    %103 = arith.index_cast %26 : i32 to index
    %c0_45 = arith.constant 0 : index
    %104 = vector.load %arg21[%103, %c0_45] : memref<16x128xf32, #tpu.memory_space<vmem>>, vector<2x128xf32>
    tpu.vector_store %arg21[%103, %c0_45], %100 {strides = array<i32>} : memref<16x128xf32, #tpu.memory_space<vmem>>, vector<2x128xf32>,
    %c1_i32_46 = arith.constant 1 : i32
    %c2_i32_47 = arith.constant 2 : i32
    %105 = arith.muli %c1_i32_46, %c2_i32_47 : i32
    %c7_i32_48 = arith.constant 7 : i32
    %106 = arith.subi %c7_i32_48, %c1_i32_46 : i32
    %c2_i32_49 = arith.constant 2 : i32
    %107 = arith.muli %106, %c2_i32_49 : i32
    %108 = arith.index_cast %105 : i32 to index
    %c0_50 = arith.constant 0 : index
    %109 = vector.load %arg18[%108, %c0_50] : memref<16x512xf32, #tpu.memory_space<vmem>>, vector<2x512xf32>
    %110 = arith.truncf %69 : vector<2x128xf32> to vector<2x128xbf16>
    %c0_51 = arith.constant 0 : index
    %c0_52 = arith.constant 0 : index
    %111 = vector.load %arg3[%c0_51, %c0_52] : memref<128x512xbf16, #tpu.memory_space<vmem>>, vector<128x512xbf16>
    %cst_53 = arith.constant dense<0.000000e+00> : vector<2x512xf32>
    %112 = tpu.matmul %110, %111, %cst_53 {dimension_numbers = #tpu.dot_dimension_numbers<[1], [0], [0], [1], [0, 0, 1, 1], [], []>} : vector<2x128xbf16>, vector<128x512xbf16>, vector<2x512xf32> -> vector<2x512xf32>
    %113 = arith.addf %109, %112 : vector<2x512xf32>
    %114 = arith.index_cast %107 : i32 to index
    %c0_54 = arith.constant 0 : index
    %115 = vector.load %arg19[%114, %c0_54] : memref<16x512xf32, #tpu.memory_space<vmem>>, vector<2x512xf32>
    %116 = arith.truncf %100 : vector<2x128xf32> to vector<2x128xbf16>
    %c0_55 = arith.constant 0 : index
    %c0_56 = arith.constant 0 : index
    %117 = vector.load %arg6[%c0_55, %c0_56] : memref<128x512xbf16, #tpu.memory_space<vmem>>, vector<128x512xbf16>
    %cst_57 = arith.constant dense<0.000000e+00> : vector<2x512xf32>
    %118 = tpu.matmul %116, %117, %cst_57 {dimension_numbers = #tpu.dot_dimension_numbers<[1], [0], [0], [1], [0, 0, 1, 1], [], []>} : vector<2x128xbf16>, vector<128x512xbf16>, vector<2x512xf32> -> vector<2x512xf32>
    %119 = arith.addf %115, %118 : vector<2x512xf32>
    %120 = vector.extract_strided_slice %113 {offsets = [0, 0], sizes = [2, 128], strides = [1, 1]} : vector<2x512xf32> to vector<2x128xf32>
    %cst_58 = arith.constant 5.000000e-01 : f32
    %121 = vector.broadcast %cst_58 : f32 to vector<2x128xf32>
    %122 = arith.mulf %121, %120 : vector<2x128xf32>
    %123 = math.tanh %122 : vector<2x128xf32>
    %cst_59 = arith.constant 5.000000e-01 : f32
    %124 = vector.broadcast %cst_59 : f32 to vector<2x128xf32>
    %125 = arith.mulf %124, %123 : vector<2x128xf32>
    %cst_60 = arith.constant 5.000000e-01 : f32
    %126 = vector.broadcast %cst_60 : f32 to vector<2x128xf32>
    %127 = arith.addf %125, %126 : vector<2x128xf32>
    %128 = vector.extract_strided_slice %113 {offsets = [0, 128], sizes = [2, 128], strides = [1, 1]} : vector<2x512xf32> to vector<2x128xf32>
    %cst_61 = arith.constant 5.000000e-01 : f32
    %129 = vector.broadcast %cst_61 : f32 to vector<2x128xf32>
    %130 = arith.mulf %129, %128 : vector<2x128xf32>
    %131 = math.tanh %130 : vector<2x128xf32>
    %cst_62 = arith.constant 5.000000e-01 : f32
    %132 = vector.broadcast %cst_62 : f32 to vector<2x128xf32>
    %133 = arith.mulf %132, %131 : vector<2x128xf32>
    %cst_63 = arith.constant 5.000000e-01 : f32
    %134 = vector.broadcast %cst_63 : f32 to vector<2x128xf32>
    %135 = arith.addf %133, %134 : vector<2x128xf32>
    %136 = vector.extract_strided_slice %113 {offsets = [0, 256], sizes = [2, 128], strides = [1, 1]} : vector<2x512xf32> to vector<2x128xf32>
    %137 = math.tanh %136 : vector<2x128xf32>
    %138 = vector.extract_strided_slice %113 {offsets = [0, 384], sizes = [2, 128], strides = [1, 1]} : vector<2x512xf32> to vector<2x128xf32>
    %cst_64 = arith.constant 5.000000e-01 : f32
    %139 = vector.broadcast %cst_64 : f32 to vector<2x128xf32>
    %140 = arith.mulf %139, %138 : vector<2x128xf32>
    %141 = math.tanh %140 : vector<2x128xf32>
    %cst_65 = arith.constant 5.000000e-01 : f32
    %142 = vector.broadcast %cst_65 : f32 to vector<2x128xf32>
    %143 = arith.mulf %142, %141 : vector<2x128xf32>
    %cst_66 = arith.constant 5.000000e-01 : f32
    %144 = vector.broadcast %cst_66 : f32 to vector<2x128xf32>
    %145 = arith.addf %143, %144 : vector<2x128xf32>
    %146 = arith.mulf %135, %67 : vector<2x128xf32>
    %147 = arith.mulf %127, %137 : vector<2x128xf32>
    %148 = arith.addf %146, %147 : vector<2x128xf32>
    %149 = math.tanh %148 : vector<2x128xf32>
    %150 = arith.mulf %145, %149 : vector<2x128xf32>
    %151 = vector.extract_strided_slice %119 {offsets = [0, 0], sizes = [2, 128], strides = [1, 1]} : vector<2x512xf32> to vector<2x128xf32>
    %cst_67 = arith.constant 5.000000e-01 : f32
    %152 = vector.broadcast %cst_67 : f32 to vector<2x128xf32>
    %153 = arith.mulf %152, %151 : vector<2x128xf32>
    %154 = math.tanh %153 : vector<2x128xf32>
    %cst_68 = arith.constant 5.000000e-01 : f32
    %155 = vector.broadcast %cst_68 : f32 to vector<2x128xf32>
    %156 = arith.mulf %155, %154 : vector<2x128xf32>
    %cst_69 = arith.constant 5.000000e-01 : f32
    %157 = vector.broadcast %cst_69 : f32 to vector<2x128xf32>
    %158 = arith.addf %156, %157 : vector<2x128xf32>
    %159 = vector.extract_strided_slice %119 {offsets = [0, 128], sizes = [2, 128], strides = [1, 1]} : vector<2x512xf32> to vector<2x128xf32>
    %cst_70 = arith.constant 5.000000e-01 : f32
    %160 = vector.broadcast %cst_70 : f32 to vector<2x128xf32>
    %161 = arith.mulf %160, %159 : vector<2x128xf32>
    %162 = math.tanh %161 : vector<2x128xf32>
    %cst_71 = arith.constant 5.000000e-01 : f32
    %163 = vector.broadcast %cst_71 : f32 to vector<2x128xf32>
    %164 = arith.mulf %163, %162 : vector<2x128xf32>
    %cst_72 = arith.constant 5.000000e-01 : f32
    %165 = vector.broadcast %cst_72 : f32 to vector<2x128xf32>
    %166 = arith.addf %164, %165 : vector<2x128xf32>
    %167 = vector.extract_strided_slice %119 {offsets = [0, 256], sizes = [2, 128], strides = [1, 1]} : vector<2x512xf32> to vector<2x128xf32>
    %168 = math.tanh %167 : vector<2x128xf32>
    %169 = vector.extract_strided_slice %119 {offsets = [0, 384], sizes = [2, 128], strides = [1, 1]} : vector<2x512xf32> to vector<2x128xf32>
    %cst_73 = arith.constant 5.000000e-01 : f32
    %170 = vector.broadcast %cst_73 : f32 to vector<2x128xf32>
    %171 = arith.mulf %170, %169 : vector<2x128xf32>
    %172 = math.tanh %171 : vector<2x128xf32>
    %cst_74 = arith.constant 5.000000e-01 : f32
    %173 = vector.broadcast %cst_74 : f32 to vector<2x128xf32>
    %174 = arith.mulf %173, %172 : vector<2x128xf32>
    %cst_75 = arith.constant 5.000000e-01 : f32
    %175 = vector.broadcast %cst_75 : f32 to vector<2x128xf32>
    %176 = arith.addf %174, %175 : vector<2x128xf32>
    %177 = arith.mulf %166, %98 : vector<2x128xf32>
    %178 = arith.mulf %158, %168 : vector<2x128xf32>
    %179 = arith.addf %177, %178 : vector<2x128xf32>
    %180 = math.tanh %179 : vector<2x128xf32>
    %181 = arith.mulf %176, %180 : vector<2x128xf32>
    %182 = arith.index_cast %105 : i32 to index
    %c0_76 = arith.constant 0 : index
    %183 = vector.load %arg20[%182, %c0_76] : memref<16x128xf32, #tpu.memory_space<vmem>>, vector<2x128xf32>
    tpu.vector_store %arg20[%182, %c0_76], %150 {strides = array<i32>} : memref<16x128xf32, #tpu.memory_space<vmem>>, vector<2x128xf32>,
    %184 = arith.index_cast %107 : i32 to index
    %c0_77 = arith.constant 0 : index
    %185 = vector.load %arg21[%184, %c0_77] : memref<16x128xf32, #tpu.memory_space<vmem>>, vector<2x128xf32>
    tpu.vector_store %arg21[%184, %c0_77], %181 {strides = array<i32>} : memref<16x128xf32, #tpu.memory_space<vmem>>, vector<2x128xf32>,
    %c2_i32_78 = arith.constant 2 : i32
    %c2_i32_79 = arith.constant 2 : i32
    %186 = arith.muli %c2_i32_78, %c2_i32_79 : i32
    %c7_i32_80 = arith.constant 7 : i32
    %187 = arith.subi %c7_i32_80, %c2_i32_78 : i32
    %c2_i32_81 = arith.constant 2 : i32
    %188 = arith.muli %187, %c2_i32_81 : i32
    %189 = arith.index_cast %186 : i32 to index
    %c0_82 = arith.constant 0 : index
    %190 = vector.load %arg18[%189, %c0_82] : memref<16x512xf32, #tpu.memory_space<vmem>>, vector<2x512xf32>
    %191 = arith.truncf %150 : vector<2x128xf32> to vector<2x128xbf16>
    %c0_83 = arith.constant 0 : index
    %c0_84 = arith.constant 0 : index
    %192 = vector.load %arg3[%c0_83, %c0_84] : memref<128x512xbf16, #tpu.memory_space<vmem>>, vector<128x512xbf16>
    %cst_85 = arith.constant dense<0.000000e+00> : vector<2x512xf32>
    %193 = tpu.matmul %191, %192, %cst_85 {dimension_numbers = #tpu.dot_dimension_numbers<[1], [0], [0], [1], [0, 0, 1, 1], [], []>} : vector<2x128xbf16>, vector<128x512xbf16>, vector<2x512xf32> -> vector<2x512xf32>
    %194 = arith.addf %190, %193 : vector<2x512xf32>
    %195 = arith.index_cast %188 : i32 to index
    %c0_86 = arith.constant 0 : index
    %196 = vector.load %arg19[%195, %c0_86] : memref<16x512xf32, #tpu.memory_space<vmem>>, vector<2x512xf32>
    %197 = arith.truncf %181 : vector<2x128xf32> to vector<2x128xbf16>
    %c0_87 = arith.constant 0 : index
    %c0_88 = arith.constant 0 : index
    %198 = vector.load %arg6[%c0_87, %c0_88] : memref<128x512xbf16, #tpu.memory_space<vmem>>, vector<128x512xbf16>
    %cst_89 = arith.constant dense<0.000000e+00> : vector<2x512xf32>
    %199 = tpu.matmul %197, %198, %cst_89 {dimension_numbers = #tpu.dot_dimension_numbers<[1], [0], [0], [1], [0, 0, 1, 1], [], []>} : vector<2x128xbf16>, vector<128x512xbf16>, vector<2x512xf32> -> vector<2x512xf32>
    %200 = arith.addf %196, %199 : vector<2x512xf32>
    %201 = vector.extract_strided_slice %194 {offsets = [0, 0], sizes = [2, 128], strides = [1, 1]} : vector<2x512xf32> to vector<2x128xf32>
    %cst_90 = arith.constant 5.000000e-01 : f32
    %202 = vector.broadcast %cst_90 : f32 to vector<2x128xf32>
    %203 = arith.mulf %202, %201 : vector<2x128xf32>
    %204 = math.tanh %203 : vector<2x128xf32>
    %cst_91 = arith.constant 5.000000e-01 : f32
    %205 = vector.broadcast %cst_91 : f32 to vector<2x128xf32>
    %206 = arith.mulf %205, %204 : vector<2x128xf32>
    %cst_92 = arith.constant 5.000000e-01 : f32
    %207 = vector.broadcast %cst_92 : f32 to vector<2x128xf32>
    %208 = arith.addf %206, %207 : vector<2x128xf32>
    %209 = vector.extract_strided_slice %194 {offsets = [0, 128], sizes = [2, 128], strides = [1, 1]} : vector<2x512xf32> to vector<2x128xf32>
    %cst_93 = arith.constant 5.000000e-01 : f32
    %210 = vector.broadcast %cst_93 : f32 to vector<2x128xf32>
    %211 = arith.mulf %210, %209 : vector<2x128xf32>
    %212 = math.tanh %211 : vector<2x128xf32>
    %cst_94 = arith.constant 5.000000e-01 : f32
    %213 = vector.broadcast %cst_94 : f32 to vector<2x128xf32>
    %214 = arith.mulf %213, %212 : vector<2x128xf32>
    %cst_95 = arith.constant 5.000000e-01 : f32
    %215 = vector.broadcast %cst_95 : f32 to vector<2x128xf32>
    %216 = arith.addf %214, %215 : vector<2x128xf32>
    %217 = vector.extract_strided_slice %194 {offsets = [0, 256], sizes = [2, 128], strides = [1, 1]} : vector<2x512xf32> to vector<2x128xf32>
    %218 = math.tanh %217 : vector<2x128xf32>
    %219 = vector.extract_strided_slice %194 {offsets = [0, 384], sizes = [2, 128], strides = [1, 1]} : vector<2x512xf32> to vector<2x128xf32>
    %cst_96 = arith.constant 5.000000e-01 : f32
    %220 = vector.broadcast %cst_96 : f32 to vector<2x128xf32>
    %221 = arith.mulf %220, %219 : vector<2x128xf32>
    %222 = math.tanh %221 : vector<2x128xf32>
    %cst_97 = arith.constant 5.000000e-01 : f32
    %223 = vector.broadcast %cst_97 : f32 to vector<2x128xf32>
    %224 = arith.mulf %223, %222 : vector<2x128xf32>
    %cst_98 = arith.constant 5.000000e-01 : f32
    %225 = vector.broadcast %cst_98 : f32 to vector<2x128xf32>
    %226 = arith.addf %224, %225 : vector<2x128xf32>
    %227 = arith.mulf %216, %148 : vector<2x128xf32>
    %228 = arith.mulf %208, %218 : vector<2x128xf32>
    %229 = arith.addf %227, %228 : vector<2x128xf32>
    %230 = math.tanh %229 : vector<2x128xf32>
    %231 = arith.mulf %226, %230 : vector<2x128xf32>
    %232 = vector.extract_strided_slice %200 {offsets = [0, 0], sizes = [2, 128], strides = [1, 1]} : vector<2x512xf32> to vector<2x128xf32>
    %cst_99 = arith.constant 5.000000e-01 : f32
    %233 = vector.broadcast %cst_99 : f32 to vector<2x128xf32>
    %234 = arith.mulf %233, %232 : vector<2x128xf32>
    %235 = math.tanh %234 : vector<2x128xf32>
    %cst_100 = arith.constant 5.000000e-01 : f32
    %236 = vector.broadcast %cst_100 : f32 to vector<2x128xf32>
    %237 = arith.mulf %236, %235 : vector<2x128xf32>
    %cst_101 = arith.constant 5.000000e-01 : f32
    %238 = vector.broadcast %cst_101 : f32 to vector<2x128xf32>
    %239 = arith.addf %237, %238 : vector<2x128xf32>
    %240 = vector.extract_strided_slice %200 {offsets = [0, 128], sizes = [2, 128], strides = [1, 1]} : vector<2x512xf32> to vector<2x128xf32>
    %cst_102 = arith.constant 5.000000e-01 : f32
    %241 = vector.broadcast %cst_102 : f32 to vector<2x128xf32>
    %242 = arith.mulf %241, %240 : vector<2x128xf32>
    %243 = math.tanh %242 : vector<2x128xf32>
    %cst_103 = arith.constant 5.000000e-01 : f32
    %244 = vector.broadcast %cst_103 : f32 to vector<2x128xf32>
    %245 = arith.mulf %244, %243 : vector<2x128xf32>
    %cst_104 = arith.constant 5.000000e-01 : f32
    %246 = vector.broadcast %cst_104 : f32 to vector<2x128xf32>
    %247 = arith.addf %245, %246 : vector<2x128xf32>
    %248 = vector.extract_strided_slice %200 {offsets = [0, 256], sizes = [2, 128], strides = [1, 1]} : vector<2x512xf32> to vector<2x128xf32>
    %249 = math.tanh %248 : vector<2x128xf32>
    %250 = vector.extract_strided_slice %200 {offsets = [0, 384], sizes = [2, 128], strides = [1, 1]} : vector<2x512xf32> to vector<2x128xf32>
    %cst_105 = arith.constant 5.000000e-01 : f32
    %251 = vector.broadcast %cst_105 : f32 to vector<2x128xf32>
    %252 = arith.mulf %251, %250 : vector<2x128xf32>
    %253 = math.tanh %252 : vector<2x128xf32>
    %cst_106 = arith.constant 5.000000e-01 : f32
    %254 = vector.broadcast %cst_106 : f32 to vector<2x128xf32>
    %255 = arith.mulf %254, %253 : vector<2x128xf32>
    %cst_107 = arith.constant 5.000000e-01 : f32
    %256 = vector.broadcast %cst_107 : f32 to vector<2x128xf32>
    %257 = arith.addf %255, %256 : vector<2x128xf32>
    %258 = arith.mulf %247, %179 : vector<2x128xf32>
    %259 = arith.mulf %239, %249 : vector<2x128xf32>
    %260 = arith.addf %258, %259 : vector<2x128xf32>
    %261 = math.tanh %260 : vector<2x128xf32>
    %262 = arith.mulf %257, %261 : vector<2x128xf32>
    %263 = arith.index_cast %186 : i32 to index
    %c0_108 = arith.constant 0 : index
    %264 = vector.load %arg20[%263, %c0_108] : memref<16x128xf32, #tpu.memory_space<vmem>>, vector<2x128xf32>
    tpu.vector_store %arg20[%263, %c0_108], %231 {strides = array<i32>} : memref<16x128xf32, #tpu.memory_space<vmem>>, vector<2x128xf32>,
    %265 = arith.index_cast %188 : i32 to index
    %c0_109 = arith.constant 0 : index
    %266 = vector.load %arg21[%265, %c0_109] : memref<16x128xf32, #tpu.memory_space<vmem>>, vector<2x128xf32>
    tpu.vector_store %arg21[%265, %c0_109], %262 {strides = array<i32>} : memref<16x128xf32, #tpu.memory_space<vmem>>, vector<2x128xf32>,
    %c3_i32_110 = arith.constant 3 : i32
    %c2_i32_111 = arith.constant 2 : i32
    %267 = arith.muli %c3_i32_110, %c2_i32_111 : i32
    %c7_i32_112 = arith.constant 7 : i32
    %268 = arith.subi %c7_i32_112, %c3_i32_110 : i32
    %c2_i32_113 = arith.constant 2 : i32
    %269 = arith.muli %268, %c2_i32_113 : i32
    %270 = arith.index_cast %267 : i32 to index
    %c0_114 = arith.constant 0 : index
    %271 = vector.load %arg18[%270, %c0_114] : memref<16x512xf32, #tpu.memory_space<vmem>>, vector<2x512xf32>
    %272 = arith.truncf %231 : vector<2x128xf32> to vector<2x128xbf16>
    %c0_115 = arith.constant 0 : index
    %c0_116 = arith.constant 0 : index
    %273 = vector.load %arg3[%c0_115, %c0_116] : memref<128x512xbf16, #tpu.memory_space<vmem>>, vector<128x512xbf16>
    %cst_117 = arith.constant dense<0.000000e+00> : vector<2x512xf32>
    %274 = tpu.matmul %272, %273, %cst_117 {dimension_numbers = #tpu.dot_dimension_numbers<[1], [0], [0], [1], [0, 0, 1, 1], [], []>} : vector<2x128xbf16>, vector<128x512xbf16>, vector<2x512xf32> -> vector<2x512xf32>
    %275 = arith.addf %271, %274 : vector<2x512xf32>
    %276 = arith.index_cast %269 : i32 to index
    %c0_118 = arith.constant 0 : index
    %277 = vector.load %arg19[%276, %c0_118] : memref<16x512xf32, #tpu.memory_space<vmem>>, vector<2x512xf32>
    %278 = arith.truncf %262 : vector<2x128xf32> to vector<2x128xbf16>
    %c0_119 = arith.constant 0 : index
    %c0_120 = arith.constant 0 : index
    %279 = vector.load %arg6[%c0_119, %c0_120] : memref<128x512xbf16, #tpu.memory_space<vmem>>, vector<128x512xbf16>
    %cst_121 = arith.constant dense<0.000000e+00> : vector<2x512xf32>
    %280 = tpu.matmul %278, %279, %cst_121 {dimension_numbers = #tpu.dot_dimension_numbers<[1], [0], [0], [1], [0, 0, 1, 1], [], []>} : vector<2x128xbf16>, vector<128x512xbf16>, vector<2x512xf32> -> vector<2x512xf32>
    %281 = arith.addf %277, %280 : vector<2x512xf32>
    %282 = vector.extract_strided_slice %275 {offsets = [0, 0], sizes = [2, 128], strides = [1, 1]} : vector<2x512xf32> to vector<2x128xf32>
    %cst_122 = arith.constant 5.000000e-01 : f32
    %283 = vector.broadcast %cst_122 : f32 to vector<2x128xf32>
    %284 = arith.mulf %283, %282 : vector<2x128xf32>
    %285 = math.tanh %284 : vector<2x128xf32>
    %cst_123 = arith.constant 5.000000e-01 : f32
    %286 = vector.broadcast %cst_123 : f32 to vector<2x128xf32>
    %287 = arith.mulf %286, %285 : vector<2x128xf32>
    %cst_124 = arith.constant 5.000000e-01 : f32
    %288 = vector.broadcast %cst_124 : f32 to vector<2x128xf32>
    %289 = arith.addf %287, %288 : vector<2x128xf32>
    %290 = vector.extract_strided_slice %275 {offsets = [0, 128], sizes = [2, 128], strides = [1, 1]} : vector<2x512xf32> to vector<2x128xf32>
    %cst_125 = arith.constant 5.000000e-01 : f32
    %291 = vector.broadcast %cst_125 : f32 to vector<2x128xf32>
    %292 = arith.mulf %291, %290 : vector<2x128xf32>
    %293 = math.tanh %292 : vector<2x128xf32>
    %cst_126 = arith.constant 5.000000e-01 : f32
    %294 = vector.broadcast %cst_126 : f32 to vector<2x128xf32>
    %295 = arith.mulf %294, %293 : vector<2x128xf32>
    %cst_127 = arith.constant 5.000000e-01 : f32
    %296 = vector.broadcast %cst_127 : f32 to vector<2x128xf32>
    %297 = arith.addf %295, %296 : vector<2x128xf32>
    %298 = vector.extract_strided_slice %275 {offsets = [0, 256], sizes = [2, 128], strides = [1, 1]} : vector<2x512xf32> to vector<2x128xf32>
    %299 = math.tanh %298 : vector<2x128xf32>
    %300 = vector.extract_strided_slice %275 {offsets = [0, 384], sizes = [2, 128], strides = [1, 1]} : vector<2x512xf32> to vector<2x128xf32>
    %cst_128 = arith.constant 5.000000e-01 : f32
    %301 = vector.broadcast %cst_128 : f32 to vector<2x128xf32>
    %302 = arith.mulf %301, %300 : vector<2x128xf32>
    %303 = math.tanh %302 : vector<2x128xf32>
    %cst_129 = arith.constant 5.000000e-01 : f32
    %304 = vector.broadcast %cst_129 : f32 to vector<2x128xf32>
    %305 = arith.mulf %304, %303 : vector<2x128xf32>
    %cst_130 = arith.constant 5.000000e-01 : f32
    %306 = vector.broadcast %cst_130 : f32 to vector<2x128xf32>
    %307 = arith.addf %305, %306 : vector<2x128xf32>
    %308 = arith.mulf %297, %229 : vector<2x128xf32>
    %309 = arith.mulf %289, %299 : vector<2x128xf32>
    %310 = arith.addf %308, %309 : vector<2x128xf32>
    %311 = math.tanh %310 : vector<2x128xf32>
    %312 = arith.mulf %307, %311 : vector<2x128xf32>
    %313 = vector.extract_strided_slice %281 {offsets = [0, 0], sizes = [2, 128], strides = [1, 1]} : vector<2x512xf32> to vector<2x128xf32>
    %cst_131 = arith.constant 5.000000e-01 : f32
    %314 = vector.broadcast %cst_131 : f32 to vector<2x128xf32>
    %315 = arith.mulf %314, %313 : vector<2x128xf32>
    %316 = math.tanh %315 : vector<2x128xf32>
    %cst_132 = arith.constant 5.000000e-01 : f32
    %317 = vector.broadcast %cst_132 : f32 to vector<2x128xf32>
    %318 = arith.mulf %317, %316 : vector<2x128xf32>
    %cst_133 = arith.constant 5.000000e-01 : f32
    %319 = vector.broadcast %cst_133 : f32 to vector<2x128xf32>
    %320 = arith.addf %318, %319 : vector<2x128xf32>
    %321 = vector.extract_strided_slice %281 {offsets = [0, 128], sizes = [2, 128], strides = [1, 1]} : vector<2x512xf32> to vector<2x128xf32>
    %cst_134 = arith.constant 5.000000e-01 : f32
    %322 = vector.broadcast %cst_134 : f32 to vector<2x128xf32>
    %323 = arith.mulf %322, %321 : vector<2x128xf32>
    %324 = math.tanh %323 : vector<2x128xf32>
    %cst_135 = arith.constant 5.000000e-01 : f32
    %325 = vector.broadcast %cst_135 : f32 to vector<2x128xf32>
    %326 = arith.mulf %325, %324 : vector<2x128xf32>
    %cst_136 = arith.constant 5.000000e-01 : f32
    %327 = vector.broadcast %cst_136 : f32 to vector<2x128xf32>
    %328 = arith.addf %326, %327 : vector<2x128xf32>
    %329 = vector.extract_strided_slice %281 {offsets = [0, 256], sizes = [2, 128], strides = [1, 1]} : vector<2x512xf32> to vector<2x128xf32>
    %330 = math.tanh %329 : vector<2x128xf32>
    %331 = vector.extract_strided_slice %281 {offsets = [0, 384], sizes = [2, 128], strides = [1, 1]} : vector<2x512xf32> to vector<2x128xf32>
    %cst_137 = arith.constant 5.000000e-01 : f32
    %332 = vector.broadcast %cst_137 : f32 to vector<2x128xf32>
    %333 = arith.mulf %332, %331 : vector<2x128xf32>
    %334 = math.tanh %333 : vector<2x128xf32>
    %cst_138 = arith.constant 5.000000e-01 : f32
    %335 = vector.broadcast %cst_138 : f32 to vector<2x128xf32>
    %336 = arith.mulf %335, %334 : vector<2x128xf32>
    %cst_139 = arith.constant 5.000000e-01 : f32
    %337 = vector.broadcast %cst_139 : f32 to vector<2x128xf32>
    %338 = arith.addf %336, %337 : vector<2x128xf32>
    %339 = arith.mulf %328, %260 : vector<2x128xf32>
    %340 = arith.mulf %320, %330 : vector<2x128xf32>
    %341 = arith.addf %339, %340 : vector<2x128xf32>
    %342 = math.tanh %341 : vector<2x128xf32>
    %343 = arith.mulf %338, %342 : vector<2x128xf32>
    %344 = arith.index_cast %267 : i32 to index
    %c0_140 = arith.constant 0 : index
    %345 = vector.load %arg20[%344, %c0_140] : memref<16x128xf32, #tpu.memory_space<vmem>>, vector<2x128xf32>
    tpu.vector_store %arg20[%344, %c0_140], %312 {strides = array<i32>} : memref<16x128xf32, #tpu.memory_space<vmem>>, vector<2x128xf32>,
    %346 = arith.index_cast %269 : i32 to index
    %c0_141 = arith.constant 0 : index
    %347 = vector.load %arg21[%346, %c0_141] : memref<16x128xf32, #tpu.memory_space<vmem>>, vector<2x128xf32>
    tpu.vector_store %arg21[%346, %c0_141], %343 {strides = array<i32>} : memref<16x128xf32, #tpu.memory_space<vmem>>, vector<2x128xf32>,
    %c4_i32_142 = arith.constant 4 : i32
    %c2_i32_143 = arith.constant 2 : i32
    %348 = arith.muli %c4_i32_142, %c2_i32_143 : i32
    %c7_i32_144 = arith.constant 7 : i32
    %349 = arith.subi %c7_i32_144, %c4_i32_142 : i32
    %c2_i32_145 = arith.constant 2 : i32
    %350 = arith.muli %349, %c2_i32_145 : i32
    %351 = arith.index_cast %348 : i32 to index
    %c0_146 = arith.constant 0 : index
    %352 = vector.load %arg18[%351, %c0_146] : memref<16x512xf32, #tpu.memory_space<vmem>>, vector<2x512xf32>
    %353 = arith.truncf %312 : vector<2x128xf32> to vector<2x128xbf16>
    %c0_147 = arith.constant 0 : index
    %c0_148 = arith.constant 0 : index
    %354 = vector.load %arg3[%c0_147, %c0_148] : memref<128x512xbf16, #tpu.memory_space<vmem>>, vector<128x512xbf16>
    %cst_149 = arith.constant dense<0.000000e+00> : vector<2x512xf32>
    %355 = tpu.matmul %353, %354, %cst_149 {dimension_numbers = #tpu.dot_dimension_numbers<[1], [0], [0], [1], [0, 0, 1, 1], [], []>} : vector<2x128xbf16>, vector<128x512xbf16>, vector<2x512xf32> -> vector<2x512xf32>
    %356 = arith.addf %352, %355 : vector<2x512xf32>
    %357 = arith.index_cast %350 : i32 to index
    %c0_150 = arith.constant 0 : index
    %358 = vector.load %arg19[%357, %c0_150] : memref<16x512xf32, #tpu.memory_space<vmem>>, vector<2x512xf32>
    %359 = arith.truncf %343 : vector<2x128xf32> to vector<2x128xbf16>
    %c0_151 = arith.constant 0 : index
    %c0_152 = arith.constant 0 : index
    %360 = vector.load %arg6[%c0_151, %c0_152] : memref<128x512xbf16, #tpu.memory_space<vmem>>, vector<128x512xbf16>
    %cst_153 = arith.constant dense<0.000000e+00> : vector<2x512xf32>
    %361 = tpu.matmul %359, %360, %cst_153 {dimension_numbers = #tpu.dot_dimension_numbers<[1], [0], [0], [1], [0, 0, 1, 1], [], []>} : vector<2x128xbf16>, vector<128x512xbf16>, vector<2x512xf32> -> vector<2x512xf32>
    %362 = arith.addf %358, %361 : vector<2x512xf32>
    %363 = vector.extract_strided_slice %356 {offsets = [0, 0], sizes = [2, 128], strides = [1, 1]} : vector<2x512xf32> to vector<2x128xf32>
    %cst_154 = arith.constant 5.000000e-01 : f32
    %364 = vector.broadcast %cst_154 : f32 to vector<2x128xf32>
    %365 = arith.mulf %364, %363 : vector<2x128xf32>
    %366 = math.tanh %365 : vector<2x128xf32>
    %cst_155 = arith.constant 5.000000e-01 : f32
    %367 = vector.broadcast %cst_155 : f32 to vector<2x128xf32>
    %368 = arith.mulf %367, %366 : vector<2x128xf32>
    %cst_156 = arith.constant 5.000000e-01 : f32
    %369 = vector.broadcast %cst_156 : f32 to vector<2x128xf32>
    %370 = arith.addf %368, %369 : vector<2x128xf32>
    %371 = vector.extract_strided_slice %356 {offsets = [0, 128], sizes = [2, 128], strides = [1, 1]} : vector<2x512xf32> to vector<2x128xf32>
    %cst_157 = arith.constant 5.000000e-01 : f32
    %372 = vector.broadcast %cst_157 : f32 to vector<2x128xf32>
    %373 = arith.mulf %372, %371 : vector<2x128xf32>
    %374 = math.tanh %373 : vector<2x128xf32>
    %cst_158 = arith.constant 5.000000e-01 : f32
    %375 = vector.broadcast %cst_158 : f32 to vector<2x128xf32>
    %376 = arith.mulf %375, %374 : vector<2x128xf32>
    %cst_159 = arith.constant 5.000000e-01 : f32
    %377 = vector.broadcast %cst_159 : f32 to vector<2x128xf32>
    %378 = arith.addf %376, %377 : vector<2x128xf32>
    %379 = vector.extract_strided_slice %356 {offsets = [0, 256], sizes = [2, 128], strides = [1, 1]} : vector<2x512xf32> to vector<2x128xf32>
    %380 = math.tanh %379 : vector<2x128xf32>
    %381 = vector.extract_strided_slice %356 {offsets = [0, 384], sizes = [2, 128], strides = [1, 1]} : vector<2x512xf32> to vector<2x128xf32>
    %cst_160 = arith.constant 5.000000e-01 : f32
    %382 = vector.broadcast %cst_160 : f32 to vector<2x128xf32>
    %383 = arith.mulf %382, %381 : vector<2x128xf32>
    %384 = math.tanh %383 : vector<2x128xf32>
    %cst_161 = arith.constant 5.000000e-01 : f32
    %385 = vector.broadcast %cst_161 : f32 to vector<2x128xf32>
    %386 = arith.mulf %385, %384 : vector<2x128xf32>
    %cst_162 = arith.constant 5.000000e-01 : f32
    %387 = vector.broadcast %cst_162 : f32 to vector<2x128xf32>
    %388 = arith.addf %386, %387 : vector<2x128xf32>
    %389 = arith.mulf %378, %310 : vector<2x128xf32>
    %390 = arith.mulf %370, %380 : vector<2x128xf32>
    %391 = arith.addf %389, %390 : vector<2x128xf32>
    %392 = math.tanh %391 : vector<2x128xf32>
    %393 = arith.mulf %388, %392 : vector<2x128xf32>
    %394 = vector.extract_strided_slice %362 {offsets = [0, 0], sizes = [2, 128], strides = [1, 1]} : vector<2x512xf32> to vector<2x128xf32>
    %cst_163 = arith.constant 5.000000e-01 : f32
    %395 = vector.broadcast %cst_163 : f32 to vector<2x128xf32>
    %396 = arith.mulf %395, %394 : vector<2x128xf32>
    %397 = math.tanh %396 : vector<2x128xf32>
    %cst_164 = arith.constant 5.000000e-01 : f32
    %398 = vector.broadcast %cst_164 : f32 to vector<2x128xf32>
    %399 = arith.mulf %398, %397 : vector<2x128xf32>
    %cst_165 = arith.constant 5.000000e-01 : f32
    %400 = vector.broadcast %cst_165 : f32 to vector<2x128xf32>
    %401 = arith.addf %399, %400 : vector<2x128xf32>
    %402 = vector.extract_strided_slice %362 {offsets = [0, 128], sizes = [2, 128], strides = [1, 1]} : vector<2x512xf32> to vector<2x128xf32>
    %cst_166 = arith.constant 5.000000e-01 : f32
    %403 = vector.broadcast %cst_166 : f32 to vector<2x128xf32>
    %404 = arith.mulf %403, %402 : vector<2x128xf32>
    %405 = math.tanh %404 : vector<2x128xf32>
    %cst_167 = arith.constant 5.000000e-01 : f32
    %406 = vector.broadcast %cst_167 : f32 to vector<2x128xf32>
    %407 = arith.mulf %406, %405 : vector<2x128xf32>
    %cst_168 = arith.constant 5.000000e-01 : f32
    %408 = vector.broadcast %cst_168 : f32 to vector<2x128xf32>
    %409 = arith.addf %407, %408 : vector<2x128xf32>
    %410 = vector.extract_strided_slice %362 {offsets = [0, 256], sizes = [2, 128], strides = [1, 1]} : vector<2x512xf32> to vector<2x128xf32>
    %411 = math.tanh %410 : vector<2x128xf32>
    %412 = vector.extract_strided_slice %362 {offsets = [0, 384], sizes = [2, 128], strides = [1, 1]} : vector<2x512xf32> to vector<2x128xf32>
    %cst_169 = arith.constant 5.000000e-01 : f32
    %413 = vector.broadcast %cst_169 : f32 to vector<2x128xf32>
    %414 = arith.mulf %413, %412 : vector<2x128xf32>
    %415 = math.tanh %414 : vector<2x128xf32>
    %cst_170 = arith.constant 5.000000e-01 : f32
    %416 = vector.broadcast %cst_170 : f32 to vector<2x128xf32>
    %417 = arith.mulf %416, %415 : vector<2x128xf32>
    %cst_171 = arith.constant 5.000000e-01 : f32
    %418 = vector.broadcast %cst_171 : f32 to vector<2x128xf32>
    %419 = arith.addf %417, %418 : vector<2x128xf32>
    %420 = arith.mulf %409, %341 : vector<2x128xf32>
    %421 = arith.mulf %401, %411 : vector<2x128xf32>
    %422 = arith.addf %420, %421 : vector<2x128xf32>
    %423 = math.tanh %422 : vector<2x128xf32>
    %424 = arith.mulf %419, %423 : vector<2x128xf32>
    %425 = arith.index_cast %348 : i32 to index
    %c0_172 = arith.constant 0 : index
    %426 = vector.load %arg20[%425, %c0_172] : memref<16x128xf32, #tpu.memory_space<vmem>>, vector<2x128xf32>
    tpu.vector_store %arg20[%425, %c0_172], %393 {strides = array<i32>} : memref<16x128xf32, #tpu.memory_space<vmem>>, vector<2x128xf32>,
    %427 = arith.index_cast %350 : i32 to index
    %c0_173 = arith.constant 0 : index
    %428 = vector.load %arg21[%427, %c0_173] : memref<16x128xf32, #tpu.memory_space<vmem>>, vector<2x128xf32>
    tpu.vector_store %arg21[%427, %c0_173], %424 {strides = array<i32>} : memref<16x128xf32, #tpu.memory_space<vmem>>, vector<2x128xf32>,
    %c5_i32 = arith.constant 5 : i32
    %c2_i32_174 = arith.constant 2 : i32
    %429 = arith.muli %c5_i32, %c2_i32_174 : i32
    %c7_i32_175 = arith.constant 7 : i32
    %430 = arith.subi %c7_i32_175, %c5_i32 : i32
    %c2_i32_176 = arith.constant 2 : i32
    %431 = arith.muli %430, %c2_i32_176 : i32
    %432 = arith.index_cast %429 : i32 to index
    %c0_177 = arith.constant 0 : index
    %433 = vector.load %arg18[%432, %c0_177] : memref<16x512xf32, #tpu.memory_space<vmem>>, vector<2x512xf32>
    %434 = arith.truncf %393 : vector<2x128xf32> to vector<2x128xbf16>
    %c0_178 = arith.constant 0 : index
    %c0_179 = arith.constant 0 : index
    %435 = vector.load %arg3[%c0_178, %c0_179] : memref<128x512xbf16, #tpu.memory_space<vmem>>, vector<128x512xbf16>
    %cst_180 = arith.constant dense<0.000000e+00> : vector<2x512xf32>
    %436 = tpu.matmul %434, %435, %cst_180 {dimension_numbers = #tpu.dot_dimension_numbers<[1], [0], [0], [1], [0, 0, 1, 1], [], []>} : vector<2x128xbf16>, vector<128x512xbf16>, vector<2x512xf32> -> vector<2x512xf32>
    %437 = arith.addf %433, %436 : vector<2x512xf32>
    %438 = arith.index_cast %431 : i32 to index
    %c0_181 = arith.constant 0 : index
    %439 = vector.load %arg19[%438, %c0_181] : memref<16x512xf32, #tpu.memory_space<vmem>>, vector<2x512xf32>
    %440 = arith.truncf %424 : vector<2x128xf32> to vector<2x128xbf16>
    %c0_182 = arith.constant 0 : index
    %c0_183 = arith.constant 0 : index
    %441 = vector.load %arg6[%c0_182, %c0_183] : memref<128x512xbf16, #tpu.memory_space<vmem>>, vector<128x512xbf16>
    %cst_184 = arith.constant dense<0.000000e+00> : vector<2x512xf32>
    %442 = tpu.matmul %440, %441, %cst_184 {dimension_numbers = #tpu.dot_dimension_numbers<[1], [0], [0], [1], [0, 0, 1, 1], [], []>} : vector<2x128xbf16>, vector<128x512xbf16>, vector<2x512xf32> -> vector<2x512xf32>
    %443 = arith.addf %439, %442 : vector<2x512xf32>
    %444 = vector.extract_strided_slice %437 {offsets = [0, 0], sizes = [2, 128], strides = [1, 1]} : vector<2x512xf32> to vector<2x128xf32>
    %cst_185 = arith.constant 5.000000e-01 : f32
    %445 = vector.broadcast %cst_185 : f32 to vector<2x128xf32>
    %446 = arith.mulf %445, %444 : vector<2x128xf32>
    %447 = math.tanh %446 : vector<2x128xf32>
    %cst_186 = arith.constant 5.000000e-01 : f32
    %448 = vector.broadcast %cst_186 : f32 to vector<2x128xf32>
    %449 = arith.mulf %448, %447 : vector<2x128xf32>
    %cst_187 = arith.constant 5.000000e-01 : f32
    %450 = vector.broadcast %cst_187 : f32 to vector<2x128xf32>
    %451 = arith.addf %449, %450 : vector<2x128xf32>
    %452 = vector.extract_strided_slice %437 {offsets = [0, 128], sizes = [2, 128], strides = [1, 1]} : vector<2x512xf32> to vector<2x128xf32>
    %cst_188 = arith.constant 5.000000e-01 : f32
    %453 = vector.broadcast %cst_188 : f32 to vector<2x128xf32>
    %454 = arith.mulf %453, %452 : vector<2x128xf32>
    %455 = math.tanh %454 : vector<2x128xf32>
    %cst_189 = arith.constant 5.000000e-01 : f32
    %456 = vector.broadcast %cst_189 : f32 to vector<2x128xf32>
    %457 = arith.mulf %456, %455 : vector<2x128xf32>
    %cst_190 = arith.constant 5.000000e-01 : f32
    %458 = vector.broadcast %cst_190 : f32 to vector<2x128xf32>
    %459 = arith.addf %457, %458 : vector<2x128xf32>
    %460 = vector.extract_strided_slice %437 {offsets = [0, 256], sizes = [2, 128], strides = [1, 1]} : vector<2x512xf32> to vector<2x128xf32>
    %461 = math.tanh %460 : vector<2x128xf32>
    %462 = vector.extract_strided_slice %437 {offsets = [0, 384], sizes = [2, 128], strides = [1, 1]} : vector<2x512xf32> to vector<2x128xf32>
    %cst_191 = arith.constant 5.000000e-01 : f32
    %463 = vector.broadcast %cst_191 : f32 to vector<2x128xf32>
    %464 = arith.mulf %463, %462 : vector<2x128xf32>
    %465 = math.tanh %464 : vector<2x128xf32>
    %cst_192 = arith.constant 5.000000e-01 : f32
    %466 = vector.broadcast %cst_192 : f32 to vector<2x128xf32>
    %467 = arith.mulf %466, %465 : vector<2x128xf32>
    %cst_193 = arith.constant 5.000000e-01 : f32
    %468 = vector.broadcast %cst_193 : f32 to vector<2x128xf32>
    %469 = arith.addf %467, %468 : vector<2x128xf32>
    %470 = arith.mulf %459, %391 : vector<2x128xf32>
    %471 = arith.mulf %451, %461 : vector<2x128xf32>
    %472 = arith.addf %470, %471 : vector<2x128xf32>
    %473 = math.tanh %472 : vector<2x128xf32>
    %474 = arith.mulf %469, %473 : vector<2x128xf32>
    %475 = vector.extract_strided_slice %443 {offsets = [0, 0], sizes = [2, 128], strides = [1, 1]} : vector<2x512xf32> to vector<2x128xf32>
    %cst_194 = arith.constant 5.000000e-01 : f32
    %476 = vector.broadcast %cst_194 : f32 to vector<2x128xf32>
    %477 = arith.mulf %476, %475 : vector<2x128xf32>
    %478 = math.tanh %477 : vector<2x128xf32>
    %cst_195 = arith.constant 5.000000e-01 : f32
    %479 = vector.broadcast %cst_195 : f32 to vector<2x128xf32>
    %480 = arith.mulf %479, %478 : vector<2x128xf32>
    %cst_196 = arith.constant 5.000000e-01 : f32
    %481 = vector.broadcast %cst_196 : f32 to vector<2x128xf32>
    %482 = arith.addf %480, %481 : vector<2x128xf32>
    %483 = vector.extract_strided_slice %443 {offsets = [0, 128], sizes = [2, 128], strides = [1, 1]} : vector<2x512xf32> to vector<2x128xf32>
    %cst_197 = arith.constant 5.000000e-01 : f32
    %484 = vector.broadcast %cst_197 : f32 to vector<2x128xf32>
    %485 = arith.mulf %484, %483 : vector<2x128xf32>
    %486 = math.tanh %485 : vector<2x128xf32>
    %cst_198 = arith.constant 5.000000e-01 : f32
    %487 = vector.broadcast %cst_198 : f32 to vector<2x128xf32>
    %488 = arith.mulf %487, %486 : vector<2x128xf32>
    %cst_199 = arith.constant 5.000000e-01 : f32
    %489 = vector.broadcast %cst_199 : f32 to vector<2x128xf32>
    %490 = arith.addf %488, %489 : vector<2x128xf32>
    %491 = vector.extract_strided_slice %443 {offsets = [0, 256], sizes = [2, 128], strides = [1, 1]} : vector<2x512xf32> to vector<2x128xf32>
    %492 = math.tanh %491 : vector<2x128xf32>
    %493 = vector.extract_strided_slice %443 {offsets = [0, 384], sizes = [2, 128], strides = [1, 1]} : vector<2x512xf32> to vector<2x128xf32>
    %cst_200 = arith.constant 5.000000e-01 : f32
    %494 = vector.broadcast %cst_200 : f32 to vector<2x128xf32>
    %495 = arith.mulf %494, %493 : vector<2x128xf32>
    %496 = math.tanh %495 : vector<2x128xf32>
    %cst_201 = arith.constant 5.000000e-01 : f32
    %497 = vector.broadcast %cst_201 : f32 to vector<2x128xf32>
    %498 = arith.mulf %497, %496 : vector<2x128xf32>
    %cst_202 = arith.constant 5.000000e-01 : f32
    %499 = vector.broadcast %cst_202 : f32 to vector<2x128xf32>
    %500 = arith.addf %498, %499 : vector<2x128xf32>
    %501 = arith.mulf %490, %422 : vector<2x128xf32>
    %502 = arith.mulf %482, %492 : vector<2x128xf32>
    %503 = arith.addf %501, %502 : vector<2x128xf32>
    %504 = math.tanh %503 : vector<2x128xf32>
    %505 = arith.mulf %500, %504 : vector<2x128xf32>
    %506 = arith.index_cast %429 : i32 to index
    %c0_203 = arith.constant 0 : index
    %507 = vector.load %arg20[%506, %c0_203] : memref<16x128xf32, #tpu.memory_space<vmem>>, vector<2x128xf32>
    tpu.vector_store %arg20[%506, %c0_203], %474 {strides = array<i32>} : memref<16x128xf32, #tpu.memory_space<vmem>>, vector<2x128xf32>,
    %508 = arith.index_cast %431 : i32 to index
    %c0_204 = arith.constant 0 : index
    %509 = vector.load %arg21[%508, %c0_204] : memref<16x128xf32, #tpu.memory_space<vmem>>, vector<2x128xf32>
    tpu.vector_store %arg21[%508, %c0_204], %505 {strides = array<i32>} : memref<16x128xf32, #tpu.memory_space<vmem>>, vector<2x128xf32>,
    %c6_i32 = arith.constant 6 : i32
    %c2_i32_205 = arith.constant 2 : i32
    %510 = arith.muli %c6_i32, %c2_i32_205 : i32
    %c7_i32_206 = arith.constant 7 : i32
    %511 = arith.subi %c7_i32_206, %c6_i32 : i32
    %c2_i32_207 = arith.constant 2 : i32
    %512 = arith.muli %511, %c2_i32_207 : i32
    %513 = arith.index_cast %510 : i32 to index
    %c0_208 = arith.constant 0 : index
    %514 = vector.load %arg18[%513, %c0_208] : memref<16x512xf32, #tpu.memory_space<vmem>>, vector<2x512xf32>
    %515 = arith.truncf %474 : vector<2x128xf32> to vector<2x128xbf16>
    %c0_209 = arith.constant 0 : index
    %c0_210 = arith.constant 0 : index
    %516 = vector.load %arg3[%c0_209, %c0_210] : memref<128x512xbf16, #tpu.memory_space<vmem>>, vector<128x512xbf16>
    %cst_211 = arith.constant dense<0.000000e+00> : vector<2x512xf32>
    %517 = tpu.matmul %515, %516, %cst_211 {dimension_numbers = #tpu.dot_dimension_numbers<[1], [0], [0], [1], [0, 0, 1, 1], [], []>} : vector<2x128xbf16>, vector<128x512xbf16>, vector<2x512xf32> -> vector<2x512xf32>
    %518 = arith.addf %514, %517 : vector<2x512xf32>
    %519 = arith.index_cast %512 : i32 to index
    %c0_212 = arith.constant 0 : index
    %520 = vector.load %arg19[%519, %c0_212] : memref<16x512xf32, #tpu.memory_space<vmem>>, vector<2x512xf32>
    %521 = arith.truncf %505 : vector<2x128xf32> to vector<2x128xbf16>
    %c0_213 = arith.constant 0 : index
    %c0_214 = arith.constant 0 : index
    %522 = vector.load %arg6[%c0_213, %c0_214] : memref<128x512xbf16, #tpu.memory_space<vmem>>, vector<128x512xbf16>
    %cst_215 = arith.constant dense<0.000000e+00> : vector<2x512xf32>
    %523 = tpu.matmul %521, %522, %cst_215 {dimension_numbers = #tpu.dot_dimension_numbers<[1], [0], [0], [1], [0, 0, 1, 1], [], []>} : vector<2x128xbf16>, vector<128x512xbf16>, vector<2x512xf32> -> vector<2x512xf32>
    %524 = arith.addf %520, %523 : vector<2x512xf32>
    %525 = vector.extract_strided_slice %518 {offsets = [0, 0], sizes = [2, 128], strides = [1, 1]} : vector<2x512xf32> to vector<2x128xf32>
    %cst_216 = arith.constant 5.000000e-01 : f32
    %526 = vector.broadcast %cst_216 : f32 to vector<2x128xf32>
    %527 = arith.mulf %526, %525 : vector<2x128xf32>
    %528 = math.tanh %527 : vector<2x128xf32>
    %cst_217 = arith.constant 5.000000e-01 : f32
    %529 = vector.broadcast %cst_217 : f32 to vector<2x128xf32>
    %530 = arith.mulf %529, %528 : vector<2x128xf32>
    %cst_218 = arith.constant 5.000000e-01 : f32
    %531 = vector.broadcast %cst_218 : f32 to vector<2x128xf32>
    %532 = arith.addf %530, %531 : vector<2x128xf32>
    %533 = vector.extract_strided_slice %518 {offsets = [0, 128], sizes = [2, 128], strides = [1, 1]} : vector<2x512xf32> to vector<2x128xf32>
    %cst_219 = arith.constant 5.000000e-01 : f32
    %534 = vector.broadcast %cst_219 : f32 to vector<2x128xf32>
    %535 = arith.mulf %534, %533 : vector<2x128xf32>
    %536 = math.tanh %535 : vector<2x128xf32>
    %cst_220 = arith.constant 5.000000e-01 : f32
    %537 = vector.broadcast %cst_220 : f32 to vector<2x128xf32>
    %538 = arith.mulf %537, %536 : vector<2x128xf32>
    %cst_221 = arith.constant 5.000000e-01 : f32
    %539 = vector.broadcast %cst_221 : f32 to vector<2x128xf32>
    %540 = arith.addf %538, %539 : vector<2x128xf32>
    %541 = vector.extract_strided_slice %518 {offsets = [0, 256], sizes = [2, 128], strides = [1, 1]} : vector<2x512xf32> to vector<2x128xf32>
    %542 = math.tanh %541 : vector<2x128xf32>
    %543 = vector.extract_strided_slice %518 {offsets = [0, 384], sizes = [2, 128], strides = [1, 1]} : vector<2x512xf32> to vector<2x128xf32>
    %cst_222 = arith.constant 5.000000e-01 : f32
    %544 = vector.broadcast %cst_222 : f32 to vector<2x128xf32>
    %545 = arith.mulf %544, %543 : vector<2x128xf32>
    %546 = math.tanh %545 : vector<2x128xf32>
    %cst_223 = arith.constant 5.000000e-01 : f32
    %547 = vector.broadcast %cst_223 : f32 to vector<2x128xf32>
    %548 = arith.mulf %547, %546 : vector<2x128xf32>
    %cst_224 = arith.constant 5.000000e-01 : f32
    %549 = vector.broadcast %cst_224 : f32 to vector<2x128xf32>
    %550 = arith.addf %548, %549 : vector<2x128xf32>
    %551 = arith.mulf %540, %472 : vector<2x128xf32>
    %552 = arith.mulf %532, %542 : vector<2x128xf32>
    %553 = arith.addf %551, %552 : vector<2x128xf32>
    %554 = math.tanh %553 : vector<2x128xf32>
    %555 = arith.mulf %550, %554 : vector<2x128xf32>
    %556 = vector.extract_strided_slice %524 {offsets = [0, 0], sizes = [2, 128], strides = [1, 1]} : vector<2x512xf32> to vector<2x128xf32>
    %cst_225 = arith.constant 5.000000e-01 : f32
    %557 = vector.broadcast %cst_225 : f32 to vector<2x128xf32>
    %558 = arith.mulf %557, %556 : vector<2x128xf32>
    %559 = math.tanh %558 : vector<2x128xf32>
    %cst_226 = arith.constant 5.000000e-01 : f32
    %560 = vector.broadcast %cst_226 : f32 to vector<2x128xf32>
    %561 = arith.mulf %560, %559 : vector<2x128xf32>
    %cst_227 = arith.constant 5.000000e-01 : f32
    %562 = vector.broadcast %cst_227 : f32 to vector<2x128xf32>
    %563 = arith.addf %561, %562 : vector<2x128xf32>
    %564 = vector.extract_strided_slice %524 {offsets = [0, 128], sizes = [2, 128], strides = [1, 1]} : vector<2x512xf32> to vector<2x128xf32>
    %cst_228 = arith.constant 5.000000e-01 : f32
    %565 = vector.broadcast %cst_228 : f32 to vector<2x128xf32>
    %566 = arith.mulf %565, %564 : vector<2x128xf32>
    %567 = math.tanh %566 : vector<2x128xf32>
    %cst_229 = arith.constant 5.000000e-01 : f32
    %568 = vector.broadcast %cst_229 : f32 to vector<2x128xf32>
    %569 = arith.mulf %568, %567 : vector<2x128xf32>
    %cst_230 = arith.constant 5.000000e-01 : f32
    %570 = vector.broadcast %cst_230 : f32 to vector<2x128xf32>
    %571 = arith.addf %569, %570 : vector<2x128xf32>
    %572 = vector.extract_strided_slice %524 {offsets = [0, 256], sizes = [2, 128], strides = [1, 1]} : vector<2x512xf32> to vector<2x128xf32>
    %573 = math.tanh %572 : vector<2x128xf32>
    %574 = vector.extract_strided_slice %524 {offsets = [0, 384], sizes = [2, 128], strides = [1, 1]} : vector<2x512xf32> to vector<2x128xf32>
    %cst_231 = arith.constant 5.000000e-01 : f32
    %575 = vector.broadcast %cst_231 : f32 to vector<2x128xf32>
    %576 = arith.mulf %575, %574 : vector<2x128xf32>
    %577 = math.tanh %576 : vector<2x128xf32>
    %cst_232 = arith.constant 5.000000e-01 : f32
    %578 = vector.broadcast %cst_232 : f32 to vector<2x128xf32>
    %579 = arith.mulf %578, %577 : vector<2x128xf32>
    %cst_233 = arith.constant 5.000000e-01 : f32
    %580 = vector.broadcast %cst_233 : f32 to vector<2x128xf32>
    %581 = arith.addf %579, %580 : vector<2x128xf32>
    %582 = arith.mulf %571, %503 : vector<2x128xf32>
    %583 = arith.mulf %563, %573 : vector<2x128xf32>
    %584 = arith.addf %582, %583 : vector<2x128xf32>
    %585 = math.tanh %584 : vector<2x128xf32>
    %586 = arith.mulf %581, %585 : vector<2x128xf32>
    %587 = arith.index_cast %510 : i32 to index
    %c0_234 = arith.constant 0 : index
    %588 = vector.load %arg20[%587, %c0_234] : memref<16x128xf32, #tpu.memory_space<vmem>>, vector<2x128xf32>
    tpu.vector_store %arg20[%587, %c0_234], %555 {strides = array<i32>} : memref<16x128xf32, #tpu.memory_space<vmem>>, vector<2x128xf32>,
    %589 = arith.index_cast %512 : i32 to index
    %c0_235 = arith.constant 0 : index
    %590 = vector.load %arg21[%589, %c0_235] : memref<16x128xf32, #tpu.memory_space<vmem>>, vector<2x128xf32>
    tpu.vector_store %arg21[%589, %c0_235], %586 {strides = array<i32>} : memref<16x128xf32, #tpu.memory_space<vmem>>, vector<2x128xf32>,
    %c7_i32_236 = arith.constant 7 : i32
    %c2_i32_237 = arith.constant 2 : i32
    %591 = arith.muli %c7_i32_236, %c2_i32_237 : i32
    %c7_i32_238 = arith.constant 7 : i32
    %592 = arith.subi %c7_i32_238, %c7_i32_236 : i32
    %c2_i32_239 = arith.constant 2 : i32
    %593 = arith.muli %592, %c2_i32_239 : i32
    %594 = arith.index_cast %591 : i32 to index
    %c0_240 = arith.constant 0 : index
    %595 = vector.load %arg18[%594, %c0_240] : memref<16x512xf32, #tpu.memory_space<vmem>>, vector<2x512xf32>
    %596 = arith.truncf %555 : vector<2x128xf32> to vector<2x128xbf16>
    %c0_241 = arith.constant 0 : index
    %c0_242 = arith.constant 0 : index
    %597 = vector.load %arg3[%c0_241, %c0_242] : memref<128x512xbf16, #tpu.memory_space<vmem>>, vector<128x512xbf16>
    %cst_243 = arith.constant dense<0.000000e+00> : vector<2x512xf32>
    %598 = tpu.matmul %596, %597, %cst_243 {dimension_numbers = #tpu.dot_dimension_numbers<[1], [0], [0], [1], [0, 0, 1, 1], [], []>} : vector<2x128xbf16>, vector<128x512xbf16>, vector<2x512xf32> -> vector<2x512xf32>
    %599 = arith.addf %595, %598 : vector<2x512xf32>
    %600 = arith.index_cast %593 : i32 to index
    %c0_244 = arith.constant 0 : index
    %601 = vector.load %arg19[%600, %c0_244] : memref<16x512xf32, #tpu.memory_space<vmem>>, vector<2x512xf32>
    %602 = arith.truncf %586 : vector<2x128xf32> to vector<2x128xbf16>
    %c0_245 = arith.constant 0 : index
    %c0_246 = arith.constant 0 : index
    %603 = vector.load %arg6[%c0_245, %c0_246] : memref<128x512xbf16, #tpu.memory_space<vmem>>, vector<128x512xbf16>
    %cst_247 = arith.constant dense<0.000000e+00> : vector<2x512xf32>
    %604 = tpu.matmul %602, %603, %cst_247 {dimension_numbers = #tpu.dot_dimension_numbers<[1], [0], [0], [1], [0, 0, 1, 1], [], []>} : vector<2x128xbf16>, vector<128x512xbf16>, vector<2x512xf32> -> vector<2x512xf32>
    %605 = arith.addf %601, %604 : vector<2x512xf32>
    %606 = vector.extract_strided_slice %599 {offsets = [0, 0], sizes = [2, 128], strides = [1, 1]} : vector<2x512xf32> to vector<2x128xf32>
    %cst_248 = arith.constant 5.000000e-01 : f32
    %607 = vector.broadcast %cst_248 : f32 to vector<2x128xf32>
    %608 = arith.mulf %607, %606 : vector<2x128xf32>
    %609 = math.tanh %608 : vector<2x128xf32>
    %cst_249 = arith.constant 5.000000e-01 : f32
    %610 = vector.broadcast %cst_249 : f32 to vector<2x128xf32>
    %611 = arith.mulf %610, %609 : vector<2x128xf32>
    %cst_250 = arith.constant 5.000000e-01 : f32
    %612 = vector.broadcast %cst_250 : f32 to vector<2x128xf32>
    %613 = arith.addf %611, %612 : vector<2x128xf32>
    %614 = vector.extract_strided_slice %599 {offsets = [0, 128], sizes = [2, 128], strides = [1, 1]} : vector<2x512xf32> to vector<2x128xf32>
    %cst_251 = arith.constant 5.000000e-01 : f32
    %615 = vector.broadcast %cst_251 : f32 to vector<2x128xf32>
    %616 = arith.mulf %615, %614 : vector<2x128xf32>
    %617 = math.tanh %616 : vector<2x128xf32>
    %cst_252 = arith.constant 5.000000e-01 : f32
    %618 = vector.broadcast %cst_252 : f32 to vector<2x128xf32>
    %619 = arith.mulf %618, %617 : vector<2x128xf32>
    %cst_253 = arith.constant 5.000000e-01 : f32
    %620 = vector.broadcast %cst_253 : f32 to vector<2x128xf32>
    %621 = arith.addf %619, %620 : vector<2x128xf32>
    %622 = vector.extract_strided_slice %599 {offsets = [0, 256], sizes = [2, 128], strides = [1, 1]} : vector<2x512xf32> to vector<2x128xf32>
    %623 = math.tanh %622 : vector<2x128xf32>
    %624 = vector.extract_strided_slice %599 {offsets = [0, 384], sizes = [2, 128], strides = [1, 1]} : vector<2x512xf32> to vector<2x128xf32>
    %cst_254 = arith.constant 5.000000e-01 : f32
    %625 = vector.broadcast %cst_254 : f32 to vector<2x128xf32>
    %626 = arith.mulf %625, %624 : vector<2x128xf32>
    %627 = math.tanh %626 : vector<2x128xf32>
    %cst_255 = arith.constant 5.000000e-01 : f32
    %628 = vector.broadcast %cst_255 : f32 to vector<2x128xf32>
    %629 = arith.mulf %628, %627 : vector<2x128xf32>
    %cst_256 = arith.constant 5.000000e-01 : f32
    %630 = vector.broadcast %cst_256 : f32 to vector<2x128xf32>
    %631 = arith.addf %629, %630 : vector<2x128xf32>
    %632 = arith.mulf %621, %553 : vector<2x128xf32>
    %633 = arith.mulf %613, %623 : vector<2x128xf32>
    %634 = arith.addf %632, %633 : vector<2x128xf32>
    %635 = math.tanh %634 : vector<2x128xf32>
    %636 = arith.mulf %631, %635 : vector<2x128xf32>
    %637 = vector.extract_strided_slice %605 {offsets = [0, 0], sizes = [2, 128], strides = [1, 1]} : vector<2x512xf32> to vector<2x128xf32>
    %cst_257 = arith.constant 5.000000e-01 : f32
    %638 = vector.broadcast %cst_257 : f32 to vector<2x128xf32>
    %639 = arith.mulf %638, %637 : vector<2x128xf32>
    %640 = math.tanh %639 : vector<2x128xf32>
    %cst_258 = arith.constant 5.000000e-01 : f32
    %641 = vector.broadcast %cst_258 : f32 to vector<2x128xf32>
    %642 = arith.mulf %641, %640 : vector<2x128xf32>
    %cst_259 = arith.constant 5.000000e-01 : f32
    %643 = vector.broadcast %cst_259 : f32 to vector<2x128xf32>
    %644 = arith.addf %642, %643 : vector<2x128xf32>
    %645 = vector.extract_strided_slice %605 {offsets = [0, 128], sizes = [2, 128], strides = [1, 1]} : vector<2x512xf32> to vector<2x128xf32>
    %cst_260 = arith.constant 5.000000e-01 : f32
    %646 = vector.broadcast %cst_260 : f32 to vector<2x128xf32>
    %647 = arith.mulf %646, %645 : vector<2x128xf32>
    %648 = math.tanh %647 : vector<2x128xf32>
    %cst_261 = arith.constant 5.000000e-01 : f32
    %649 = vector.broadcast %cst_261 : f32 to vector<2x128xf32>
    %650 = arith.mulf %649, %648 : vector<2x128xf32>
    %cst_262 = arith.constant 5.000000e-01 : f32
    %651 = vector.broadcast %cst_262 : f32 to vector<2x128xf32>
    %652 = arith.addf %650, %651 : vector<2x128xf32>
    %653 = vector.extract_strided_slice %605 {offsets = [0, 256], sizes = [2, 128], strides = [1, 1]} : vector<2x512xf32> to vector<2x128xf32>
    %654 = math.tanh %653 : vector<2x128xf32>
    %655 = vector.extract_strided_slice %605 {offsets = [0, 384], sizes = [2, 128], strides = [1, 1]} : vector<2x512xf32> to vector<2x128xf32>
    %cst_263 = arith.constant 5.000000e-01 : f32
    %656 = vector.broadcast %cst_263 : f32 to vector<2x128xf32>
    %657 = arith.mulf %656, %655 : vector<2x128xf32>
    %658 = math.tanh %657 : vector<2x128xf32>
    %cst_264 = arith.constant 5.000000e-01 : f32
    %659 = vector.broadcast %cst_264 : f32 to vector<2x128xf32>
    %660 = arith.mulf %659, %658 : vector<2x128xf32>
    %cst_265 = arith.constant 5.000000e-01 : f32
    %661 = vector.broadcast %cst_265 : f32 to vector<2x128xf32>
    %662 = arith.addf %660, %661 : vector<2x128xf32>
    %663 = arith.mulf %652, %584 : vector<2x128xf32>
    %664 = arith.mulf %644, %654 : vector<2x128xf32>
    %665 = arith.addf %663, %664 : vector<2x128xf32>
    %666 = math.tanh %665 : vector<2x128xf32>
    %667 = arith.mulf %662, %666 : vector<2x128xf32>
    %668 = arith.index_cast %591 : i32 to index
    %c0_266 = arith.constant 0 : index
    %669 = vector.load %arg20[%668, %c0_266] : memref<16x128xf32, #tpu.memory_space<vmem>>, vector<2x128xf32>
    tpu.vector_store %arg20[%668, %c0_266], %636 {strides = array<i32>} : memref<16x128xf32, #tpu.memory_space<vmem>>, vector<2x128xf32>,
    %670 = arith.index_cast %593 : i32 to index
    %c0_267 = arith.constant 0 : index
    %671 = vector.load %arg21[%670, %c0_267] : memref<16x128xf32, #tpu.memory_space<vmem>>, vector<2x128xf32>
    tpu.vector_store %arg21[%670, %c0_267], %667 {strides = array<i32>} : memref<16x128xf32, #tpu.memory_space<vmem>>, vector<2x128xf32>,
    %c8_i32 = arith.constant 8 : i32
    %c0_i32_268 = arith.constant 0 : i32
    %672 = tpu.memref_slice %arg28[%c0_i32_268] : memref<5x!tpu.dma_semaphore, #tpu.memory_space<semaphore_mem>> -> memref<1x!tpu.dma_semaphore, #tpu.memory_space<semaphore_mem>>
    %673 = tpu.memref_squeeze %672 : memref<1x!tpu.dma_semaphore, #tpu.memory_space<semaphore_mem>> -> memref<!tpu.dma_semaphore, #tpu.memory_space<semaphore_mem>>
    tpu.wait_dma2 semaphore(%673 : memref<!tpu.dma_semaphore, #tpu.memory_space<semaphore_mem>>) src(%arg12 : memref<128x512xbf16, #tpu.memory_space<any>>) dst(%arg23 : memref<128x512xbf16, #tpu.memory_space<vmem>>)
    %c1_i32_269 = arith.constant 1 : i32
    %674 = tpu.memref_slice %arg28[%c1_i32_269] : memref<5x!tpu.dma_semaphore, #tpu.memory_space<semaphore_mem>> -> memref<1x!tpu.dma_semaphore, #tpu.memory_space<semaphore_mem>>
    %675 = tpu.memref_squeeze %674 : memref<1x!tpu.dma_semaphore, #tpu.memory_space<semaphore_mem>> -> memref<!tpu.dma_semaphore, #tpu.memory_space<semaphore_mem>>
    tpu.wait_dma2 semaphore(%675 : memref<!tpu.dma_semaphore, #tpu.memory_space<semaphore_mem>>) src(%arg13 : memref<128x512xbf16, #tpu.memory_space<any>>) dst(%arg24 : memref<128x512xbf16, #tpu.memory_space<vmem>>)
    %c2_i32_270 = arith.constant 2 : i32
    %676 = tpu.memref_slice %arg28[%c2_i32_270] : memref<5x!tpu.dma_semaphore, #tpu.memory_space<semaphore_mem>> -> memref<1x!tpu.dma_semaphore, #tpu.memory_space<semaphore_mem>>
    %677 = tpu.memref_squeeze %676 : memref<1x!tpu.dma_semaphore, #tpu.memory_space<semaphore_mem>> -> memref<!tpu.dma_semaphore, #tpu.memory_space<semaphore_mem>>
    tpu.wait_dma2 semaphore(%677 : memref<!tpu.dma_semaphore, #tpu.memory_space<semaphore_mem>>) src(%arg14 : memref<128x512xbf16, #tpu.memory_space<any>>) dst(%arg25 : memref<128x512xbf16, #tpu.memory_space<vmem>>)
    %c3_i32_271 = arith.constant 3 : i32
    %678 = tpu.memref_slice %arg28[%c3_i32_271] : memref<5x!tpu.dma_semaphore, #tpu.memory_space<semaphore_mem>> -> memref<1x!tpu.dma_semaphore, #tpu.memory_space<semaphore_mem>>
    %679 = tpu.memref_squeeze %678 : memref<1x!tpu.dma_semaphore, #tpu.memory_space<semaphore_mem>> -> memref<!tpu.dma_semaphore, #tpu.memory_space<semaphore_mem>>
    tpu.wait_dma2 semaphore(%679 : memref<!tpu.dma_semaphore, #tpu.memory_space<semaphore_mem>>) src(%arg15 : memref<128x512xbf16, #tpu.memory_space<any>>) dst(%arg26 : memref<128x512xbf16, #tpu.memory_space<vmem>>)
    %c4_i32_272 = arith.constant 4 : i32
    %680 = tpu.memref_slice %arg28[%c4_i32_272] : memref<5x!tpu.dma_semaphore, #tpu.memory_space<semaphore_mem>> -> memref<1x!tpu.dma_semaphore, #tpu.memory_space<semaphore_mem>>
    %681 = tpu.memref_squeeze %680 : memref<1x!tpu.dma_semaphore, #tpu.memory_space<semaphore_mem>> -> memref<!tpu.dma_semaphore, #tpu.memory_space<semaphore_mem>>
    tpu.wait_dma2 semaphore(%681 : memref<!tpu.dma_semaphore, #tpu.memory_space<semaphore_mem>>) src(%arg16 : memref<128x512xbf16, #tpu.memory_space<any>>) dst(%arg27 : memref<128x512xbf16, #tpu.memory_space<vmem>>)
    %c0_273 = arith.constant 0 : index
    %c0_274 = arith.constant 0 : index
    %682 = vector.load %arg20[%c0_273, %c0_274] : memref<16x128xf32, #tpu.memory_space<vmem>>, vector<16x128xf32>
    %683 = arith.truncf %682 : vector<16x128xf32> to vector<16x128xbf16>
    %c0_275 = arith.constant 0 : index
    %c0_276 = arith.constant 0 : index
    %684 = vector.load %arg21[%c0_275, %c0_276] : memref<16x128xf32, #tpu.memory_space<vmem>>, vector<16x128xf32>
    %685 = arith.truncf %684 : vector<16x128xf32> to vector<16x128xbf16>
    %c0_277 = arith.constant 0 : index
    %c0_278 = arith.constant 0 : index
    %686 = vector.load %arg23[%c0_277, %c0_278] : memref<128x512xbf16, #tpu.memory_space<vmem>>, vector<128x512xbf16>
    %cst_279 = arith.constant dense<0.000000e+00> : vector<16x512xf32>
    %687 = tpu.matmul %683, %686, %cst_279 {dimension_numbers = #tpu.dot_dimension_numbers<[1], [0], [0], [1], [0, 0, 1, 1], [], []>} : vector<16x128xbf16>, vector<128x512xbf16>, vector<16x512xf32> -> vector<16x512xf32>
    %c0_280 = arith.constant 0 : index
    %c0_281 = arith.constant 0 : index
    %688 = vector.load %arg24[%c0_280, %c0_281] : memref<128x512xbf16, #tpu.memory_space<vmem>>, vector<128x512xbf16>
    %cst_282 = arith.constant dense<0.000000e+00> : vector<16x512xf32>
    %689 = tpu.matmul %685, %688, %cst_282 {dimension_numbers = #tpu.dot_dimension_numbers<[1], [0], [0], [1], [0, 0, 1, 1], [], []>} : vector<16x128xbf16>, vector<128x512xbf16>, vector<16x512xf32> -> vector<16x512xf32>
    %690 = arith.addf %687, %689 : vector<16x512xf32>
    %c0_283 = arith.constant 0 : index
    %c0_284 = arith.constant 0 : index
    %691 = vector.load %arg7[%c0_283, %c0_284] : memref<1x512xf32, #tpu.memory_space<vmem>>, vector<1x512xf32>
    %692 = vector.broadcast %691 : vector<1x512xf32> to vector<16x512xf32>
    %693 = arith.addf %690, %692 : vector<16x512xf32>
    %c0_285 = arith.constant 0 : index
    %c0_286 = arith.constant 0 : index
    %694 = vector.load %arg22[%c0_285, %c0_286] : memref<16x512xf32, #tpu.memory_space<vmem>>, vector<16x512xf32>
    tpu.vector_store %arg22[%c0_285, %c0_286], %693 {strides = array<i32>} : memref<16x512xf32, #tpu.memory_space<vmem>>, vector<16x512xf32>,
    %c0_i32_287 = arith.constant 0 : i32
    %c2_i32_288 = arith.constant 2 : i32
    %695 = arith.muli %c0_i32_287, %c2_i32_288 : i32
    %696 = arith.index_cast %695 : i32 to index
    %c0_289 = arith.constant 0 : index
    %697 = vector.load %arg22[%696, %c0_289] : memref<16x512xf32, #tpu.memory_space<vmem>>, vector<2x512xf32>
    %698 = arith.truncf %23 : vector<2x128xf32> to vector<2x128xbf16>
    %c0_290 = arith.constant 0 : index
    %c0_291 = arith.constant 0 : index
    %699 = vector.load %arg25[%c0_290, %c0_291] : memref<128x512xbf16, #tpu.memory_space<vmem>>, vector<128x512xbf16>
    %cst_292 = arith.constant dense<0.000000e+00> : vector<2x512xf32>
    %700 = tpu.matmul %698, %699, %cst_292 {dimension_numbers = #tpu.dot_dimension_numbers<[1], [0], [0], [1], [0, 0, 1, 1], [], []>} : vector<2x128xbf16>, vector<128x512xbf16>, vector<2x512xf32> -> vector<2x512xf32>
    %701 = arith.addf %697, %700 : vector<2x512xf32>
    %702 = vector.extract_strided_slice %701 {offsets = [0, 0], sizes = [2, 128], strides = [1, 1]} : vector<2x512xf32> to vector<2x128xf32>
    %cst_293 = arith.constant 5.000000e-01 : f32
    %703 = vector.broadcast %cst_293 : f32 to vector<2x128xf32>
    %704 = arith.mulf %703, %702 : vector<2x128xf32>
    %705 = math.tanh %704 : vector<2x128xf32>
    %cst_294 = arith.constant 5.000000e-01 : f32
    %706 = vector.broadcast %cst_294 : f32 to vector<2x128xf32>
    %707 = arith.mulf %706, %705 : vector<2x128xf32>
    %cst_295 = arith.constant 5.000000e-01 : f32
    %708 = vector.broadcast %cst_295 : f32 to vector<2x128xf32>
    %709 = arith.addf %707, %708 : vector<2x128xf32>
    %710 = vector.extract_strided_slice %701 {offsets = [0, 128], sizes = [2, 128], strides = [1, 1]} : vector<2x512xf32> to vector<2x128xf32>
    %cst_296 = arith.constant 5.000000e-01 : f32
    %711 = vector.broadcast %cst_296 : f32 to vector<2x128xf32>
    %712 = arith.mulf %711, %710 : vector<2x128xf32>
    %713 = math.tanh %712 : vector<2x128xf32>
    %cst_297 = arith.constant 5.000000e-01 : f32
    %714 = vector.broadcast %cst_297 : f32 to vector<2x128xf32>
    %715 = arith.mulf %714, %713 : vector<2x128xf32>
    %cst_298 = arith.constant 5.000000e-01 : f32
    %716 = vector.broadcast %cst_298 : f32 to vector<2x128xf32>
    %717 = arith.addf %715, %716 : vector<2x128xf32>
    %718 = vector.extract_strided_slice %701 {offsets = [0, 256], sizes = [2, 128], strides = [1, 1]} : vector<2x512xf32> to vector<2x128xf32>
    %719 = math.tanh %718 : vector<2x128xf32>
    %720 = vector.extract_strided_slice %701 {offsets = [0, 384], sizes = [2, 128], strides = [1, 1]} : vector<2x512xf32> to vector<2x128xf32>
    %cst_299 = arith.constant 5.000000e-01 : f32
    %721 = vector.broadcast %cst_299 : f32 to vector<2x128xf32>
    %722 = arith.mulf %721, %720 : vector<2x128xf32>
    %723 = math.tanh %722 : vector<2x128xf32>
    %cst_300 = arith.constant 5.000000e-01 : f32
    %724 = vector.broadcast %cst_300 : f32 to vector<2x128xf32>
    %725 = arith.mulf %724, %723 : vector<2x128xf32>
    %cst_301 = arith.constant 5.000000e-01 : f32
    %726 = vector.broadcast %cst_301 : f32 to vector<2x128xf32>
    %727 = arith.addf %725, %726 : vector<2x128xf32>
    %728 = arith.mulf %717, %23 : vector<2x128xf32>
    %729 = arith.mulf %709, %719 : vector<2x128xf32>
    %730 = arith.addf %728, %729 : vector<2x128xf32>
    %731 = math.tanh %730 : vector<2x128xf32>
    %732 = arith.mulf %727, %731 : vector<2x128xf32>
    %c1_i32_302 = arith.constant 1 : i32
    %c2_i32_303 = arith.constant 2 : i32
    %733 = arith.muli %c1_i32_302, %c2_i32_303 : i32
    %734 = arith.index_cast %733 : i32 to index
    %c0_304 = arith.constant 0 : index
    %735 = vector.load %arg22[%734, %c0_304] : memref<16x512xf32, #tpu.memory_space<vmem>>, vector<2x512xf32>
    %736 = arith.truncf %732 : vector<2x128xf32> to vector<2x128xbf16>
    %c0_305 = arith.constant 0 : index
    %c0_306 = arith.constant 0 : index
    %737 = vector.load %arg25[%c0_305, %c0_306] : memref<128x512xbf16, #tpu.memory_space<vmem>>, vector<128x512xbf16>
    %cst_307 = arith.constant dense<0.000000e+00> : vector<2x512xf32>
    %738 = tpu.matmul %736, %737, %cst_307 {dimension_numbers = #tpu.dot_dimension_numbers<[1], [0], [0], [1], [0, 0, 1, 1], [], []>} : vector<2x128xbf16>, vector<128x512xbf16>, vector<2x512xf32> -> vector<2x512xf32>
    %739 = arith.addf %735, %738 : vector<2x512xf32>
    %740 = vector.extract_strided_slice %739 {offsets = [0, 0], sizes = [2, 128], strides = [1, 1]} : vector<2x512xf32> to vector<2x128xf32>
    %cst_308 = arith.constant 5.000000e-01 : f32
    %741 = vector.broadcast %cst_308 : f32 to vector<2x128xf32>
    %742 = arith.mulf %741, %740 : vector<2x128xf32>
    %743 = math.tanh %742 : vector<2x128xf32>
    %cst_309 = arith.constant 5.000000e-01 : f32
    %744 = vector.broadcast %cst_309 : f32 to vector<2x128xf32>
    %745 = arith.mulf %744, %743 : vector<2x128xf32>
    %cst_310 = arith.constant 5.000000e-01 : f32
    %746 = vector.broadcast %cst_310 : f32 to vector<2x128xf32>
    %747 = arith.addf %745, %746 : vector<2x128xf32>
    %748 = vector.extract_strided_slice %739 {offsets = [0, 128], sizes = [2, 128], strides = [1, 1]} : vector<2x512xf32> to vector<2x128xf32>
    %cst_311 = arith.constant 5.000000e-01 : f32
    %749 = vector.broadcast %cst_311 : f32 to vector<2x128xf32>
    %750 = arith.mulf %749, %748 : vector<2x128xf32>
    %751 = math.tanh %750 : vector<2x128xf32>
    %cst_312 = arith.constant 5.000000e-01 : f32
    %752 = vector.broadcast %cst_312 : f32 to vector<2x128xf32>
    %753 = arith.mulf %752, %751 : vector<2x128xf32>
    %cst_313 = arith.constant 5.000000e-01 : f32
    %754 = vector.broadcast %cst_313 : f32 to vector<2x128xf32>
    %755 = arith.addf %753, %754 : vector<2x128xf32>
    %756 = vector.extract_strided_slice %739 {offsets = [0, 256], sizes = [2, 128], strides = [1, 1]} : vector<2x512xf32> to vector<2x128xf32>
    %757 = math.tanh %756 : vector<2x128xf32>
    %758 = vector.extract_strided_slice %739 {offsets = [0, 384], sizes = [2, 128], strides = [1, 1]} : vector<2x512xf32> to vector<2x128xf32>
    %cst_314 = arith.constant 5.000000e-01 : f32
    %759 = vector.broadcast %cst_314 : f32 to vector<2x128xf32>
    %760 = arith.mulf %759, %758 : vector<2x128xf32>
    %761 = math.tanh %760 : vector<2x128xf32>
    %cst_315 = arith.constant 5.000000e-01 : f32
    %762 = vector.broadcast %cst_315 : f32 to vector<2x128xf32>
    %763 = arith.mulf %762, %761 : vector<2x128xf32>
    %cst_316 = arith.constant 5.000000e-01 : f32
    %764 = vector.broadcast %cst_316 : f32 to vector<2x128xf32>
    %765 = arith.addf %763, %764 : vector<2x128xf32>
    %766 = arith.mulf %755, %730 : vector<2x128xf32>
    %767 = arith.mulf %747, %757 : vector<2x128xf32>
    %768 = arith.addf %766, %767 : vector<2x128xf32>
    %769 = math.tanh %768 : vector<2x128xf32>
    %770 = arith.mulf %765, %769 : vector<2x128xf32>
    %c2_i32_317 = arith.constant 2 : i32
    %c2_i32_318 = arith.constant 2 : i32
    %771 = arith.muli %c2_i32_317, %c2_i32_318 : i32
    %772 = arith.index_cast %771 : i32 to index
    %c0_319 = arith.constant 0 : index
    %773 = vector.load %arg22[%772, %c0_319] : memref<16x512xf32, #tpu.memory_space<vmem>>, vector<2x512xf32>
    %774 = arith.truncf %770 : vector<2x128xf32> to vector<2x128xbf16>
    %c0_320 = arith.constant 0 : index
    %c0_321 = arith.constant 0 : index
    %775 = vector.load %arg25[%c0_320, %c0_321] : memref<128x512xbf16, #tpu.memory_space<vmem>>, vector<128x512xbf16>
    %cst_322 = arith.constant dense<0.000000e+00> : vector<2x512xf32>
    %776 = tpu.matmul %774, %775, %cst_322 {dimension_numbers = #tpu.dot_dimension_numbers<[1], [0], [0], [1], [0, 0, 1, 1], [], []>} : vector<2x128xbf16>, vector<128x512xbf16>, vector<2x512xf32> -> vector<2x512xf32>
    %777 = arith.addf %773, %776 : vector<2x512xf32>
    %778 = vector.extract_strided_slice %777 {offsets = [0, 0], sizes = [2, 128], strides = [1, 1]} : vector<2x512xf32> to vector<2x128xf32>
    %cst_323 = arith.constant 5.000000e-01 : f32
    %779 = vector.broadcast %cst_323 : f32 to vector<2x128xf32>
    %780 = arith.mulf %779, %778 : vector<2x128xf32>
    %781 = math.tanh %780 : vector<2x128xf32>
    %cst_324 = arith.constant 5.000000e-01 : f32
    %782 = vector.broadcast %cst_324 : f32 to vector<2x128xf32>
    %783 = arith.mulf %782, %781 : vector<2x128xf32>
    %cst_325 = arith.constant 5.000000e-01 : f32
    %784 = vector.broadcast %cst_325 : f32 to vector<2x128xf32>
    %785 = arith.addf %783, %784 : vector<2x128xf32>
    %786 = vector.extract_strided_slice %777 {offsets = [0, 128], sizes = [2, 128], strides = [1, 1]} : vector<2x512xf32> to vector<2x128xf32>
    %cst_326 = arith.constant 5.000000e-01 : f32
    %787 = vector.broadcast %cst_326 : f32 to vector<2x128xf32>
    %788 = arith.mulf %787, %786 : vector<2x128xf32>
    %789 = math.tanh %788 : vector<2x128xf32>
    %cst_327 = arith.constant 5.000000e-01 : f32
    %790 = vector.broadcast %cst_327 : f32 to vector<2x128xf32>
    %791 = arith.mulf %790, %789 : vector<2x128xf32>
    %cst_328 = arith.constant 5.000000e-01 : f32
    %792 = vector.broadcast %cst_328 : f32 to vector<2x128xf32>
    %793 = arith.addf %791, %792 : vector<2x128xf32>
    %794 = vector.extract_strided_slice %777 {offsets = [0, 256], sizes = [2, 128], strides = [1, 1]} : vector<2x512xf32> to vector<2x128xf32>
    %795 = math.tanh %794 : vector<2x128xf32>
    %796 = vector.extract_strided_slice %777 {offsets = [0, 384], sizes = [2, 128], strides = [1, 1]} : vector<2x512xf32> to vector<2x128xf32>
    %cst_329 = arith.constant 5.000000e-01 : f32
    %797 = vector.broadcast %cst_329 : f32 to vector<2x128xf32>
    %798 = arith.mulf %797, %796 : vector<2x128xf32>
    %799 = math.tanh %798 : vector<2x128xf32>
    %cst_330 = arith.constant 5.000000e-01 : f32
    %800 = vector.broadcast %cst_330 : f32 to vector<2x128xf32>
    %801 = arith.mulf %800, %799 : vector<2x128xf32>
    %cst_331 = arith.constant 5.000000e-01 : f32
    %802 = vector.broadcast %cst_331 : f32 to vector<2x128xf32>
    %803 = arith.addf %801, %802 : vector<2x128xf32>
    %804 = arith.mulf %793, %768 : vector<2x128xf32>
    %805 = arith.mulf %785, %795 : vector<2x128xf32>
    %806 = arith.addf %804, %805 : vector<2x128xf32>
    %807 = math.tanh %806 : vector<2x128xf32>
    %808 = arith.mulf %803, %807 : vector<2x128xf32>
    %c3_i32_332 = arith.constant 3 : i32
    %c2_i32_333 = arith.constant 2 : i32
    %809 = arith.muli %c3_i32_332, %c2_i32_333 : i32
    %810 = arith.index_cast %809 : i32 to index
    %c0_334 = arith.constant 0 : index
    %811 = vector.load %arg22[%810, %c0_334] : memref<16x512xf32, #tpu.memory_space<vmem>>, vector<2x512xf32>
    %812 = arith.truncf %808 : vector<2x128xf32> to vector<2x128xbf16>
    %c0_335 = arith.constant 0 : index
    %c0_336 = arith.constant 0 : index
    %813 = vector.load %arg25[%c0_335, %c0_336] : memref<128x512xbf16, #tpu.memory_space<vmem>>, vector<128x512xbf16>
    %cst_337 = arith.constant dense<0.000000e+00> : vector<2x512xf32>
    %814 = tpu.matmul %812, %813, %cst_337 {dimension_numbers = #tpu.dot_dimension_numbers<[1], [0], [0], [1], [0, 0, 1, 1], [], []>} : vector<2x128xbf16>, vector<128x512xbf16>, vector<2x512xf32> -> vector<2x512xf32>
    %815 = arith.addf %811, %814 : vector<2x512xf32>
    %816 = vector.extract_strided_slice %815 {offsets = [0, 0], sizes = [2, 128], strides = [1, 1]} : vector<2x512xf32> to vector<2x128xf32>
    %cst_338 = arith.constant 5.000000e-01 : f32
    %817 = vector.broadcast %cst_338 : f32 to vector<2x128xf32>
    %818 = arith.mulf %817, %816 : vector<2x128xf32>
    %819 = math.tanh %818 : vector<2x128xf32>
    %cst_339 = arith.constant 5.000000e-01 : f32
    %820 = vector.broadcast %cst_339 : f32 to vector<2x128xf32>
    %821 = arith.mulf %820, %819 : vector<2x128xf32>
    %cst_340 = arith.constant 5.000000e-01 : f32
    %822 = vector.broadcast %cst_340 : f32 to vector<2x128xf32>
    %823 = arith.addf %821, %822 : vector<2x128xf32>
    %824 = vector.extract_strided_slice %815 {offsets = [0, 128], sizes = [2, 128], strides = [1, 1]} : vector<2x512xf32> to vector<2x128xf32>
    %cst_341 = arith.constant 5.000000e-01 : f32
    %825 = vector.broadcast %cst_341 : f32 to vector<2x128xf32>
    %826 = arith.mulf %825, %824 : vector<2x128xf32>
    %827 = math.tanh %826 : vector<2x128xf32>
    %cst_342 = arith.constant 5.000000e-01 : f32
    %828 = vector.broadcast %cst_342 : f32 to vector<2x128xf32>
    %829 = arith.mulf %828, %827 : vector<2x128xf32>
    %cst_343 = arith.constant 5.000000e-01 : f32
    %830 = vector.broadcast %cst_343 : f32 to vector<2x128xf32>
    %831 = arith.addf %829, %830 : vector<2x128xf32>
    %832 = vector.extract_strided_slice %815 {offsets = [0, 256], sizes = [2, 128], strides = [1, 1]} : vector<2x512xf32> to vector<2x128xf32>
    %833 = math.tanh %832 : vector<2x128xf32>
    %834 = vector.extract_strided_slice %815 {offsets = [0, 384], sizes = [2, 128], strides = [1, 1]} : vector<2x512xf32> to vector<2x128xf32>
    %cst_344 = arith.constant 5.000000e-01 : f32
    %835 = vector.broadcast %cst_344 : f32 to vector<2x128xf32>
    %836 = arith.mulf %835, %834 : vector<2x128xf32>
    %837 = math.tanh %836 : vector<2x128xf32>
    %cst_345 = arith.constant 5.000000e-01 : f32
    %838 = vector.broadcast %cst_345 : f32 to vector<2x128xf32>
    %839 = arith.mulf %838, %837 : vector<2x128xf32>
    %cst_346 = arith.constant 5.000000e-01 : f32
    %840 = vector.broadcast %cst_346 : f32 to vector<2x128xf32>
    %841 = arith.addf %839, %840 : vector<2x128xf32>
    %842 = arith.mulf %831, %806 : vector<2x128xf32>
    %843 = arith.mulf %823, %833 : vector<2x128xf32>
    %844 = arith.addf %842, %843 : vector<2x128xf32>
    %845 = math.tanh %844 : vector<2x128xf32>
    %846 = arith.mulf %841, %845 : vector<2x128xf32>
    %c4_i32_347 = arith.constant 4 : i32
    %c2_i32_348 = arith.constant 2 : i32
    %847 = arith.muli %c4_i32_347, %c2_i32_348 : i32
    %848 = arith.index_cast %847 : i32 to index
    %c0_349 = arith.constant 0 : index
    %849 = vector.load %arg22[%848, %c0_349] : memref<16x512xf32, #tpu.memory_space<vmem>>, vector<2x512xf32>
    %850 = arith.truncf %846 : vector<2x128xf32> to vector<2x128xbf16>
    %c0_350 = arith.constant 0 : index
    %c0_351 = arith.constant 0 : index
    %851 = vector.load %arg25[%c0_350, %c0_351] : memref<128x512xbf16, #tpu.memory_space<vmem>>, vector<128x512xbf16>
    %cst_352 = arith.constant dense<0.000000e+00> : vector<2x512xf32>
    %852 = tpu.matmul %850, %851, %cst_352 {dimension_numbers = #tpu.dot_dimension_numbers<[1], [0], [0], [1], [0, 0, 1, 1], [], []>} : vector<2x128xbf16>, vector<128x512xbf16>, vector<2x512xf32> -> vector<2x512xf32>
    %853 = arith.addf %849, %852 : vector<2x512xf32>
    %854 = vector.extract_strided_slice %853 {offsets = [0, 0], sizes = [2, 128], strides = [1, 1]} : vector<2x512xf32> to vector<2x128xf32>
    %cst_353 = arith.constant 5.000000e-01 : f32
    %855 = vector.broadcast %cst_353 : f32 to vector<2x128xf32>
    %856 = arith.mulf %855, %854 : vector<2x128xf32>
    %857 = math.tanh %856 : vector<2x128xf32>
    %cst_354 = arith.constant 5.000000e-01 : f32
    %858 = vector.broadcast %cst_354 : f32 to vector<2x128xf32>
    %859 = arith.mulf %858, %857 : vector<2x128xf32>
    %cst_355 = arith.constant 5.000000e-01 : f32
    %860 = vector.broadcast %cst_355 : f32 to vector<2x128xf32>
    %861 = arith.addf %859, %860 : vector<2x128xf32>
    %862 = vector.extract_strided_slice %853 {offsets = [0, 128], sizes = [2, 128], strides = [1, 1]} : vector<2x512xf32> to vector<2x128xf32>
    %cst_356 = arith.constant 5.000000e-01 : f32
    %863 = vector.broadcast %cst_356 : f32 to vector<2x128xf32>
    %864 = arith.mulf %863, %862 : vector<2x128xf32>
    %865 = math.tanh %864 : vector<2x128xf32>
    %cst_357 = arith.constant 5.000000e-01 : f32
    %866 = vector.broadcast %cst_357 : f32 to vector<2x128xf32>
    %867 = arith.mulf %866, %865 : vector<2x128xf32>
    %cst_358 = arith.constant 5.000000e-01 : f32
    %868 = vector.broadcast %cst_358 : f32 to vector<2x128xf32>
    %869 = arith.addf %867, %868 : vector<2x128xf32>
    %870 = vector.extract_strided_slice %853 {offsets = [0, 256], sizes = [2, 128], strides = [1, 1]} : vector<2x512xf32> to vector<2x128xf32>
    %871 = math.tanh %870 : vector<2x128xf32>
    %872 = vector.extract_strided_slice %853 {offsets = [0, 384], sizes = [2, 128], strides = [1, 1]} : vector<2x512xf32> to vector<2x128xf32>
    %cst_359 = arith.constant 5.000000e-01 : f32
    %873 = vector.broadcast %cst_359 : f32 to vector<2x128xf32>
    %874 = arith.mulf %873, %872 : vector<2x128xf32>
    %875 = math.tanh %874 : vector<2x128xf32>
    %cst_360 = arith.constant 5.000000e-01 : f32
    %876 = vector.broadcast %cst_360 : f32 to vector<2x128xf32>
    %877 = arith.mulf %876, %875 : vector<2x128xf32>
    %cst_361 = arith.constant 5.000000e-01 : f32
    %878 = vector.broadcast %cst_361 : f32 to vector<2x128xf32>
    %879 = arith.addf %877, %878 : vector<2x128xf32>
    %880 = arith.mulf %869, %844 : vector<2x128xf32>
    %881 = arith.mulf %861, %871 : vector<2x128xf32>
    %882 = arith.addf %880, %881 : vector<2x128xf32>
    %883 = math.tanh %882 : vector<2x128xf32>
    %884 = arith.mulf %879, %883 : vector<2x128xf32>
    %c5_i32_362 = arith.constant 5 : i32
    %c2_i32_363 = arith.constant 2 : i32
    %885 = arith.muli %c5_i32_362, %c2_i32_363 : i32
    %886 = arith.index_cast %885 : i32 to index
    %c0_364 = arith.constant 0 : index
    %887 = vector.load %arg22[%886, %c0_364] : memref<16x512xf32, #tpu.memory_space<vmem>>, vector<2x512xf32>
    %888 = arith.truncf %884 : vector<2x128xf32> to vector<2x128xbf16>
    %c0_365 = arith.constant 0 : index
    %c0_366 = arith.constant 0 : index
    %889 = vector.load %arg25[%c0_365, %c0_366] : memref<128x512xbf16, #tpu.memory_space<vmem>>, vector<128x512xbf16>
    %cst_367 = arith.constant dense<0.000000e+00> : vector<2x512xf32>
    %890 = tpu.matmul %888, %889, %cst_367 {dimension_numbers = #tpu.dot_dimension_numbers<[1], [0], [0], [1], [0, 0, 1, 1], [], []>} : vector<2x128xbf16>, vector<128x512xbf16>, vector<2x512xf32> -> vector<2x512xf32>
    %891 = arith.addf %887, %890 : vector<2x512xf32>
    %892 = vector.extract_strided_slice %891 {offsets = [0, 0], sizes = [2, 128], strides = [1, 1]} : vector<2x512xf32> to vector<2x128xf32>
    %cst_368 = arith.constant 5.000000e-01 : f32
    %893 = vector.broadcast %cst_368 : f32 to vector<2x128xf32>
    %894 = arith.mulf %893, %892 : vector<2x128xf32>
    %895 = math.tanh %894 : vector<2x128xf32>
    %cst_369 = arith.constant 5.000000e-01 : f32
    %896 = vector.broadcast %cst_369 : f32 to vector<2x128xf32>
    %897 = arith.mulf %896, %895 : vector<2x128xf32>
    %cst_370 = arith.constant 5.000000e-01 : f32
    %898 = vector.broadcast %cst_370 : f32 to vector<2x128xf32>
    %899 = arith.addf %897, %898 : vector<2x128xf32>
    %900 = vector.extract_strided_slice %891 {offsets = [0, 128], sizes = [2, 128], strides = [1, 1]} : vector<2x512xf32> to vector<2x128xf32>
    %cst_371 = arith.constant 5.000000e-01 : f32
    %901 = vector.broadcast %cst_371 : f32 to vector<2x128xf32>
    %902 = arith.mulf %901, %900 : vector<2x128xf32>
    %903 = math.tanh %902 : vector<2x128xf32>
    %cst_372 = arith.constant 5.000000e-01 : f32
    %904 = vector.broadcast %cst_372 : f32 to vector<2x128xf32>
    %905 = arith.mulf %904, %903 : vector<2x128xf32>
    %cst_373 = arith.constant 5.000000e-01 : f32
    %906 = vector.broadcast %cst_373 : f32 to vector<2x128xf32>
    %907 = arith.addf %905, %906 : vector<2x128xf32>
    %908 = vector.extract_strided_slice %891 {offsets = [0, 256], sizes = [2, 128], strides = [1, 1]} : vector<2x512xf32> to vector<2x128xf32>
    %909 = math.tanh %908 : vector<2x128xf32>
    %910 = vector.extract_strided_slice %891 {offsets = [0, 384], sizes = [2, 128], strides = [1, 1]} : vector<2x512xf32> to vector<2x128xf32>
    %cst_374 = arith.constant 5.000000e-01 : f32
    %911 = vector.broadcast %cst_374 : f32 to vector<2x128xf32>
    %912 = arith.mulf %911, %910 : vector<2x128xf32>
    %913 = math.tanh %912 : vector<2x128xf32>
    %cst_375 = arith.constant 5.000000e-01 : f32
    %914 = vector.broadcast %cst_375 : f32 to vector<2x128xf32>
    %915 = arith.mulf %914, %913 : vector<2x128xf32>
    %cst_376 = arith.constant 5.000000e-01 : f32
    %916 = vector.broadcast %cst_376 : f32 to vector<2x128xf32>
    %917 = arith.addf %915, %916 : vector<2x128xf32>
    %918 = arith.mulf %907, %882 : vector<2x128xf32>
    %919 = arith.mulf %899, %909 : vector<2x128xf32>
    %920 = arith.addf %918, %919 : vector<2x128xf32>
    %921 = math.tanh %920 : vector<2x128xf32>
    %922 = arith.mulf %917, %921 : vector<2x128xf32>
    %c6_i32_377 = arith.constant 6 : i32
    %c2_i32_378 = arith.constant 2 : i32
    %923 = arith.muli %c6_i32_377, %c2_i32_378 : i32
    %924 = arith.index_cast %923 : i32 to index
    %c0_379 = arith.constant 0 : index
    %925 = vector.load %arg22[%924, %c0_379] : memref<16x512xf32, #tpu.memory_space<vmem>>, vector<2x512xf32>
    %926 = arith.truncf %922 : vector<2x128xf32> to vector<2x128xbf16>
    %c0_380 = arith.constant 0 : index
    %c0_381 = arith.constant 0 : index
    %927 = vector.load %arg25[%c0_380, %c0_381] : memref<128x512xbf16, #tpu.memory_space<vmem>>, vector<128x512xbf16>
    %cst_382 = arith.constant dense<0.000000e+00> : vector<2x512xf32>
    %928 = tpu.matmul %926, %927, %cst_382 {dimension_numbers = #tpu.dot_dimension_numbers<[1], [0], [0], [1], [0, 0, 1, 1], [], []>} : vector<2x128xbf16>, vector<128x512xbf16>, vector<2x512xf32> -> vector<2x512xf32>
    %929 = arith.addf %925, %928 : vector<2x512xf32>
    %930 = vector.extract_strided_slice %929 {offsets = [0, 0], sizes = [2, 128], strides = [1, 1]} : vector<2x512xf32> to vector<2x128xf32>
    %cst_383 = arith.constant 5.000000e-01 : f32
    %931 = vector.broadcast %cst_383 : f32 to vector<2x128xf32>
    %932 = arith.mulf %931, %930 : vector<2x128xf32>
    %933 = math.tanh %932 : vector<2x128xf32>
    %cst_384 = arith.constant 5.000000e-01 : f32
    %934 = vector.broadcast %cst_384 : f32 to vector<2x128xf32>
    %935 = arith.mulf %934, %933 : vector<2x128xf32>
    %cst_385 = arith.constant 5.000000e-01 : f32
    %936 = vector.broadcast %cst_385 : f32 to vector<2x128xf32>
    %937 = arith.addf %935, %936 : vector<2x128xf32>
    %938 = vector.extract_strided_slice %929 {offsets = [0, 128], sizes = [2, 128], strides = [1, 1]} : vector<2x512xf32> to vector<2x128xf32>
    %cst_386 = arith.constant 5.000000e-01 : f32
    %939 = vector.broadcast %cst_386 : f32 to vector<2x128xf32>
    %940 = arith.mulf %939, %938 : vector<2x128xf32>
    %941 = math.tanh %940 : vector<2x128xf32>
    %cst_387 = arith.constant 5.000000e-01 : f32
    %942 = vector.broadcast %cst_387 : f32 to vector<2x128xf32>
    %943 = arith.mulf %942, %941 : vector<2x128xf32>
    %cst_388 = arith.constant 5.000000e-01 : f32
    %944 = vector.broadcast %cst_388 : f32 to vector<2x128xf32>
    %945 = arith.addf %943, %944 : vector<2x128xf32>
    %946 = vector.extract_strided_slice %929 {offsets = [0, 256], sizes = [2, 128], strides = [1, 1]} : vector<2x512xf32> to vector<2x128xf32>
    %947 = math.tanh %946 : vector<2x128xf32>
    %948 = vector.extract_strided_slice %929 {offsets = [0, 384], sizes = [2, 128], strides = [1, 1]} : vector<2x512xf32> to vector<2x128xf32>
    %cst_389 = arith.constant 5.000000e-01 : f32
    %949 = vector.broadcast %cst_389 : f32 to vector<2x128xf32>
    %950 = arith.mulf %949, %948 : vector<2x128xf32>
    %951 = math.tanh %950 : vector<2x128xf32>
    %cst_390 = arith.constant 5.000000e-01 : f32
    %952 = vector.broadcast %cst_390 : f32 to vector<2x128xf32>
    %953 = arith.mulf %952, %951 : vector<2x128xf32>
    %cst_391 = arith.constant 5.000000e-01 : f32
    %954 = vector.broadcast %cst_391 : f32 to vector<2x128xf32>
    %955 = arith.addf %953, %954 : vector<2x128xf32>
    %956 = arith.mulf %945, %920 : vector<2x128xf32>
    %957 = arith.mulf %937, %947 : vector<2x128xf32>
    %958 = arith.addf %956, %957 : vector<2x128xf32>
    %959 = math.tanh %958 : vector<2x128xf32>
    %960 = arith.mulf %955, %959 : vector<2x128xf32>
    %c7_i32_392 = arith.constant 7 : i32
    %c2_i32_393 = arith.constant 2 : i32
    %961 = arith.muli %c7_i32_392, %c2_i32_393 : i32
    %962 = arith.index_cast %961 : i32 to index
    %c0_394 = arith.constant 0 : index
    %963 = vector.load %arg22[%962, %c0_394] : memref<16x512xf32, #tpu.memory_space<vmem>>, vector<2x512xf32>
    %964 = arith.truncf %960 : vector<2x128xf32> to vector<2x128xbf16>
    %c0_395 = arith.constant 0 : index
    %c0_396 = arith.constant 0 : index
    %965 = vector.load %arg25[%c0_395, %c0_396] : memref<128x512xbf16, #tpu.memory_space<vmem>>, vector<128x512xbf16>
    %cst_397 = arith.constant dense<0.000000e+00> : vector<2x512xf32>
    %966 = tpu.matmul %964, %965, %cst_397 {dimension_numbers = #tpu.dot_dimension_numbers<[1], [0], [0], [1], [0, 0, 1, 1], [], []>} : vector<2x128xbf16>, vector<128x512xbf16>, vector<2x512xf32> -> vector<2x512xf32>
    %967 = arith.addf %963, %966 : vector<2x512xf32>
    %968 = vector.extract_strided_slice %967 {offsets = [0, 0], sizes = [2, 128], strides = [1, 1]} : vector<2x512xf32> to vector<2x128xf32>
    %cst_398 = arith.constant 5.000000e-01 : f32
    %969 = vector.broadcast %cst_398 : f32 to vector<2x128xf32>
    %970 = arith.mulf %969, %968 : vector<2x128xf32>
    %971 = math.tanh %970 : vector<2x128xf32>
    %cst_399 = arith.constant 5.000000e-01 : f32
    %972 = vector.broadcast %cst_399 : f32 to vector<2x128xf32>
    %973 = arith.mulf %972, %971 : vector<2x128xf32>
    %cst_400 = arith.constant 5.000000e-01 : f32
    %974 = vector.broadcast %cst_400 : f32 to vector<2x128xf32>
    %975 = arith.addf %973, %974 : vector<2x128xf32>
    %976 = vector.extract_strided_slice %967 {offsets = [0, 128], sizes = [2, 128], strides = [1, 1]} : vector<2x512xf32> to vector<2x128xf32>
    %cst_401 = arith.constant 5.000000e-01 : f32
    %977 = vector.broadcast %cst_401 : f32 to vector<2x128xf32>
    %978 = arith.mulf %977, %976 : vector<2x128xf32>
    %979 = math.tanh %978 : vector<2x128xf32>
    %cst_402 = arith.constant 5.000000e-01 : f32
    %980 = vector.broadcast %cst_402 : f32 to vector<2x128xf32>
    %981 = arith.mulf %980, %979 : vector<2x128xf32>
    %cst_403 = arith.constant 5.000000e-01 : f32
    %982 = vector.broadcast %cst_403 : f32 to vector<2x128xf32>
    %983 = arith.addf %981, %982 : vector<2x128xf32>
    %984 = vector.extract_strided_slice %967 {offsets = [0, 256], sizes = [2, 128], strides = [1, 1]} : vector<2x512xf32> to vector<2x128xf32>
    %985 = math.tanh %984 : vector<2x128xf32>
    %986 = vector.extract_strided_slice %967 {offsets = [0, 384], sizes = [2, 128], strides = [1, 1]} : vector<2x512xf32> to vector<2x128xf32>
    %cst_404 = arith.constant 5.000000e-01 : f32
    %987 = vector.broadcast %cst_404 : f32 to vector<2x128xf32>
    %988 = arith.mulf %987, %986 : vector<2x128xf32>
    %989 = math.tanh %988 : vector<2x128xf32>
    %cst_405 = arith.constant 5.000000e-01 : f32
    %990 = vector.broadcast %cst_405 : f32 to vector<2x128xf32>
    %991 = arith.mulf %990, %989 : vector<2x128xf32>
    %cst_406 = arith.constant 5.000000e-01 : f32
    %992 = vector.broadcast %cst_406 : f32 to vector<2x128xf32>
    %993 = arith.addf %991, %992 : vector<2x128xf32>
    %994 = arith.mulf %983, %958 : vector<2x128xf32>
    %995 = arith.mulf %975, %985 : vector<2x128xf32>
    %996 = arith.addf %994, %995 : vector<2x128xf32>
    %997 = math.tanh %996 : vector<2x128xf32>
    %998 = arith.mulf %993, %997 : vector<2x128xf32>
    %c8_i32_407 = arith.constant 8 : i32
    %c14 = arith.constant 14 : index
    %c0_408 = arith.constant 0 : index
    %999 = vector.load %arg20[%c14, %c0_408] : memref<16x128xf32, #tpu.memory_space<vmem>>, vector<2x128xf32>
    %1000 = arith.truncf %999 : vector<2x128xf32> to vector<2x128xbf16>
    %c0_409 = arith.constant 0 : index
    %c0_410 = arith.constant 0 : index
    %1001 = vector.load %arg26[%c0_409, %c0_410] : memref<128x512xbf16, #tpu.memory_space<vmem>>, vector<128x512xbf16>
    %cst_411 = arith.constant dense<0.000000e+00> : vector<2x512xf32>
    %1002 = tpu.matmul %1000, %1001, %cst_411 {dimension_numbers = #tpu.dot_dimension_numbers<[1], [0], [0], [1], [0, 0, 1, 1], [], []>} : vector<2x128xbf16>, vector<128x512xbf16>, vector<2x512xf32> -> vector<2x512xf32>
    %c14_412 = arith.constant 14 : index
    %c0_413 = arith.constant 0 : index
    %1003 = vector.load %arg21[%c14_412, %c0_413] : memref<16x128xf32, #tpu.memory_space<vmem>>, vector<2x128xf32>
    %1004 = arith.truncf %1003 : vector<2x128xf32> to vector<2x128xbf16>
    %c0_414 = arith.constant 0 : index
    %c0_415 = arith.constant 0 : index
    %1005 = vector.load %arg27[%c0_414, %c0_415] : memref<128x512xbf16, #tpu.memory_space<vmem>>, vector<128x512xbf16>
    %cst_416 = arith.constant dense<0.000000e+00> : vector<2x512xf32>
    %1006 = tpu.matmul %1004, %1005, %cst_416 {dimension_numbers = #tpu.dot_dimension_numbers<[1], [0], [0], [1], [0, 0, 1, 1], [], []>} : vector<2x128xbf16>, vector<128x512xbf16>, vector<2x512xf32> -> vector<2x512xf32>
    %1007 = arith.addf %1002, %1006 : vector<2x512xf32>
    %c0_417 = arith.constant 0 : index
    %c0_418 = arith.constant 0 : index
    %1008 = vector.load %arg8[%c0_417, %c0_418] : memref<1x512xf32, #tpu.memory_space<vmem>>, vector<1x512xf32>
    %1009 = vector.broadcast %1008 : vector<1x512xf32> to vector<2x512xf32>
    %1010 = arith.addf %1007, %1009 : vector<2x512xf32>
    %1011 = vector.extract_strided_slice %1010 {offsets = [0, 0], sizes = [2, 128], strides = [1, 1]} : vector<2x512xf32> to vector<2x128xf32>
    %cst_419 = arith.constant 5.000000e-01 : f32
    %1012 = vector.broadcast %cst_419 : f32 to vector<2x128xf32>
    %1013 = arith.mulf %1012, %1011 : vector<2x128xf32>
    %1014 = math.tanh %1013 : vector<2x128xf32>
    %cst_420 = arith.constant 5.000000e-01 : f32
    %1015 = vector.broadcast %cst_420 : f32 to vector<2x128xf32>
    %1016 = arith.mulf %1015, %1014 : vector<2x128xf32>
    %cst_421 = arith.constant 5.000000e-01 : f32
    %1017 = vector.broadcast %cst_421 : f32 to vector<2x128xf32>
    %1018 = arith.addf %1016, %1017 : vector<2x128xf32>
    %1019 = vector.extract_strided_slice %1010 {offsets = [0, 128], sizes = [2, 128], strides = [1, 1]} : vector<2x512xf32> to vector<2x128xf32>
    %cst_422 = arith.constant 5.000000e-01 : f32
    %1020 = vector.broadcast %cst_422 : f32 to vector<2x128xf32>
    %1021 = arith.mulf %1020, %1019 : vector<2x128xf32>
    %1022 = math.tanh %1021 : vector<2x128xf32>
    %cst_423 = arith.constant 5.000000e-01 : f32
    %1023 = vector.broadcast %cst_423 : f32 to vector<2x128xf32>
    %1024 = arith.mulf %1023, %1022 : vector<2x128xf32>
    %cst_424 = arith.constant 5.000000e-01 : f32
    %1025 = vector.broadcast %cst_424 : f32 to vector<2x128xf32>
    %1026 = arith.addf %1024, %1025 : vector<2x128xf32>
    %1027 = vector.extract_strided_slice %1010 {offsets = [0, 256], sizes = [2, 128], strides = [1, 1]} : vector<2x512xf32> to vector<2x128xf32>
    %1028 = math.tanh %1027 : vector<2x128xf32>
    %1029 = vector.extract_strided_slice %1010 {offsets = [0, 384], sizes = [2, 128], strides = [1, 1]} : vector<2x512xf32> to vector<2x128xf32>
    %cst_425 = arith.constant 5.000000e-01 : f32
    %1030 = vector.broadcast %cst_425 : f32 to vector<2x128xf32>
    %1031 = arith.mulf %1030, %1029 : vector<2x128xf32>
    %1032 = math.tanh %1031 : vector<2x128xf32>
    %cst_426 = arith.constant 5.000000e-01 : f32
    %1033 = vector.broadcast %cst_426 : f32 to vector<2x128xf32>
    %1034 = arith.mulf %1033, %1032 : vector<2x128xf32>
    %cst_427 = arith.constant 5.000000e-01 : f32
    %1035 = vector.broadcast %cst_427 : f32 to vector<2x128xf32>
    %1036 = arith.addf %1034, %1035 : vector<2x128xf32>
    %1037 = arith.mulf %1026, %23 : vector<2x128xf32>
    %1038 = arith.mulf %1018, %1028 : vector<2x128xf32>
    %1039 = arith.addf %1037, %1038 : vector<2x128xf32>
    %1040 = math.tanh %1039 : vector<2x128xf32>
    %1041 = arith.mulf %1036, %1040 : vector<2x128xf32>
    %1042 = arith.truncf %998 : vector<2x128xf32> to vector<2x128xbf16>
    %c0_428 = arith.constant 0 : index
    %c0_429 = arith.constant 0 : index
    %1043 = vector.load %arg9[%c0_428, %c0_429] : memref<128x1xbf16, #tpu.memory_space<vmem>>, vector<128x1xbf16>
    %cst_430 = arith.constant dense<0.000000e+00> : vector<2x1xf32>
    %1044 = tpu.matmul %1042, %1043, %cst_430 {dimension_numbers = #tpu.dot_dimension_numbers<[1], [0], [0], [1], [0, 0, 1, 1], [], []>} : vector<2x128xbf16>, vector<128x1xbf16>, vector<2x1xf32> -> vector<2x1xf32>
    %1045 = arith.truncf %1041 : vector<2x128xf32> to vector<2x128xbf16>
    %c0_431 = arith.constant 0 : index
    %c0_432 = arith.constant 0 : index
    %1046 = vector.load %arg10[%c0_431, %c0_432] : memref<128x1xbf16, #tpu.memory_space<vmem>>, vector<128x1xbf16>
    %cst_433 = arith.constant dense<0.000000e+00> : vector<2x1xf32>
    %1047 = tpu.matmul %1045, %1046, %cst_433 {dimension_numbers = #tpu.dot_dimension_numbers<[1], [0], [0], [1], [0, 0, 1, 1], [], []>} : vector<2x128xbf16>, vector<128x1xbf16>, vector<2x1xf32> -> vector<2x1xf32>
    %1048 = arith.addf %1044, %1047 : vector<2x1xf32>
    %c0_434 = arith.constant 0 : index
    %c0_435 = arith.constant 0 : index
    %1049 = vector.load %arg11[%c0_434, %c0_435] : memref<1x1xf32, #tpu.memory_space<vmem>>, vector<1x1xf32>
    %1050 = vector.broadcast %1049 : vector<1x1xf32> to vector<2x1xf32>
    %1051 = arith.addf %1048, %1050 : vector<2x1xf32>
    %c0_436 = arith.constant 0 : index
    %c0_437 = arith.constant 0 : index
    %1052 = vector.load %arg17[%c0_436, %c0_437] : memref<2x1xf32, #tpu.memory_space<vmem>>, vector<2x1xf32>
    tpu.vector_store %arg17[%c0_436, %c0_437], %1051 {strides = array<i32>} : memref<2x1xf32, #tpu.memory_space<vmem>>, vector<2x1xf32>,
    return
  }
}

</mosaic_0001>

<llo_original>
// kernel: lstm_model.1
$region0: #{lstm_model.1}
  #allocation0 [shape = 'u32[]', space=smem, size = 0x4, offset = 0x4, fixed_abs, tag = 'smem constant byte address 0x4 - core index']
  #allocation1 [shape = 'u32[144,128]{1,0:T(1,128)}', space=vmem, size = 0x12000, scoped, tag = 'internal scratch']
  #allocation2 [shape = 'f32[16,512]{1,0:T(8,128)}', space=vmem, size = 0x8000, scoped, tag = 'scratch operand']
  #allocation3 [shape = 'f32[16,512]{1,0:T(8,128)}', space=vmem, size = 0x8000, scoped, tag = 'scratch operand']
  #allocation4 [shape = 'f32[16,128]{1,0:T(8,128)}', space=vmem, size = 0x2000, scoped, tag = 'scratch operand']
  #allocation5 [shape = 'f32[16,128]{1,0:T(8,128)}', space=vmem, size = 0x2000, scoped, tag = 'scratch operand']
  #allocation6 [shape = 'f32[16,512]{1,0:T(8,128)}', space=vmem, size = 0x8000, scoped, tag = 'scratch operand']
  #allocation7 [shape = 'bf16[128,512]{1,0:T(16,128)(2,1)}', space=vmem, size = 0x20000, scoped, tag = 'scratch operand']
  #allocation8 [shape = 'bf16[128,512]{1,0:T(16,128)(2,1)}', space=vmem, size = 0x20000, scoped, tag = 'scratch operand']
  #allocation9 [shape = 'bf16[128,512]{1,0:T(16,128)(2,1)}', space=vmem, size = 0x20000, scoped, tag = 'scratch operand']
  #allocation10 [shape = 'bf16[128,512]{1,0:T(16,128)(2,1)}', space=vmem, size = 0x20000, scoped, tag = 'scratch operand']
  #allocation11 [shape = 'bf16[128,512]{1,0:T(16,128)(2,1)}', space=vmem, size = 0x20000, scoped, tag = 'scratch operand']
  #allocation12 [shape = 's32[5]{0}', space=sflag, size = 0x14, scoped, tag = 'scratch operand']
  #allocation13 [shape = 'f32[1,1]{1,0:T(1,128)S(1)}', space=vmem, size = 0x200, scoped, tag = 'scoped memory for lstm_model.1']
  #allocation14 [shape = 's32[]', space=sflag, size = 0x4, offset = 0, fixed_abs, tag = 'sflag constant byte address 0x0 - dummy sync flag']
  #allocation15 [shape = 's32[]', space=sflag, size = 0x4, offset = 0, fixed_abs, tag = 'sflag constant byte address 0x0 - dummy sync flag']
  #allocation16 [shape = 's32[]', space=sflag, size = 0x4, offset = 0, fixed_abs, tag = 'sflag constant byte address 0x0 - dummy sync flag']
  #allocation17 [shape = 's32[]', space=sflag, size = 0x4, offset = 0, fixed_abs, tag = 'sflag constant byte address 0x0 - dummy sync flag']
  #allocation18 [shape = 's32[]', space=sflag, size = 0x4, offset = 0, fixed_abs, tag = 'sflag constant byte address 0x0 - dummy sync flag']
  %s0 = inlined_call_operand.vmem [shape: bf16[16,16], index: 0, kind: input, shape index: {}]
  %s1 = inlined_call_operand.vmem [shape: bf16[16,512], index: 1, kind: input, shape index: {}]
  %s2 = inlined_call_operand.vmem [shape: f32[1,512], index: 2, kind: input, shape index: {}]
  %s3 = inlined_call_operand.vmem [shape: bf16[128,512], index: 3, kind: input, shape index: {}]
  %s4 = inlined_call_operand.vmem [shape: bf16[16,512], index: 4, kind: input, shape index: {}]
  %s5 = inlined_call_operand.vmem [shape: f32[1,512], index: 5, kind: input, shape index: {}]
  %s6 = inlined_call_operand.vmem [shape: bf16[128,512], index: 6, kind: input, shape index: {}]
  %s7 = inlined_call_operand.vmem [shape: f32[1,512], index: 7, kind: input, shape index: {}]
  %s8 = inlined_call_operand.vmem [shape: f32[1,512], index: 8, kind: input, shape index: {}]
  %s9 = inlined_call_operand.vmem [shape: bf16[128,1], index: 9, kind: input, shape index: {}]
  %s10 = inlined_call_operand.vmem [shape: bf16[128,1], index: 10, kind: input, shape index: {}]
  %s11 = inlined_call_operand.<no memory space> [shape: f32[1,1], index: 11, kind: input, shape index: {}]
  %s12 = inlined_call_operand.vmem [shape: bf16[128,512], index: 12, kind: input, shape index: {}]
  %s13 = inlined_call_operand.vmem [shape: bf16[128,512], index: 13, kind: input, shape index: {}]
  %s14 = inlined_call_operand.vmem [shape: bf16[128,512], index: 14, kind: input, shape index: {}]
  %s15 = inlined_call_operand.vmem [shape: bf16[128,512], index: 15, kind: input, shape index: {}]
  %s16 = inlined_call_operand.vmem [shape: bf16[128,512], index: 16, kind: input, shape index: {}]
  %s17 = inlined_call_operand.vmem [shape: f32[2,1], index: 17, kind: output, shape index: {}]
  %s18 = sld [smem:[#allocation0]]
  $region243: #{lstm_model.1} parent=0
    _
  %s20 = ssub.s32 1, %s18
  %s21 = scalar_select 0, %s20, %s18
  %v22 = vstv %s11
  %23 = vst [vmem:[#allocation13] sm:$0x1] %v22
  // Predicated region
  $region2: #{lstm_model.1} parent=0 // pred_check
    _
  $region3: #{lstm_model.1} parent=0 // pred_check_branch
    %25 = sbr.rel (0) target = $region5
  $region4: #{lstm_model.1} parent=0 // pred_region
    _
  $region5: #{lstm_model.1} parent=0 // pred_fallthru
    _
  // Predicated region
  $region6: #{lstm_model.1} parent=0 // pred_check
    _
  $region7: #{lstm_model.1} parent=0 // pred_check_branch
    %27 = sbr.rel (0) target = $region9
  $region8: #{lstm_model.1} parent=0 // pred_region
    _
  $region9: #{lstm_model.1} parent=0 // pred_fallthru
    _
  // Predicated region
  $region10: #{lstm_model.1} parent=0 // pred_check
    _
  $region11: #{lstm_model.1} parent=0 // pred_check_branch
    %29 = sbr.rel (0) target = $region13
  $region12: #{lstm_model.1} parent=0 // pred_region
    _
  $region13: #{lstm_model.1} parent=0 // pred_fallthru
    _
  // Predicated region
  $region14: #{lstm_model.1} parent=0 // pred_check
    _
  $region15: #{lstm_model.1} parent=0 // pred_check_branch
    %31 = sbr.rel (0) target = $region17
  $region16: #{lstm_model.1} parent=0 // pred_region
    _
  $region17: #{lstm_model.1} parent=0 // pred_fallthru
    _
  // Predicated region
  $region18: #{lstm_model.1} parent=0 // pred_check
    _
  $region19: #{lstm_model.1} parent=0 // pred_check_branch
    %33 = sbr.rel (0) target = $region21
  $region20: #{lstm_model.1} parent=0 // pred_region
    _
  $region21: #{lstm_model.1} parent=0 // pred_fallthru
    _
  // Predicated region
  $region22: #{lstm_model.1} parent=0 // pred_check
    _
  $region23: #{lstm_model.1} parent=0 // pred_check_branch
    %35 = sbr.rel (0) target = $region25
  $region24: #{lstm_model.1} parent=0 // pred_region
    _
  $region25: #{lstm_model.1} parent=0 // pred_fallthru
    _
  // Predicated region
  $region26: #{lstm_model.1} parent=0 // pred_check
    _
  $region27: #{lstm_model.1} parent=0 // pred_check_branch
    %37 = sbr.rel (0) target = $region29
  $region28: #{lstm_model.1} parent=0 // pred_region
    _
  $region29: #{lstm_model.1} parent=0 // pred_fallthru
    _
  // Predicated region
  $region30: #{lstm_model.1} parent=0 // pred_check
    _
  $region31: #{lstm_model.1} parent=0 // pred_check_branch
    %39 = sbr.rel (0) target = $region33
  $region32: #{lstm_model.1} parent=0 // pred_region
    _
  $region33: #{lstm_model.1} parent=0 // pred_fallthru
    _
  // Predicated region
  $region34: #{lstm_model.1} parent=0 // pred_check
    _
  $region35: #{lstm_model.1} parent=0 // pred_check_branch
    %41 = sbr.rel (0) target = $region37
  $region36: #{lstm_model.1} parent=0 // pred_region
    _
  $region37: #{lstm_model.1} parent=0 // pred_fallthru
    _
  // Predicated region
  $region38: #{lstm_model.1} parent=0 // pred_check
    _
  $region39: #{lstm_model.1} parent=0 // pred_check_branch
    %43 = sbr.rel (0) target = $region41
  $region40: #{lstm_model.1} parent=0 // pred_region
    _
  $region41: #{lstm_model.1} parent=0 // pred_fallthru
    _
  // Predicated region
  $region42: #{lstm_model.1} parent=0 // pred_check
    _
  $region43: #{lstm_model.1} parent=0 // pred_check_branch
    %45 = sbr.rel (0) target = $region45
  $region44: #{lstm_model.1} parent=0 // pred_region
    _
  $region45: #{lstm_model.1} parent=0 // pred_fallthru
    _
  // Predicated region
  $region46: #{lstm_model.1} parent=0 // pred_check
    _
  $region47: #{lstm_model.1} parent=0 // pred_check_branch
    %47 = sbr.rel (0) target = $region49
  $region48: #{lstm_model.1} parent=0 // pred_region
    _
  $region49: #{lstm_model.1} parent=0 // pred_fallthru
    _
  %p50 = scmp.lt.u32.totalorder 4, 8
  %p51 = pneg %p50
  // Predicated region
  $region50: #{lstm_model.1} parent=0 // pred_check
    _
  $region51: #{lstm_model.1} parent=0 // pred_check_branch
    %53 = sbr.rel (%p50) target = $region53
  $region52: #{lstm_model.1} parent=0 // pred_region
    %s194 = sand.u32 4, 7
    %p195 = scmp.eq.s32.totalorder %s194, 0
    %p196 = pneg %p195
    // Predicated region
    $region65: #{lstm_model.1} parent=52 // pred_check
      _
    $region66: #{lstm_model.1} parent=52 // pred_check_branch
      %198 = sbr.rel (%p195) target = $region68
    $region67: #{lstm_model.1} parent=52 // pred_region
      %s199 = sand.u32 4, 7
      %s200 = ssub.s32 4, %s199
      %s201 = scalar_lea.vmem %s12, %s200
      %s202 = ssub.s32 4, %s199
      %s203 = scalar_lea.vmem [#allocation7], %s202
      loop: start=0, step=1, limit=1
      $region69: #{lstm_model.1} parent=67 // loop_pre_header
        _
      $region70: #{lstm_model.1} parent=67 // loop_header
        %s205 = sphi 0, %s209
        %p206 = scmp.ge.s32.totalorder %s205, 1
        %s210 = sphi %s12, %s12
        %s211 = sphi [#allocation7], [#allocation7]
      $region71: #{lstm_model.1} parent=67 // loop_header_branch
        %208 = sbr.rel (%p206) target = $region75
      $region72: #{lstm_model.1} parent=67 // loop_body
        _
      $region73: #{lstm_model.1} parent=67 // loop_footer
        %s209 = sadd.s32 1, %s205
      $region74: #{lstm_model.1} parent=67 // loop_footer_branch
        %204 = sbr.rel target = $region70
      $region75: #{lstm_model.1} parent=67 // loop_exit
        _
      %s212 = sshllo.u32 0, %s199
      loop: start=0, step=1, limit=1
      $region76: #{lstm_model.1} parent=67 // loop_pre_header
        _
      $region77: #{lstm_model.1} parent=67 // loop_header
        %s214 = sphi 0, %s218
        %p215 = scmp.ge.s32.totalorder %s214, 1
        %s219 = sphi %s201, %s201
        %s220 = sphi %s203, %s203
      $region78: #{lstm_model.1} parent=67 // loop_header_branch
        %217 = sbr.rel (%p215) target = $region82
      $region79: #{lstm_model.1} parent=67 // loop_body
        %v221 = vld [vmem:[%s219] sm:%s212]
        %222 = vst [vmem:[%s220] sm:%s212] %v221
        %v223 = vld [vmem:[%s219 + $0x10] sm:%s212]
        %224 = vst [vmem:[%s220 + $0x4] sm:%s212] %v223
        %v225 = vld [vmem:[%s219 + $0x4] sm:%s212]
        %226 = vst [vmem:[%s220 + $0x8] sm:%s212] %v225
        %v227 = vld [vmem:[%s219 + $0x14] sm:%s212]
        %228 = vst [vmem:[%s220 + $0xc] sm:%s212] %v227
        %v229 = vld [vmem:[%s219 + $0x8] sm:%s212]
        %230 = vst [vmem:[%s220 + $0x10] sm:%s212] %v229
        %v231 = vld [vmem:[%s219 + $0x18] sm:%s212]
        %232 = vst [vmem:[%s220 + $0x14] sm:%s212] %v231
        %v233 = vld [vmem:[%s219 + $0xc] sm:%s212]
        %234 = vst [vmem:[%s220 + $0x18] sm:%s212] %v233
        %v235 = vld [vmem:[%s219 + $0x1c] sm:%s212]
        %236 = vst [vmem:[%s220 + $0x1c] sm:%s212] %v235
        %v237 = vld [vmem:[%s219 + $0x20] sm:%s212]
        %238 = vst [vmem:[%s220 + $0x20] sm:%s212] %v237
        %v239 = vld [vmem:[%s219 + $0x30] sm:%s212]
        %240 = vst [vmem:[%s220 + $0x24] sm:%s212] %v239
        %v241 = vld [vmem:[%s219 + $0x24] sm:%s212]
        %242 = vst [vmem:[%s220 + $0x28] sm:%s212] %v241
        %v243 = vld [vmem:[%s219 + $0x34] sm:%s212]
        %244 = vst [vmem:[%s220 + $0x2c] sm:%s212] %v243
        %v245 = vld [vmem:[%s219 + $0x28] sm:%s212]
        %246 = vst [vmem:[%s220 + $0x30] sm:%s212] %v245
        %v247 = vld [vmem:[%s219 + $0x38] sm:%s212]
        %248 = vst [vmem:[%s220 + $0x34] sm:%s212] %v247
        %v249 = vld [vmem:[%s219 + $0x2c] sm:%s212]
        %250 = vst [vmem:[%s220 + $0x38] sm:%s212] %v249
        %v251 = vld [vmem:[%s219 + $0x3c] sm:%s212]
        %252 = vst [vmem:[%s220 + $0x3c] sm:%s212] %v251
        %v253 = vld [vmem:[%s219 + $0x40] sm:%s212]
        %254 = vst [vmem:[%s220 + $0x40] sm:%s212] %v253
        %v255 = vld [vmem:[%s219 + $0x50] sm:%s212]
        %256 = vst [vmem:[%s220 + $0x44] sm:%s212] %v255
        %v257 = vld [vmem:[%s219 + $0x44] sm:%s212]
        %258 = vst [vmem:[%s220 + $0x48] sm:%s212] %v257
        %v259 = vld [vmem:[%s219 + $0x54] sm:%s212]
        %260 = vst [vmem:[%s220 + $0x4c] sm:%s212] %v259
        %v261 = vld [vmem:[%s219 + $0x48] sm:%s212]
        %262 = vst [vmem:[%s220 + $0x50] sm:%s212] %v261
        %v263 = vld [vmem:[%s219 + $0x58] sm:%s212]
        %264 = vst [vmem:[%s220 + $0x54] sm:%s212] %v263
        %v265 = vld [vmem:[%s219 + $0x4c] sm:%s212]
        %266 = vst [vmem:[%s220 + $0x58] sm:%s212] %v265
        %v267 = vld [vmem:[%s219 + $0x5c] sm:%s212]
        %268 = vst [vmem:[%s220 + $0x5c] sm:%s212] %v267
        %v269 = vld [vmem:[%s219 + $0x60] sm:%s212]
        %270 = vst [vmem:[%s220 + $0x60] sm:%s212] %v269
        %v271 = vld [vmem:[%s219 + $0x70] sm:%s212]
        %272 = vst [vmem:[%s220 + $0x64] sm:%s212] %v271
        %v273 = vld [vmem:[%s219 + $0x64] sm:%s212]
        %274 = vst [vmem:[%s220 + $0x68] sm:%s212] %v273
        %v275 = vld [vmem:[%s219 + $0x74] sm:%s212]
        %276 = vst [vmem:[%s220 + $0x6c] sm:%s212] %v275
        %v277 = vld [vmem:[%s219 + $0x68] sm:%s212]
        %278 = vst [vmem:[%s220 + $0x70] sm:%s212] %v277
        %v279 = vld [vmem:[%s219 + $0x78] sm:%s212]
        %280 = vst [vmem:[%s220 + $0x74] sm:%s212] %v279
        %v281 = vld [vmem:[%s219 + $0x6c] sm:%s212]
        %282 = vst [vmem:[%s220 + $0x78] sm:%s212] %v281
        %v283 = vld [vmem:[%s219 + $0x7c] sm:%s212]
        %284 = vst [vmem:[%s220 + $0x7c] sm:%s212] %v283
        %v285 = vld [vmem:[%s219 + $0x80] sm:%s212]
        %286 = vst [vmem:[%s220 + $0x80] sm:%s212] %v285
        %v287 = vld [vmem:[%s219 + $0x90] sm:%s212]
        %288 = vst [vmem:[%s220 + $0x84] sm:%s212] %v287
        %v289 = vld [vmem:[%s219 + $0x84] sm:%s212]
        %290 = vst [vmem:[%s220 + $0x88] sm:%s212] %v289
        %v291 = vld [vmem:[%s219 + $0x94] sm:%s212]
        %292 = vst [vmem:[%s220 + $0x8c] sm:%s212] %v291
        %v293 = vld [vmem:[%s219 + $0x88] sm:%s212]
        %294 = vst [vmem:[%s220 + $0x90] sm:%s212] %v293
        %v295 = vld [vmem:[%s219 + $0x98] sm:%s212]
        %296 = vst [vmem:[%s220 + $0x94] sm:%s212] %v295
        %v297 = vld [vmem:[%s219 + $0x8c] sm:%s212]
        %298 = vst [vmem:[%s220 + $0x98] sm:%s212] %v297
        %v299 = vld [vmem:[%s219 + $0x9c] sm:%s212]
        %300 = vst [vmem:[%s220 + $0x9c] sm:%s212] %v299
        %v301 = vld [vmem:[%s219 + $0xa0] sm:%s212]
        %302 = vst [vmem:[%s220 + $0xa0] sm:%s212] %v301
        %v303 = vld [vmem:[%s219 + $0xb0] sm:%s212]
        %304 = vst [vmem:[%s220 + $0xa4] sm:%s212] %v303
        %v305 = vld [vmem:[%s219 + $0xa4] sm:%s212]
        %306 = vst [vmem:[%s220 + $0xa8] sm:%s212] %v305
        %v307 = vld [vmem:[%s219 + $0xb4] sm:%s212]
        %308 = vst [vmem:[%s220 + $0xac] sm:%s212] %v307
        %v309 = vld [vmem:[%s219 + $0xa8] sm:%s212]
        %310 = vst [vmem:[%s220 + $0xb0] sm:%s212] %v309
        %v311 = vld [vmem:[%s219 + $0xb8] sm:%s212]
        %312 = vst [vmem:[%s220 + $0xb4] sm:%s212] %v311
        %v313 = vld [vmem:[%s219 + $0xac] sm:%s212]
        %314 = vst [vmem:[%s220 + $0xb8] sm:%s212] %v313
        %v315 = vld [vmem:[%s219 + $0xbc] sm:%s212]
        %316 = vst [vmem:[%s220 + $0xbc] sm:%s212] %v315
        %v317 = vld [vmem:[%s219 + $0xc0] sm:%s212]
        %318 = vst [vmem:[%s220 + $0xc0] sm:%s212] %v317
        %v319 = vld [vmem:[%s219 + $0xd0] sm:%s212]
        %320 = vst [vmem:[%s220 + $0xc4] sm:%s212] %v319
        %v321 = vld [vmem:[%s219 + $0xc4] sm:%s212]
        %322 = vst [vmem:[%s220 + $0xc8] sm:%s212] %v321
        %v323 = vld [vmem:[%s219 + $0xd4] sm:%s212]
        %324 = vst [vmem:[%s220 + $0xcc] sm:%s212] %v323
        %v325 = vld [vmem:[%s219 + $0xc8] sm:%s212]
        %326 = vst [vmem:[%s220 + $0xd0] sm:%s212] %v325
        %v327 = vld [vmem:[%s219 + $0xd8] sm:%s212]
        %328 = vst [vmem:[%s220 + $0xd4] sm:%s212] %v327
        %v329 = vld [vmem:[%s219 + $0xcc] sm:%s212]
        %330 = vst [vmem:[%s220 + $0xd8] sm:%s212] %v329
        %v331 = vld [vmem:[%s219 + $0xdc] sm:%s212]
        %332 = vst [vmem:[%s220 + $0xdc] sm:%s212] %v331
        %v333 = vld [vmem:[%s219 + $0xe0] sm:%s212]
        %334 = vst [vmem:[%s220 + $0xe0] sm:%s212] %v333
        %v335 = vld [vmem:[%s219 + $0xf0] sm:%s212]
        %336 = vst [vmem:[%s220 + $0xe4] sm:%s212] %v335
        %v337 = vld [vmem:[%s219 + $0xe4] sm:%s212]
        %338 = vst [vmem:[%s220 + $0xe8] sm:%s212] %v337
        %v339 = vld [vmem:[%s219 + $0xf4] sm:%s212]
        %340 = vst [vmem:[%s220 + $0xec] sm:%s212] %v339
        %v341 = vld [vmem:[%s219 + $0xe8] sm:%s212]
        %342 = vst [vmem:[%s220 + $0xf0] sm:%s212] %v341
        %v343 = vld [vmem:[%s219 + $0xf8] sm:%s212]
        %344 = vst [vmem:[%s220 + $0xf4] sm:%s212] %v343
        %v345 = vld [vmem:[%s219 + $0xec] sm:%s212]
        %346 = vst [vmem:[%s220 + $0xf8] sm:%s212] %v345
        %v347 = vld [vmem:[%s219 + $0xfc] sm:%s212]
        %348 = vst [vmem:[%s220 + $0xfc] sm:%s212] %v347
      $region80: #{lstm_model.1} parent=67 // loop_footer
        %s218 = sadd.s32 1, %s214
      $region81: #{lstm_model.1} parent=67 // loop_footer_branch
        %213 = sbr.rel target = $region77
      $region82: #{lstm_model.1} parent=67 // loop_exit
        _
    $region68: #{lstm_model.1} parent=52 // pred_fallthru
      _
  $region53: #{lstm_model.1} parent=0 // pred_fallthru
    _
  // Predicated region
  $region54: #{lstm_model.1} parent=0 // pred_check
    %p54 = pneg %p50
  $region55: #{lstm_model.1} parent=0 // pred_check_branch
    %56 = sbr.rel (%p54) target = $region57
  $region56: #{lstm_model.1} parent=0 // pred_region
    %s57 = sshllo.u32 0, 4
    loop: start=0, step=1, limit=1
    $region58: #{lstm_model.1} parent=56 // loop_pre_header
      _
    $region59: #{lstm_model.1} parent=56 // loop_header
      %s59 = sphi 0, %s63
      %p60 = scmp.ge.s32.totalorder %s59, 1
      %s64 = sphi %s12, %s12
      %s65 = sphi [#allocation7], [#allocation7]
    $region60: #{lstm_model.1} parent=56 // loop_header_branch
      %62 = sbr.rel (%p60) target = $region64
    $region61: #{lstm_model.1} parent=56 // loop_body
      %v66 = vld [vmem:[%s64] sm:%s57]
      %67 = vst [vmem:[%s65] sm:%s57] %v66
      %v68 = vld [vmem:[%s64 + $0x10] sm:%s57]
      %69 = vst [vmem:[%s65 + $0x4] sm:%s57] %v68
      %v70 = vld [vmem:[%s64 + $0x4] sm:%s57]
      %71 = vst [vmem:[%s65 + $0x8] sm:%s57] %v70
      %v72 = vld [vmem:[%s64 + $0x14] sm:%s57]
      %73 = vst [vmem:[%s65 + $0xc] sm:%s57] %v72
      %v74 = vld [vmem:[%s64 + $0x8] sm:%s57]
      %75 = vst [vmem:[%s65 + $0x10] sm:%s57] %v74
      %v76 = vld [vmem:[%s64 + $0x18] sm:%s57]
      %77 = vst [vmem:[%s65 + $0x14] sm:%s57] %v76
      %v78 = vld [vmem:[%s64 + $0xc] sm:%s57]
      %79 = vst [vmem:[%s65 + $0x18] sm:%s57] %v78
      %v80 = vld [vmem:[%s64 + $0x1c] sm:%s57]
      %81 = vst [vmem:[%s65 + $0x1c] sm:%s57] %v80
      %v82 = vld [vmem:[%s64 + $0x20] sm:%s57]
      %83 = vst [vmem:[%s65 + $0x20] sm:%s57] %v82
      %v84 = vld [vmem:[%s64 + $0x30] sm:%s57]
      %85 = vst [vmem:[%s65 + $0x24] sm:%s57] %v84
      %v86 = vld [vmem:[%s64 + $0x24] sm:%s57]
      %87 = vst [vmem:[%s65 + $0x28] sm:%s57] %v86
      %v88 = vld [vmem:[%s64 + $0x34] sm:%s57]
      %89 = vst [vmem:[%s65 + $0x2c] sm:%s57] %v88
      %v90 = vld [vmem:[%s64 + $0x28] sm:%s57]
      %91 = vst [vmem:[%s65 + $0x30] sm:%s57] %v90
      %v92 = vld [vmem:[%s64 + $0x38] sm:%s57]
      %93 = vst [vmem:[%s65 + $0x34] sm:%s57] %v92
      %v94 = vld [vmem:[%s64 + $0x2c] sm:%s57]
      %95 = vst [vmem:[%s65 + $0x38] sm:%s57] %v94
      %v96 = vld [vmem:[%s64 + $0x3c] sm:%s57]
      %97 = vst [vmem:[%s65 + $0x3c] sm:%s57] %v96
      %v98 = vld [vmem:[%s64 + $0x40] sm:%s57]
      %99 = vst [vmem:[%s65 + $0x40] sm:%s57] %v98
      %v100 = vld [vmem:[%s64 + $0x50] sm:%s57]
      %101 = vst [vmem:[%s65 + $0x44] sm:%s57] %v100
      %v102 = vld [vmem:[%s64 + $0x44] sm:%s57]
      %103 = vst [vmem:[%s65 + $0x48] sm:%s57] %v102
      %v104 = vld [vmem:[%s64 + $0x54] sm:%s57]
      %105 = vst [vmem:[%s65 + $0x4c] sm:%s57] %v104
      %v106 = vld [vmem:[%s64 + $0x48] sm:%s57]
      %107 = vst [vmem:[%s65 + $0x50] sm:%s57] %v106
      %v108 = vld [vmem:[%s64 + $0x58] sm:%s57]
      %109 = vst [vmem:[%s65 + $0x54] sm:%s57] %v108
      %v110 = vld [vmem:[%s64 + $0x4c] sm:%s57]
      %111 = vst [vmem:[%s65 + $0x58] sm:%s57] %v110
      %v112 = vld [vmem:[%s64 + $0x5c] sm:%s57]
      %113 = vst [vmem:[%s65 + $0x5c] sm:%s57] %v112
      %v114 = vld [vmem:[%s64 + $0x60] sm:%s57]
      %115 = vst [vmem:[%s65 + $0x60] sm:%s57] %v114
      %v116 = vld [vmem:[%s64 + $0x70] sm:%s57]
      %117 = vst [vmem:[%s65 + $0x64] sm:%s57] %v116
      %v118 = vld [vmem:[%s64 + $0x64] sm:%s57]
      %119 = vst [vmem:[%s65 + $0x68] sm:%s57] %v118
      %v120 = vld [vmem:[%s64 + $0x74] sm:%s57]
      %121 = vst [vmem:[%s65 + $0x6c] sm:%s57] %v120
      %v122 = vld [vmem:[%s64 + $0x68] sm:%s57]
      %123 = vst [vmem:[%s65 + $0x70] sm:%s57] %v122
      %v124 = vld [vmem:[%s64 + $0x78] sm:%s57]
      %125 = vst [vmem:[%s65 + $0x74] sm:%s57] %v124
      %v126 = vld [vmem:[%s64 + $0x6c] sm:%s57]
      %127 = vst [vmem:[%s65 + $0x78] sm:%s57] %v126
      %v128 = vld [vmem:[%s64 + $0x7c] sm:%s57]
      %129 = vst [vmem:[%s65 + $0x7c] sm:%s57] %v128
      %v130 = vld [vmem:[%s64 + $0x80] sm:%s57]
      %131 = vst [vmem:[%s65 + $0x80] sm:%s57] %v130
      %v132 = vld [vmem:[%s64 + $0x90] sm:%s57]
      %133 = vst [vmem:[%s65 + $0x84] sm:%s57] %v132
      %v134 = vld [vmem:[%s64 + $0x84] sm:%s57]
      %135 = vst [vmem:[%s65 + $0x88] sm:%s57] %v134
      %v136 = vld [vmem:[%s64 + $0x94] sm:%s57]
      %137 = vst [vmem:[%s65 + $0x8c] sm:%s57] %v136
      %v138 = vld [vmem:[%s64 + $0x88] sm:%s57]
      %139 = vst [vmem:[%s65 + $0x90] sm:%s57] %v138
      %v140 = vld [vmem:[%s64 + $0x98] sm:%s57]
      %141 = vst [vmem:[%s65 + $0x94] sm:%s57] %v140
      %v142 = vld [vmem:[%s64 + $0x8c] sm:%s57]
      %143 = vst [vmem:[%s65 + $0x98] sm:%s57] %v142
      %v144 = vld [vmem:[%s64 + $0x9c] sm:%s57]
      %145 = vst [vmem:[%s65 + $0x9c] sm:%s57] %v144
      %v146 = vld [vmem:[%s64 + $0xa0] sm:%s57]
      %147 = vst [vmem:[%s65 + $0xa0] sm:%s57] %v146
      %v148 = vld [vmem:[%s64 + $0xb0] sm:%s57]
      %149 = vst [vmem:[%s65 + $0xa4] sm:%s57] %v148
      %v150 = vld [vmem:[%s64 + $0xa4] sm:%s57]
      %151 = vst [vmem:[%s65 + $0xa8] sm:%s57] %v150
      %v152 = vld [vmem:[%s64 + $0xb4] sm:%s57]
      %153 = vst [vmem:[%s65 + $0xac] sm:%s57] %v152
      %v154 = vld [vmem:[%s64 + $0xa8] sm:%s57]
      %155 = vst [vmem:[%s65 + $0xb0] sm:%s57] %v154
      %v156 = vld [vmem:[%s64 + $0xb8] sm:%s57]
      %157 = vst [vmem:[%s65 + $0xb4] sm:%s57] %v156
      %v158 = vld [vmem:[%s64 + $0xac] sm:%s57]
      %159 = vst [vmem:[%s65 + $0xb8] sm:%s57] %v158
      %v160 = vld [vmem:[%s64 + $0xbc] sm:%s57]
      %161 = vst [vmem:[%s65 + $0xbc] sm:%s57] %v160
      %v162 = vld [vmem:[%s64 + $0xc0] sm:%s57]
      %163 = vst [vmem:[%s65 + $0xc0] sm:%s57] %v162
      %v164 = vld [vmem:[%s64 + $0xd0] sm:%s57]
      %165 = vst [vmem:[%s65 + $0xc4] sm:%s57] %v164
      %v166 = vld [vmem:[%s64 + $0xc4] sm:%s57]
      %167 = vst [vmem:[%s65 + $0xc8] sm:%s57] %v166
      %v168 = vld [vmem:[%s64 + $0xd4] sm:%s57]
      %169 = vst [vmem:[%s65 + $0xcc] sm:%s57] %v168
      %v170 = vld [vmem:[%s64 + $0xc8] sm:%s57]
      %171 = vst [vmem:[%s65 + $0xd0] sm:%s57] %v170
      %v172 = vld [vmem:[%s64 + $0xd8] sm:%s57]
      %173 = vst [vmem:[%s65 + $0xd4] sm:%s57] %v172
      %v174 = vld [vmem:[%s64 + $0xcc] sm:%s57]
      %175 = vst [vmem:[%s65 + $0xd8] sm:%s57] %v174
      %v176 = vld [vmem:[%s64 + $0xdc] sm:%s57]
      %177 = vst [vmem:[%s65 + $0xdc] sm:%s57] %v176
      %v178 = vld [vmem:[%s64 + $0xe0] sm:%s57]
      %179 = vst [vmem:[%s65 + $0xe0] sm:%s57] %v178
      %v180 = vld [vmem:[%s64 + $0xf0] sm:%s57]
      %181 = vst [vmem:[%s65 + $0xe4] sm:%s57] %v180
      %v182 = vld [vmem:[%s64 + $0xe4] sm:%s57]
      %183 = vst [vmem:[%s65 + $0xe8] sm:%s57] %v182
      %v184 = vld [vmem:[%s64 + $0xf4] sm:%s57]
      %185 = vst [vmem:[%s65 + $0xec] sm:%s57] %v184
      %v186 = vld [vmem:[%s64 + $0xe8] sm:%s57]
      %187 = vst [vmem:[%s65 + $0xf0] sm:%s57] %v186
      %v188 = vld [vmem:[%s64 + $0xf8] sm:%s57]
      %189 = vst [vmem:[%s65 + $0xf4] sm:%s57] %v188
      %v190 = vld [vmem:[%s64 + $0xec] sm:%s57]
      %191 = vst [vmem:[%s65 + $0xf8] sm:%s57] %v190
      %v192 = vld [vmem:[%s64 + $0xfc] sm:%s57]
      %193 = vst [vmem:[%s65 + $0xfc] sm:%s57] %v192
    $region62: #{lstm_model.1} parent=56 // loop_footer
      %s63 = sadd.s32 1, %s59
    $region63: #{lstm_model.1} parent=56 // loop_footer_branch
      %58 = sbr.rel target = $region59
    $region64: #{lstm_model.1} parent=56 // loop_exit
      _
  $region57: #{lstm_model.1} parent=0 // pred_fallthru
    _
  // Predicated region
  $region83: #{lstm_model.1} parent=0 // pred_check
    _
  $region84: #{lstm_model.1} parent=0 // pred_check_branch
    %351 = sbr.rel (0) target = $region86
  $region85: #{lstm_model.1} parent=0 // pred_region
    %352 = vsyncadd [#allocation12], 4096
  $region86: #{lstm_model.1} parent=0 // pred_fallthru
    _
  %s353 = scalar_lea.sflag [#allocation12], 1
  %p355 = scmp.lt.u32.totalorder 4, 8
  %p356 = pneg %p355
  // Predicated region
  $region87: #{lstm_model.1} parent=0 // pred_check
    _
  $region88: #{lstm_model.1} parent=0 // pred_check_branch
    %358 = sbr.rel (%p355) target = $region90
  $region89: #{lstm_model.1} parent=0 // pred_region
    %s499 = sand.u32 4, 7
    %p500 = scmp.eq.s32.totalorder %s499, 0
    %p501 = pneg %p500
    // Predicated region
    $region102: #{lstm_model.1} parent=89 // pred_check
      _
    $region103: #{lstm_model.1} parent=89 // pred_check_branch
      %503 = sbr.rel (%p500) target = $region105
    $region104: #{lstm_model.1} parent=89 // pred_region
      %s504 = sand.u32 4, 7
      %s505 = ssub.s32 4, %s504
      %s506 = scalar_lea.vmem %s13, %s505
      %s507 = ssub.s32 4, %s504
      %s508 = scalar_lea.vmem [#allocation8], %s507
      loop: start=0, step=1, limit=1
      $region106: #{lstm_model.1} parent=104 // loop_pre_header
        _
      $region107: #{lstm_model.1} parent=104 // loop_header
        %s510 = sphi 0, %s514
        %p511 = scmp.ge.s32.totalorder %s510, 1
        %s515 = sphi %s13, %s13
        %s516 = sphi [#allocation8], [#allocation8]
      $region108: #{lstm_model.1} parent=104 // loop_header_branch
        %513 = sbr.rel (%p511) target = $region112
      $region109: #{lstm_model.1} parent=104 // loop_body
        _
      $region110: #{lstm_model.1} parent=104 // loop_footer
        %s514 = sadd.s32 1, %s510
      $region111: #{lstm_model.1} parent=104 // loop_footer_branch
        %509 = sbr.rel target = $region107
      $region112: #{lstm_model.1} parent=104 // loop_exit
        _
      %s517 = sshllo.u32 0, %s504
      loop: start=0, step=1, limit=1
      $region113: #{lstm_model.1} parent=104 // loop_pre_header
        _
      $region114: #{lstm_model.1} parent=104 // loop_header
        %s519 = sphi 0, %s523
        %p520 = scmp.ge.s32.totalorder %s519, 1
        %s524 = sphi %s506, %s506
        %s525 = sphi %s508, %s508
      $region115: #{lstm_model.1} parent=104 // loop_header_branch
        %522 = sbr.rel (%p520) target = $region119
      $region116: #{lstm_model.1} parent=104 // loop_body
        %v526 = vld [vmem:[%s524] sm:%s517]
        %527 = vst [vmem:[%s525] sm:%s517] %v526
        %v528 = vld [vmem:[%s524 + $0x10] sm:%s517]
        %529 = vst [vmem:[%s525 + $0x4] sm:%s517] %v528
        %v530 = vld [vmem:[%s524 + $0x4] sm:%s517]
        %531 = vst [vmem:[%s525 + $0x8] sm:%s517] %v530
        %v532 = vld [vmem:[%s524 + $0x14] sm:%s517]
        %533 = vst [vmem:[%s525 + $0xc] sm:%s517] %v532
        %v534 = vld [vmem:[%s524 + $0x8] sm:%s517]
        %535 = vst [vmem:[%s525 + $0x10] sm:%s517] %v534
        %v536 = vld [vmem:[%s524 + $0x18] sm:%s517]
        %537 = vst [vmem:[%s525 + $0x14] sm:%s517] %v536
        %v538 = vld [vmem:[%s524 + $0xc] sm:%s517]
        %539 = vst [vmem:[%s525 + $0x18] sm:%s517] %v538
        %v540 = vld [vmem:[%s524 + $0x1c] sm:%s517]
        %541 = vst [vmem:[%s525 + $0x1c] sm:%s517] %v540
        %v542 = vld [vmem:[%s524 + $0x20] sm:%s517]
        %543 = vst [vmem:[%s525 + $0x20] sm:%s517] %v542
        %v544 = vld [vmem:[%s524 + $0x30] sm:%s517]
        %545 = vst [vmem:[%s525 + $0x24] sm:%s517] %v544
        %v546 = vld [vmem:[%s524 + $0x24] sm:%s517]
        %547 = vst [vmem:[%s525 + $0x28] sm:%s517] %v546
        %v548 = vld [vmem:[%s524 + $0x34] sm:%s517]
        %549 = vst [vmem:[%s525 + $0x2c] sm:%s517] %v548
        %v550 = vld [vmem:[%s524 + $0x28] sm:%s517]
        %551 = vst [vmem:[%s525 + $0x30] sm:%s517] %v550
        %v552 = vld [vmem:[%s524 + $0x38] sm:%s517]
        %553 = vst [vmem:[%s525 + $0x34] sm:%s517] %v552
        %v554 = vld [vmem:[%s524 + $0x2c] sm:%s517]
        %555 = vst [vmem:[%s525 + $0x38] sm:%s517] %v554
        %v556 = vld [vmem:[%s524 + $0x3c] sm:%s517]
        %557 = vst [vmem:[%s525 + $0x3c] sm:%s517] %v556
        %v558 = vld [vmem:[%s524 + $0x40] sm:%s517]
        %559 = vst [vmem:[%s525 + $0x40] sm:%s517] %v558
        %v560 = vld [vmem:[%s524 + $0x50] sm:%s517]
        %561 = vst [vmem:[%s525 + $0x44] sm:%s517] %v560
        %v562 = vld [vmem:[%s524 + $0x44] sm:%s517]
        %563 = vst [vmem:[%s525 + $0x48] sm:%s517] %v562
        %v564 = vld [vmem:[%s524 + $0x54] sm:%s517]
        %565 = vst [vmem:[%s525 + $0x4c] sm:%s517] %v564
        %v566 = vld [vmem:[%s524 + $0x48] sm:%s517]
        %567 = vst [vmem:[%s525 + $0x50] sm:%s517] %v566
        %v568 = vld [vmem:[%s524 + $0x58] sm:%s517]
        %569 = vst [vmem:[%s525 + $0x54] sm:%s517] %v568
        %v570 = vld [vmem:[%s524 + $0x4c] sm:%s517]
        %571 = vst [vmem:[%s525 + $0x58] sm:%s517] %v570
        %v572 = vld [vmem:[%s524 + $0x5c] sm:%s517]
        %573 = vst [vmem:[%s525 + $0x5c] sm:%s517] %v572
        %v574 = vld [vmem:[%s524 + $0x60] sm:%s517]
        %575 = vst [vmem:[%s525 + $0x60] sm:%s517] %v574
        %v576 = vld [vmem:[%s524 + $0x70] sm:%s517]
        %577 = vst [vmem:[%s525 + $0x64] sm:%s517] %v576
        %v578 = vld [vmem:[%s524 + $0x64] sm:%s517]
        %579 = vst [vmem:[%s525 + $0x68] sm:%s517] %v578
        %v580 = vld [vmem:[%s524 + $0x74] sm:%s517]
        %581 = vst [vmem:[%s525 + $0x6c] sm:%s517] %v580
        %v582 = vld [vmem:[%s524 + $0x68] sm:%s517]
        %583 = vst [vmem:[%s525 + $0x70] sm:%s517] %v582
        %v584 = vld [vmem:[%s524 + $0x78] sm:%s517]
        %585 = vst [vmem:[%s525 + $0x74] sm:%s517] %v584
        %v586 = vld [vmem:[%s524 + $0x6c] sm:%s517]
        %587 = vst [vmem:[%s525 + $0x78] sm:%s517] %v586
        %v588 = vld [vmem:[%s524 + $0x7c] sm:%s517]
        %589 = vst [vmem:[%s525 + $0x7c] sm:%s517] %v588
        %v590 = vld [vmem:[%s524 + $0x80] sm:%s517]
        %591 = vst [vmem:[%s525 + $0x80] sm:%s517] %v590
        %v592 = vld [vmem:[%s524 + $0x90] sm:%s517]
        %593 = vst [vmem:[%s525 + $0x84] sm:%s517] %v592
        %v594 = vld [vmem:[%s524 + $0x84] sm:%s517]
        %595 = vst [vmem:[%s525 + $0x88] sm:%s517] %v594
        %v596 = vld [vmem:[%s524 + $0x94] sm:%s517]
        %597 = vst [vmem:[%s525 + $0x8c] sm:%s517] %v596
        %v598 = vld [vmem:[%s524 + $0x88] sm:%s517]
        %599 = vst [vmem:[%s525 + $0x90] sm:%s517] %v598
        %v600 = vld [vmem:[%s524 + $0x98] sm:%s517]
        %601 = vst [vmem:[%s525 + $0x94] sm:%s517] %v600
        %v602 = vld [vmem:[%s524 + $0x8c] sm:%s517]
        %603 = vst [vmem:[%s525 + $0x98] sm:%s517] %v602
        %v604 = vld [vmem:[%s524 + $0x9c] sm:%s517]
        %605 = vst [vmem:[%s525 + $0x9c] sm:%s517] %v604
        %v606 = vld [vmem:[%s524 + $0xa0] sm:%s517]
        %607 = vst [vmem:[%s525 + $0xa0] sm:%s517] %v606
        %v608 = vld [vmem:[%s524 + $0xb0] sm:%s517]
        %609 = vst [vmem:[%s525 + $0xa4] sm:%s517] %v608
        %v610 = vld [vmem:[%s524 + $0xa4] sm:%s517]
        %611 = vst [vmem:[%s525 + $0xa8] sm:%s517] %v610
        %v612 = vld [vmem:[%s524 + $0xb4] sm:%s517]
        %613 = vst [vmem:[%s525 + $0xac] sm:%s517] %v612
        %v614 = vld [vmem:[%s524 + $0xa8] sm:%s517]
        %615 = vst [vmem:[%s525 + $0xb0] sm:%s517] %v614
        %v616 = vld [vmem:[%s524 + $0xb8] sm:%s517]
        %617 = vst [vmem:[%s525 + $0xb4] sm:%s517] %v616
        %v618 = vld [vmem:[%s524 + $0xac] sm:%s517]
        %619 = vst [vmem:[%s525 + $0xb8] sm:%s517] %v618
        %v620 = vld [vmem:[%s524 + $0xbc] sm:%s517]
        %621 = vst [vmem:[%s525 + $0xbc] sm:%s517] %v620
        %v622 = vld [vmem:[%s524 + $0xc0] sm:%s517]
        %623 = vst [vmem:[%s525 + $0xc0] sm:%s517] %v622
        %v624 = vld [vmem:[%s524 + $0xd0] sm:%s517]
        %625 = vst [vmem:[%s525 + $0xc4] sm:%s517] %v624
        %v626 = vld [vmem:[%s524 + $0xc4] sm:%s517]
        %627 = vst [vmem:[%s525 + $0xc8] sm:%s517] %v626
        %v628 = vld [vmem:[%s524 + $0xd4] sm:%s517]
        %629 = vst [vmem:[%s525 + $0xcc] sm:%s517] %v628
        %v630 = vld [vmem:[%s524 + $0xc8] sm:%s517]
        %631 = vst [vmem:[%s525 + $0xd0] sm:%s517] %v630
        %v632 = vld [vmem:[%s524 + $0xd8] sm:%s517]
        %633 = vst [vmem:[%s525 + $0xd4] sm:%s517] %v632
        %v634 = vld [vmem:[%s524 + $0xcc] sm:%s517]
        %635 = vst [vmem:[%s525 + $0xd8] sm:%s517] %v634
        %v636 = vld [vmem:[%s524 + $0xdc] sm:%s517]
        %637 = vst [vmem:[%s525 + $0xdc] sm:%s517] %v636
        %v638 = vld [vmem:[%s524 + $0xe0] sm:%s517]
        %639 = vst [vmem:[%s525 + $0xe0] sm:%s517] %v638
        %v640 = vld [vmem:[%s524 + $0xf0] sm:%s517]
        %641 = vst [vmem:[%s525 + $0xe4] sm:%s517] %v640
        %v642 = vld [vmem:[%s524 + $0xe4] sm:%s517]
        %643 = vst [vmem:[%s525 + $0xe8] sm:%s517] %v642
        %v644 = vld [vmem:[%s524 + $0xf4] sm:%s517]
        %645 = vst [vmem:[%s525 + $0xec] sm:%s517] %v644
        %v646 = vld [vmem:[%s524 + $0xe8] sm:%s517]
        %647 = vst [vmem:[%s525 + $0xf0] sm:%s517] %v646
        %v648 = vld [vmem:[%s524 + $0xf8] sm:%s517]
        %649 = vst [vmem:[%s525 + $0xf4] sm:%s517] %v648
        %v650 = vld [vmem:[%s524 + $0xec] sm:%s517]
        %651 = vst [vmem:[%s525 + $0xf8] sm:%s517] %v650
        %v652 = vld [vmem:[%s524 + $0xfc] sm:%s517]
        %653 = vst [vmem:[%s525 + $0xfc] sm:%s517] %v652
      $region117: #{lstm_model.1} parent=104 // loop_footer
        %s523 = sadd.s32 1, %s519
      $region118: #{lstm_model.1} parent=104 // loop_footer_branch
        %518 = sbr.rel target = $region114
      $region119: #{lstm_model.1} parent=104 // loop_exit
        _
    $region105: #{lstm_model.1} parent=89 // pred_fallthru
      _
  $region90: #{lstm_model.1} parent=0 // pred_fallthru
    _
  // Predicated region
  $region91: #{lstm_model.1} parent=0 // pred_check
    %p359 = pneg %p355
  $region92: #{lstm_model.1} parent=0 // pred_check_branch
    %361 = sbr.rel (%p359) target = $region94
  $region93: #{lstm_model.1} parent=0 // pred_region
    %s362 = sshllo.u32 0, 4
    loop: start=0, step=1, limit=1
    $region95: #{lstm_model.1} parent=93 // loop_pre_header
      _
    $region96: #{lstm_model.1} parent=93 // loop_header
      %s364 = sphi 0, %s368
      %p365 = scmp.ge.s32.totalorder %s364, 1
      %s369 = sphi %s13, %s13
      %s370 = sphi [#allocation8], [#allocation8]
    $region97: #{lstm_model.1} parent=93 // loop_header_branch
      %367 = sbr.rel (%p365) target = $region101
    $region98: #{lstm_model.1} parent=93 // loop_body
      %v371 = vld [vmem:[%s369] sm:%s362]
      %372 = vst [vmem:[%s370] sm:%s362] %v371
      %v373 = vld [vmem:[%s369 + $0x10] sm:%s362]
      %374 = vst [vmem:[%s370 + $0x4] sm:%s362] %v373
      %v375 = vld [vmem:[%s369 + $0x4] sm:%s362]
      %376 = vst [vmem:[%s370 + $0x8] sm:%s362] %v375
      %v377 = vld [vmem:[%s369 + $0x14] sm:%s362]
      %378 = vst [vmem:[%s370 + $0xc] sm:%s362] %v377
      %v379 = vld [vmem:[%s369 + $0x8] sm:%s362]
      %380 = vst [vmem:[%s370 + $0x10] sm:%s362] %v379
      %v381 = vld [vmem:[%s369 + $0x18] sm:%s362]
      %382 = vst [vmem:[%s370 + $0x14] sm:%s362] %v381
      %v383 = vld [vmem:[%s369 + $0xc] sm:%s362]
      %384 = vst [vmem:[%s370 + $0x18] sm:%s362] %v383
      %v385 = vld [vmem:[%s369 + $0x1c] sm:%s362]
      %386 = vst [vmem:[%s370 + $0x1c] sm:%s362] %v385
      %v387 = vld [vmem:[%s369 + $0x20] sm:%s362]
      %388 = vst [vmem:[%s370 + $0x20] sm:%s362] %v387
      %v389 = vld [vmem:[%s369 + $0x30] sm:%s362]
      %390 = vst [vmem:[%s370 + $0x24] sm:%s362] %v389
      %v391 = vld [vmem:[%s369 + $0x24] sm:%s362]
      %392 = vst [vmem:[%s370 + $0x28] sm:%s362] %v391
      %v393 = vld [vmem:[%s369 + $0x34] sm:%s362]
      %394 = vst [vmem:[%s370 + $0x2c] sm:%s362] %v393
      %v395 = vld [vmem:[%s369 + $0x28] sm:%s362]
      %396 = vst [vmem:[%s370 + $0x30] sm:%s362] %v395
      %v397 = vld [vmem:[%s369 + $0x38] sm:%s362]
      %398 = vst [vmem:[%s370 + $0x34] sm:%s362] %v397
      %v399 = vld [vmem:[%s369 + $0x2c] sm:%s362]
      %400 = vst [vmem:[%s370 + $0x38] sm:%s362] %v399
      %v401 = vld [vmem:[%s369 + $0x3c] sm:%s362]
      %402 = vst [vmem:[%s370 + $0x3c] sm:%s362] %v401
      %v403 = vld [vmem:[%s369 + $0x40] sm:%s362]
      %404 = vst [vmem:[%s370 + $0x40] sm:%s362] %v403
      %v405 = vld [vmem:[%s369 + $0x50] sm:%s362]
      %406 = vst [vmem:[%s370 + $0x44] sm:%s362] %v405
      %v407 = vld [vmem:[%s369 + $0x44] sm:%s362]
      %408 = vst [vmem:[%s370 + $0x48] sm:%s362] %v407
      %v409 = vld [vmem:[%s369 + $0x54] sm:%s362]
      %410 = vst [vmem:[%s370 + $0x4c] sm:%s362] %v409
      %v411 = vld [vmem:[%s369 + $0x48] sm:%s362]
      %412 = vst [vmem:[%s370 + $0x50] sm:%s362] %v411
      %v413 = vld [vmem:[%s369 + $0x58] sm:%s362]
      %414 = vst [vmem:[%s370 + $0x54] sm:%s362] %v413
      %v415 = vld [vmem:[%s369 + $0x4c] sm:%s362]
      %416 = vst [vmem:[%s370 + $0x58] sm:%s362] %v415
      %v417 = vld [vmem:[%s369 + $0x5c] sm:%s362]
      %418 = vst [vmem:[%s370 + $0x5c] sm:%s362] %v417
      %v419 = vld [vmem:[%s369 + $0x60] sm:%s362]
      %420 = vst [vmem:[%s370 + $0x60] sm:%s362] %v419
      %v421 = vld [vmem:[%s369 + $0x70] sm:%s362]
      %422 = vst [vmem:[%s370 + $0x64] sm:%s362] %v421
      %v423 = vld [vmem:[%s369 + $0x64] sm:%s362]
      %424 = vst [vmem:[%s370 + $0x68] sm:%s362] %v423
      %v425 = vld [vmem:[%s369 + $0x74] sm:%s362]
      %426 = vst [vmem:[%s370 + $0x6c] sm:%s362] %v425
      %v427 = vld [vmem:[%s369 + $0x68] sm:%s362]
      %428 = vst [vmem:[%s370 + $0x70] sm:%s362] %v427
      %v429 = vld [vmem:[%s369 + $0x78] sm:%s362]
      %430 = vst [vmem:[%s370 + $0x74] sm:%s362] %v429
      %v431 = vld [vmem:[%s369 + $0x6c] sm:%s362]
      %432 = vst [vmem:[%s370 + $0x78] sm:%s362] %v431
      %v433 = vld [vmem:[%s369 + $0x7c] sm:%s362]
      %434 = vst [vmem:[%s370 + $0x7c] sm:%s362] %v433
      %v435 = vld [vmem:[%s369 + $0x80] sm:%s362]
      %436 = vst [vmem:[%s370 + $0x80] sm:%s362] %v435
      %v437 = vld [vmem:[%s369 + $0x90] sm:%s362]
      %438 = vst [vmem:[%s370 + $0x84] sm:%s362] %v437
      %v439 = vld [vmem:[%s369 + $0x84] sm:%s362]
      %440 = vst [vmem:[%s370 + $0x88] sm:%s362] %v439
      %v441 = vld [vmem:[%s369 + $0x94] sm:%s362]
      %442 = vst [vmem:[%s370 + $0x8c] sm:%s362] %v441
      %v443 = vld [vmem:[%s369 + $0x88] sm:%s362]
      %444 = vst [vmem:[%s370 + $0x90] sm:%s362] %v443
      %v445 = vld [vmem:[%s369 + $0x98] sm:%s362]
      %446 = vst [vmem:[%s370 + $0x94] sm:%s362] %v445
      %v447 = vld [vmem:[%s369 + $0x8c] sm:%s362]
      %448 = vst [vmem:[%s370 + $0x98] sm:%s362] %v447
      %v449 = vld [vmem:[%s369 + $0x9c] sm:%s362]
      %450 = vst [vmem:[%s370 + $0x9c] sm:%s362] %v449
      %v451 = vld [vmem:[%s369 + $0xa0] sm:%s362]
      %452 = vst [vmem:[%s370 + $0xa0] sm:%s362] %v451
      %v453 = vld [vmem:[%s369 + $0xb0] sm:%s362]
      %454 = vst [vmem:[%s370 + $0xa4] sm:%s362] %v453
      %v455 = vld [vmem:[%s369 + $0xa4] sm:%s362]
      %456 = vst [vmem:[%s370 + $0xa8] sm:%s362] %v455
      %v457 = vld [vmem:[%s369 + $0xb4] sm:%s362]
      %458 = vst [vmem:[%s370 + $0xac] sm:%s362] %v457
      %v459 = vld [vmem:[%s369 + $0xa8] sm:%s362]
      %460 = vst [vmem:[%s370 + $0xb0] sm:%s362] %v459
      %v461 = vld [vmem:[%s369 + $0xb8] sm:%s362]
      %462 = vst [vmem:[%s370 + $0xb4] sm:%s362] %v461
      %v463 = vld [vmem:[%s369 + $0xac] sm:%s362]
      %464 = vst [vmem:[%s370 + $0xb8] sm:%s362] %v463
      %v465 = vld [vmem:[%s369 + $0xbc] sm:%s362]
      %466 = vst [vmem:[%s370 + $0xbc] sm:%s362] %v465
      %v467 = vld [vmem:[%s369 + $0xc0] sm:%s362]
      %468 = vst [vmem:[%s370 + $0xc0] sm:%s362] %v467
      %v469 = vld [vmem:[%s369 + $0xd0] sm:%s362]
      %470 = vst [vmem:[%s370 + $0xc4] sm:%s362] %v469
      %v471 = vld [vmem:[%s369 + $0xc4] sm:%s362]
      %472 = vst [vmem:[%s370 + $0xc8] sm:%s362] %v471
      %v473 = vld [vmem:[%s369 + $0xd4] sm:%s362]
      %474 = vst [vmem:[%s370 + $0xcc] sm:%s362] %v473
      %v475 = vld [vmem:[%s369 + $0xc8] sm:%s362]
      %476 = vst [vmem:[%s370 + $0xd0] sm:%s362] %v475
      %v477 = vld [vmem:[%s369 + $0xd8] sm:%s362]
      %478 = vst [vmem:[%s370 + $0xd4] sm:%s362] %v477
      %v479 = vld [vmem:[%s369 + $0xcc] sm:%s362]
      %480 = vst [vmem:[%s370 + $0xd8] sm:%s362] %v479
      %v481 = vld [vmem:[%s369 + $0xdc] sm:%s362]
      %482 = vst [vmem:[%s370 + $0xdc] sm:%s362] %v481
      %v483 = vld [vmem:[%s369 + $0xe0] sm:%s362]
      %484 = vst [vmem:[%s370 + $0xe0] sm:%s362] %v483
      %v485 = vld [vmem:[%s369 + $0xf0] sm:%s362]
      %486 = vst [vmem:[%s370 + $0xe4] sm:%s362] %v485
      %v487 = vld [vmem:[%s369 + $0xe4] sm:%s362]
      %488 = vst [vmem:[%s370 + $0xe8] sm:%s362] %v487
      %v489 = vld [vmem:[%s369 + $0xf4] sm:%s362]
      %490 = vst [vmem:[%s370 + $0xec] sm:%s362] %v489
      %v491 = vld [vmem:[%s369 + $0xe8] sm:%s362]
      %492 = vst [vmem:[%s370 + $0xf0] sm:%s362] %v491
      %v493 = vld [vmem:[%s369 + $0xf8] sm:%s362]
      %494 = vst [vmem:[%s370 + $0xf4] sm:%s362] %v493
      %v495 = vld [vmem:[%s369 + $0xec] sm:%s362]
      %496 = vst [vmem:[%s370 + $0xf8] sm:%s362] %v495
      %v497 = vld [vmem:[%s369 + $0xfc] sm:%s362]
      %498 = vst [vmem:[%s370 + $0xfc] sm:%s362] %v497
    $region99: #{lstm_model.1} parent=93 // loop_footer
      %s368 = sadd.s32 1, %s364
    $region100: #{lstm_model.1} parent=93 // loop_footer_branch
      %363 = sbr.rel target = $region96
    $region101: #{lstm_model.1} parent=93 // loop_exit
      _
  $region94: #{lstm_model.1} parent=0 // pred_fallthru
    _
  // Predicated region
  $region120: #{lstm_model.1} parent=0 // pred_check
    _
  $region121: #{lstm_model.1} parent=0 // pred_check_branch
    %656 = sbr.rel (0) target = $region123
  $region122: #{lstm_model.1} parent=0 // pred_region
    %657 = vsyncadd %s353, 4096
  $region123: #{lstm_model.1} parent=0 // pred_fallthru
    _
  %s658 = scalar_lea.sflag [#allocation12], 2
  %p660 = scmp.lt.u32.totalorder 4, 8
  %p661 = pneg %p660
  // Predicated region
  $region124: #{lstm_model.1} parent=0 // pred_check
    _
  $region125: #{lstm_model.1} parent=0 // pred_check_branch
    %663 = sbr.rel (%p660) target = $region127
  $region126: #{lstm_model.1} parent=0 // pred_region
    %s804 = sand.u32 4, 7
    %p805 = scmp.eq.s32.totalorder %s804, 0
    %p806 = pneg %p805
    // Predicated region
    $region139: #{lstm_model.1} parent=126 // pred_check
      _
    $region140: #{lstm_model.1} parent=126 // pred_check_branch
      %808 = sbr.rel (%p805) target = $region142
    $region141: #{lstm_model.1} parent=126 // pred_region
      %s809 = sand.u32 4, 7
      %s810 = ssub.s32 4, %s809
      %s811 = scalar_lea.vmem %s14, %s810
      %s812 = ssub.s32 4, %s809
      %s813 = scalar_lea.vmem [#allocation9], %s812
      loop: start=0, step=1, limit=1
      $region143: #{lstm_model.1} parent=141 // loop_pre_header
        _
      $region144: #{lstm_model.1} parent=141 // loop_header
        %s815 = sphi 0, %s819
        %p816 = scmp.ge.s32.totalorder %s815, 1
        %s820 = sphi %s14, %s14
        %s821 = sphi [#allocation9], [#allocation9]
      $region145: #{lstm_model.1} parent=141 // loop_header_branch
        %818 = sbr.rel (%p816) target = $region149
      $region146: #{lstm_model.1} parent=141 // loop_body
        _
      $region147: #{lstm_model.1} parent=141 // loop_footer
        %s819 = sadd.s32 1, %s815
      $region148: #{lstm_model.1} parent=141 // loop_footer_branch
        %814 = sbr.rel target = $region144
      $region149: #{lstm_model.1} parent=141 // loop_exit
        _
      %s822 = sshllo.u32 0, %s809
      loop: start=0, step=1, limit=1
      $region150: #{lstm_model.1} parent=141 // loop_pre_header
        _
      $region151: #{lstm_model.1} parent=141 // loop_header
        %s824 = sphi 0, %s828
        %p825 = scmp.ge.s32.totalorder %s824, 1
        %s829 = sphi %s811, %s811
        %s830 = sphi %s813, %s813
      $region152: #{lstm_model.1} parent=141 // loop_header_branch
        %827 = sbr.rel (%p825) target = $region156
      $region153: #{lstm_model.1} parent=141 // loop_body
        %v831 = vld [vmem:[%s829] sm:%s822]
        %832 = vst [vmem:[%s830] sm:%s822] %v831
        %v833 = vld [vmem:[%s829 + $0x10] sm:%s822]
        %834 = vst [vmem:[%s830 + $0x4] sm:%s822] %v833
        %v835 = vld [vmem:[%s829 + $0x4] sm:%s822]
        %836 = vst [vmem:[%s830 + $0x8] sm:%s822] %v835
        %v837 = vld [vmem:[%s829 + $0x14] sm:%s822]
        %838 = vst [vmem:[%s830 + $0xc] sm:%s822] %v837
        %v839 = vld [vmem:[%s829 + $0x8] sm:%s822]
        %840 = vst [vmem:[%s830 + $0x10] sm:%s822] %v839
        %v841 = vld [vmem:[%s829 + $0x18] sm:%s822]
        %842 = vst [vmem:[%s830 + $0x14] sm:%s822] %v841
        %v843 = vld [vmem:[%s829 + $0xc] sm:%s822]
        %844 = vst [vmem:[%s830 + $0x18] sm:%s822] %v843
        %v845 = vld [vmem:[%s829 + $0x1c] sm:%s822]
        %846 = vst [vmem:[%s830 + $0x1c] sm:%s822] %v845
        %v847 = vld [vmem:[%s829 + $0x20] sm:%s822]
        %848 = vst [vmem:[%s830 + $0x20] sm:%s822] %v847
        %v849 = vld [vmem:[%s829 + $0x30] sm:%s822]
        %850 = vst [vmem:[%s830 + $0x24] sm:%s822] %v849
        %v851 = vld [vmem:[%s829 + $0x24] sm:%s822]
        %852 = vst [vmem:[%s830 + $0x28] sm:%s822] %v851
        %v853 = vld [vmem:[%s829 + $0x34] sm:%s822]
        %854 = vst [vmem:[%s830 + $0x2c] sm:%s822] %v853
        %v855 = vld [vmem:[%s829 + $0x28] sm:%s822]
        %856 = vst [vmem:[%s830 + $0x30] sm:%s822] %v855
        %v857 = vld [vmem:[%s829 + $0x38] sm:%s822]
        %858 = vst [vmem:[%s830 + $0x34] sm:%s822] %v857
        %v859 = vld [vmem:[%s829 + $0x2c] sm:%s822]
        %860 = vst [vmem:[%s830 + $0x38] sm:%s822] %v859
        %v861 = vld [vmem:[%s829 + $0x3c] sm:%s822]
        %862 = vst [vmem:[%s830 + $0x3c] sm:%s822] %v861
        %v863 = vld [vmem:[%s829 + $0x40] sm:%s822]
        %864 = vst [vmem:[%s830 + $0x40] sm:%s822] %v863
        %v865 = vld [vmem:[%s829 + $0x50] sm:%s822]
        %866 = vst [vmem:[%s830 + $0x44] sm:%s822] %v865
        %v867 = vld [vmem:[%s829 + $0x44] sm:%s822]
        %868 = vst [vmem:[%s830 + $0x48] sm:%s822] %v867
        %v869 = vld [vmem:[%s829 + $0x54] sm:%s822]
        %870 = vst [vmem:[%s830 + $0x4c] sm:%s822] %v869
        %v871 = vld [vmem:[%s829 + $0x48] sm:%s822]
        %872 = vst [vmem:[%s830 + $0x50] sm:%s822] %v871
        %v873 = vld [vmem:[%s829 + $0x58] sm:%s822]
        %874 = vst [vmem:[%s830 + $0x54] sm:%s822] %v873
        %v875 = vld [vmem:[%s829 + $0x4c] sm:%s822]
        %876 = vst [vmem:[%s830 + $0x58] sm:%s822] %v875
        %v877 = vld [vmem:[%s829 + $0x5c] sm:%s822]
        %878 = vst [vmem:[%s830 + $0x5c] sm:%s822] %v877
        %v879 = vld [vmem:[%s829 + $0x60] sm:%s822]
        %880 = vst [vmem:[%s830 + $0x60] sm:%s822] %v879
        %v881 = vld [vmem:[%s829 + $0x70] sm:%s822]
        %882 = vst [vmem:[%s830 + $0x64] sm:%s822] %v881
        %v883 = vld [vmem:[%s829 + $0x64] sm:%s822]
        %884 = vst [vmem:[%s830 + $0x68] sm:%s822] %v883
        %v885 = vld [vmem:[%s829 + $0x74] sm:%s822]
        %886 = vst [vmem:[%s830 + $0x6c] sm:%s822] %v885
        %v887 = vld [vmem:[%s829 + $0x68] sm:%s822]
        %888 = vst [vmem:[%s830 + $0x70] sm:%s822] %v887
        %v889 = vld [vmem:[%s829 + $0x78] sm:%s822]
        %890 = vst [vmem:[%s830 + $0x74] sm:%s822] %v889
        %v891 = vld [vmem:[%s829 + $0x6c] sm:%s822]
        %892 = vst [vmem:[%s830 + $0x78] sm:%s822] %v891
        %v893 = vld [vmem:[%s829 + $0x7c] sm:%s822]
        %894 = vst [vmem:[%s830 + $0x7c] sm:%s822] %v893
        %v895 = vld [vmem:[%s829 + $0x80] sm:%s822]
        %896 = vst [vmem:[%s830 + $0x80] sm:%s822] %v895
        %v897 = vld [vmem:[%s829 + $0x90] sm:%s822]
        %898 = vst [vmem:[%s830 + $0x84] sm:%s822] %v897
        %v899 = vld [vmem:[%s829 + $0x84] sm:%s822]
        %900 = vst [vmem:[%s830 + $0x88] sm:%s822] %v899
        %v901 = vld [vmem:[%s829 + $0x94] sm:%s822]
        %902 = vst [vmem:[%s830 + $0x8c] sm:%s822] %v901
        %v903 = vld [vmem:[%s829 + $0x88] sm:%s822]
        %904 = vst [vmem:[%s830 + $0x90] sm:%s822] %v903
        %v905 = vld [vmem:[%s829 + $0x98] sm:%s822]
        %906 = vst [vmem:[%s830 + $0x94] sm:%s822] %v905
        %v907 = vld [vmem:[%s829 + $0x8c] sm:%s822]
        %908 = vst [vmem:[%s830 + $0x98] sm:%s822] %v907
        %v909 = vld [vmem:[%s829 + $0x9c] sm:%s822]
        %910 = vst [vmem:[%s830 + $0x9c] sm:%s822] %v909
        %v911 = vld [vmem:[%s829 + $0xa0] sm:%s822]
        %912 = vst [vmem:[%s830 + $0xa0] sm:%s822] %v911
        %v913 = vld [vmem:[%s829 + $0xb0] sm:%s822]
        %914 = vst [vmem:[%s830 + $0xa4] sm:%s822] %v913
        %v915 = vld [vmem:[%s829 + $0xa4] sm:%s822]
        %916 = vst [vmem:[%s830 + $0xa8] sm:%s822] %v915
        %v917 = vld [vmem:[%s829 + $0xb4] sm:%s822]
        %918 = vst [vmem:[%s830 + $0xac] sm:%s822] %v917
        %v919 = vld [vmem:[%s829 + $0xa8] sm:%s822]
        %920 = vst [vmem:[%s830 + $0xb0] sm:%s822] %v919
        %v921 = vld [vmem:[%s829 + $0xb8] sm:%s822]
        %922 = vst [vmem:[%s830 + $0xb4] sm:%s822] %v921
        %v923 = vld [vmem:[%s829 + $0xac] sm:%s822]
        %924 = vst [vmem:[%s830 + $0xb8] sm:%s822] %v923
        %v925 = vld [vmem:[%s829 + $0xbc] sm:%s822]
        %926 = vst [vmem:[%s830 + $0xbc] sm:%s822] %v925
        %v927 = vld [vmem:[%s829 + $0xc0] sm:%s822]
        %928 = vst [vmem:[%s830 + $0xc0] sm:%s822] %v927
        %v929 = vld [vmem:[%s829 + $0xd0] sm:%s822]
        %930 = vst [vmem:[%s830 + $0xc4] sm:%s822] %v929
        %v931 = vld [vmem:[%s829 + $0xc4] sm:%s822]
        %932 = vst [vmem:[%s830 + $0xc8] sm:%s822] %v931
        %v933 = vld [vmem:[%s829 + $0xd4] sm:%s822]
        %934 = vst [vmem:[%s830 + $0xcc] sm:%s822] %v933
        %v935 = vld [vmem:[%s829 + $0xc8] sm:%s822]
        %936 = vst [vmem:[%s830 + $0xd0] sm:%s822] %v935
        %v937 = vld [vmem:[%s829 + $0xd8] sm:%s822]
        %938 = vst [vmem:[%s830 + $0xd4] sm:%s822] %v937
        %v939 = vld [vmem:[%s829 + $0xcc] sm:%s822]
        %940 = vst [vmem:[%s830 + $0xd8] sm:%s822] %v939
        %v941 = vld [vmem:[%s829 + $0xdc] sm:%s822]
        %942 = vst [vmem:[%s830 + $0xdc] sm:%s822] %v941
        %v943 = vld [vmem:[%s829 + $0xe0] sm:%s822]
        %944 = vst [vmem:[%s830 + $0xe0] sm:%s822] %v943
        %v945 = vld [vmem:[%s829 + $0xf0] sm:%s822]
        %946 = vst [vmem:[%s830 + $0xe4] sm:%s822] %v945
        %v947 = vld [vmem:[%s829 + $0xe4] sm:%s822]
        %948 = vst [vmem:[%s830 + $0xe8] sm:%s822] %v947
        %v949 = vld [vmem:[%s829 + $0xf4] sm:%s822]
        %950 = vst [vmem:[%s830 + $0xec] sm:%s822] %v949
        %v951 = vld [vmem:[%s829 + $0xe8] sm:%s822]
        %952 = vst [vmem:[%s830 + $0xf0] sm:%s822] %v951
        %v953 = vld [vmem:[%s829 + $0xf8] sm:%s822]
        %954 = vst [vmem:[%s830 + $0xf4] sm:%s822] %v953
        %v955 = vld [vmem:[%s829 + $0xec] sm:%s822]
        %956 = vst [vmem:[%s830 + $0xf8] sm:%s822] %v955
        %v957 = vld [vmem:[%s829 + $0xfc] sm:%s822]
        %958 = vst [vmem:[%s830 + $0xfc] sm:%s822] %v957
      $region154: #{lstm_model.1} parent=141 // loop_footer
        %s828 = sadd.s32 1, %s824
      $region155: #{lstm_model.1} parent=141 // loop_footer_branch
        %823 = sbr.rel target = $region151
      $region156: #{lstm_model.1} parent=141 // loop_exit
        _
    $region142: #{lstm_model.1} parent=126 // pred_fallthru
      _
  $region127: #{lstm_model.1} parent=0 // pred_fallthru
    _
  // Predicated region
  $region128: #{lstm_model.1} parent=0 // pred_check
    %p664 = pneg %p660
  $region129: #{lstm_model.1} parent=0 // pred_check_branch
    %666 = sbr.rel (%p664) target = $region131
  $region130: #{lstm_model.1} parent=0 // pred_region
    %s667 = sshllo.u32 0, 4
    loop: start=0, step=1, limit=1
    $region132: #{lstm_model.1} parent=130 // loop_pre_header
      _
    $region133: #{lstm_model.1} parent=130 // loop_header
      %s669 = sphi 0, %s673
      %p670 = scmp.ge.s32.totalorder %s669, 1
      %s674 = sphi %s14, %s14
      %s675 = sphi [#allocation9], [#allocation9]
    $region134: #{lstm_model.1} parent=130 // loop_header_branch
      %672 = sbr.rel (%p670) target = $region138
    $region135: #{lstm_model.1} parent=130 // loop_body
      %v676 = vld [vmem:[%s674] sm:%s667]
      %677 = vst [vmem:[%s675] sm:%s667] %v676
      %v678 = vld [vmem:[%s674 + $0x10] sm:%s667]
      %679 = vst [vmem:[%s675 + $0x4] sm:%s667] %v678
      %v680 = vld [vmem:[%s674 + $0x4] sm:%s667]
      %681 = vst [vmem:[%s675 + $0x8] sm:%s667] %v680
      %v682 = vld [vmem:[%s674 + $0x14] sm:%s667]
      %683 = vst [vmem:[%s675 + $0xc] sm:%s667] %v682
      %v684 = vld [vmem:[%s674 + $0x8] sm:%s667]
      %685 = vst [vmem:[%s675 + $0x10] sm:%s667] %v684
      %v686 = vld [vmem:[%s674 + $0x18] sm:%s667]
      %687 = vst [vmem:[%s675 + $0x14] sm:%s667] %v686
      %v688 = vld [vmem:[%s674 + $0xc] sm:%s667]
      %689 = vst [vmem:[%s675 + $0x18] sm:%s667] %v688
      %v690 = vld [vmem:[%s674 + $0x1c] sm:%s667]
      %691 = vst [vmem:[%s675 + $0x1c] sm:%s667] %v690
      %v692 = vld [vmem:[%s674 + $0x20] sm:%s667]
      %693 = vst [vmem:[%s675 + $0x20] sm:%s667] %v692
      %v694 = vld [vmem:[%s674 + $0x30] sm:%s667]
      %695 = vst [vmem:[%s675 + $0x24] sm:%s667] %v694
      %v696 = vld [vmem:[%s674 + $0x24] sm:%s667]
      %697 = vst [vmem:[%s675 + $0x28] sm:%s667] %v696
      %v698 = vld [vmem:[%s674 + $0x34] sm:%s667]
      %699 = vst [vmem:[%s675 + $0x2c] sm:%s667] %v698
      %v700 = vld [vmem:[%s674 + $0x28] sm:%s667]
      %701 = vst [vmem:[%s675 + $0x30] sm:%s667] %v700
      %v702 = vld [vmem:[%s674 + $0x38] sm:%s667]
      %703 = vst [vmem:[%s675 + $0x34] sm:%s667] %v702
      %v704 = vld [vmem:[%s674 + $0x2c] sm:%s667]
      %705 = vst [vmem:[%s675 + $0x38] sm:%s667] %v704
      %v706 = vld [vmem:[%s674 + $0x3c] sm:%s667]
      %707 = vst [vmem:[%s675 + $0x3c] sm:%s667] %v706
      %v708 = vld [vmem:[%s674 + $0x40] sm:%s667]
      %709 = vst [vmem:[%s675 + $0x40] sm:%s667] %v708
      %v710 = vld [vmem:[%s674 + $0x50] sm:%s667]
      %711 = vst [vmem:[%s675 + $0x44] sm:%s667] %v710
      %v712 = vld [vmem:[%s674 + $0x44] sm:%s667]
      %713 = vst [vmem:[%s675 + $0x48] sm:%s667] %v712
      %v714 = vld [vmem:[%s674 + $0x54] sm:%s667]
      %715 = vst [vmem:[%s675 + $0x4c] sm:%s667] %v714
      %v716 = vld [vmem:[%s674 + $0x48] sm:%s667]
      %717 = vst [vmem:[%s675 + $0x50] sm:%s667] %v716
      %v718 = vld [vmem:[%s674 + $0x58] sm:%s667]
      %719 = vst [vmem:[%s675 + $0x54] sm:%s667] %v718
      %v720 = vld [vmem:[%s674 + $0x4c] sm:%s667]
      %721 = vst [vmem:[%s675 + $0x58] sm:%s667] %v720
      %v722 = vld [vmem:[%s674 + $0x5c] sm:%s667]
      %723 = vst [vmem:[%s675 + $0x5c] sm:%s667] %v722
      %v724 = vld [vmem:[%s674 + $0x60] sm:%s667]
      %725 = vst [vmem:[%s675 + $0x60] sm:%s667] %v724
      %v726 = vld [vmem:[%s674 + $0x70] sm:%s667]
      %727 = vst [vmem:[%s675 + $0x64] sm:%s667] %v726
      %v728 = vld [vmem:[%s674 + $0x64] sm:%s667]
      %729 = vst [vmem:[%s675 + $0x68] sm:%s667] %v728
      %v730 = vld [vmem:[%s674 + $0x74] sm:%s667]
      %731 = vst [vmem:[%s675 + $0x6c] sm:%s667] %v730
      %v732 = vld [vmem:[%s674 + $0x68] sm:%s667]
      %733 = vst [vmem:[%s675 + $0x70] sm:%s667] %v732
      %v734 = vld [vmem:[%s674 + $0x78] sm:%s667]
      %735 = vst [vmem:[%s675 + $0x74] sm:%s667] %v734
      %v736 = vld [vmem:[%s674 + $0x6c] sm:%s667]
      %737 = vst [vmem:[%s675 + $0x78] sm:%s667] %v736
      %v738 = vld [vmem:[%s674 + $0x7c] sm:%s667]
      %739 = vst [vmem:[%s675 + $0x7c] sm:%s667] %v738
      %v740 = vld [vmem:[%s674 + $0x80] sm:%s667]
      %741 = vst [vmem:[%s675 + $0x80] sm:%s667] %v740
      %v742 = vld [vmem:[%s674 + $0x90] sm:%s667]
      %743 = vst [vmem:[%s675 + $0x84] sm:%s667] %v742
      %v744 = vld [vmem:[%s674 + $0x84] sm:%s667]
      %745 = vst [vmem:[%s675 + $0x88] sm:%s667] %v744
      %v746 = vld [vmem:[%s674 + $0x94] sm:%s667]
      %747 = vst [vmem:[%s675 + $0x8c] sm:%s667] %v746
      %v748 = vld [vmem:[%s674 + $0x88] sm:%s667]
      %749 = vst [vmem:[%s675 + $0x90] sm:%s667] %v748
      %v750 = vld [vmem:[%s674 + $0x98] sm:%s667]
      %751 = vst [vmem:[%s675 + $0x94] sm:%s667] %v750
      %v752 = vld [vmem:[%s674 + $0x8c] sm:%s667]
      %753 = vst [vmem:[%s675 + $0x98] sm:%s667] %v752
      %v754 = vld [vmem:[%s674 + $0x9c] sm:%s667]
      %755 = vst [vmem:[%s675 + $0x9c] sm:%s667] %v754
      %v756 = vld [vmem:[%s674 + $0xa0] sm:%s667]
      %757 = vst [vmem:[%s675 + $0xa0] sm:%s667] %v756
      %v758 = vld [vmem:[%s674 + $0xb0] sm:%s667]
      %759 = vst [vmem:[%s675 + $0xa4] sm:%s667] %v758
      %v760 = vld [vmem:[%s674 + $0xa4] sm:%s667]
      %761 = vst [vmem:[%s675 + $0xa8] sm:%s667] %v760
      %v762 = vld [vmem:[%s674 + $0xb4] sm:%s667]
      %763 = vst [vmem:[%s675 + $0xac] sm:%s667] %v762
      %v764 = vld [vmem:[%s674 + $0xa8] sm:%s667]
      %765 = vst [vmem:[%s675 + $0xb0] sm:%s667] %v764
      %v766 = vld [vmem:[%s674 + $0xb8] sm:%s667]
      %767 = vst [vmem:[%s675 + $0xb4] sm:%s667] %v766
      %v768 = vld [vmem:[%s674 + $0xac] sm:%s667]
      %769 = vst [vmem:[%s675 + $0xb8] sm:%s667] %v768
      %v770 = vld [vmem:[%s674 + $0xbc] sm:%s667]
      %771 = vst [vmem:[%s675 + $0xbc] sm:%s667] %v770
      %v772 = vld [vmem:[%s674 + $0xc0] sm:%s667]
      %773 = vst [vmem:[%s675 + $0xc0] sm:%s667] %v772
      %v774 = vld [vmem:[%s674 + $0xd0] sm:%s667]
      %775 = vst [vmem:[%s675 + $0xc4] sm:%s667] %v774
      %v776 = vld [vmem:[%s674 + $0xc4] sm:%s667]
      %777 = vst [vmem:[%s675 + $0xc8] sm:%s667] %v776
      %v778 = vld [vmem:[%s674 + $0xd4] sm:%s667]
      %779 = vst [vmem:[%s675 + $0xcc] sm:%s667] %v778
      %v780 = vld [vmem:[%s674 + $0xc8] sm:%s667]
      %781 = vst [vmem:[%s675 + $0xd0] sm:%s667] %v780
      %v782 = vld [vmem:[%s674 + $0xd8] sm:%s667]
      %783 = vst [vmem:[%s675 + $0xd4] sm:%s667] %v782
      %v784 = vld [vmem:[%s674 + $0xcc] sm:%s667]
      %785 = vst [vmem:[%s675 + $0xd8] sm:%s667] %v784
      %v786 = vld [vmem:[%s674 + $0xdc] sm:%s667]
      %787 = vst [vmem:[%s675 + $0xdc] sm:%s667] %v786
      %v788 = vld [vmem:[%s674 + $0xe0] sm:%s667]
      %789 = vst [vmem:[%s675 + $0xe0] sm:%s667] %v788
      %v790 = vld [vmem:[%s674 + $0xf0] sm:%s667]
      %791 = vst [vmem:[%s675 + $0xe4] sm:%s667] %v790
      %v792 = vld [vmem:[%s674 + $0xe4] sm:%s667]
      %793 = vst [vmem:[%s675 + $0xe8] sm:%s667] %v792
      %v794 = vld [vmem:[%s674 + $0xf4] sm:%s667]
      %795 = vst [vmem:[%s675 + $0xec] sm:%s667] %v794
      %v796 = vld [vmem:[%s674 + $0xe8] sm:%s667]
      %797 = vst [vmem:[%s675 + $0xf0] sm:%s667] %v796
      %v798 = vld [vmem:[%s674 + $0xf8] sm:%s667]
      %799 = vst [vmem:[%s675 + $0xf4] sm:%s667] %v798
      %v800 = vld [vmem:[%s674 + $0xec] sm:%s667]
      %801 = vst [vmem:[%s675 + $0xf8] sm:%s667] %v800
      %v802 = vld [vmem:[%s674 + $0xfc] sm:%s667]
      %803 = vst [vmem:[%s675 + $0xfc] sm:%s667] %v802
    $region136: #{lstm_model.1} parent=130 // loop_footer
      %s673 = sadd.s32 1, %s669
    $region137: #{lstm_model.1} parent=130 // loop_footer_branch
      %668 = sbr.rel target = $region133
    $region138: #{lstm_model.1} parent=130 // loop_exit
      _
  $region131: #{lstm_model.1} parent=0 // pred_fallthru
    _
  // Predicated region
  $region157: #{lstm_model.1} parent=0 // pred_check
    _
  $region158: #{lstm_model.1} parent=0 // pred_check_branch
    %961 = sbr.rel (0) target = $region160
  $region159: #{lstm_model.1} parent=0 // pred_region
    %962 = vsyncadd %s658, 4096
  $region160: #{lstm_model.1} parent=0 // pred_fallthru
    _
  %s963 = scalar_lea.sflag [#allocation12], 3
  %p965 = scmp.lt.u32.totalorder 4, 8
  %p966 = pneg %p965
  // Predicated region
  $region161: #{lstm_model.1} parent=0 // pred_check
    _
  $region162: #{lstm_model.1} parent=0 // pred_check_branch
    %968 = sbr.rel (%p965) target = $region164
  $region163: #{lstm_model.1} parent=0 // pred_region
    %s1109 = sand.u32 4, 7
    %p1110 = scmp.eq.s32.totalorder %s1109, 0
    %p1111 = pneg %p1110
    // Predicated region
    $region176: #{lstm_model.1} parent=163 // pred_check
      _
    $region177: #{lstm_model.1} parent=163 // pred_check_branch
      %1113 = sbr.rel (%p1110) target = $region179
    $region178: #{lstm_model.1} parent=163 // pred_region
      %s1114 = sand.u32 4, 7
      %s1115 = ssub.s32 4, %s1114
      %s1116 = scalar_lea.vmem %s15, %s1115
      %s1117 = ssub.s32 4, %s1114
      %s1118 = scalar_lea.vmem [#allocation10], %s1117
      loop: start=0, step=1, limit=1
      $region180: #{lstm_model.1} parent=178 // loop_pre_header
        _
      $region181: #{lstm_model.1} parent=178 // loop_header
        %s1120 = sphi 0, %s1124
        %p1121 = scmp.ge.s32.totalorder %s1120, 1
        %s1125 = sphi %s15, %s15
        %s1126 = sphi [#allocation10], [#allocation10]
      $region182: #{lstm_model.1} parent=178 // loop_header_branch
        %1123 = sbr.rel (%p1121) target = $region186
      $region183: #{lstm_model.1} parent=178 // loop_body
        _
      $region184: #{lstm_model.1} parent=178 // loop_footer
        %s1124 = sadd.s32 1, %s1120
      $region185: #{lstm_model.1} parent=178 // loop_footer_branch
        %1119 = sbr.rel target = $region181
      $region186: #{lstm_model.1} parent=178 // loop_exit
        _
      %s1127 = sshllo.u32 0, %s1114
      loop: start=0, step=1, limit=1
      $region187: #{lstm_model.1} parent=178 // loop_pre_header
        _
      $region188: #{lstm_model.1} parent=178 // loop_header
        %s1129 = sphi 0, %s1133
        %p1130 = scmp.ge.s32.totalorder %s1129, 1
        %s1134 = sphi %s1116, %s1116
        %s1135 = sphi %s1118, %s1118
      $region189: #{lstm_model.1} parent=178 // loop_header_branch
        %1132 = sbr.rel (%p1130) target = $region193
      $region190: #{lstm_model.1} parent=178 // loop_body
        %v1136 = vld [vmem:[%s1134] sm:%s1127]
        %1137 = vst [vmem:[%s1135] sm:%s1127] %v1136
        %v1138 = vld [vmem:[%s1134 + $0x10] sm:%s1127]
        %1139 = vst [vmem:[%s1135 + $0x4] sm:%s1127] %v1138
        %v1140 = vld [vmem:[%s1134 + $0x4] sm:%s1127]
        %1141 = vst [vmem:[%s1135 + $0x8] sm:%s1127] %v1140
        %v1142 = vld [vmem:[%s1134 + $0x14] sm:%s1127]
        %1143 = vst [vmem:[%s1135 + $0xc] sm:%s1127] %v1142
        %v1144 = vld [vmem:[%s1134 + $0x8] sm:%s1127]
        %1145 = vst [vmem:[%s1135 + $0x10] sm:%s1127] %v1144
        %v1146 = vld [vmem:[%s1134 + $0x18] sm:%s1127]
        %1147 = vst [vmem:[%s1135 + $0x14] sm:%s1127] %v1146
        %v1148 = vld [vmem:[%s1134 + $0xc] sm:%s1127]
        %1149 = vst [vmem:[%s1135 + $0x18] sm:%s1127] %v1148
        %v1150 = vld [vmem:[%s1134 + $0x1c] sm:%s1127]
        %1151 = vst [vmem:[%s1135 + $0x1c] sm:%s1127] %v1150
        %v1152 = vld [vmem:[%s1134 + $0x20] sm:%s1127]
        %1153 = vst [vmem:[%s1135 + $0x20] sm:%s1127] %v1152
        %v1154 = vld [vmem:[%s1134 + $0x30] sm:%s1127]
        %1155 = vst [vmem:[%s1135 + $0x24] sm:%s1127] %v1154
        %v1156 = vld [vmem:[%s1134 + $0x24] sm:%s1127]
        %1157 = vst [vmem:[%s1135 + $0x28] sm:%s1127] %v1156
        %v1158 = vld [vmem:[%s1134 + $0x34] sm:%s1127]
        %1159 = vst [vmem:[%s1135 + $0x2c] sm:%s1127] %v1158
        %v1160 = vld [vmem:[%s1134 + $0x28] sm:%s1127]
        %1161 = vst [vmem:[%s1135 + $0x30] sm:%s1127] %v1160
        %v1162 = vld [vmem:[%s1134 + $0x38] sm:%s1127]
        %1163 = vst [vmem:[%s1135 + $0x34] sm:%s1127] %v1162
        %v1164 = vld [vmem:[%s1134 + $0x2c] sm:%s1127]
        %1165 = vst [vmem:[%s1135 + $0x38] sm:%s1127] %v1164
        %v1166 = vld [vmem:[%s1134 + $0x3c] sm:%s1127]
        %1167 = vst [vmem:[%s1135 + $0x3c] sm:%s1127] %v1166
        %v1168 = vld [vmem:[%s1134 + $0x40] sm:%s1127]
        %1169 = vst [vmem:[%s1135 + $0x40] sm:%s1127] %v1168
        %v1170 = vld [vmem:[%s1134 + $0x50] sm:%s1127]
        %1171 = vst [vmem:[%s1135 + $0x44] sm:%s1127] %v1170
        %v1172 = vld [vmem:[%s1134 + $0x44] sm:%s1127]
        %1173 = vst [vmem:[%s1135 + $0x48] sm:%s1127] %v1172
        %v1174 = vld [vmem:[%s1134 + $0x54] sm:%s1127]
        %1175 = vst [vmem:[%s1135 + $0x4c] sm:%s1127] %v1174
        %v1176 = vld [vmem:[%s1134 + $0x48] sm:%s1127]
        %1177 = vst [vmem:[%s1135 + $0x50] sm:%s1127] %v1176
        %v1178 = vld [vmem:[%s1134 + $0x58] sm:%s1127]
        %1179 = vst [vmem:[%s1135 + $0x54] sm:%s1127] %v1178
        %v1180 = vld [vmem:[%s1134 + $0x4c] sm:%s1127]
        %1181 = vst [vmem:[%s1135 + $0x58] sm:%s1127] %v1180
        %v1182 = vld [vmem:[%s1134 + $0x5c] sm:%s1127]
        %1183 = vst [vmem:[%s1135 + $0x5c] sm:%s1127] %v1182
        %v1184 = vld [vmem:[%s1134 + $0x60] sm:%s1127]
        %1185 = vst [vmem:[%s1135 + $0x60] sm:%s1127] %v1184
        %v1186 = vld [vmem:[%s1134 + $0x70] sm:%s1127]
        %1187 = vst [vmem:[%s1135 + $0x64] sm:%s1127] %v1186
        %v1188 = vld [vmem:[%s1134 + $0x64] sm:%s1127]
        %1189 = vst [vmem:[%s1135 + $0x68] sm:%s1127] %v1188
        %v1190 = vld [vmem:[%s1134 + $0x74] sm:%s1127]
        %1191 = vst [vmem:[%s1135 + $0x6c] sm:%s1127] %v1190
        %v1192 = vld [vmem:[%s1134 + $0x68] sm:%s1127]
        %1193 = vst [vmem:[%s1135 + $0x70] sm:%s1127] %v1192
        %v1194 = vld [vmem:[%s1134 + $0x78] sm:%s1127]
        %1195 = vst [vmem:[%s1135 + $0x74] sm:%s1127] %v1194
        %v1196 = vld [vmem:[%s1134 + $0x6c] sm:%s1127]
        %1197 = vst [vmem:[%s1135 + $0x78] sm:%s1127] %v1196
        %v1198 = vld [vmem:[%s1134 + $0x7c] sm:%s1127]
        %1199 = vst [vmem:[%s1135 + $0x7c] sm:%s1127] %v1198
        %v1200 = vld [vmem:[%s1134 + $0x80] sm:%s1127]
        %1201 = vst [vmem:[%s1135 + $0x80] sm:%s1127] %v1200
        %v1202 = vld [vmem:[%s1134 + $0x90] sm:%s1127]
        %1203 = vst [vmem:[%s1135 + $0x84] sm:%s1127] %v1202
        %v1204 = vld [vmem:[%s1134 + $0x84] sm:%s1127]
        %1205 = vst [vmem:[%s1135 + $0x88] sm:%s1127] %v1204
        %v1206 = vld [vmem:[%s1134 + $0x94] sm:%s1127]
        %1207 = vst [vmem:[%s1135 + $0x8c] sm:%s1127] %v1206
        %v1208 = vld [vmem:[%s1134 + $0x88] sm:%s1127]
        %1209 = vst [vmem:[%s1135 + $0x90] sm:%s1127] %v1208
        %v1210 = vld [vmem:[%s1134 + $0x98] sm:%s1127]
        %1211 = vst [vmem:[%s1135 + $0x94] sm:%s1127] %v1210
        %v1212 = vld [vmem:[%s1134 + $0x8c] sm:%s1127]
        %1213 = vst [vmem:[%s1135 + $0x98] sm:%s1127] %v1212
        %v1214 = vld [vmem:[%s1134 + $0x9c] sm:%s1127]
        %1215 = vst [vmem:[%s1135 + $0x9c] sm:%s1127] %v1214
        %v1216 = vld [vmem:[%s1134 + $0xa0] sm:%s1127]
        %1217 = vst [vmem:[%s1135 + $0xa0] sm:%s1127] %v1216
        %v1218 = vld [vmem:[%s1134 + $0xb0] sm:%s1127]
        %1219 = vst [vmem:[%s1135 + $0xa4] sm:%s1127] %v1218
        %v1220 = vld [vmem:[%s1134 + $0xa4] sm:%s1127]
        %1221 = vst [vmem:[%s1135 + $0xa8] sm:%s1127] %v1220
        %v1222 = vld [vmem:[%s1134 + $0xb4] sm:%s1127]
        %1223 = vst [vmem:[%s1135 + $0xac] sm:%s1127] %v1222
        %v1224 = vld [vmem:[%s1134 + $0xa8] sm:%s1127]
        %1225 = vst [vmem:[%s1135 + $0xb0] sm:%s1127] %v1224
        %v1226 = vld [vmem:[%s1134 + $0xb8] sm:%s1127]
        %1227 = vst [vmem:[%s1135 + $0xb4] sm:%s1127] %v1226
        %v1228 = vld [vmem:[%s1134 + $0xac] sm:%s1127]
        %1229 = vst [vmem:[%s1135 + $0xb8] sm:%s1127] %v1228
        %v1230 = vld [vmem:[%s1134 + $0xbc] sm:%s1127]
        %1231 = vst [vmem:[%s1135 + $0xbc] sm:%s1127] %v1230
        %v1232 = vld [vmem:[%s1134 + $0xc0] sm:%s1127]
        %1233 = vst [vmem:[%s1135 + $0xc0] sm:%s1127] %v1232
        %v1234 = vld [vmem:[%s1134 + $0xd0] sm:%s1127]
        %1235 = vst [vmem:[%s1135 + $0xc4] sm:%s1127] %v1234
        %v1236 = vld [vmem:[%s1134 + $0xc4] sm:%s1127]
        %1237 = vst [vmem:[%s1135 + $0xc8] sm:%s1127] %v1236
        %v1238 = vld [vmem:[%s1134 + $0xd4] sm:%s1127]
        %1239 = vst [vmem:[%s1135 + $0xcc] sm:%s1127] %v1238
        %v1240 = vld [vmem:[%s1134 + $0xc8] sm:%s1127]
        %1241 = vst [vmem:[%s1135 + $0xd0] sm:%s1127] %v1240
        %v1242 = vld [vmem:[%s1134 + $0xd8] sm:%s1127]
        %1243 = vst [vmem:[%s1135 + $0xd4] sm:%s1127] %v1242
        %v1244 = vld [vmem:[%s1134 + $0xcc] sm:%s1127]
        %1245 = vst [vmem:[%s1135 + $0xd8] sm:%s1127] %v1244
        %v1246 = vld [vmem:[%s1134 + $0xdc] sm:%s1127]
        %1247 = vst [vmem:[%s1135 + $0xdc] sm:%s1127] %v1246
        %v1248 = vld [vmem:[%s1134 + $0xe0] sm:%s1127]
        %1249 = vst [vmem:[%s1135 + $0xe0] sm:%s1127] %v1248
        %v1250 = vld [vmem:[%s1134 + $0xf0] sm:%s1127]
        %1251 = vst [vmem:[%s1135 + $0xe4] sm:%s1127] %v1250
        %v1252 = vld [vmem:[%s1134 + $0xe4] sm:%s1127]
        %1253 = vst [vmem:[%s1135 + $0xe8] sm:%s1127] %v1252
        %v1254 = vld [vmem:[%s1134 + $0xf4] sm:%s1127]
        %1255 = vst [vmem:[%s1135 + $0xec] sm:%s1127] %v1254
        %v1256 = vld [vmem:[%s1134 + $0xe8] sm:%s1127]
        %1257 = vst [vmem:[%s1135 + $0xf0] sm:%s1127] %v1256
        %v1258 = vld [vmem:[%s1134 + $0xf8] sm:%s1127]
        %1259 = vst [vmem:[%s1135 + $0xf4] sm:%s1127] %v1258
        %v1260 = vld [vmem:[%s1134 + $0xec] sm:%s1127]
        %1261 = vst [vmem:[%s1135 + $0xf8] sm:%s1127] %v1260
        %v1262 = vld [vmem:[%s1134 + $0xfc] sm:%s1127]
        %1263 = vst [vmem:[%s1135 + $0xfc] sm:%s1127] %v1262
      $region191: #{lstm_model.1} parent=178 // loop_footer
        %s1133 = sadd.s32 1, %s1129
      $region192: #{lstm_model.1} parent=178 // loop_footer_branch
        %1128 = sbr.rel target = $region188
      $region193: #{lstm_model.1} parent=178 // loop_exit
        _
    $region179: #{lstm_model.1} parent=163 // pred_fallthru
      _
  $region164: #{lstm_model.1} parent=0 // pred_fallthru
    _
  // Predicated region
  $region165: #{lstm_model.1} parent=0 // pred_check
    %p969 = pneg %p965
  $region166: #{lstm_model.1} parent=0 // pred_check_branch
    %971 = sbr.rel (%p969) target = $region168
  $region167: #{lstm_model.1} parent=0 // pred_region
    %s972 = sshllo.u32 0, 4
    loop: start=0, step=1, limit=1
    $region169: #{lstm_model.1} parent=167 // loop_pre_header
      _
    $region170: #{lstm_model.1} parent=167 // loop_header
      %s974 = sphi 0, %s978
      %p975 = scmp.ge.s32.totalorder %s974, 1
      %s979 = sphi %s15, %s15
      %s980 = sphi [#allocation10], [#allocation10]
    $region171: #{lstm_model.1} parent=167 // loop_header_branch
      %977 = sbr.rel (%p975) target = $region175
    $region172: #{lstm_model.1} parent=167 // loop_body
      %v981 = vld [vmem:[%s979] sm:%s972]
      %982 = vst [vmem:[%s980] sm:%s972] %v981
      %v983 = vld [vmem:[%s979 + $0x10] sm:%s972]
      %984 = vst [vmem:[%s980 + $0x4] sm:%s972] %v983
      %v985 = vld [vmem:[%s979 + $0x4] sm:%s972]
      %986 = vst [vmem:[%s980 + $0x8] sm:%s972] %v985
      %v987 = vld [vmem:[%s979 + $0x14] sm:%s972]
      %988 = vst [vmem:[%s980 + $0xc] sm:%s972] %v987
      %v989 = vld [vmem:[%s979 + $0x8] sm:%s972]
      %990 = vst [vmem:[%s980 + $0x10] sm:%s972] %v989
      %v991 = vld [vmem:[%s979 + $0x18] sm:%s972]
      %992 = vst [vmem:[%s980 + $0x14] sm:%s972] %v991
      %v993 = vld [vmem:[%s979 + $0xc] sm:%s972]
      %994 = vst [vmem:[%s980 + $0x18] sm:%s972] %v993
      %v995 = vld [vmem:[%s979 + $0x1c] sm:%s972]
      %996 = vst [vmem:[%s980 + $0x1c] sm:%s972] %v995
      %v997 = vld [vmem:[%s979 + $0x20] sm:%s972]
      %998 = vst [vmem:[%s980 + $0x20] sm:%s972] %v997
      %v999 = vld [vmem:[%s979 + $0x30] sm:%s972]
      %1000 = vst [vmem:[%s980 + $0x24] sm:%s972] %v999
      %v1001 = vld [vmem:[%s979 + $0x24] sm:%s972]
      %1002 = vst [vmem:[%s980 + $0x28] sm:%s972] %v1001
      %v1003 = vld [vmem:[%s979 + $0x34] sm:%s972]
      %1004 = vst [vmem:[%s980 + $0x2c] sm:%s972] %v1003
      %v1005 = vld [vmem:[%s979 + $0x28] sm:%s972]
      %1006 = vst [vmem:[%s980 + $0x30] sm:%s972] %v1005
      %v1007 = vld [vmem:[%s979 + $0x38] sm:%s972]
      %1008 = vst [vmem:[%s980 + $0x34] sm:%s972] %v1007
      %v1009 = vld [vmem:[%s979 + $0x2c] sm:%s972]
      %1010 = vst [vmem:[%s980 + $0x38] sm:%s972] %v1009
      %v1011 = vld [vmem:[%s979 + $0x3c] sm:%s972]
      %1012 = vst [vmem:[%s980 + $0x3c] sm:%s972] %v1011
      %v1013 = vld [vmem:[%s979 + $0x40] sm:%s972]
      %1014 = vst [vmem:[%s980 + $0x40] sm:%s972] %v1013
      %v1015 = vld [vmem:[%s979 + $0x50] sm:%s972]
      %1016 = vst [vmem:[%s980 + $0x44] sm:%s972] %v1015
      %v1017 = vld [vmem:[%s979 + $0x44] sm:%s972]
      %1018 = vst [vmem:[%s980 + $0x48] sm:%s972] %v1017
      %v1019 = vld [vmem:[%s979 + $0x54] sm:%s972]
      %1020 = vst [vmem:[%s980 + $0x4c] sm:%s972] %v1019
      %v1021 = vld [vmem:[%s979 + $0x48] sm:%s972]
      %1022 = vst [vmem:[%s980 + $0x50] sm:%s972] %v1021
      %v1023 = vld [vmem:[%s979 + $0x58] sm:%s972]
      %1024 = vst [vmem:[%s980 + $0x54] sm:%s972] %v1023
      %v1025 = vld [vmem:[%s979 + $0x4c] sm:%s972]
      %1026 = vst [vmem:[%s980 + $0x58] sm:%s972] %v1025
      %v1027 = vld [vmem:[%s979 + $0x5c] sm:%s972]
      %1028 = vst [vmem:[%s980 + $0x5c] sm:%s972] %v1027
      %v1029 = vld [vmem:[%s979 + $0x60] sm:%s972]
      %1030 = vst [vmem:[%s980 + $0x60] sm:%s972] %v1029
      %v1031 = vld [vmem:[%s979 + $0x70] sm:%s972]
      %1032 = vst [vmem:[%s980 + $0x64] sm:%s972] %v1031
      %v1033 = vld [vmem:[%s979 + $0x64] sm:%s972]
      %1034 = vst [vmem:[%s980 + $0x68] sm:%s972] %v1033
      %v1035 = vld [vmem:[%s979 + $0x74] sm:%s972]
      %1036 = vst [vmem:[%s980 + $0x6c] sm:%s972] %v1035
      %v1037 = vld [vmem:[%s979 + $0x68] sm:%s972]
      %1038 = vst [vmem:[%s980 + $0x70] sm:%s972] %v1037
      %v1039 = vld [vmem:[%s979 + $0x78] sm:%s972]
      %1040 = vst [vmem:[%s980 + $0x74] sm:%s972] %v1039
      %v1041 = vld [vmem:[%s979 + $0x6c] sm:%s972]
      %1042 = vst [vmem:[%s980 + $0x78] sm:%s972] %v1041
      %v1043 = vld [vmem:[%s979 + $0x7c] sm:%s972]
      %1044 = vst [vmem:[%s980 + $0x7c] sm:%s972] %v1043
      %v1045 = vld [vmem:[%s979 + $0x80] sm:%s972]
      %1046 = vst [vmem:[%s980 + $0x80] sm:%s972] %v1045
      %v1047 = vld [vmem:[%s979 + $0x90] sm:%s972]
      %1048 = vst [vmem:[%s980 + $0x84] sm:%s972] %v1047
      %v1049 = vld [vmem:[%s979 + $0x84] sm:%s972]
      %1050 = vst [vmem:[%s980 + $0x88] sm:%s972] %v1049
      %v1051 = vld [vmem:[%s979 + $0x94] sm:%s972]
      %1052 = vst [vmem:[%s980 + $0x8c] sm:%s972] %v1051
      %v1053 = vld [vmem:[%s979 + $0x88] sm:%s972]
      %1054 = vst [vmem:[%s980 + $0x90] sm:%s972] %v1053
      %v1055 = vld [vmem:[%s979 + $0x98] sm:%s972]
      %1056 = vst [vmem:[%s980 + $0x94] sm:%s972] %v1055
      %v1057 = vld [vmem:[%s979 + $0x8c] sm:%s972]
      %1058 = vst [vmem:[%s980 + $0x98] sm:%s972] %v1057
      %v1059 = vld [vmem:[%s979 + $0x9c] sm:%s972]
      %1060 = vst [vmem:[%s980 + $0x9c] sm:%s972] %v1059
      %v1061 = vld [vmem:[%s979 + $0xa0] sm:%s972]
      %1062 = vst [vmem:[%s980 + $0xa0] sm:%s972] %v1061
      %v1063 = vld [vmem:[%s979 + $0xb0] sm:%s972]
      %1064 = vst [vmem:[%s980 + $0xa4] sm:%s972] %v1063
      %v1065 = vld [vmem:[%s979 + $0xa4] sm:%s972]
      %1066 = vst [vmem:[%s980 + $0xa8] sm:%s972] %v1065
      %v1067 = vld [vmem:[%s979 + $0xb4] sm:%s972]
      %1068 = vst [vmem:[%s980 + $0xac] sm:%s972] %v1067
      %v1069 = vld [vmem:[%s979 + $0xa8] sm:%s972]
      %1070 = vst [vmem:[%s980 + $0xb0] sm:%s972] %v1069
      %v1071 = vld [vmem:[%s979 + $0xb8] sm:%s972]
      %1072 = vst [vmem:[%s980 + $0xb4] sm:%s972] %v1071
      %v1073 = vld [vmem:[%s979 + $0xac] sm:%s972]
      %1074 = vst [vmem:[%s980 + $0xb8] sm:%s972] %v1073
      %v1075 = vld [vmem:[%s979 + $0xbc] sm:%s972]
      %1076 = vst [vmem:[%s980 + $0xbc] sm:%s972] %v1075
      %v1077 = vld [vmem:[%s979 + $0xc0] sm:%s972]
      %1078 = vst [vmem:[%s980 + $0xc0] sm:%s972] %v1077
      %v1079 = vld [vmem:[%s979 + $0xd0] sm:%s972]
      %1080 = vst [vmem:[%s980 + $0xc4] sm:%s972] %v1079
      %v1081 = vld [vmem:[%s979 + $0xc4] sm:%s972]
      %1082 = vst [vmem:[%s980 + $0xc8] sm:%s972] %v1081
      %v1083 = vld [vmem:[%s979 + $0xd4] sm:%s972]
      %1084 = vst [vmem:[%s980 + $0xcc] sm:%s972] %v1083
      %v1085 = vld [vmem:[%s979 + $0xc8] sm:%s972]
      %1086 = vst [vmem:[%s980 + $0xd0] sm:%s972] %v1085
      %v1087 = vld [vmem:[%s979 + $0xd8] sm:%s972]
      %1088 = vst [vmem:[%s980 + $0xd4] sm:%s972] %v1087
      %v1089 = vld [vmem:[%s979 + $0xcc] sm:%s972]
      %1090 = vst [vmem:[%s980 + $0xd8] sm:%s972] %v1089
      %v1091 = vld [vmem:[%s979 + $0xdc] sm:%s972]
      %1092 = vst [vmem:[%s980 + $0xdc] sm:%s972] %v1091
      %v1093 = vld [vmem:[%s979 + $0xe0] sm:%s972]
      %1094 = vst [vmem:[%s980 + $0xe0] sm:%s972] %v1093
      %v1095 = vld [vmem:[%s979 + $0xf0] sm:%s972]
      %1096 = vst [vmem:[%s980 + $0xe4] sm:%s972] %v1095
      %v1097 = vld [vmem:[%s979 + $0xe4] sm:%s972]
      %1098 = vst [vmem:[%s980 + $0xe8] sm:%s972] %v1097
      %v1099 = vld [vmem:[%s979 + $0xf4] sm:%s972]
      %1100 = vst [vmem:[%s980 + $0xec] sm:%s972] %v1099
      %v1101 = vld [vmem:[%s979 + $0xe8] sm:%s972]
      %1102 = vst [vmem:[%s980 + $0xf0] sm:%s972] %v1101
      %v1103 = vld [vmem:[%s979 + $0xf8] sm:%s972]
      %1104 = vst [vmem:[%s980 + $0xf4] sm:%s972] %v1103
      %v1105 = vld [vmem:[%s979 + $0xec] sm:%s972]
      %1106 = vst [vmem:[%s980 + $0xf8] sm:%s972] %v1105
      %v1107 = vld [vmem:[%s979 + $0xfc] sm:%s972]
      %1108 = vst [vmem:[%s980 + $0xfc] sm:%s972] %v1107
    $region173: #{lstm_model.1} parent=167 // loop_footer
      %s978 = sadd.s32 1, %s974
    $region174: #{lstm_model.1} parent=167 // loop_footer_branch
      %973 = sbr.rel target = $region170
    $region175: #{lstm_model.1} parent=167 // loop_exit
      _
  $region168: #{lstm_model.1} parent=0 // pred_fallthru
    _
  // Predicated region
  $region194: #{lstm_model.1} parent=0 // pred_check
    _
  $region195: #{lstm_model.1} parent=0 // pred_check_branch
    %1266 = sbr.rel (0) target = $region197
  $region196: #{lstm_model.1} parent=0 // pred_region
    %1267 = vsyncadd %s963, 4096
  $region197: #{lstm_model.1} parent=0 // pred_fallthru
    _
  %s1268 = scalar_lea.sflag [#allocation12], 4
  %p1270 = scmp.lt.u32.totalorder 4, 8
  %p1271 = pneg %p1270
  // Predicated region
  $region198: #{lstm_model.1} parent=0 // pred_check
    _
  $region199: #{lstm_model.1} parent=0 // pred_check_branch
    %1273 = sbr.rel (%p1270) target = $region201
  $region200: #{lstm_model.1} parent=0 // pred_region
    %s1414 = sand.u32 4, 7
    %p1415 = scmp.eq.s32.totalorder %s1414, 0
    %p1416 = pneg %p1415
    // Predicated region
    $region213: #{lstm_model.1} parent=200 // pred_check
      _
    $region214: #{lstm_model.1} parent=200 // pred_check_branch
      %1418 = sbr.rel (%p1415) target = $region216
    $region215: #{lstm_model.1} parent=200 // pred_region
      %s1419 = sand.u32 4, 7
      %s1420 = ssub.s32 4, %s1419
      %s1421 = scalar_lea.vmem %s16, %s1420
      %s1422 = ssub.s32 4, %s1419
      %s1423 = scalar_lea.vmem [#allocation11], %s1422
      loop: start=0, step=1, limit=1
      $region217: #{lstm_model.1} parent=215 // loop_pre_header
        _
      $region218: #{lstm_model.1} parent=215 // loop_header
        %s1425 = sphi 0, %s1429
        %p1426 = scmp.ge.s32.totalorder %s1425, 1
        %s1430 = sphi %s16, %s16
        %s1431 = sphi [#allocation11], [#allocation11]
      $region219: #{lstm_model.1} parent=215 // loop_header_branch
        %1428 = sbr.rel (%p1426) target = $region223
      $region220: #{lstm_model.1} parent=215 // loop_body
        _
      $region221: #{lstm_model.1} parent=215 // loop_footer
        %s1429 = sadd.s32 1, %s1425
      $region222: #{lstm_model.1} parent=215 // loop_footer_branch
        %1424 = sbr.rel target = $region218
      $region223: #{lstm_model.1} parent=215 // loop_exit
        _
      %s1432 = sshllo.u32 0, %s1419
      loop: start=0, step=1, limit=1
      $region224: #{lstm_model.1} parent=215 // loop_pre_header
        _
      $region225: #{lstm_model.1} parent=215 // loop_header
        %s1434 = sphi 0, %s1438
        %p1435 = scmp.ge.s32.totalorder %s1434, 1
        %s1439 = sphi %s1421, %s1421
        %s1440 = sphi %s1423, %s1423
      $region226: #{lstm_model.1} parent=215 // loop_header_branch
        %1437 = sbr.rel (%p1435) target = $region230
      $region227: #{lstm_model.1} parent=215 // loop_body
        %v1441 = vld [vmem:[%s1439] sm:%s1432]
        %1442 = vst [vmem:[%s1440] sm:%s1432] %v1441
        %v1443 = vld [vmem:[%s1439 + $0x10] sm:%s1432]
        %1444 = vst [vmem:[%s1440 + $0x4] sm:%s1432] %v1443
        %v1445 = vld [vmem:[%s1439 + $0x4] sm:%s1432]
        %1446 = vst [vmem:[%s1440 + $0x8] sm:%s1432] %v1445
        %v1447 = vld [vmem:[%s1439 + $0x14] sm:%s1432]
        %1448 = vst [vmem:[%s1440 + $0xc] sm:%s1432] %v1447
        %v1449 = vld [vmem:[%s1439 + $0x8] sm:%s1432]
        %1450 = vst [vmem:[%s1440 + $0x10] sm:%s1432] %v1449
        %v1451 = vld [vmem:[%s1439 + $0x18] sm:%s1432]
        %1452 = vst [vmem:[%s1440 + $0x14] sm:%s1432] %v1451
        %v1453 = vld [vmem:[%s1439 + $0xc] sm:%s1432]
        %1454 = vst [vmem:[%s1440 + $0x18] sm:%s1432] %v1453
        %v1455 = vld [vmem:[%s1439 + $0x1c] sm:%s1432]
        %1456 = vst [vmem:[%s1440 + $0x1c] sm:%s1432] %v1455
        %v1457 = vld [vmem:[%s1439 + $0x20] sm:%s1432]
        %1458 = vst [vmem:[%s1440 + $0x20] sm:%s1432] %v1457
        %v1459 = vld [vmem:[%s1439 + $0x30] sm:%s1432]
        %1460 = vst [vmem:[%s1440 + $0x24] sm:%s1432] %v1459
        %v1461 = vld [vmem:[%s1439 + $0x24] sm:%s1432]
        %1462 = vst [vmem:[%s1440 + $0x28] sm:%s1432] %v1461
        %v1463 = vld [vmem:[%s1439 + $0x34] sm:%s1432]
        %1464 = vst [vmem:[%s1440 + $0x2c] sm:%s1432] %v1463
        %v1465 = vld [vmem:[%s1439 + $0x28] sm:%s1432]
        %1466 = vst [vmem:[%s1440 + $0x30] sm:%s1432] %v1465
        %v1467 = vld [vmem:[%s1439 + $0x38] sm:%s1432]
        %1468 = vst [vmem:[%s1440 + $0x34] sm:%s1432] %v1467
        %v1469 = vld [vmem:[%s1439 + $0x2c] sm:%s1432]
        %1470 = vst [vmem:[%s1440 + $0x38] sm:%s1432] %v1469
        %v1471 = vld [vmem:[%s1439 + $0x3c] sm:%s1432]
        %1472 = vst [vmem:[%s1440 + $0x3c] sm:%s1432] %v1471
        %v1473 = vld [vmem:[%s1439 + $0x40] sm:%s1432]
        %1474 = vst [vmem:[%s1440 + $0x40] sm:%s1432] %v1473
        %v1475 = vld [vmem:[%s1439 + $0x50] sm:%s1432]
        %1476 = vst [vmem:[%s1440 + $0x44] sm:%s1432] %v1475
        %v1477 = vld [vmem:[%s1439 + $0x44] sm:%s1432]
        %1478 = vst [vmem:[%s1440 + $0x48] sm:%s1432] %v1477
        %v1479 = vld [vmem:[%s1439 + $0x54] sm:%s1432]
        %1480 = vst [vmem:[%s1440 + $0x4c] sm:%s1432] %v1479
        %v1481 = vld [vmem:[%s1439 + $0x48] sm:%s1432]
        %1482 = vst [vmem:[%s1440 + $0x50] sm:%s1432] %v1481
        %v1483 = vld [vmem:[%s1439 + $0x58] sm:%s1432]
        %1484 = vst [vmem:[%s1440 + $0x54] sm:%s1432] %v1483
        %v1485 = vld [vmem:[%s1439 + $0x4c] sm:%s1432]
        %1486 = vst [vmem:[%s1440 + $0x58] sm:%s1432] %v1485
        %v1487 = vld [vmem:[%s1439 + $0x5c] sm:%s1432]
        %1488 = vst [vmem:[%s1440 + $0x5c] sm:%s1432] %v1487
        %v1489 = vld [vmem:[%s1439 + $0x60] sm:%s1432]
        %1490 = vst [vmem:[%s1440 + $0x60] sm:%s1432] %v1489
        %v1491 = vld [vmem:[%s1439 + $0x70] sm:%s1432]
        %1492 = vst [vmem:[%s1440 + $0x64] sm:%s1432] %v1491
        %v1493 = vld [vmem:[%s1439 + $0x64] sm:%s1432]
        %1494 = vst [vmem:[%s1440 + $0x68] sm:%s1432] %v1493
        %v1495 = vld [vmem:[%s1439 + $0x74] sm:%s1432]
        %1496 = vst [vmem:[%s1440 + $0x6c] sm:%s1432] %v1495
        %v1497 = vld [vmem:[%s1439 + $0x68] sm:%s1432]
        %1498 = vst [vmem:[%s1440 + $0x70] sm:%s1432] %v1497
        %v1499 = vld [vmem:[%s1439 + $0x78] sm:%s1432]
        %1500 = vst [vmem:[%s1440 + $0x74] sm:%s1432] %v1499
        %v1501 = vld [vmem:[%s1439 + $0x6c] sm:%s1432]
        %1502 = vst [vmem:[%s1440 + $0x78] sm:%s1432] %v1501
        %v1503 = vld [vmem:[%s1439 + $0x7c] sm:%s1432]
        %1504 = vst [vmem:[%s1440 + $0x7c] sm:%s1432] %v1503
        %v1505 = vld [vmem:[%s1439 + $0x80] sm:%s1432]
        %1506 = vst [vmem:[%s1440 + $0x80] sm:%s1432] %v1505
        %v1507 = vld [vmem:[%s1439 + $0x90] sm:%s1432]
        %1508 = vst [vmem:[%s1440 + $0x84] sm:%s1432] %v1507
        %v1509 = vld [vmem:[%s1439 + $0x84] sm:%s1432]
        %1510 = vst [vmem:[%s1440 + $0x88] sm:%s1432] %v1509
        %v1511 = vld [vmem:[%s1439 + $0x94] sm:%s1432]
        %1512 = vst [vmem:[%s1440 + $0x8c] sm:%s1432] %v1511
        %v1513 = vld [vmem:[%s1439 + $0x88] sm:%s1432]
        %1514 = vst [vmem:[%s1440 + $0x90] sm:%s1432] %v1513
        %v1515 = vld [vmem:[%s1439 + $0x98] sm:%s1432]
        %1516 = vst [vmem:[%s1440 + $0x94] sm:%s1432] %v1515
        %v1517 = vld [vmem:[%s1439 + $0x8c] sm:%s1432]
        %1518 = vst [vmem:[%s1440 + $0x98] sm:%s1432] %v1517
        %v1519 = vld [vmem:[%s1439 + $0x9c] sm:%s1432]
        %1520 = vst [vmem:[%s1440 + $0x9c] sm:%s1432] %v1519
        %v1521 = vld [vmem:[%s1439 + $0xa0] sm:%s1432]
        %1522 = vst [vmem:[%s1440 + $0xa0] sm:%s1432] %v1521
        %v1523 = vld [vmem:[%s1439 + $0xb0] sm:%s1432]
        %1524 = vst [vmem:[%s1440 + $0xa4] sm:%s1432] %v1523
        %v1525 = vld [vmem:[%s1439 + $0xa4] sm:%s1432]
        %1526 = vst [vmem:[%s1440 + $0xa8] sm:%s1432] %v1525
        %v1527 = vld [vmem:[%s1439 + $0xb4] sm:%s1432]
        %1528 = vst [vmem:[%s1440 + $0xac] sm:%s1432] %v1527
        %v1529 = vld [vmem:[%s1439 + $0xa8] sm:%s1432]
        %1530 = vst [vmem:[%s1440 + $0xb0] sm:%s1432] %v1529
        %v1531 = vld [vmem:[%s1439 + $0xb8] sm:%s1432]
        %1532 = vst [vmem:[%s1440 + $0xb4] sm:%s1432] %v1531
        %v1533 = vld [vmem:[%s1439 + $0xac] sm:%s1432]
        %1534 = vst [vmem:[%s1440 + $0xb8] sm:%s1432] %v1533
        %v1535 = vld [vmem:[%s1439 + $0xbc] sm:%s1432]
        %1536 = vst [vmem:[%s1440 + $0xbc] sm:%s1432] %v1535
        %v1537 = vld [vmem:[%s1439 + $0xc0] sm:%s1432]
        %1538 = vst [vmem:[%s1440 + $0xc0] sm:%s1432] %v1537
        %v1539 = vld [vmem:[%s1439 + $0xd0] sm:%s1432]
        %1540 = vst [vmem:[%s1440 + $0xc4] sm:%s1432] %v1539
        %v1541 = vld [vmem:[%s1439 + $0xc4] sm:%s1432]
        %1542 = vst [vmem:[%s1440 + $0xc8] sm:%s1432] %v1541
        %v1543 = vld [vmem:[%s1439 + $0xd4] sm:%s1432]
        %1544 = vst [vmem:[%s1440 + $0xcc] sm:%s1432] %v1543
        %v1545 = vld [vmem:[%s1439 + $0xc8] sm:%s1432]
        %1546 = vst [vmem:[%s1440 + $0xd0] sm:%s1432] %v1545
        %v1547 = vld [vmem:[%s1439 + $0xd8] sm:%s1432]
        %1548 = vst [vmem:[%s1440 + $0xd4] sm:%s1432] %v1547
        %v1549 = vld [vmem:[%s1439 + $0xcc] sm:%s1432]
        %1550 = vst [vmem:[%s1440 + $0xd8] sm:%s1432] %v1549
        %v1551 = vld [vmem:[%s1439 + $0xdc] sm:%s1432]
        %1552 = vst [vmem:[%s1440 + $0xdc] sm:%s1432] %v1551
        %v1553 = vld [vmem:[%s1439 + $0xe0] sm:%s1432]
        %1554 = vst [vmem:[%s1440 + $0xe0] sm:%s1432] %v1553
        %v1555 = vld [vmem:[%s1439 + $0xf0] sm:%s1432]
        %1556 = vst [vmem:[%s1440 + $0xe4] sm:%s1432] %v1555
        %v1557 = vld [vmem:[%s1439 + $0xe4] sm:%s1432]
        %1558 = vst [vmem:[%s1440 + $0xe8] sm:%s1432] %v1557
        %v1559 = vld [vmem:[%s1439 + $0xf4] sm:%s1432]
        %1560 = vst [vmem:[%s1440 + $0xec] sm:%s1432] %v1559
        %v1561 = vld [vmem:[%s1439 + $0xe8] sm:%s1432]
        %1562 = vst [vmem:[%s1440 + $0xf0] sm:%s1432] %v1561
        %v1563 = vld [vmem:[%s1439 + $0xf8] sm:%s1432]
        %1564 = vst [vmem:[%s1440 + $0xf4] sm:%s1432] %v1563
        %v1565 = vld [vmem:[%s1439 + $0xec] sm:%s1432]
        %1566 = vst [vmem:[%s1440 + $0xf8] sm:%s1432] %v1565
        %v1567 = vld [vmem:[%s1439 + $0xfc] sm:%s1432]
        %1568 = vst [vmem:[%s1440 + $0xfc] sm:%s1432] %v1567
      $region228: #{lstm_model.1} parent=215 // loop_footer
        %s1438 = sadd.s32 1, %s1434
      $region229: #{lstm_model.1} parent=215 // loop_footer_branch
        %1433 = sbr.rel target = $region225
      $region230: #{lstm_model.1} parent=215 // loop_exit
        _
    $region216: #{lstm_model.1} parent=200 // pred_fallthru
      _
  $region201: #{lstm_model.1} parent=0 // pred_fallthru
    _
  // Predicated region
  $region202: #{lstm_model.1} parent=0 // pred_check
    %p1274 = pneg %p1270
  $region203: #{lstm_model.1} parent=0 // pred_check_branch
    %1276 = sbr.rel (%p1274) target = $region205
  $region204: #{lstm_model.1} parent=0 // pred_region
    %s1277 = sshllo.u32 0, 4
    loop: start=0, step=1, limit=1
    $region206: #{lstm_model.1} parent=204 // loop_pre_header
      _
    $region207: #{lstm_model.1} parent=204 // loop_header
      %s1279 = sphi 0, %s1283
      %p1280 = scmp.ge.s32.totalorder %s1279, 1
      %s1284 = sphi %s16, %s16
      %s1285 = sphi [#allocation11], [#allocation11]
    $region208: #{lstm_model.1} parent=204 // loop_header_branch
      %1282 = sbr.rel (%p1280) target = $region212
    $region209: #{lstm_model.1} parent=204 // loop_body
      %v1286 = vld [vmem:[%s1284] sm:%s1277]
      %1287 = vst [vmem:[%s1285] sm:%s1277] %v1286
      %v1288 = vld [vmem:[%s1284 + $0x10] sm:%s1277]
      %1289 = vst [vmem:[%s1285 + $0x4] sm:%s1277] %v1288
      %v1290 = vld [vmem:[%s1284 + $0x4] sm:%s1277]
      %1291 = vst [vmem:[%s1285 + $0x8] sm:%s1277] %v1290
      %v1292 = vld [vmem:[%s1284 + $0x14] sm:%s1277]
      %1293 = vst [vmem:[%s1285 + $0xc] sm:%s1277] %v1292
      %v1294 = vld [vmem:[%s1284 + $0x8] sm:%s1277]
      %1295 = vst [vmem:[%s1285 + $0x10] sm:%s1277] %v1294
      %v1296 = vld [vmem:[%s1284 + $0x18] sm:%s1277]
      %1297 = vst [vmem:[%s1285 + $0x14] sm:%s1277] %v1296
      %v1298 = vld [vmem:[%s1284 + $0xc] sm:%s1277]
      %1299 = vst [vmem:[%s1285 + $0x18] sm:%s1277] %v1298
      %v1300 = vld [vmem:[%s1284 + $0x1c] sm:%s1277]
      %1301 = vst [vmem:[%s1285 + $0x1c] sm:%s1277] %v1300
      %v1302 = vld [vmem:[%s1284 + $0x20] sm:%s1277]
      %1303 = vst [vmem:[%s1285 + $0x20] sm:%s1277] %v1302
      %v1304 = vld [vmem:[%s1284 + $0x30] sm:%s1277]
      %1305 = vst [vmem:[%s1285 + $0x24] sm:%s1277] %v1304
      %v1306 = vld [vmem:[%s1284 + $0x24] sm:%s1277]
      %1307 = vst [vmem:[%s1285 + $0x28] sm:%s1277] %v1306
      %v1308 = vld [vmem:[%s1284 + $0x34] sm:%s1277]
      %1309 = vst [vmem:[%s1285 + $0x2c] sm:%s1277] %v1308
      %v1310 = vld [vmem:[%s1284 + $0x28] sm:%s1277]
      %1311 = vst [vmem:[%s1285 + $0x30] sm:%s1277] %v1310
      %v1312 = vld [vmem:[%s1284 + $0x38] sm:%s1277]
      %1313 = vst [vmem:[%s1285 + $0x34] sm:%s1277] %v1312
      %v1314 = vld [vmem:[%s1284 + $0x2c] sm:%s1277]
      %1315 = vst [vmem:[%s1285 + $0x38] sm:%s1277] %v1314
      %v1316 = vld [vmem:[%s1284 + $0x3c] sm:%s1277]
      %1317 = vst [vmem:[%s1285 + $0x3c] sm:%s1277] %v1316
      %v1318 = vld [vmem:[%s1284 + $0x40] sm:%s1277]
      %1319 = vst [vmem:[%s1285 + $0x40] sm:%s1277] %v1318
      %v1320 = vld [vmem:[%s1284 + $0x50] sm:%s1277]
      %1321 = vst [vmem:[%s1285 + $0x44] sm:%s1277] %v1320
      %v1322 = vld [vmem:[%s1284 + $0x44] sm:%s1277]
      %1323 = vst [vmem:[%s1285 + $0x48] sm:%s1277] %v1322
      %v1324 = vld [vmem:[%s1284 + $0x54] sm:%s1277]
      %1325 = vst [vmem:[%s1285 + $0x4c] sm:%s1277] %v1324
      %v1326 = vld [vmem:[%s1284 + $0x48] sm:%s1277]
      %1327 = vst [vmem:[%s1285 + $0x50] sm:%s1277] %v1326
      %v1328 = vld [vmem:[%s1284 + $0x58] sm:%s1277]
      %1329 = vst [vmem:[%s1285 + $0x54] sm:%s1277] %v1328
      %v1330 = vld [vmem:[%s1284 + $0x4c] sm:%s1277]
      %1331 = vst [vmem:[%s1285 + $0x58] sm:%s1277] %v1330
      %v1332 = vld [vmem:[%s1284 + $0x5c] sm:%s1277]
      %1333 = vst [vmem:[%s1285 + $0x5c] sm:%s1277] %v1332
      %v1334 = vld [vmem:[%s1284 + $0x60] sm:%s1277]
      %1335 = vst [vmem:[%s1285 + $0x60] sm:%s1277] %v1334
      %v1336 = vld [vmem:[%s1284 + $0x70] sm:%s1277]
      %1337 = vst [vmem:[%s1285 + $0x64] sm:%s1277] %v1336
      %v1338 = vld [vmem:[%s1284 + $0x64] sm:%s1277]
      %1339 = vst [vmem:[%s1285 + $0x68] sm:%s1277] %v1338
      %v1340 = vld [vmem:[%s1284 + $0x74] sm:%s1277]
      %1341 = vst [vmem:[%s1285 + $0x6c] sm:%s1277] %v1340
      %v1342 = vld [vmem:[%s1284 + $0x68] sm:%s1277]
      %1343 = vst [vmem:[%s1285 + $0x70] sm:%s1277] %v1342
      %v1344 = vld [vmem:[%s1284 + $0x78] sm:%s1277]
      %1345 = vst [vmem:[%s1285 + $0x74] sm:%s1277] %v1344
      %v1346 = vld [vmem:[%s1284 + $0x6c] sm:%s1277]
      %1347 = vst [vmem:[%s1285 + $0x78] sm:%s1277] %v1346
      %v1348 = vld [vmem:[%s1284 + $0x7c] sm:%s1277]
      %1349 = vst [vmem:[%s1285 + $0x7c] sm:%s1277] %v1348
      %v1350 = vld [vmem:[%s1284 + $0x80] sm:%s1277]
      %1351 = vst [vmem:[%s1285 + $0x80] sm:%s1277] %v1350
      %v1352 = vld [vmem:[%s1284 + $0x90] sm:%s1277]
      %1353 = vst [vmem:[%s1285 + $0x84] sm:%s1277] %v1352
      %v1354 = vld [vmem:[%s1284 + $0x84] sm:%s1277]
      %1355 = vst [vmem:[%s1285 + $0x88] sm:%s1277] %v1354
      %v1356 = vld [vmem:[%s1284 + $0x94] sm:%s1277]
      %1357 = vst [vmem:[%s1285 + $0x8c] sm:%s1277] %v1356
      %v1358 = vld [vmem:[%s1284 + $0x88] sm:%s1277]
      %1359 = vst [vmem:[%s1285 + $0x90] sm:%s1277] %v1358
      %v1360 = vld [vmem:[%s1284 + $0x98] sm:%s1277]
      %1361 = vst [vmem:[%s1285 + $0x94] sm:%s1277] %v1360
      %v1362 = vld [vmem:[%s1284 + $0x8c] sm:%s1277]
      %1363 = vst [vmem:[%s1285 + $0x98] sm:%s1277] %v1362
      %v1364 = vld [vmem:[%s1284 + $0x9c] sm:%s1277]
      %1365 = vst [vmem:[%s1285 + $0x9c] sm:%s1277] %v1364
      %v1366 = vld [vmem:[%s1284 + $0xa0] sm:%s1277]
      %1367 = vst [vmem:[%s1285 + $0xa0] sm:%s1277] %v1366
      %v1368 = vld [vmem:[%s1284 + $0xb0] sm:%s1277]
      %1369 = vst [vmem:[%s1285 + $0xa4] sm:%s1277] %v1368
      %v1370 = vld [vmem:[%s1284 + $0xa4] sm:%s1277]
      %1371 = vst [vmem:[%s1285 + $0xa8] sm:%s1277] %v1370
      %v1372 = vld [vmem:[%s1284 + $0xb4] sm:%s1277]
      %1373 = vst [vmem:[%s1285 + $0xac] sm:%s1277] %v1372
      %v1374 = vld [vmem:[%s1284 + $0xa8] sm:%s1277]
      %1375 = vst [vmem:[%s1285 + $0xb0] sm:%s1277] %v1374
      %v1376 = vld [vmem:[%s1284 + $0xb8] sm:%s1277]
      %1377 = vst [vmem:[%s1285 + $0xb4] sm:%s1277] %v1376
      %v1378 = vld [vmem:[%s1284 + $0xac] sm:%s1277]
      %1379 = vst [vmem:[%s1285 + $0xb8] sm:%s1277] %v1378
      %v1380 = vld [vmem:[%s1284 + $0xbc] sm:%s1277]
      %1381 = vst [vmem:[%s1285 + $0xbc] sm:%s1277] %v1380
      %v1382 = vld [vmem:[%s1284 + $0xc0] sm:%s1277]
      %1383 = vst [vmem:[%s1285 + $0xc0] sm:%s1277] %v1382
      %v1384 = vld [vmem:[%s1284 + $0xd0] sm:%s1277]
      %1385 = vst [vmem:[%s1285 + $0xc4] sm:%s1277] %v1384
      %v1386 = vld [vmem:[%s1284 + $0xc4] sm:%s1277]
      %1387 = vst [vmem:[%s1285 + $0xc8] sm:%s1277] %v1386
      %v1388 = vld [vmem:[%s1284 + $0xd4] sm:%s1277]
      %1389 = vst [vmem:[%s1285 + $0xcc] sm:%s1277] %v1388
      %v1390 = vld [vmem:[%s1284 + $0xc8] sm:%s1277]
      %1391 = vst [vmem:[%s1285 + $0xd0] sm:%s1277] %v1390
      %v1392 = vld [vmem:[%s1284 + $0xd8] sm:%s1277]
      %1393 = vst [vmem:[%s1285 + $0xd4] sm:%s1277] %v1392
      %v1394 = vld [vmem:[%s1284 + $0xcc] sm:%s1277]
      %1395 = vst [vmem:[%s1285 + $0xd8] sm:%s1277] %v1394
      %v1396 = vld [vmem:[%s1284 + $0xdc] sm:%s1277]
      %1397 = vst [vmem:[%s1285 + $0xdc] sm:%s1277] %v1396
      %v1398 = vld [vmem:[%s1284 + $0xe0] sm:%s1277]
      %1399 = vst [vmem:[%s1285 + $0xe0] sm:%s1277] %v1398
      %v1400 = vld [vmem:[%s1284 + $0xf0] sm:%s1277]
      %1401 = vst [vmem:[%s1285 + $0xe4] sm:%s1277] %v1400
      %v1402 = vld [vmem:[%s1284 + $0xe4] sm:%s1277]
      %1403 = vst [vmem:[%s1285 + $0xe8] sm:%s1277] %v1402
      %v1404 = vld [vmem:[%s1284 + $0xf4] sm:%s1277]
      %1405 = vst [vmem:[%s1285 + $0xec] sm:%s1277] %v1404
      %v1406 = vld [vmem:[%s1284 + $0xe8] sm:%s1277]
      %1407 = vst [vmem:[%s1285 + $0xf0] sm:%s1277] %v1406
      %v1408 = vld [vmem:[%s1284 + $0xf8] sm:%s1277]
      %1409 = vst [vmem:[%s1285 + $0xf4] sm:%s1277] %v1408
      %v1410 = vld [vmem:[%s1284 + $0xec] sm:%s1277]
      %1411 = vst [vmem:[%s1285 + $0xf8] sm:%s1277] %v1410
      %v1412 = vld [vmem:[%s1284 + $0xfc] sm:%s1277]
      %1413 = vst [vmem:[%s1285 + $0xfc] sm:%s1277] %v1412
    $region210: #{lstm_model.1} parent=204 // loop_footer
      %s1283 = sadd.s32 1, %s1279
    $region211: #{lstm_model.1} parent=204 // loop_footer_branch
      %1278 = sbr.rel target = $region207
    $region212: #{lstm_model.1} parent=204 // loop_exit
      _
  $region205: #{lstm_model.1} parent=0 // pred_fallthru
    _
  // Predicated region
  $region231: #{lstm_model.1} parent=0 // pred_check
    _
  $region232: #{lstm_model.1} parent=0 // pred_check_branch
    %1571 = sbr.rel (0) target = $region234
  $region233: #{lstm_model.1} parent=0 // pred_region
    %1572 = vsyncadd %s1268, 4096
  $region234: #{lstm_model.1} parent=0 // pred_fallthru
    _
  %v1573 = vld [vmem:[%s0] sm:$0xf]
  %v1574 = vld [vmem:[%s0 + $0x4] sm:$0xf]
  %v1575 = vld [vmem:[%s1] sm:$0xff]
  %v1576 = vld [vmem:[%s1 + $0x8] sm:$0xff]
  %v1577 = vld [vmem:[%s1 + $0x10] sm:$0xff]
  %v1578 = vld [vmem:[%s1 + $0x18] sm:$0xff]
  %v1579 = vld [vmem:[%s2] sm:$0xf]
  %v1581 = vlaneseq
  %v1582 = vshrl.u32 %v1581, 7
  %v1583 = vsub.s32 0, %v1582
  %v1584 = vrot.slane %v1579, %v1583
  %v1585 = vlaneseq
  %v1586 = vshrl.u32 %v1585, 7
  %v1587 = vsub.s32 1, %v1586
  %v1588 = vrot.slane %v1579, %v1587
  %v1589 = vlaneseq
  %v1590 = vshrl.u32 %v1589, 7
  %v1591 = vsub.s32 2, %v1590
  %v1592 = vrot.slane %v1579, %v1591
  %v1593 = vlaneseq
  %v1594 = vshrl.u32 %v1593, 7
  %v1595 = vsub.s32 3, %v1594
  %v1596 = vrot.slane %v1579, %v1595
  %v1603 = vunpack.c.l.b16 %v1573
  %v1604 = vunpack.c.l.b16 %v1574
  %v1605 = vpack.c.b16 %v1604, %v1603
  %v1610 = vunpack.c.l.b16 %v1575
  %v1611 = vunpack.c.h.b16 %v1575
  %v1612 = vunpack.c.l.b16 %v1576
  %v1613 = vunpack.c.h.b16 %v1576
  %v1614 = vunpack.c.l.b16 %v1577
  %v1615 = vunpack.c.h.b16 %v1577
  %v1616 = vunpack.c.l.b16 %v1578
  %v1617 = vunpack.c.h.b16 %v1578
  %v1618 = vpack.c.b16 %v1614, %v1610
  %v1619 = vpack.c.b16 %v1615, %v1611
  %v1620 = vpack.c.b16 %v1616, %v1612
  %v1621 = vpack.c.b16 %v1617, %v1613
  %vm1626 = vcmask 130048
  %v1628 = vsel %vm1626, %v1605, 0
  %1630 = vmatprep.subr.bf16.mxu0 %v1619
  %1631 = vmatpush1.bf16.msra.mxu0 %v1618
  %1632 = vmatprep.subr.bf16.mxu0 0
  %1633 = vmatpush1.bf16.msra.mxu0 0
  %1634 = vmatprep.subr.bf16.mxu0 0
  %1635 = vmatpush1.bf16.msra.mxu0 0
  %1636 = vmatprep.subr.bf16.mxu0 0
  %1637 = vmatpush1.bf16.msra.mxu0 0
  %1638 = vmatprep.subr.bf16.mxu0 0
  %1639 = vmatpush1.bf16.msra.mxu0 0
  %1640 = vmatprep.subr.bf16.mxu0 0
  %1641 = vmatpush1.bf16.msra.mxu0 0
  %1642 = vmatprep.subr.bf16.mxu0 0
  %1643 = vmatpush1.bf16.msra.mxu0 0
  %1644 = vmatprep.subr.bf16.mxu0 0
  %1645 = vmatpush1.bf16.msra.mxu0 0
  %1646 = vmatprep.subr.bf16.mxu0 0
  %1647 = vmatpush1.bf16.msra.mxu0 0
  %1648 = vmatprep.subr.bf16.mxu0 0
  %1649 = vmatpush1.bf16.msra.mxu0 0
  %1650 = vmatprep.subr.bf16.mxu0 0
  %1651 = vmatpush1.bf16.msra.mxu0 0
  %1652 = vmatprep.subr.bf16.mxu0 0
  %1653 = vmatpush1.bf16.msra.mxu0 0
  %1654 = vmatprep.subr.bf16.mxu0 0
  %1655 = vmatpush1.bf16.msra.mxu0 0
  %1656 = vmatprep.subr.bf16.mxu0 0
  %1657 = vmatpush1.bf16.msra.mxu0 0
  %1658 = vmatprep.subr.bf16.mxu0 0
  %1659 = vmatpush1.bf16.msra.mxu0 0
  %1660 = vmatprep.subr.bf16.mxu0 0
  %1661 = vmatpush1.bf16.msra.mxu0 0
  %1662 = vmatprep.mubr.bf16.mxu0 0
  %1663 = vmatmul.mubr.bf16.gmra.mrb[0].mxu0 %v1628
  %v1664 = vpop.f32.mrb[0].mxu0
  %v1665 = vadd.f32 %v1584, %v1664
  %v1666 = vpop.f32.mrb[0].mxu0
  %v1667 = vadd.f32 %v1588, %v1666
  %v1668 = vpop.f32.mrb[0].mxu0
  %v1669 = vadd.f32 %v1584, %v1668
  %v1670 = vpop.f32.mrb[0].mxu0
  %v1671 = vadd.f32 %v1588, %v1670
  %1672 = vdwg.mxu0
  %1673 = vmatprep.subr.bf16.mxu0 %v1621
  %1674 = vmatpush1.bf16.msra.mxu0 %v1620
  %1675 = vmatprep.subr.bf16.mxu0 0
  %1676 = vmatpush1.bf16.msra.mxu0 0
  %1677 = vmatprep.subr.bf16.mxu0 0
  %1678 = vmatpush1.bf16.msra.mxu0 0
  %1679 = vmatprep.subr.bf16.mxu0 0
  %1680 = vmatpush1.bf16.msra.mxu0 0
  %1681 = vmatprep.subr.bf16.mxu0 0
  %1682 = vmatpush1.bf16.msra.mxu0 0
  %1683 = vmatprep.subr.bf16.mxu0 0
  %1684 = vmatpush1.bf16.msra.mxu0 0
  %1685 = vmatprep.subr.bf16.mxu0 0
  %1686 = vmatpush1.bf16.msra.mxu0 0
  %1687 = vmatprep.subr.bf16.mxu0 0
  %1688 = vmatpush1.bf16.msra.mxu0 0
  %1689 = vmatprep.subr.bf16.mxu0 0
  %1690 = vmatpush1.bf16.msra.mxu0 0
  %1691 = vmatprep.subr.bf16.mxu0 0
  %1692 = vmatpush1.bf16.msra.mxu0 0
  %1693 = vmatprep.subr.bf16.mxu0 0
  %1694 = vmatpush1.bf16.msra.mxu0 0
  %1695 = vmatprep.subr.bf16.mxu0 0
  %1696 = vmatpush1.bf16.msra.mxu0 0
  %1697 = vmatprep.subr.bf16.mxu0 0
  %1698 = vmatpush1.bf16.msra.mxu0 0
  %1699 = vmatprep.subr.bf16.mxu0 0
  %1700 = vmatpush1.bf16.msra.mxu0 0
  %1701 = vmatprep.subr.bf16.mxu0 0
  %1702 = vmatpush1.bf16.msra.mxu0 0
  %1703 = vmatprep.subr.bf16.mxu0 0
  %1704 = vmatpush1.bf16.msra.mxu0 0
  %1705 = vmatprep.mubr.bf16.mxu0 0
  %1706 = vmatmul.mubr.bf16.gmra.mrb[0].mxu0 %v1628
  %v1707 = vpop.f32.mrb[0].mxu0
  %v1708 = vadd.f32 %v1592, %v1707
  %v1709 = vpop.f32.mrb[0].mxu0
  %v1710 = vadd.f32 %v1596, %v1709
  %v1711 = vpop.f32.mrb[0].mxu0
  %v1712 = vadd.f32 %v1592, %v1711
  %v1713 = vpop.f32.mrb[0].mxu0
  %v1714 = vadd.f32 %v1596, %v1713
  %1715 = vdwg.mxu0
  %1716 = vst [vmem:[#allocation2] sm:$0xff] %v1665
  %1717 = vst [vmem:[#allocation2 + $0x8] sm:$0xff] %v1667
  %1718 = vst [vmem:[#allocation2 + $0x10] sm:$0xff] %v1708
  %1719 = vst [vmem:[#allocation2 + $0x18] sm:$0xff] %v1710
  %1720 = vst [vmem:[#allocation2 + $0x20] sm:$0xff] %v1669
  %1721 = vst [vmem:[#allocation2 + $0x28] sm:$0xff] %v1671
  %1722 = vst [vmem:[#allocation2 + $0x30] sm:$0xff] %v1712
  %1723 = vst [vmem:[#allocation2 + $0x38] sm:$0xff] %v1714
  %v1724 = vld [vmem:[%s4] sm:$0xff]
  %v1725 = vld [vmem:[%s4 + $0x8] sm:$0xff]
  %v1726 = vld [vmem:[%s4 + $0x10] sm:$0xff]
  %v1727 = vld [vmem:[%s4 + $0x18] sm:$0xff]
  %v1728 = vld [vmem:[%s5] sm:$0xf]
  %v1730 = vlaneseq
  %v1731 = vshrl.u32 %v1730, 7
  %v1732 = vsub.s32 0, %v1731
  %v1733 = vrot.slane %v1728, %v1732
  %v1734 = vlaneseq
  %v1735 = vshrl.u32 %v1734, 7
  %v1736 = vsub.s32 1, %v1735
  %v1737 = vrot.slane %v1728, %v1736
  %v1738 = vlaneseq
  %v1739 = vshrl.u32 %v1738, 7
  %v1740 = vsub.s32 2, %v1739
  %v1741 = vrot.slane %v1728, %v1740
  %v1742 = vlaneseq
  %v1743 = vshrl.u32 %v1742, 7
  %v1744 = vsub.s32 3, %v1743
  %v1745 = vrot.slane %v1728, %v1744
  %v1754 = vunpack.c.l.b16 %v1724
  %v1755 = vunpack.c.h.b16 %v1724
  %v1756 = vunpack.c.l.b16 %v1725
  %v1757 = vunpack.c.h.b16 %v1725
  %v1758 = vunpack.c.l.b16 %v1726
  %v1759 = vunpack.c.h.b16 %v1726
  %v1760 = vunpack.c.l.b16 %v1727
  %v1761 = vunpack.c.h.b16 %v1727
  %v1762 = vpack.c.b16 %v1758, %v1754
  %v1763 = vpack.c.b16 %v1759, %v1755
  %v1764 = vpack.c.b16 %v1760, %v1756
  %v1765 = vpack.c.b16 %v1761, %v1757
  %1770 = vmatprep.subr.bf16.mxu0 %v1763
  %1771 = vmatpush1.bf16.msra.mxu0 %v1762
  %1772 = vmatprep.subr.bf16.mxu0 0
  %1773 = vmatpush1.bf16.msra.mxu0 0
  %1774 = vmatprep.subr.bf16.mxu0 0
  %1775 = vmatpush1.bf16.msra.mxu0 0
  %1776 = vmatprep.subr.bf16.mxu0 0
  %1777 = vmatpush1.bf16.msra.mxu0 0
  %1778 = vmatprep.subr.bf16.mxu0 0
  %1779 = vmatpush1.bf16.msra.mxu0 0
  %1780 = vmatprep.subr.bf16.mxu0 0
  %1781 = vmatpush1.bf16.msra.mxu0 0
  %1782 = vmatprep.subr.bf16.mxu0 0
  %1783 = vmatpush1.bf16.msra.mxu0 0
  %1784 = vmatprep.subr.bf16.mxu0 0
  %1785 = vmatpush1.bf16.msra.mxu0 0
  %1786 = vmatprep.subr.bf16.mxu0 0
  %1787 = vmatpush1.bf16.msra.mxu0 0
  %1788 = vmatprep.subr.bf16.mxu0 0
  %1789 = vmatpush1.bf16.msra.mxu0 0
  %1790 = vmatprep.subr.bf16.mxu0 0
  %1791 = vmatpush1.bf16.msra.mxu0 0
  %1792 = vmatprep.subr.bf16.mxu0 0
  %1793 = vmatpush1.bf16.msra.mxu0 0
  %1794 = vmatprep.subr.bf16.mxu0 0
  %1795 = vmatpush1.bf16.msra.mxu0 0
  %1796 = vmatprep.subr.bf16.mxu0 0
  %1797 = vmatpush1.bf16.msra.mxu0 0
  %1798 = vmatprep.subr.bf16.mxu0 0
  %1799 = vmatpush1.bf16.msra.mxu0 0
  %1800 = vmatprep.subr.bf16.mxu0 0
  %1801 = vmatpush1.bf16.msra.mxu0 0
  %1802 = vmatprep.mubr.bf16.mxu0 0
  %1803 = vmatmul.mubr.bf16.gmra.mrb[0].mxu0 %v1628
  %v1804 = vpop.f32.mrb[0].mxu0
  %v1805 = vadd.f32 %v1733, %v1804
  %v1806 = vpop.f32.mrb[0].mxu0
  %v1807 = vadd.f32 %v1737, %v1806
  %v1808 = vpop.f32.mrb[0].mxu0
  %v1809 = vadd.f32 %v1733, %v1808
  %v1810 = vpop.f32.mrb[0].mxu0
  %v1811 = vadd.f32 %v1737, %v1810
  %1812 = vdwg.mxu0
  %1813 = vmatprep.subr.bf16.mxu0 %v1765
  %1814 = vmatpush1.bf16.msra.mxu0 %v1764
  %1815 = vmatprep.subr.bf16.mxu0 0
  %1816 = vmatpush1.bf16.msra.mxu0 0
  %1817 = vmatprep.subr.bf16.mxu0 0
  %1818 = vmatpush1.bf16.msra.mxu0 0
  %1819 = vmatprep.subr.bf16.mxu0 0
  %1820 = vmatpush1.bf16.msra.mxu0 0
  %1821 = vmatprep.subr.bf16.mxu0 0
  %1822 = vmatpush1.bf16.msra.mxu0 0
  %1823 = vmatprep.subr.bf16.mxu0 0
  %1824 = vmatpush1.bf16.msra.mxu0 0
  %1825 = vmatprep.subr.bf16.mxu0 0
  %1826 = vmatpush1.bf16.msra.mxu0 0
  %1827 = vmatprep.subr.bf16.mxu0 0
  %1828 = vmatpush1.bf16.msra.mxu0 0
  %1829 = vmatprep.subr.bf16.mxu0 0
  %1830 = vmatpush1.bf16.msra.mxu0 0
  %1831 = vmatprep.subr.bf16.mxu0 0
  %1832 = vmatpush1.bf16.msra.mxu0 0
  %1833 = vmatprep.subr.bf16.mxu0 0
  %1834 = vmatpush1.bf16.msra.mxu0 0
  %1835 = vmatprep.subr.bf16.mxu0 0
  %1836 = vmatpush1.bf16.msra.mxu0 0
  %1837 = vmatprep.subr.bf16.mxu0 0
  %1838 = vmatpush1.bf16.msra.mxu0 0
  %1839 = vmatprep.subr.bf16.mxu0 0
  %1840 = vmatpush1.bf16.msra.mxu0 0
  %1841 = vmatprep.subr.bf16.mxu0 0
  %1842 = vmatpush1.bf16.msra.mxu0 0
  %1843 = vmatprep.subr.bf16.mxu0 0
  %1844 = vmatpush1.bf16.msra.mxu0 0
  %1845 = vmatprep.mubr.bf16.mxu0 0
  %1846 = vmatmul.mubr.bf16.gmra.mrb[0].mxu0 %v1628
  %v1847 = vpop.f32.mrb[0].mxu0
  %v1848 = vadd.f32 %v1741, %v1847
  %v1849 = vpop.f32.mrb[0].mxu0
  %v1850 = vadd.f32 %v1745, %v1849
  %v1851 = vpop.f32.mrb[0].mxu0
  %v1852 = vadd.f32 %v1741, %v1851
  %v1853 = vpop.f32.mrb[0].mxu0
  %v1854 = vadd.f32 %v1745, %v1853
  %1855 = vdwg.mxu0
  %1856 = vst [vmem:[#allocation3] sm:$0xff] %v1805
  %1857 = vst [vmem:[#allocation3 + $0x8] sm:$0xff] %v1807
  %1858 = vst [vmem:[#allocation3 + $0x10] sm:$0xff] %v1848
  %1859 = vst [vmem:[#allocation3 + $0x18] sm:$0xff] %v1850
  %1860 = vst [vmem:[#allocation3 + $0x20] sm:$0xff] %v1809
  %1861 = vst [vmem:[#allocation3 + $0x28] sm:$0xff] %v1811
  %1862 = vst [vmem:[#allocation3 + $0x30] sm:$0xff] %v1852
  %1863 = vst [vmem:[#allocation3 + $0x38] sm:$0xff] %v1854
  %v1864 = vld [vmem:[#allocation2] sm:$0x3]
  %v1865 = vld [vmem:[#allocation2 + $0x8] sm:$0x3]
  %v1866 = vld [vmem:[#allocation2 + $0x10] sm:$0x3]
  %v1867 = vld [vmem:[#allocation2 + $0x18] sm:$0x3]
  %v1868 = vld [vmem:[%s3] sm:$0xff]
  %v1869 = vld [vmem:[%s3 + $0x8] sm:$0xff]
  %v1870 = vld [vmem:[%s3 + $0x10] sm:$0xff]
  %v1871 = vld [vmem:[%s3 + $0x18] sm:$0xff]
  %v1872 = vld [vmem:[%s3 + $0x20] sm:$0xff]
  %v1873 = vld [vmem:[%s3 + $0x28] sm:$0xff]
  %v1874 = vld [vmem:[%s3 + $0x30] sm:$0xff]
  %v1875 = vld [vmem:[%s3 + $0x38] sm:$0xff]
  %v1876 = vld [vmem:[%s3 + $0x40] sm:$0xff]
  %v1877 = vld [vmem:[%s3 + $0x48] sm:$0xff]
  %v1878 = vld [vmem:[%s3 + $0x50] sm:$0xff]
  %v1879 = vld [vmem:[%s3 + $0x58] sm:$0xff]
  %v1880 = vld [vmem:[%s3 + $0x60] sm:$0xff]
  %v1881 = vld [vmem:[%s3 + $0x68] sm:$0xff]
  %v1882 = vld [vmem:[%s3 + $0x70] sm:$0xff]
  %v1883 = vld [vmem:[%s3 + $0x78] sm:$0xff]
  %v1884 = vld [vmem:[%s3 + $0x80] sm:$0xff]
  %v1885 = vld [vmem:[%s3 + $0x88] sm:$0xff]
  %v1886 = vld [vmem:[%s3 + $0x90] sm:$0xff]
  %v1887 = vld [vmem:[%s3 + $0x98] sm:$0xff]
  %v1888 = vld [vmem:[%s3 + $0xa0] sm:$0xff]
  %v1889 = vld [vmem:[%s3 + $0xa8] sm:$0xff]
  %v1890 = vld [vmem:[%s3 + $0xb0] sm:$0xff]
  %v1891 = vld [vmem:[%s3 + $0xb8] sm:$0xff]
  %v1892 = vld [vmem:[%s3 + $0xc0] sm:$0xff]
  %v1893 = vld [vmem:[%s3 + $0xc8] sm:$0xff]
  %v1894 = vld [vmem:[%s3 + $0xd0] sm:$0xff]
  %v1895 = vld [vmem:[%s3 + $0xd8] sm:$0xff]
  %v1896 = vld [vmem:[%s3 + $0xe0] sm:$0xff]
  %v1897 = vld [vmem:[%s3 + $0xe8] sm:$0xff]
  %v1898 = vld [vmem:[%s3 + $0xf0] sm:$0xff]
  %v1899 = vld [vmem:[%s3 + $0xf8] sm:$0xff]
  %v1932 = vunpack.c.l.b16 %v1868
  %v1933 = vunpack.c.h.b16 %v1868
  %v1934 = vunpack.c.l.b16 %v1869
  %v1935 = vunpack.c.h.b16 %v1869
  %v1936 = vunpack.c.l.b16 %v1870
  %v1937 = vunpack.c.h.b16 %v1870
  %v1938 = vunpack.c.l.b16 %v1871
  %v1939 = vunpack.c.h.b16 %v1871
  %v1940 = vunpack.c.l.b16 %v1872
  %v1941 = vunpack.c.h.b16 %v1872
  %v1942 = vunpack.c.l.b16 %v1873
  %v1943 = vunpack.c.h.b16 %v1873
  %v1944 = vunpack.c.l.b16 %v1874
  %v1945 = vunpack.c.h.b16 %v1874
  %v1946 = vunpack.c.l.b16 %v1875
  %v1947 = vunpack.c.h.b16 %v1875
  %v1948 = vunpack.c.l.b16 %v1876
  %v1949 = vunpack.c.h.b16 %v1876
  %v1950 = vunpack.c.l.b16 %v1877
  %v1951 = vunpack.c.h.b16 %v1877
  %v1952 = vunpack.c.l.b16 %v1878
  %v1953 = vunpack.c.h.b16 %v1878
  %v1954 = vunpack.c.l.b16 %v1879
  %v1955 = vunpack.c.h.b16 %v1879
  %v1956 = vunpack.c.l.b16 %v1880
  %v1957 = vunpack.c.h.b16 %v1880
  %v1958 = vunpack.c.l.b16 %v1881
  %v1959 = vunpack.c.h.b16 %v1881
  %v1960 = vunpack.c.l.b16 %v1882
  %v1961 = vunpack.c.h.b16 %v1882
  %v1962 = vunpack.c.l.b16 %v1883
  %v1963 = vunpack.c.h.b16 %v1883
  %v1964 = vunpack.c.l.b16 %v1884
  %v1965 = vunpack.c.h.b16 %v1884
  %v1966 = vunpack.c.l.b16 %v1885
  %v1967 = vunpack.c.h.b16 %v1885
  %v1968 = vunpack.c.l.b16 %v1886
  %v1969 = vunpack.c.h.b16 %v1886
  %v1970 = vunpack.c.l.b16 %v1887
  %v1971 = vunpack.c.h.b16 %v1887
  %v1972 = vunpack.c.l.b16 %v1888
  %v1973 = vunpack.c.h.b16 %v1888
  %v1974 = vunpack.c.l.b16 %v1889
  %v1975 = vunpack.c.h.b16 %v1889
  %v1976 = vunpack.c.l.b16 %v1890
  %v1977 = vunpack.c.h.b16 %v1890
  %v1978 = vunpack.c.l.b16 %v1891
  %v1979 = vunpack.c.h.b16 %v1891
  %v1980 = vunpack.c.l.b16 %v1892
  %v1981 = vunpack.c.h.b16 %v1892
  %v1982 = vunpack.c.l.b16 %v1893
  %v1983 = vunpack.c.h.b16 %v1893
  %v1984 = vunpack.c.l.b16 %v1894
  %v1985 = vunpack.c.h.b16 %v1894
  %v1986 = vunpack.c.l.b16 %v1895
  %v1987 = vunpack.c.h.b16 %v1895
  %v1988 = vunpack.c.l.b16 %v1896
  %v1989 = vunpack.c.h.b16 %v1896
  %v1990 = vunpack.c.l.b16 %v1897
  %v1991 = vunpack.c.h.b16 %v1897
  %v1992 = vunpack.c.l.b16 %v1898
  %v1993 = vunpack.c.h.b16 %v1898
  %v1994 = vunpack.c.l.b16 %v1899
  %v1995 = vunpack.c.h.b16 %v1899
  %v1996 = vpack.c.b16 %v1936, %v1932
  %v1997 = vpack.c.b16 %v1937, %v1933
  %v1998 = vpack.c.b16 %v1938, %v1934
  %v1999 = vpack.c.b16 %v1939, %v1935
  %v2000 = vpack.c.b16 %v1944, %v1940
  %v2001 = vpack.c.b16 %v1945, %v1941
  %v2002 = vpack.c.b16 %v1946, %v1942
  %v2003 = vpack.c.b16 %v1947, %v1943
  %v2004 = vpack.c.b16 %v1952, %v1948
  %v2005 = vpack.c.b16 %v1953, %v1949
  %v2006 = vpack.c.b16 %v1954, %v1950
  %v2007 = vpack.c.b16 %v1955, %v1951
  %v2008 = vpack.c.b16 %v1960, %v1956
  %v2009 = vpack.c.b16 %v1961, %v1957
  %v2010 = vpack.c.b16 %v1962, %v1958
  %v2011 = vpack.c.b16 %v1963, %v1959
  %v2012 = vpack.c.b16 %v1968, %v1964
  %v2013 = vpack.c.b16 %v1969, %v1965
  %v2014 = vpack.c.b16 %v1970, %v1966
  %v2015 = vpack.c.b16 %v1971, %v1967
  %v2016 = vpack.c.b16 %v1976, %v1972
  %v2017 = vpack.c.b16 %v1977, %v1973
  %v2018 = vpack.c.b16 %v1978, %v1974
  %v2019 = vpack.c.b16 %v1979, %v1975
  %v2020 = vpack.c.b16 %v1984, %v1980
  %v2021 = vpack.c.b16 %v1985, %v1981
  %v2022 = vpack.c.b16 %v1986, %v1982
  %v2023 = vpack.c.b16 %v1987, %v1983
  %v2024 = vpack.c.b16 %v1992, %v1988
  %v2025 = vpack.c.b16 %v1993, %v1989
  %v2026 = vpack.c.b16 %v1994, %v1990
  %v2027 = vpack.c.b16 %v1995, %v1991
  %2060 = vmatprep.subr.bf16.mxu0 %v1997
  %2061 = vmatpush1.bf16.msra.mxu0 %v1996
  %2062 = vmatprep.subr.bf16.mxu0 %v2001
  %2063 = vmatpush1.bf16.msra.mxu0 %v2000
  %2064 = vmatprep.subr.bf16.mxu0 %v2005
  %2065 = vmatpush1.bf16.msra.mxu0 %v2004
  %2066 = vmatprep.subr.bf16.mxu0 %v2009
  %2067 = vmatpush1.bf16.msra.mxu0 %v2008
  %2068 = vmatprep.subr.bf16.mxu0 %v2013
  %2069 = vmatpush1.bf16.msra.mxu0 %v2012
  %2070 = vmatprep.subr.bf16.mxu0 %v2017
  %2071 = vmatpush1.bf16.msra.mxu0 %v2016
  %2072 = vmatprep.subr.bf16.mxu0 %v2021
  %2073 = vmatpush1.bf16.msra.mxu0 %v2020
  %2074 = vmatprep.subr.bf16.mxu0 %v2025
  %2075 = vmatpush1.bf16.msra.mxu0 %v2024
  %2076 = vmatprep.subr.bf16.mxu0 0
  %2077 = vmatpush1.bf16.msra.mxu0 0
  %2078 = vmatprep.subr.bf16.mxu0 0
  %2079 = vmatpush1.bf16.msra.mxu0 0
  %2080 = vmatprep.subr.bf16.mxu0 0
  %2081 = vmatpush1.bf16.msra.mxu0 0
  %2082 = vmatprep.subr.bf16.mxu0 0
  %2083 = vmatpush1.bf16.msra.mxu0 0
  %2084 = vmatprep.subr.bf16.mxu0 0
  %2085 = vmatpush1.bf16.msra.mxu0 0
  %2086 = vmatprep.subr.bf16.mxu0 0
  %2087 = vmatpush1.bf16.msra.mxu0 0
  %2088 = vmatprep.subr.bf16.mxu0 0
  %2089 = vmatpush1.bf16.msra.mxu0 0
  %2090 = vmatprep.subr.bf16.mxu0 0
  %2091 = vmatpush1.bf16.msra.mxu0 0
  %2092 = vmatprep.mubr.bf16.mxu0 0
  %2093 = vmatmul.mubr.bf16.gmra.mrb[0].mxu0 0
  %v2094 = vpop.f32.mrb[0].mxu0
  %v2095 = vadd.f32 0.0, %v2094
  %v2096 = vpop.f32.mrb[0].mxu0
  %v2097 = vadd.f32 0.0, %v2096
  %v2098 = vpop.f32.mrb[0].mxu0
  %v2099 = vpop.f32.mrb[0].mxu0
  %2100 = vdwg.mxu0
  %2101 = vmatprep.subr.bf16.mxu0 %v1999
  %2102 = vmatpush1.bf16.msra.mxu0 %v1998
  %2103 = vmatprep.subr.bf16.mxu0 %v2003
  %2104 = vmatpush1.bf16.msra.mxu0 %v2002
  %2105 = vmatprep.subr.bf16.mxu0 %v2007
  %2106 = vmatpush1.bf16.msra.mxu0 %v2006
  %2107 = vmatprep.subr.bf16.mxu0 %v2011
  %2108 = vmatpush1.bf16.msra.mxu0 %v2010
  %2109 = vmatprep.subr.bf16.mxu0 %v2015
  %2110 = vmatpush1.bf16.msra.mxu0 %v2014
  %2111 = vmatprep.subr.bf16.mxu0 %v2019
  %2112 = vmatpush1.bf16.msra.mxu0 %v2018
  %2113 = vmatprep.subr.bf16.mxu0 %v2023
  %2114 = vmatpush1.bf16.msra.mxu0 %v2022
  %2115 = vmatprep.subr.bf16.mxu0 %v2027
  %2116 = vmatpush1.bf16.msra.mxu0 %v2026
  %2117 = vmatprep.subr.bf16.mxu0 0
  %2118 = vmatpush1.bf16.msra.mxu0 0
  %2119 = vmatprep.subr.bf16.mxu0 0
  %2120 = vmatpush1.bf16.msra.mxu0 0
  %2121 = vmatprep.subr.bf16.mxu0 0
  %2122 = vmatpush1.bf16.msra.mxu0 0
  %2123 = vmatprep.subr.bf16.mxu0 0
  %2124 = vmatpush1.bf16.msra.mxu0 0
  %2125 = vmatprep.subr.bf16.mxu0 0
  %2126 = vmatpush1.bf16.msra.mxu0 0
  %2127 = vmatprep.subr.bf16.mxu0 0
  %2128 = vmatpush1.bf16.msra.mxu0 0
  %2129 = vmatprep.subr.bf16.mxu0 0
  %2130 = vmatpush1.bf16.msra.mxu0 0
  %2131 = vmatprep.subr.bf16.mxu0 0
  %2132 = vmatpush1.bf16.msra.mxu0 0
  %2133 = vmatprep.mubr.bf16.mxu0 0
  %2134 = vmatmul.mubr.bf16.gmra.mrb[0].mxu0 0
  %v2135 = vpop.f32.mrb[0].mxu0
  %v2136 = vadd.f32 0.0, %v2135
  %v2137 = vpop.f32.mrb[0].mxu0
  %v2138 = vadd.f32 0.0, %v2137
  %v2139 = vpop.f32.mrb[0].mxu0
  %v2140 = vpop.f32.mrb[0].mxu0
  %2141 = vdwg.mxu0
  %v2142 = vadd.f32 %v1864, %v2095
  %v2143 = vadd.f32 %v1865, %v2097
  %v2144 = vadd.f32 %v1866, %v2136
  %v2145 = vadd.f32 %v1867, %v2138
  %v2146 = vld [vmem:[#allocation3 + $0x20] sm:$0xc0]
  %v2147 = vld [vmem:[#allocation3 + $0x28] sm:$0xc0]
  %v2148 = vld [vmem:[#allocation3 + $0x30] sm:$0xc0]
  %v2149 = vld [vmem:[#allocation3 + $0x38] sm:$0xc0]
  %v2150 = vld [vmem:[%s6] sm:$0xff]
  %v2151 = vld [vmem:[%s6 + $0x8] sm:$0xff]
  %v2152 = vld [vmem:[%s6 + $0x10] sm:$0xff]
  %v2153 = vld [vmem:[%s6 + $0x18] sm:$0xff]
  %v2154 = vld [vmem:[%s6 + $0x20] sm:$0xff]
  %v2155 = vld [vmem:[%s6 + $0x28] sm:$0xff]
  %v2156 = vld [vmem:[%s6 + $0x30] sm:$0xff]
  %v2157 = vld [vmem:[%s6 + $0x38] sm:$0xff]
  %v2158 = vld [vmem:[%s6 + $0x40] sm:$0xff]
  %v2159 = vld [vmem:[%s6 + $0x48] sm:$0xff]
  %v2160 = vld [vmem:[%s6 + $0x50] sm:$0xff]
  %v2161 = vld [vmem:[%s6 + $0x58] sm:$0xff]
  %v2162 = vld [vmem:[%s6 + $0x60] sm:$0xff]
  %v2163 = vld [vmem:[%s6 + $0x68] sm:$0xff]
  %v2164 = vld [vmem:[%s6 + $0x70] sm:$0xff]
  %v2165 = vld [vmem:[%s6 + $0x78] sm:$0xff]
  %v2166 = vld [vmem:[%s6 + $0x80] sm:$0xff]
  %v2167 = vld [vmem:[%s6 + $0x88] sm:$0xff]
  %v2168 = vld [vmem:[%s6 + $0x90] sm:$0xff]
  %v2169 = vld [vmem:[%s6 + $0x98] sm:$0xff]
  %v2170 = vld [vmem:[%s6 + $0xa0] sm:$0xff]
  %v2171 = vld [vmem:[%s6 + $0xa8] sm:$0xff]
  %v2172 = vld [vmem:[%s6 + $0xb0] sm:$0xff]
  %v2173 = vld [vmem:[%s6 + $0xb8] sm:$0xff]
  %v2174 = vld [vmem:[%s6 + $0xc0] sm:$0xff]
  %v2175 = vld [vmem:[%s6 + $0xc8] sm:$0xff]
  %v2176 = vld [vmem:[%s6 + $0xd0] sm:$0xff]
  %v2177 = vld [vmem:[%s6 + $0xd8] sm:$0xff]
  %v2178 = vld [vmem:[%s6 + $0xe0] sm:$0xff]
  %v2179 = vld [vmem:[%s6 + $0xe8] sm:$0xff]
  %v2180 = vld [vmem:[%s6 + $0xf0] sm:$0xff]
  %v2181 = vld [vmem:[%s6 + $0xf8] sm:$0xff]
  %v2214 = vunpack.c.l.b16 %v2150
  %v2215 = vunpack.c.h.b16 %v2150
  %v2216 = vunpack.c.l.b16 %v2151
  %v2217 = vunpack.c.h.b16 %v2151
  %v2218 = vunpack.c.l.b16 %v2152
  %v2219 = vunpack.c.h.b16 %v2152
  %v2220 = vunpack.c.l.b16 %v2153
  %v2221 = vunpack.c.h.b16 %v2153
  %v2222 = vunpack.c.l.b16 %v2154
  %v2223 = vunpack.c.h.b16 %v2154
  %v2224 = vunpack.c.l.b16 %v2155
  %v2225 = vunpack.c.h.b16 %v2155
  %v2226 = vunpack.c.l.b16 %v2156
  %v2227 = vunpack.c.h.b16 %v2156
  %v2228 = vunpack.c.l.b16 %v2157
  %v2229 = vunpack.c.h.b16 %v2157
  %v2230 = vunpack.c.l.b16 %v2158
  %v2231 = vunpack.c.h.b16 %v2158
  %v2232 = vunpack.c.l.b16 %v2159
  %v2233 = vunpack.c.h.b16 %v2159
  %v2234 = vunpack.c.l.b16 %v2160
  %v2235 = vunpack.c.h.b16 %v2160
  %v2236 = vunpack.c.l.b16 %v2161
  %v2237 = vunpack.c.h.b16 %v2161
  %v2238 = vunpack.c.l.b16 %v2162
  %v2239 = vunpack.c.h.b16 %v2162
  %v2240 = vunpack.c.l.b16 %v2163
  %v2241 = vunpack.c.h.b16 %v2163
  %v2242 = vunpack.c.l.b16 %v2164
  %v2243 = vunpack.c.h.b16 %v2164
  %v2244 = vunpack.c.l.b16 %v2165
  %v2245 = vunpack.c.h.b16 %v2165
  %v2246 = vunpack.c.l.b16 %v2166
  %v2247 = vunpack.c.h.b16 %v2166
  %v2248 = vunpack.c.l.b16 %v2167
  %v2249 = vunpack.c.h.b16 %v2167
  %v2250 = vunpack.c.l.b16 %v2168
  %v2251 = vunpack.c.h.b16 %v2168
  %v2252 = vunpack.c.l.b16 %v2169
  %v2253 = vunpack.c.h.b16 %v2169
  %v2254 = vunpack.c.l.b16 %v2170
  %v2255 = vunpack.c.h.b16 %v2170
  %v2256 = vunpack.c.l.b16 %v2171
  %v2257 = vunpack.c.h.b16 %v2171
  %v2258 = vunpack.c.l.b16 %v2172
  %v2259 = vunpack.c.h.b16 %v2172
  %v2260 = vunpack.c.l.b16 %v2173
  %v2261 = vunpack.c.h.b16 %v2173
  %v2262 = vunpack.c.l.b16 %v2174
  %v2263 = vunpack.c.h.b16 %v2174
  %v2264 = vunpack.c.l.b16 %v2175
  %v2265 = vunpack.c.h.b16 %v2175
  %v2266 = vunpack.c.l.b16 %v2176
  %v2267 = vunpack.c.h.b16 %v2176
  %v2268 = vunpack.c.l.b16 %v2177
  %v2269 = vunpack.c.h.b16 %v2177
  %v2270 = vunpack.c.l.b16 %v2178
  %v2271 = vunpack.c.h.b16 %v2178
  %v2272 = vunpack.c.l.b16 %v2179
  %v2273 = vunpack.c.h.b16 %v2179
  %v2274 = vunpack.c.l.b16 %v2180
  %v2275 = vunpack.c.h.b16 %v2180
  %v2276 = vunpack.c.l.b16 %v2181
  %v2277 = vunpack.c.h.b16 %v2181
  %v2278 = vpack.c.b16 %v2218, %v2214
  %v2279 = vpack.c.b16 %v2219, %v2215
  %v2280 = vpack.c.b16 %v2220, %v2216
  %v2281 = vpack.c.b16 %v2221, %v2217
  %v2282 = vpack.c.b16 %v2226, %v2222
  %v2283 = vpack.c.b16 %v2227, %v2223
  %v2284 = vpack.c.b16 %v2228, %v2224
  %v2285 = vpack.c.b16 %v2229, %v2225
  %v2286 = vpack.c.b16 %v2234, %v2230
  %v2287 = vpack.c.b16 %v2235, %v2231
  %v2288 = vpack.c.b16 %v2236, %v2232
  %v2289 = vpack.c.b16 %v2237, %v2233
  %v2290 = vpack.c.b16 %v2242, %v2238
  %v2291 = vpack.c.b16 %v2243, %v2239
  %v2292 = vpack.c.b16 %v2244, %v2240
  %v2293 = vpack.c.b16 %v2245, %v2241
  %v2294 = vpack.c.b16 %v2250, %v2246
  %v2295 = vpack.c.b16 %v2251, %v2247
  %v2296 = vpack.c.b16 %v2252, %v2248
  %v2297 = vpack.c.b16 %v2253, %v2249
  %v2298 = vpack.c.b16 %v2258, %v2254
  %v2299 = vpack.c.b16 %v2259, %v2255
  %v2300 = vpack.c.b16 %v2260, %v2256
  %v2301 = vpack.c.b16 %v2261, %v2257
  %v2302 = vpack.c.b16 %v2266, %v2262
  %v2303 = vpack.c.b16 %v2267, %v2263
  %v2304 = vpack.c.b16 %v2268, %v2264
  %v2305 = vpack.c.b16 %v2269, %v2265
  %v2306 = vpack.c.b16 %v2274, %v2270
  %v2307 = vpack.c.b16 %v2275, %v2271
  %v2308 = vpack.c.b16 %v2276, %v2272
  %v2309 = vpack.c.b16 %v2277, %v2273
  %2342 = vmatprep.subr.bf16.mxu0 %v2279
  %2343 = vmatpush1.bf16.msra.mxu0 %v2278
  %2344 = vmatprep.subr.bf16.mxu0 %v2283
  %2345 = vmatpush1.bf16.msra.mxu0 %v2282
  %2346 = vmatprep.subr.bf16.mxu0 %v2287
  %2347 = vmatpush1.bf16.msra.mxu0 %v2286
  %2348 = vmatprep.subr.bf16.mxu0 %v2291
  %2349 = vmatpush1.bf16.msra.mxu0 %v2290
  %2350 = vmatprep.subr.bf16.mxu0 %v2295
  %2351 = vmatpush1.bf16.msra.mxu0 %v2294
  %2352 = vmatprep.subr.bf16.mxu0 %v2299
  %2353 = vmatpush1.bf16.msra.mxu0 %v2298
  %2354 = vmatprep.subr.bf16.mxu0 %v2303
  %2355 = vmatpush1.bf16.msra.mxu0 %v2302
  %2356 = vmatprep.subr.bf16.mxu0 %v2307
  %2357 = vmatpush1.bf16.msra.mxu0 %v2306
  %2358 = vmatprep.subr.bf16.mxu0 0
  %2359 = vmatpush1.bf16.msra.mxu0 0
  %2360 = vmatprep.subr.bf16.mxu0 0
  %2361 = vmatpush1.bf16.msra.mxu0 0
  %2362 = vmatprep.subr.bf16.mxu0 0
  %2363 = vmatpush1.bf16.msra.mxu0 0
  %2364 = vmatprep.subr.bf16.mxu0 0
  %2365 = vmatpush1.bf16.msra.mxu0 0
  %2366 = vmatprep.subr.bf16.mxu0 0
  %2367 = vmatpush1.bf16.msra.mxu0 0
  %2368 = vmatprep.subr.bf16.mxu0 0
  %2369 = vmatpush1.bf16.msra.mxu0 0
  %2370 = vmatprep.subr.bf16.mxu0 0
  %2371 = vmatpush1.bf16.msra.mxu0 0
  %2372 = vmatprep.subr.bf16.mxu0 0
  %2373 = vmatpush1.bf16.msra.mxu0 0
  %2374 = vmatprep.mubr.bf16.mxu0 0
  %2375 = vmatmul.mubr.bf16.gmra.mrb[0].mxu0 0
  %v2376 = vpop.f32.mrb[0].mxu0
  %v2377 = vadd.f32 0.0, %v2376
  %v2378 = vpop.f32.mrb[0].mxu0
  %v2379 = vadd.f32 0.0, %v2378
  %v2380 = vpop.f32.mrb[0].mxu0
  %v2381 = vpop.f32.mrb[0].mxu0
  %2382 = vdwg.mxu0
  %2383 = vmatprep.subr.bf16.mxu0 %v2281
  %2384 = vmatpush1.bf16.msra.mxu0 %v2280
  %2385 = vmatprep.subr.bf16.mxu0 %v2285
  %2386 = vmatpush1.bf16.msra.mxu0 %v2284
  %2387 = vmatprep.subr.bf16.mxu0 %v2289
  %2388 = vmatpush1.bf16.msra.mxu0 %v2288
  %2389 = vmatprep.subr.bf16.mxu0 %v2293
  %2390 = vmatpush1.bf16.msra.mxu0 %v2292
  %2391 = vmatprep.subr.bf16.mxu0 %v2297
  %2392 = vmatpush1.bf16.msra.mxu0 %v2296
  %2393 = vmatprep.subr.bf16.mxu0 %v2301
  %2394 = vmatpush1.bf16.msra.mxu0 %v2300
  %2395 = vmatprep.subr.bf16.mxu0 %v2305
  %2396 = vmatpush1.bf16.msra.mxu0 %v2304
  %2397 = vmatprep.subr.bf16.mxu0 %v2309
  %2398 = vmatpush1.bf16.msra.mxu0 %v2308
  %2399 = vmatprep.subr.bf16.mxu0 0
  %2400 = vmatpush1.bf16.msra.mxu0 0
  %2401 = vmatprep.subr.bf16.mxu0 0
  %2402 = vmatpush1.bf16.msra.mxu0 0
  %2403 = vmatprep.subr.bf16.mxu0 0
  %2404 = vmatpush1.bf16.msra.mxu0 0
  %2405 = vmatprep.subr.bf16.mxu0 0
  %2406 = vmatpush1.bf16.msra.mxu0 0
  %2407 = vmatprep.subr.bf16.mxu0 0
  %2408 = vmatpush1.bf16.msra.mxu0 0
  %2409 = vmatprep.subr.bf16.mxu0 0
  %2410 = vmatpush1.bf16.msra.mxu0 0
  %2411 = vmatprep.subr.bf16.mxu0 0
  %2412 = vmatpush1.bf16.msra.mxu0 0
  %2413 = vmatprep.subr.bf16.mxu0 0
  %2414 = vmatpush1.bf16.msra.mxu0 0
  %2415 = vmatprep.mubr.bf16.mxu0 0
  %2416 = vmatmul.mubr.bf16.gmra.mrb[0].mxu0 0
  %v2417 = vpop.f32.mrb[0].mxu0
  %v2418 = vadd.f32 0.0, %v2417
  %v2419 = vpop.f32.mrb[0].mxu0
  %v2420 = vadd.f32 0.0, %v2419
  %v2421 = vpop.f32.mrb[0].mxu0
  %v2422 = vpop.f32.mrb[0].mxu0
  %2423 = vdwg.mxu0
  %v2428 = vrot.slane %v2377, 2
  %v2429 = vrot.slane %v2379, 2
  %v2430 = vrot.slane %v2418, 2
  %v2431 = vrot.slane %v2420, 2
  %v2436 = vadd.f32 %v2146, %v2428
  %v2437 = vadd.f32 %v2147, %v2429
  %v2438 = vadd.f32 %v2148, %v2430
  %v2439 = vadd.f32 %v2149, %v2431
  %v2440 = vmul.f32 %v2142, 0.5
  %v2441 = vtanh.pop %v2440
  %v2442 = vmul.f32 %v2441, 0.5
  %v2443 = vadd.f32 %v2442, 0.5
  %v2444 = vmul.f32 %v2143, 0.5
  %v2445 = vtanh.pop %v2444
  %v2446 = vmul.f32 %v2445, 0.5
  %v2447 = vadd.f32 %v2446, 0.5
  %v2448 = vtanh.pop %v2144
  %v2449 = vmul.f32 %v2145, 0.5
  %v2450 = vtanh.pop %v2449
  %v2451 = vmul.f32 %v2450, 0.5
  %v2452 = vadd.f32 %v2451, 0.5
  %v2453 = vmul.f32 %v2447, 0.0
  %v2454 = vmul.f32 %v2443, %v2448
  %v2455 = vadd.f32 %v2453, %v2454
  %v2456 = vtanh.pop %v2455
  %v2457 = vmul.f32 %v2452, %v2456
  %v2458 = vmul.f32 %v2436, 0.5
  %v2459 = vtanh.pop %v2458
  %v2460 = vmul.f32 %v2459, 0.5
  %v2461 = vadd.f32 %v2460, 0.5
  %v2462 = vmul.f32 %v2437, 0.5
  %v2463 = vtanh.pop %v2462
  %v2464 = vmul.f32 %v2463, 0.5
  %v2465 = vadd.f32 %v2464, 0.5
  %v2466 = vtanh.pop %v2438
  %v2467 = vmul.f32 %v2439, 0.5
  %v2468 = vtanh.pop %v2467
  %v2469 = vmul.f32 %v2468, 0.5
  %v2470 = vadd.f32 %v2469, 0.5
  %v2471 = vmul.f32 %v2465, 0.0
  %v2472 = vmul.f32 %v2461, %v2466
  %v2473 = vadd.f32 %v2471, %v2472
  %v2474 = vtanh.pop %v2473
  %v2475 = vmul.f32 %v2470, %v2474
  %2476 = vst [vmem:[#allocation4] sm:$0x3] %v2457
  %2477 = vst [vmem:[#allocation5 + $0x8] sm:$0xc0] %v2475
  %v2478 = vld [vmem:[#allocation2] sm:$0xc]
  %v2479 = vld [vmem:[#allocation2 + $0x8] sm:$0xc]
  %v2480 = vld [vmem:[#allocation2 + $0x10] sm:$0xc]
  %v2481 = vld [vmem:[#allocation2 + $0x18] sm:$0xc]
  %v2482 = vpack.c.bf16 %v2457, %v2457
  %v2483 = vld [vmem:[%s3] sm:$0xff]
  %v2484 = vld [vmem:[%s3 + $0x8] sm:$0xff]
  %v2485 = vld [vmem:[%s3 + $0x10] sm:$0xff]
  %v2486 = vld [vmem:[%s3 + $0x18] sm:$0xff]
  %v2487 = vld [vmem:[%s3 + $0x20] sm:$0xff]
  %v2488 = vld [vmem:[%s3 + $0x28] sm:$0xff]
  %v2489 = vld [vmem:[%s3 + $0x30] sm:$0xff]
  %v2490 = vld [vmem:[%s3 + $0x38] sm:$0xff]
  %v2491 = vld [vmem:[%s3 + $0x40] sm:$0xff]
  %v2492 = vld [vmem:[%s3 + $0x48] sm:$0xff]
  %v2493 = vld [vmem:[%s3 + $0x50] sm:$0xff]
  %v2494 = vld [vmem:[%s3 + $0x58] sm:$0xff]
  %v2495 = vld [vmem:[%s3 + $0x60] sm:$0xff]
  %v2496 = vld [vmem:[%s3 + $0x68] sm:$0xff]
  %v2497 = vld [vmem:[%s3 + $0x70] sm:$0xff]
  %v2498 = vld [vmem:[%s3 + $0x78] sm:$0xff]
  %v2499 = vld [vmem:[%s3 + $0x80] sm:$0xff]
  %v2500 = vld [vmem:[%s3 + $0x88] sm:$0xff]
  %v2501 = vld [vmem:[%s3 + $0x90] sm:$0xff]
  %v2502 = vld [vmem:[%s3 + $0x98] sm:$0xff]
  %v2503 = vld [vmem:[%s3 + $0xa0] sm:$0xff]
  %v2504 = vld [vmem:[%s3 + $0xa8] sm:$0xff]
  %v2505 = vld [vmem:[%s3 + $0xb0] sm:$0xff]
  %v2506 = vld [vmem:[%s3 + $0xb8] sm:$0xff]
  %v2507 = vld [vmem:[%s3 + $0xc0] sm:$0xff]
  %v2508 = vld [vmem:[%s3 + $0xc8] sm:$0xff]
  %v2509 = vld [vmem:[%s3 + $0xd0] sm:$0xff]
  %v2510 = vld [vmem:[%s3 + $0xd8] sm:$0xff]
  %v2511 = vld [vmem:[%s3 + $0xe0] sm:$0xff]
  %v2512 = vld [vmem:[%s3 + $0xe8] sm:$0xff]
  %v2513 = vld [vmem:[%s3 + $0xf0] sm:$0xff]
  %v2514 = vld [vmem:[%s3 + $0xf8] sm:$0xff]
  %v2547 = vunpack.c.l.b16 %v2483
  %v2548 = vunpack.c.h.b16 %v2483
  %v2549 = vunpack.c.l.b16 %v2484
  %v2550 = vunpack.c.h.b16 %v2484
  %v2551 = vunpack.c.l.b16 %v2485
  %v2552 = vunpack.c.h.b16 %v2485
  %v2553 = vunpack.c.l.b16 %v2486
  %v2554 = vunpack.c.h.b16 %v2486
  %v2555 = vunpack.c.l.b16 %v2487
  %v2556 = vunpack.c.h.b16 %v2487
  %v2557 = vunpack.c.l.b16 %v2488
  %v2558 = vunpack.c.h.b16 %v2488
  %v2559 = vunpack.c.l.b16 %v2489
  %v2560 = vunpack.c.h.b16 %v2489
  %v2561 = vunpack.c.l.b16 %v2490
  %v2562 = vunpack.c.h.b16 %v2490
  %v2563 = vunpack.c.l.b16 %v2491
  %v2564 = vunpack.c.h.b16 %v2491
  %v2565 = vunpack.c.l.b16 %v2492
  %v2566 = vunpack.c.h.b16 %v2492
  %v2567 = vunpack.c.l.b16 %v2493
  %v2568 = vunpack.c.h.b16 %v2493
  %v2569 = vunpack.c.l.b16 %v2494
  %v2570 = vunpack.c.h.b16 %v2494
  %v2571 = vunpack.c.l.b16 %v2495
  %v2572 = vunpack.c.h.b16 %v2495
  %v2573 = vunpack.c.l.b16 %v2496
  %v2574 = vunpack.c.h.b16 %v2496
  %v2575 = vunpack.c.l.b16 %v2497
  %v2576 = vunpack.c.h.b16 %v2497
  %v2577 = vunpack.c.l.b16 %v2498
  %v2578 = vunpack.c.h.b16 %v2498
  %v2579 = vunpack.c.l.b16 %v2499
  %v2580 = vunpack.c.h.b16 %v2499
  %v2581 = vunpack.c.l.b16 %v2500
  %v2582 = vunpack.c.h.b16 %v2500
  %v2583 = vunpack.c.l.b16 %v2501
  %v2584 = vunpack.c.h.b16 %v2501
  %v2585 = vunpack.c.l.b16 %v2502
  %v2586 = vunpack.c.h.b16 %v2502
  %v2587 = vunpack.c.l.b16 %v2503
  %v2588 = vunpack.c.h.b16 %v2503
  %v2589 = vunpack.c.l.b16 %v2504
  %v2590 = vunpack.c.h.b16 %v2504
  %v2591 = vunpack.c.l.b16 %v2505
  %v2592 = vunpack.c.h.b16 %v2505
  %v2593 = vunpack.c.l.b16 %v2506
  %v2594 = vunpack.c.h.b16 %v2506
  %v2595 = vunpack.c.l.b16 %v2507
  %v2596 = vunpack.c.h.b16 %v2507
  %v2597 = vunpack.c.l.b16 %v2508
  %v2598 = vunpack.c.h.b16 %v2508
  %v2599 = vunpack.c.l.b16 %v2509
  %v2600 = vunpack.c.h.b16 %v2509
  %v2601 = vunpack.c.l.b16 %v2510
  %v2602 = vunpack.c.h.b16 %v2510
  %v2603 = vunpack.c.l.b16 %v2511
  %v2604 = vunpack.c.h.b16 %v2511
  %v2605 = vunpack.c.l.b16 %v2512
  %v2606 = vunpack.c.h.b16 %v2512
  %v2607 = vunpack.c.l.b16 %v2513
  %v2608 = vunpack.c.h.b16 %v2513
  %v2609 = vunpack.c.l.b16 %v2514
  %v2610 = vunpack.c.h.b16 %v2514
  %v2611 = vpack.c.b16 %v2551, %v2547
  %v2612 = vpack.c.b16 %v2552, %v2548
  %v2613 = vpack.c.b16 %v2553, %v2549
  %v2614 = vpack.c.b16 %v2554, %v2550
  %v2615 = vpack.c.b16 %v2559, %v2555
  %v2616 = vpack.c.b16 %v2560, %v2556
  %v2617 = vpack.c.b16 %v2561, %v2557
  %v2618 = vpack.c.b16 %v2562, %v2558
  %v2619 = vpack.c.b16 %v2567, %v2563
  %v2620 = vpack.c.b16 %v2568, %v2564
  %v2621 = vpack.c.b16 %v2569, %v2565
  %v2622 = vpack.c.b16 %v2570, %v2566
  %v2623 = vpack.c.b16 %v2575, %v2571
  %v2624 = vpack.c.b16 %v2576, %v2572
  %v2625 = vpack.c.b16 %v2577, %v2573
  %v2626 = vpack.c.b16 %v2578, %v2574
  %v2627 = vpack.c.b16 %v2583, %v2579
  %v2628 = vpack.c.b16 %v2584, %v2580
  %v2629 = vpack.c.b16 %v2585, %v2581
  %v2630 = vpack.c.b16 %v2586, %v2582
  %v2631 = vpack.c.b16 %v2591, %v2587
  %v2632 = vpack.c.b16 %v2592, %v2588
  %v2633 = vpack.c.b16 %v2593, %v2589
  %v2634 = vpack.c.b16 %v2594, %v2590
  %v2635 = vpack.c.b16 %v2599, %v2595
  %v2636 = vpack.c.b16 %v2600, %v2596
  %v2637 = vpack.c.b16 %v2601, %v2597
  %v2638 = vpack.c.b16 %v2602, %v2598
  %v2639 = vpack.c.b16 %v2607, %v2603
  %v2640 = vpack.c.b16 %v2608, %v2604
  %v2641 = vpack.c.b16 %v2609, %v2605
  %v2642 = vpack.c.b16 %v2610, %v2606
  %2675 = vmatprep.subr.bf16.mxu0 %v2612
  %2676 = vmatpush1.bf16.msra.mxu0 %v2611
  %2677 = vmatprep.subr.bf16.mxu0 %v2616
  %2678 = vmatpush1.bf16.msra.mxu0 %v2615
  %2679 = vmatprep.subr.bf16.mxu0 %v2620
  %2680 = vmatpush1.bf16.msra.mxu0 %v2619
  %2681 = vmatprep.subr.bf16.mxu0 %v2624
  %2682 = vmatpush1.bf16.msra.mxu0 %v2623
  %2683 = vmatprep.subr.bf16.mxu0 %v2628
  %2684 = vmatpush1.bf16.msra.mxu0 %v2627
  %2685 = vmatprep.subr.bf16.mxu0 %v2632
  %2686 = vmatpush1.bf16.msra.mxu0 %v2631
  %2687 = vmatprep.subr.bf16.mxu0 %v2636
  %2688 = vmatpush1.bf16.msra.mxu0 %v2635
  %2689 = vmatprep.subr.bf16.mxu0 %v2640
  %2690 = vmatpush1.bf16.msra.mxu0 %v2639
  %2691 = vmatprep.subr.bf16.mxu0 0
  %2692 = vmatpush1.bf16.msra.mxu0 0
  %2693 = vmatprep.subr.bf16.mxu0 0
  %2694 = vmatpush1.bf16.msra.mxu0 0
  %2695 = vmatprep.subr.bf16.mxu0 0
  %2696 = vmatpush1.bf16.msra.mxu0 0
  %2697 = vmatprep.subr.bf16.mxu0 0
  %2698 = vmatpush1.bf16.msra.mxu0 0
  %2699 = vmatprep.subr.bf16.mxu0 0
  %2700 = vmatpush1.bf16.msra.mxu0 0
  %2701 = vmatprep.subr.bf16.mxu0 0
  %2702 = vmatpush1.bf16.msra.mxu0 0
  %2703 = vmatprep.subr.bf16.mxu0 0
  %2704 = vmatpush1.bf16.msra.mxu0 0
  %2705 = vmatprep.subr.bf16.mxu0 0
  %2706 = vmatpush1.bf16.msra.mxu0 0
  %2707 = vmatprep.mubr.bf16.mxu0 0
  %2708 = vmatmul.mubr.bf16.gmra.mrb[0].mxu0 %v2482
  %v2709 = vpop.f32.mrb[0].mxu0
  %v2710 = vadd.f32 0.0, %v2709
  %v2711 = vpop.f32.mrb[0].mxu0
  %v2712 = vadd.f32 0.0, %v2711
  %v2713 = vpop.f32.mrb[0].mxu0
  %v2714 = vpop.f32.mrb[0].mxu0
  %2715 = vdwg.mxu0
  %2716 = vmatprep.subr.bf16.mxu0 %v2614
  %2717 = vmatpush1.bf16.msra.mxu0 %v2613
  %2718 = vmatprep.subr.bf16.mxu0 %v2618
  %2719 = vmatpush1.bf16.msra.mxu0 %v2617
  %2720 = vmatprep.subr.bf16.mxu0 %v2622
  %2721 = vmatpush1.bf16.msra.mxu0 %v2621
  %2722 = vmatprep.subr.bf16.mxu0 %v2626
  %2723 = vmatpush1.bf16.msra.mxu0 %v2625
  %2724 = vmatprep.subr.bf16.mxu0 %v2630
  %2725 = vmatpush1.bf16.msra.mxu0 %v2629
  %2726 = vmatprep.subr.bf16.mxu0 %v2634
  %2727 = vmatpush1.bf16.msra.mxu0 %v2633
  %2728 = vmatprep.subr.bf16.mxu0 %v2638
  %2729 = vmatpush1.bf16.msra.mxu0 %v2637
  %2730 = vmatprep.subr.bf16.mxu0 %v2642
  %2731 = vmatpush1.bf16.msra.mxu0 %v2641
  %2732 = vmatprep.subr.bf16.mxu0 0
  %2733 = vmatpush1.bf16.msra.mxu0 0
  %2734 = vmatprep.subr.bf16.mxu0 0
  %2735 = vmatpush1.bf16.msra.mxu0 0
  %2736 = vmatprep.subr.bf16.mxu0 0
  %2737 = vmatpush1.bf16.msra.mxu0 0
  %2738 = vmatprep.subr.bf16.mxu0 0
  %2739 = vmatpush1.bf16.msra.mxu0 0
  %2740 = vmatprep.subr.bf16.mxu0 0
  %2741 = vmatpush1.bf16.msra.mxu0 0
  %2742 = vmatprep.subr.bf16.mxu0 0
  %2743 = vmatpush1.bf16.msra.mxu0 0
  %2744 = vmatprep.subr.bf16.mxu0 0
  %2745 = vmatpush1.bf16.msra.mxu0 0
  %2746 = vmatprep.subr.bf16.mxu0 0
  %2747 = vmatpush1.bf16.msra.mxu0 0
  %2748 = vmatprep.mubr.bf16.mxu0 0
  %2749 = vmatmul.mubr.bf16.gmra.mrb[0].mxu0 %v2482
  %v2750 = vpop.f32.mrb[0].mxu0
  %v2751 = vadd.f32 0.0, %v2750
  %v2752 = vpop.f32.mrb[0].mxu0
  %v2753 = vadd.f32 0.0, %v2752
  %v2754 = vpop.f32.mrb[0].mxu0
  %v2755 = vpop.f32.mrb[0].mxu0
  %2756 = vdwg.mxu0
  %v2761 = vrot.slane %v2710, 6
  %v2762 = vrot.slane %v2712, 6
  %v2763 = vrot.slane %v2751, 6
  %v2764 = vrot.slane %v2753, 6
  %v2769 = vadd.f32 %v2478, %v2761
  %v2770 = vadd.f32 %v2479, %v2762
  %v2771 = vadd.f32 %v2480, %v2763
  %v2772 = vadd.f32 %v2481, %v2764
  %v2773 = vld [vmem:[#allocation3 + $0x20] sm:$0x30]
  %v2774 = vld [vmem:[#allocation3 + $0x28] sm:$0x30]
  %v2775 = vld [vmem:[#allocation3 + $0x30] sm:$0x30]
  %v2776 = vld [vmem:[#allocation3 + $0x38] sm:$0x30]
  %v2777 = vpack.c.bf16 %v2475, %v2475
  %v2778 = vld [vmem:[%s6] sm:$0xff]
  %v2779 = vld [vmem:[%s6 + $0x8] sm:$0xff]
  %v2780 = vld [vmem:[%s6 + $0x10] sm:$0xff]
  %v2781 = vld [vmem:[%s6 + $0x18] sm:$0xff]
  %v2782 = vld [vmem:[%s6 + $0x20] sm:$0xff]
  %v2783 = vld [vmem:[%s6 + $0x28] sm:$0xff]
  %v2784 = vld [vmem:[%s6 + $0x30] sm:$0xff]
  %v2785 = vld [vmem:[%s6 + $0x38] sm:$0xff]
  %v2786 = vld [vmem:[%s6 + $0x40] sm:$0xff]
  %v2787 = vld [vmem:[%s6 + $0x48] sm:$0xff]
  %v2788 = vld [vmem:[%s6 + $0x50] sm:$0xff]
  %v2789 = vld [vmem:[%s6 + $0x58] sm:$0xff]
  %v2790 = vld [vmem:[%s6 + $0x60] sm:$0xff]
  %v2791 = vld [vmem:[%s6 + $0x68] sm:$0xff]
  %v2792 = vld [vmem:[%s6 + $0x70] sm:$0xff]
  %v2793 = vld [vmem:[%s6 + $0x78] sm:$0xff]
  %v2794 = vld [vmem:[%s6 + $0x80] sm:$0xff]
  %v2795 = vld [vmem:[%s6 + $0x88] sm:$0xff]
  %v2796 = vld [vmem:[%s6 + $0x90] sm:$0xff]
  %v2797 = vld [vmem:[%s6 + $0x98] sm:$0xff]
  %v2798 = vld [vmem:[%s6 + $0xa0] sm:$0xff]
  %v2799 = vld [vmem:[%s6 + $0xa8] sm:$0xff]
  %v2800 = vld [vmem:[%s6 + $0xb0] sm:$0xff]
  %v2801 = vld [vmem:[%s6 + $0xb8] sm:$0xff]
  %v2802 = vld [vmem:[%s6 + $0xc0] sm:$0xff]
  %v2803 = vld [vmem:[%s6 + $0xc8] sm:$0xff]
  %v2804 = vld [vmem:[%s6 + $0xd0] sm:$0xff]
  %v2805 = vld [vmem:[%s6 + $0xd8] sm:$0xff]
  %v2806 = vld [vmem:[%s6 + $0xe0] sm:$0xff]
  %v2807 = vld [vmem:[%s6 + $0xe8] sm:$0xff]
  %v2808 = vld [vmem:[%s6 + $0xf0] sm:$0xff]
  %v2809 = vld [vmem:[%s6 + $0xf8] sm:$0xff]
  %v2811 = vrot.slane %v2777, 3
  %v2845 = vunpack.c.l.b16 %v2778
  %v2846 = vunpack.c.h.b16 %v2778
  %v2847 = vunpack.c.l.b16 %v2779
  %v2848 = vunpack.c.h.b16 %v2779
  %v2849 = vunpack.c.l.b16 %v2780
  %v2850 = vunpack.c.h.b16 %v2780
  %v2851 = vunpack.c.l.b16 %v2781
  %v2852 = vunpack.c.h.b16 %v2781
  %v2853 = vunpack.c.l.b16 %v2782
  %v2854 = vunpack.c.h.b16 %v2782
  %v2855 = vunpack.c.l.b16 %v2783
  %v2856 = vunpack.c.h.b16 %v2783
  %v2857 = vunpack.c.l.b16 %v2784
  %v2858 = vunpack.c.h.b16 %v2784
  %v2859 = vunpack.c.l.b16 %v2785
  %v2860 = vunpack.c.h.b16 %v2785
  %v2861 = vunpack.c.l.b16 %v2786
  %v2862 = vunpack.c.h.b16 %v2786
  %v2863 = vunpack.c.l.b16 %v2787
  %v2864 = vunpack.c.h.b16 %v2787
  %v2865 = vunpack.c.l.b16 %v2788
  %v2866 = vunpack.c.h.b16 %v2788
  %v2867 = vunpack.c.l.b16 %v2789
  %v2868 = vunpack.c.h.b16 %v2789
  %v2869 = vunpack.c.l.b16 %v2790
  %v2870 = vunpack.c.h.b16 %v2790
  %v2871 = vunpack.c.l.b16 %v2791
  %v2872 = vunpack.c.h.b16 %v2791
  %v2873 = vunpack.c.l.b16 %v2792
  %v2874 = vunpack.c.h.b16 %v2792
  %v2875 = vunpack.c.l.b16 %v2793
  %v2876 = vunpack.c.h.b16 %v2793
  %v2877 = vunpack.c.l.b16 %v2794
  %v2878 = vunpack.c.h.b16 %v2794
  %v2879 = vunpack.c.l.b16 %v2795
  %v2880 = vunpack.c.h.b16 %v2795
  %v2881 = vunpack.c.l.b16 %v2796
  %v2882 = vunpack.c.h.b16 %v2796
  %v2883 = vunpack.c.l.b16 %v2797
  %v2884 = vunpack.c.h.b16 %v2797
  %v2885 = vunpack.c.l.b16 %v2798
  %v2886 = vunpack.c.h.b16 %v2798
  %v2887 = vunpack.c.l.b16 %v2799
  %v2888 = vunpack.c.h.b16 %v2799
  %v2889 = vunpack.c.l.b16 %v2800
  %v2890 = vunpack.c.h.b16 %v2800
  %v2891 = vunpack.c.l.b16 %v2801
  %v2892 = vunpack.c.h.b16 %v2801
  %v2893 = vunpack.c.l.b16 %v2802
  %v2894 = vunpack.c.h.b16 %v2802
  %v2895 = vunpack.c.l.b16 %v2803
  %v2896 = vunpack.c.h.b16 %v2803
  %v2897 = vunpack.c.l.b16 %v2804
  %v2898 = vunpack.c.h.b16 %v2804
  %v2899 = vunpack.c.l.b16 %v2805
  %v2900 = vunpack.c.h.b16 %v2805
  %v2901 = vunpack.c.l.b16 %v2806
  %v2902 = vunpack.c.h.b16 %v2806
  %v2903 = vunpack.c.l.b16 %v2807
  %v2904 = vunpack.c.h.b16 %v2807
  %v2905 = vunpack.c.l.b16 %v2808
  %v2906 = vunpack.c.h.b16 %v2808
  %v2907 = vunpack.c.l.b16 %v2809
  %v2908 = vunpack.c.h.b16 %v2809
  %v2909 = vpack.c.b16 %v2849, %v2845
  %v2910 = vpack.c.b16 %v2850, %v2846
  %v2911 = vpack.c.b16 %v2851, %v2847
  %v2912 = vpack.c.b16 %v2852, %v2848
  %v2913 = vpack.c.b16 %v2857, %v2853
  %v2914 = vpack.c.b16 %v2858, %v2854
  %v2915 = vpack.c.b16 %v2859, %v2855
  %v2916 = vpack.c.b16 %v2860, %v2856
  %v2917 = vpack.c.b16 %v2865, %v2861
  %v2918 = vpack.c.b16 %v2866, %v2862
  %v2919 = vpack.c.b16 %v2867, %v2863
  %v2920 = vpack.c.b16 %v2868, %v2864
  %v2921 = vpack.c.b16 %v2873, %v2869
  %v2922 = vpack.c.b16 %v2874, %v2870
  %v2923 = vpack.c.b16 %v2875, %v2871
  %v2924 = vpack.c.b16 %v2876, %v2872
  %v2925 = vpack.c.b16 %v2881, %v2877
  %v2926 = vpack.c.b16 %v2882, %v2878
  %v2927 = vpack.c.b16 %v2883, %v2879
  %v2928 = vpack.c.b16 %v2884, %v2880
  %v2929 = vpack.c.b16 %v2889, %v2885
  %v2930 = vpack.c.b16 %v2890, %v2886
  %v2931 = vpack.c.b16 %v2891, %v2887
  %v2932 = vpack.c.b16 %v2892, %v2888
  %v2933 = vpack.c.b16 %v2897, %v2893
  %v2934 = vpack.c.b16 %v2898, %v2894
  %v2935 = vpack.c.b16 %v2899, %v2895
  %v2936 = vpack.c.b16 %v2900, %v2896
  %v2937 = vpack.c.b16 %v2905, %v2901
  %v2938 = vpack.c.b16 %v2906, %v2902
  %v2939 = vpack.c.b16 %v2907, %v2903
  %v2940 = vpack.c.b16 %v2908, %v2904
  %2973 = vmatprep.subr.bf16.mxu0 %v2910
  %2974 = vmatpush1.bf16.msra.mxu0 %v2909
  %2975 = vmatprep.subr.bf16.mxu0 %v2914
  %2976 = vmatpush1.bf16.msra.mxu0 %v2913
  %2977 = vmatprep.subr.bf16.mxu0 %v2918
  %2978 = vmatpush1.bf16.msra.mxu0 %v2917
  %2979 = vmatprep.subr.bf16.mxu0 %v2922
  %2980 = vmatpush1.bf16.msra.mxu0 %v2921
  %2981 = vmatprep.subr.bf16.mxu0 %v2926
  %2982 = vmatpush1.bf16.msra.mxu0 %v2925
  %2983 = vmatprep.subr.bf16.mxu0 %v2930
  %2984 = vmatpush1.bf16.msra.mxu0 %v2929
  %2985 = vmatprep.subr.bf16.mxu0 %v2934
  %2986 = vmatpush1.bf16.msra.mxu0 %v2933
  %2987 = vmatprep.subr.bf16.mxu0 %v2938
  %2988 = vmatpush1.bf16.msra.mxu0 %v2937
  %2989 = vmatprep.subr.bf16.mxu0 0
  %2990 = vmatpush1.bf16.msra.mxu0 0
  %2991 = vmatprep.subr.bf16.mxu0 0
  %2992 = vmatpush1.bf16.msra.mxu0 0
  %2993 = vmatprep.subr.bf16.mxu0 0
  %2994 = vmatpush1.bf16.msra.mxu0 0
  %2995 = vmatprep.subr.bf16.mxu0 0
  %2996 = vmatpush1.bf16.msra.mxu0 0
  %2997 = vmatprep.subr.bf16.mxu0 0
  %2998 = vmatpush1.bf16.msra.mxu0 0
  %2999 = vmatprep.subr.bf16.mxu0 0
  %3000 = vmatpush1.bf16.msra.mxu0 0
  %3001 = vmatprep.subr.bf16.mxu0 0
  %3002 = vmatpush1.bf16.msra.mxu0 0
  %3003 = vmatprep.subr.bf16.mxu0 0
  %3004 = vmatpush1.bf16.msra.mxu0 0
  %3005 = vmatprep.mubr.bf16.mxu0 0
  %3006 = vmatmul.mubr.bf16.gmra.mrb[0].mxu0 %v2811
  %v3007 = vpop.f32.mrb[0].mxu0
  %v3008 = vadd.f32 0.0, %v3007
  %v3009 = vpop.f32.mrb[0].mxu0
  %v3010 = vadd.f32 0.0, %v3009
  %v3011 = vpop.f32.mrb[0].mxu0
  %v3012 = vpop.f32.mrb[0].mxu0
  %3013 = vdwg.mxu0
  %3014 = vmatprep.subr.bf16.mxu0 %v2912
  %3015 = vmatpush1.bf16.msra.mxu0 %v2911
  %3016 = vmatprep.subr.bf16.mxu0 %v2916
  %3017 = vmatpush1.bf16.msra.mxu0 %v2915
  %3018 = vmatprep.subr.bf16.mxu0 %v2920
  %3019 = vmatpush1.bf16.msra.mxu0 %v2919
  %3020 = vmatprep.subr.bf16.mxu0 %v2924
  %3021 = vmatpush1.bf16.msra.mxu0 %v2923
  %3022 = vmatprep.subr.bf16.mxu0 %v2928
  %3023 = vmatpush1.bf16.msra.mxu0 %v2927
  %3024 = vmatprep.subr.bf16.mxu0 %v2932
  %3025 = vmatpush1.bf16.msra.mxu0 %v2931
  %3026 = vmatprep.subr.bf16.mxu0 %v2936
  %3027 = vmatpush1.bf16.msra.mxu0 %v2935
  %3028 = vmatprep.subr.bf16.mxu0 %v2940
  %3029 = vmatpush1.bf16.msra.mxu0 %v2939
  %3030 = vmatprep.subr.bf16.mxu0 0
  %3031 = vmatpush1.bf16.msra.mxu0 0
  %3032 = vmatprep.subr.bf16.mxu0 0
  %3033 = vmatpush1.bf16.msra.mxu0 0
  %3034 = vmatprep.subr.bf16.mxu0 0
  %3035 = vmatpush1.bf16.msra.mxu0 0
  %3036 = vmatprep.subr.bf16.mxu0 0
  %3037 = vmatpush1.bf16.msra.mxu0 0
  %3038 = vmatprep.subr.bf16.mxu0 0
  %3039 = vmatpush1.bf16.msra.mxu0 0
  %3040 = vmatprep.subr.bf16.mxu0 0
  %3041 = vmatpush1.bf16.msra.mxu0 0
  %3042 = vmatprep.subr.bf16.mxu0 0
  %3043 = vmatpush1.bf16.msra.mxu0 0
  %3044 = vmatprep.subr.bf16.mxu0 0
  %3045 = vmatpush1.bf16.msra.mxu0 0
  %3046 = vmatprep.mubr.bf16.mxu0 0
  %3047 = vmatmul.mubr.bf16.gmra.mrb[0].mxu0 %v2811
  %v3048 = vpop.f32.mrb[0].mxu0
  %v3049 = vadd.f32 0.0, %v3048
  %v3050 = vpop.f32.mrb[0].mxu0
  %v3051 = vadd.f32 0.0, %v3050
  %v3052 = vpop.f32.mrb[0].mxu0
  %v3053 = vpop.f32.mrb[0].mxu0
  %3054 = vdwg.mxu0
  %v3059 = vrot.slane %v3008, 4
  %v3060 = vrot.slane %v3010, 4
  %v3061 = vrot.slane %v3049, 4
  %v3062 = vrot.slane %v3051, 4
  %v3067 = vadd.f32 %v2773, %v3059
  %v3068 = vadd.f32 %v2774, %v3060
  %v3069 = vadd.f32 %v2775, %v3061
  %v3070 = vadd.f32 %v2776, %v3062
  %v3071 = vmul.f32 %v2769, 0.5
  %v3072 = vtanh.pop %v3071
  %v3073 = vmul.f32 %v3072, 0.5
  %v3074 = vadd.f32 %v3073, 0.5
  %v3075 = vmul.f32 %v2770, 0.5
  %v3076 = vtanh.pop %v3075
  %v3077 = vmul.f32 %v3076, 0.5
  %v3078 = vadd.f32 %v3077, 0.5
  %v3079 = vtanh.pop %v2771
  %v3080 = vmul.f32 %v2772, 0.5
  %v3081 = vtanh.pop %v3080
  %v3082 = vmul.f32 %v3081, 0.5
  %v3083 = vadd.f32 %v3082, 0.5
  %v3085 = vrot.slane %v2455, 6
  %v3087 = vmul.f32 %v3078, %v3085
  %v3088 = vmul.f32 %v3074, %v3079
  %v3089 = vadd.f32 %v3087, %v3088
  %v3090 = vtanh.pop %v3089
  %v3091 = vmul.f32 %v3083, %v3090
  %v3092 = vmul.f32 %v3067, 0.5
  %v3093 = vtanh.pop %v3092
  %v3094 = vmul.f32 %v3093, 0.5
  %v3095 = vadd.f32 %v3094, 0.5
  %v3096 = vmul.f32 %v3068, 0.5
  %v3097 = vtanh.pop %v3096
  %v3098 = vmul.f32 %v3097, 0.5
  %v3099 = vadd.f32 %v3098, 0.5
  %v3100 = vtanh.pop %v3069
  %v3101 = vmul.f32 %v3070, 0.5
  %v3102 = vtanh.pop %v3101
  %v3103 = vmul.f32 %v3102, 0.5
  %v3104 = vadd.f32 %v3103, 0.5
  %v3106 = vrot.slane %v2473, 2
  %v3108 = vmul.f32 %v3099, %v3106
  %v3109 = vmul.f32 %v3095, %v3100
  %v3110 = vadd.f32 %v3108, %v3109
  %v3111 = vtanh.pop %v3110
  %v3112 = vmul.f32 %v3104, %v3111
  %3113 = vst [vmem:[#allocation4] sm:$0xc] %v3091
  %3114 = vst [vmem:[#allocation5 + $0x8] sm:$0x30] %v3112
  %v3115 = vld [vmem:[#allocation2] sm:$0x30]
  %v3116 = vld [vmem:[#allocation2 + $0x8] sm:$0x30]
  %v3117 = vld [vmem:[#allocation2 + $0x10] sm:$0x30]
  %v3118 = vld [vmem:[#allocation2 + $0x18] sm:$0x30]
  %v3119 = vpack.c.bf16 %v3091, %v3091
  %v3120 = vld [vmem:[%s3] sm:$0xff]
  %v3121 = vld [vmem:[%s3 + $0x8] sm:$0xff]
  %v3122 = vld [vmem:[%s3 + $0x10] sm:$0xff]
  %v3123 = vld [vmem:[%s3 + $0x18] sm:$0xff]
  %v3124 = vld [vmem:[%s3 + $0x20] sm:$0xff]
  %v3125 = vld [vmem:[%s3 + $0x28] sm:$0xff]
  %v3126 = vld [vmem:[%s3 + $0x30] sm:$0xff]
  %v3127 = vld [vmem:[%s3 + $0x38] sm:$0xff]
  %v3128 = vld [vmem:[%s3 + $0x40] sm:$0xff]
  %v3129 = vld [vmem:[%s3 + $0x48] sm:$0xff]
  %v3130 = vld [vmem:[%s3 + $0x50] sm:$0xff]
  %v3131 = vld [vmem:[%s3 + $0x58] sm:$0xff]
  %v3132 = vld [vmem:[%s3 + $0x60] sm:$0xff]
  %v3133 = vld [vmem:[%s3 + $0x68] sm:$0xff]
  %v3134 = vld [vmem:[%s3 + $0x70] sm:$0xff]
  %v3135 = vld [vmem:[%s3 + $0x78] sm:$0xff]
  %v3136 = vld [vmem:[%s3 + $0x80] sm:$0xff]
  %v3137 = vld [vmem:[%s3 + $0x88] sm:$0xff]
  %v3138 = vld [vmem:[%s3 + $0x90] sm:$0xff]
  %v3139 = vld [vmem:[%s3 + $0x98] sm:$0xff]
  %v3140 = vld [vmem:[%s3 + $0xa0] sm:$0xff]
  %v3141 = vld [vmem:[%s3 + $0xa8] sm:$0xff]
  %v3142 = vld [vmem:[%s3 + $0xb0] sm:$0xff]
  %v3143 = vld [vmem:[%s3 + $0xb8] sm:$0xff]
  %v3144 = vld [vmem:[%s3 + $0xc0] sm:$0xff]
  %v3145 = vld [vmem:[%s3 + $0xc8] sm:$0xff]
  %v3146 = vld [vmem:[%s3 + $0xd0] sm:$0xff]
  %v3147 = vld [vmem:[%s3 + $0xd8] sm:$0xff]
  %v3148 = vld [vmem:[%s3 + $0xe0] sm:$0xff]
  %v3149 = vld [vmem:[%s3 + $0xe8] sm:$0xff]
  %v3150 = vld [vmem:[%s3 + $0xf0] sm:$0xff]
  %v3151 = vld [vmem:[%s3 + $0xf8] sm:$0xff]
  %v3153 = vrot.slane %v3119, 1
  %v3187 = vunpack.c.l.b16 %v3120
  %v3188 = vunpack.c.h.b16 %v3120
  %v3189 = vunpack.c.l.b16 %v3121
  %v3190 = vunpack.c.h.b16 %v3121
  %v3191 = vunpack.c.l.b16 %v3122
  %v3192 = vunpack.c.h.b16 %v3122
  %v3193 = vunpack.c.l.b16 %v3123
  %v3194 = vunpack.c.h.b16 %v3123
  %v3195 = vunpack.c.l.b16 %v3124
  %v3196 = vunpack.c.h.b16 %v3124
  %v3197 = vunpack.c.l.b16 %v3125
  %v3198 = vunpack.c.h.b16 %v3125
  %v3199 = vunpack.c.l.b16 %v3126
  %v3200 = vunpack.c.h.b16 %v3126
  %v3201 = vunpack.c.l.b16 %v3127
  %v3202 = vunpack.c.h.b16 %v3127
  %v3203 = vunpack.c.l.b16 %v3128
  %v3204 = vunpack.c.h.b16 %v3128
  %v3205 = vunpack.c.l.b16 %v3129
  %v3206 = vunpack.c.h.b16 %v3129
  %v3207 = vunpack.c.l.b16 %v3130
  %v3208 = vunpack.c.h.b16 %v3130
  %v3209 = vunpack.c.l.b16 %v3131
  %v3210 = vunpack.c.h.b16 %v3131
  %v3211 = vunpack.c.l.b16 %v3132
  %v3212 = vunpack.c.h.b16 %v3132
  %v3213 = vunpack.c.l.b16 %v3133
  %v3214 = vunpack.c.h.b16 %v3133
  %v3215 = vunpack.c.l.b16 %v3134
  %v3216 = vunpack.c.h.b16 %v3134
  %v3217 = vunpack.c.l.b16 %v3135
  %v3218 = vunpack.c.h.b16 %v3135
  %v3219 = vunpack.c.l.b16 %v3136
  %v3220 = vunpack.c.h.b16 %v3136
  %v3221 = vunpack.c.l.b16 %v3137
  %v3222 = vunpack.c.h.b16 %v3137
  %v3223 = vunpack.c.l.b16 %v3138
  %v3224 = vunpack.c.h.b16 %v3138
  %v3225 = vunpack.c.l.b16 %v3139
  %v3226 = vunpack.c.h.b16 %v3139
  %v3227 = vunpack.c.l.b16 %v3140
  %v3228 = vunpack.c.h.b16 %v3140
  %v3229 = vunpack.c.l.b16 %v3141
  %v3230 = vunpack.c.h.b16 %v3141
  %v3231 = vunpack.c.l.b16 %v3142
  %v3232 = vunpack.c.h.b16 %v3142
  %v3233 = vunpack.c.l.b16 %v3143
  %v3234 = vunpack.c.h.b16 %v3143
  %v3235 = vunpack.c.l.b16 %v3144
  %v3236 = vunpack.c.h.b16 %v3144
  %v3237 = vunpack.c.l.b16 %v3145
  %v3238 = vunpack.c.h.b16 %v3145
  %v3239 = vunpack.c.l.b16 %v3146
  %v3240 = vunpack.c.h.b16 %v3146
  %v3241 = vunpack.c.l.b16 %v3147
  %v3242 = vunpack.c.h.b16 %v3147
  %v3243 = vunpack.c.l.b16 %v3148
  %v3244 = vunpack.c.h.b16 %v3148
  %v3245 = vunpack.c.l.b16 %v3149
  %v3246 = vunpack.c.h.b16 %v3149
  %v3247 = vunpack.c.l.b16 %v3150
  %v3248 = vunpack.c.h.b16 %v3150
  %v3249 = vunpack.c.l.b16 %v3151
  %v3250 = vunpack.c.h.b16 %v3151
  %v3251 = vpack.c.b16 %v3191, %v3187
  %v3252 = vpack.c.b16 %v3192, %v3188
  %v3253 = vpack.c.b16 %v3193, %v3189
  %v3254 = vpack.c.b16 %v3194, %v3190
  %v3255 = vpack.c.b16 %v3199, %v3195
  %v3256 = vpack.c.b16 %v3200, %v3196
  %v3257 = vpack.c.b16 %v3201, %v3197
  %v3258 = vpack.c.b16 %v3202, %v3198
  %v3259 = vpack.c.b16 %v3207, %v3203
  %v3260 = vpack.c.b16 %v3208, %v3204
  %v3261 = vpack.c.b16 %v3209, %v3205
  %v3262 = vpack.c.b16 %v3210, %v3206
  %v3263 = vpack.c.b16 %v3215, %v3211
  %v3264 = vpack.c.b16 %v3216, %v3212
  %v3265 = vpack.c.b16 %v3217, %v3213
  %v3266 = vpack.c.b16 %v3218, %v3214
  %v3267 = vpack.c.b16 %v3223, %v3219
  %v3268 = vpack.c.b16 %v3224, %v3220
  %v3269 = vpack.c.b16 %v3225, %v3221
  %v3270 = vpack.c.b16 %v3226, %v3222
  %v3271 = vpack.c.b16 %v3231, %v3227
  %v3272 = vpack.c.b16 %v3232, %v3228
  %v3273 = vpack.c.b16 %v3233, %v3229
  %v3274 = vpack.c.b16 %v3234, %v3230
  %v3275 = vpack.c.b16 %v3239, %v3235
  %v3276 = vpack.c.b16 %v3240, %v3236
  %v3277 = vpack.c.b16 %v3241, %v3237
  %v3278 = vpack.c.b16 %v3242, %v3238
  %v3279 = vpack.c.b16 %v3247, %v3243
  %v3280 = vpack.c.b16 %v3248, %v3244
  %v3281 = vpack.c.b16 %v3249, %v3245
  %v3282 = vpack.c.b16 %v3250, %v3246
  %3315 = vmatprep.subr.bf16.mxu0 %v3252
  %3316 = vmatpush1.bf16.msra.mxu0 %v3251
  %3317 = vmatprep.subr.bf16.mxu0 %v3256
  %3318 = vmatpush1.bf16.msra.mxu0 %v3255
  %3319 = vmatprep.subr.bf16.mxu0 %v3260
  %3320 = vmatpush1.bf16.msra.mxu0 %v3259
  %3321 = vmatprep.subr.bf16.mxu0 %v3264
  %3322 = vmatpush1.bf16.msra.mxu0 %v3263
  %3323 = vmatprep.subr.bf16.mxu0 %v3268
  %3324 = vmatpush1.bf16.msra.mxu0 %v3267
  %3325 = vmatprep.subr.bf16.mxu0 %v3272
  %3326 = vmatpush1.bf16.msra.mxu0 %v3271
  %3327 = vmatprep.subr.bf16.mxu0 %v3276
  %3328 = vmatpush1.bf16.msra.mxu0 %v3275
  %3329 = vmatprep.subr.bf16.mxu0 %v3280
  %3330 = vmatpush1.bf16.msra.mxu0 %v3279
  %3331 = vmatprep.subr.bf16.mxu0 0
  %3332 = vmatpush1.bf16.msra.mxu0 0
  %3333 = vmatprep.subr.bf16.mxu0 0
  %3334 = vmatpush1.bf16.msra.mxu0 0
  %3335 = vmatprep.subr.bf16.mxu0 0
  %3336 = vmatpush1.bf16.msra.mxu0 0
  %3337 = vmatprep.subr.bf16.mxu0 0
  %3338 = vmatpush1.bf16.msra.mxu0 0
  %3339 = vmatprep.subr.bf16.mxu0 0
  %3340 = vmatpush1.bf16.msra.mxu0 0
  %3341 = vmatprep.subr.bf16.mxu0 0
  %3342 = vmatpush1.bf16.msra.mxu0 0
  %3343 = vmatprep.subr.bf16.mxu0 0
  %3344 = vmatpush1.bf16.msra.mxu0 0
  %3345 = vmatprep.subr.bf16.mxu0 0
  %3346 = vmatpush1.bf16.msra.mxu0 0
  %3347 = vmatprep.mubr.bf16.mxu0 0
  %3348 = vmatmul.mubr.bf16.gmra.mrb[0].mxu0 %v3153
  %v3349 = vpop.f32.mrb[0].mxu0
  %v3350 = vadd.f32 0.0, %v3349
  %v3351 = vpop.f32.mrb[0].mxu0
  %v3352 = vadd.f32 0.0, %v3351
  %v3353 = vpop.f32.mrb[0].mxu0
  %v3354 = vpop.f32.mrb[0].mxu0
  %3355 = vdwg.mxu0
  %3356 = vmatprep.subr.bf16.mxu0 %v3254
  %3357 = vmatpush1.bf16.msra.mxu0 %v3253
  %3358 = vmatprep.subr.bf16.mxu0 %v3258
  %3359 = vmatpush1.bf16.msra.mxu0 %v3257
  %3360 = vmatprep.subr.bf16.mxu0 %v3262
  %3361 = vmatpush1.bf16.msra.mxu0 %v3261
  %3362 = vmatprep.subr.bf16.mxu0 %v3266
  %3363 = vmatpush1.bf16.msra.mxu0 %v3265
  %3364 = vmatprep.subr.bf16.mxu0 %v3270
  %3365 = vmatpush1.bf16.msra.mxu0 %v3269
  %3366 = vmatprep.subr.bf16.mxu0 %v3274
  %3367 = vmatpush1.bf16.msra.mxu0 %v3273
  %3368 = vmatprep.subr.bf16.mxu0 %v3278
  %3369 = vmatpush1.bf16.msra.mxu0 %v3277
  %3370 = vmatprep.subr.bf16.mxu0 %v3282
  %3371 = vmatpush1.bf16.msra.mxu0 %v3281
  %3372 = vmatprep.subr.bf16.mxu0 0
  %3373 = vmatpush1.bf16.msra.mxu0 0
  %3374 = vmatprep.subr.bf16.mxu0 0
  %3375 = vmatpush1.bf16.msra.mxu0 0
  %3376 = vmatprep.subr.bf16.mxu0 0
  %3377 = vmatpush1.bf16.msra.mxu0 0
  %3378 = vmatprep.subr.bf16.mxu0 0
  %3379 = vmatpush1.bf16.msra.mxu0 0
  %3380 = vmatprep.subr.bf16.mxu0 0
  %3381 = vmatpush1.bf16.msra.mxu0 0
  %3382 = vmatprep.subr.bf16.mxu0 0
  %3383 = vmatpush1.bf16.msra.mxu0 0
  %3384 = vmatprep.subr.bf16.mxu0 0
  %3385 = vmatpush1.bf16.msra.mxu0 0
  %3386 = vmatprep.subr.bf16.mxu0 0
  %3387 = vmatpush1.bf16.msra.mxu0 0
  %3388 = vmatprep.mubr.bf16.mxu0 0
  %3389 = vmatmul.mubr.bf16.gmra.mrb[0].mxu0 %v3153
  %v3390 = vpop.f32.mrb[0].mxu0
  %v3391 = vadd.f32 0.0, %v3390
  %v3392 = vpop.f32.mrb[0].mxu0
  %v3393 = vadd.f32 0.0, %v3392
  %v3394 = vpop.f32.mrb[0].mxu0
  %v3395 = vpop.f32.mrb[0].mxu0
  %3396 = vdwg.mxu0
  %v3401 = vrot.slane %v3350, 4
  %v3402 = vrot.slane %v3352, 4
  %v3403 = vrot.slane %v3391, 4
  %v3404 = vrot.slane %v3393, 4
  %v3409 = vadd.f32 %v3115, %v3401
  %v3410 = vadd.f32 %v3116, %v3402
  %v3411 = vadd.f32 %v3117, %v3403
  %v3412 = vadd.f32 %v3118, %v3404
  %v3413 = vld [vmem:[#allocation3 + $0x20] sm:$0xc]
  %v3414 = vld [vmem:[#allocation3 + $0x28] sm:$0xc]
  %v3415 = vld [vmem:[#allocation3 + $0x30] sm:$0xc]
  %v3416 = vld [vmem:[#allocation3 + $0x38] sm:$0xc]
  %v3417 = vpack.c.bf16 %v3112, %v3112
  %v3418 = vld [vmem:[%s6] sm:$0xff]
  %v3419 = vld [vmem:[%s6 + $0x8] sm:$0xff]
  %v3420 = vld [vmem:[%s6 + $0x10] sm:$0xff]
  %v3421 = vld [vmem:[%s6 + $0x18] sm:$0xff]
  %v3422 = vld [vmem:[%s6 + $0x20] sm:$0xff]
  %v3423 = vld [vmem:[%s6 + $0x28] sm:$0xff]
  %v3424 = vld [vmem:[%s6 + $0x30] sm:$0xff]
  %v3425 = vld [vmem:[%s6 + $0x38] sm:$0xff]
  %v3426 = vld [vmem:[%s6 + $0x40] sm:$0xff]
  %v3427 = vld [vmem:[%s6 + $0x48] sm:$0xff]
  %v3428 = vld [vmem:[%s6 + $0x50] sm:$0xff]
  %v3429 = vld [vmem:[%s6 + $0x58] sm:$0xff]
  %v3430 = vld [vmem:[%s6 + $0x60] sm:$0xff]
  %v3431 = vld [vmem:[%s6 + $0x68] sm:$0xff]
  %v3432 = vld [vmem:[%s6 + $0x70] sm:$0xff]
  %v3433 = vld [vmem:[%s6 + $0x78] sm:$0xff]
  %v3434 = vld [vmem:[%s6 + $0x80] sm:$0xff]
  %v3435 = vld [vmem:[%s6 + $0x88] sm:$0xff]
  %v3436 = vld [vmem:[%s6 + $0x90] sm:$0xff]
  %v3437 = vld [vmem:[%s6 + $0x98] sm:$0xff]
  %v3438 = vld [vmem:[%s6 + $0xa0] sm:$0xff]
  %v3439 = vld [vmem:[%s6 + $0xa8] sm:$0xff]
  %v3440 = vld [vmem:[%s6 + $0xb0] sm:$0xff]
  %v3441 = vld [vmem:[%s6 + $0xb8] sm:$0xff]
  %v3442 = vld [vmem:[%s6 + $0xc0] sm:$0xff]
  %v3443 = vld [vmem:[%s6 + $0xc8] sm:$0xff]
  %v3444 = vld [vmem:[%s6 + $0xd0] sm:$0xff]
  %v3445 = vld [vmem:[%s6 + $0xd8] sm:$0xff]
  %v3446 = vld [vmem:[%s6 + $0xe0] sm:$0xff]
  %v3447 = vld [vmem:[%s6 + $0xe8] sm:$0xff]
  %v3448 = vld [vmem:[%s6 + $0xf0] sm:$0xff]
  %v3449 = vld [vmem:[%s6 + $0xf8] sm:$0xff]
  %v3451 = vrot.slane %v3417, 2
  %v3485 = vunpack.c.l.b16 %v3418
  %v3486 = vunpack.c.h.b16 %v3418
  %v3487 = vunpack.c.l.b16 %v3419
  %v3488 = vunpack.c.h.b16 %v3419
  %v3489 = vunpack.c.l.b16 %v3420
  %v3490 = vunpack.c.h.b16 %v3420
  %v3491 = vunpack.c.l.b16 %v3421
  %v3492 = vunpack.c.h.b16 %v3421
  %v3493 = vunpack.c.l.b16 %v3422
  %v3494 = vunpack.c.h.b16 %v3422
  %v3495 = vunpack.c.l.b16 %v3423
  %v3496 = vunpack.c.h.b16 %v3423
  %v3497 = vunpack.c.l.b16 %v3424
  %v3498 = vunpack.c.h.b16 %v3424
  %v3499 = vunpack.c.l.b16 %v3425
  %v3500 = vunpack.c.h.b16 %v3425
  %v3501 = vunpack.c.l.b16 %v3426
  %v3502 = vunpack.c.h.b16 %v3426
  %v3503 = vunpack.c.l.b16 %v3427
  %v3504 = vunpack.c.h.b16 %v3427
  %v3505 = vunpack.c.l.b16 %v3428
  %v3506 = vunpack.c.h.b16 %v3428
  %v3507 = vunpack.c.l.b16 %v3429
  %v3508 = vunpack.c.h.b16 %v3429
  %v3509 = vunpack.c.l.b16 %v3430
  %v3510 = vunpack.c.h.b16 %v3430
  %v3511 = vunpack.c.l.b16 %v3431
  %v3512 = vunpack.c.h.b16 %v3431
  %v3513 = vunpack.c.l.b16 %v3432
  %v3514 = vunpack.c.h.b16 %v3432
  %v3515 = vunpack.c.l.b16 %v3433
  %v3516 = vunpack.c.h.b16 %v3433
  %v3517 = vunpack.c.l.b16 %v3434
  %v3518 = vunpack.c.h.b16 %v3434
  %v3519 = vunpack.c.l.b16 %v3435
  %v3520 = vunpack.c.h.b16 %v3435
  %v3521 = vunpack.c.l.b16 %v3436
  %v3522 = vunpack.c.h.b16 %v3436
  %v3523 = vunpack.c.l.b16 %v3437
  %v3524 = vunpack.c.h.b16 %v3437
  %v3525 = vunpack.c.l.b16 %v3438
  %v3526 = vunpack.c.h.b16 %v3438
  %v3527 = vunpack.c.l.b16 %v3439
  %v3528 = vunpack.c.h.b16 %v3439
  %v3529 = vunpack.c.l.b16 %v3440
  %v3530 = vunpack.c.h.b16 %v3440
  %v3531 = vunpack.c.l.b16 %v3441
  %v3532 = vunpack.c.h.b16 %v3441
  %v3533 = vunpack.c.l.b16 %v3442
  %v3534 = vunpack.c.h.b16 %v3442
  %v3535 = vunpack.c.l.b16 %v3443
  %v3536 = vunpack.c.h.b16 %v3443
  %v3537 = vunpack.c.l.b16 %v3444
  %v3538 = vunpack.c.h.b16 %v3444
  %v3539 = vunpack.c.l.b16 %v3445
  %v3540 = vunpack.c.h.b16 %v3445
  %v3541 = vunpack.c.l.b16 %v3446
  %v3542 = vunpack.c.h.b16 %v3446
  %v3543 = vunpack.c.l.b16 %v3447
  %v3544 = vunpack.c.h.b16 %v3447
  %v3545 = vunpack.c.l.b16 %v3448
  %v3546 = vunpack.c.h.b16 %v3448
  %v3547 = vunpack.c.l.b16 %v3449
  %v3548 = vunpack.c.h.b16 %v3449
  %v3549 = vpack.c.b16 %v3489, %v3485
  %v3550 = vpack.c.b16 %v3490, %v3486
  %v3551 = vpack.c.b16 %v3491, %v3487
  %v3552 = vpack.c.b16 %v3492, %v3488
  %v3553 = vpack.c.b16 %v3497, %v3493
  %v3554 = vpack.c.b16 %v3498, %v3494
  %v3555 = vpack.c.b16 %v3499, %v3495
  %v3556 = vpack.c.b16 %v3500, %v3496
  %v3557 = vpack.c.b16 %v3505, %v3501
  %v3558 = vpack.c.b16 %v3506, %v3502
  %v3559 = vpack.c.b16 %v3507, %v3503
  %v3560 = vpack.c.b16 %v3508, %v3504
  %v3561 = vpack.c.b16 %v3513, %v3509
  %v3562 = vpack.c.b16 %v3514, %v3510
  %v3563 = vpack.c.b16 %v3515, %v3511
  %v3564 = vpack.c.b16 %v3516, %v3512
  %v3565 = vpack.c.b16 %v3521, %v3517
  %v3566 = vpack.c.b16 %v3522, %v3518
  %v3567 = vpack.c.b16 %v3523, %v3519
  %v3568 = vpack.c.b16 %v3524, %v3520
  %v3569 = vpack.c.b16 %v3529, %v3525
  %v3570 = vpack.c.b16 %v3530, %v3526
  %v3571 = vpack.c.b16 %v3531, %v3527
  %v3572 = vpack.c.b16 %v3532, %v3528
  %v3573 = vpack.c.b16 %v3537, %v3533
  %v3574 = vpack.c.b16 %v3538, %v3534
  %v3575 = vpack.c.b16 %v3539, %v3535
  %v3576 = vpack.c.b16 %v3540, %v3536
  %v3577 = vpack.c.b16 %v3545, %v3541
  %v3578 = vpack.c.b16 %v3546, %v3542
  %v3579 = vpack.c.b16 %v3547, %v3543
  %v3580 = vpack.c.b16 %v3548, %v3544
  %3613 = vmatprep.subr.bf16.mxu0 %v3550
  %3614 = vmatpush1.bf16.msra.mxu0 %v3549
  %3615 = vmatprep.subr.bf16.mxu0 %v3554
  %3616 = vmatpush1.bf16.msra.mxu0 %v3553
  %3617 = vmatprep.subr.bf16.mxu0 %v3558
  %3618 = vmatpush1.bf16.msra.mxu0 %v3557
  %3619 = vmatprep.subr.bf16.mxu0 %v3562
  %3620 = vmatpush1.bf16.msra.mxu0 %v3561
  %3621 = vmatprep.subr.bf16.mxu0 %v3566
  %3622 = vmatpush1.bf16.msra.mxu0 %v3565
  %3623 = vmatprep.subr.bf16.mxu0 %v3570
  %3624 = vmatpush1.bf16.msra.mxu0 %v3569
  %3625 = vmatprep.subr.bf16.mxu0 %v3574
  %3626 = vmatpush1.bf16.msra.mxu0 %v3573
  %3627 = vmatprep.subr.bf16.mxu0 %v3578
  %3628 = vmatpush1.bf16.msra.mxu0 %v3577
  %3629 = vmatprep.subr.bf16.mxu0 0
  %3630 = vmatpush1.bf16.msra.mxu0 0
  %3631 = vmatprep.subr.bf16.mxu0 0
  %3632 = vmatpush1.bf16.msra.mxu0 0
  %3633 = vmatprep.subr.bf16.mxu0 0
  %3634 = vmatpush1.bf16.msra.mxu0 0
  %3635 = vmatprep.subr.bf16.mxu0 0
  %3636 = vmatpush1.bf16.msra.mxu0 0
  %3637 = vmatprep.subr.bf16.mxu0 0
  %3638 = vmatpush1.bf16.msra.mxu0 0
  %3639 = vmatprep.subr.bf16.mxu0 0
  %3640 = vmatpush1.bf16.msra.mxu0 0
  %3641 = vmatprep.subr.bf16.mxu0 0
  %3642 = vmatpush1.bf16.msra.mxu0 0
  %3643 = vmatprep.subr.bf16.mxu0 0
  %3644 = vmatpush1.bf16.msra.mxu0 0
  %3645 = vmatprep.mubr.bf16.mxu0 0
  %3646 = vmatmul.mubr.bf16.gmra.mrb[0].mxu0 %v3451
  %v3647 = vpop.f32.mrb[0].mxu0
  %v3648 = vadd.f32 0.0, %v3647
  %v3649 = vpop.f32.mrb[0].mxu0
  %v3650 = vadd.f32 0.0, %v3649
  %v3651 = vpop.f32.mrb[0].mxu0
  %v3652 = vpop.f32.mrb[0].mxu0
  %3653 = vdwg.mxu0
  %3654 = vmatprep.subr.bf16.mxu0 %v3552
  %3655 = vmatpush1.bf16.msra.mxu0 %v3551
  %3656 = vmatprep.subr.bf16.mxu0 %v3556
  %3657 = vmatpush1.bf16.msra.mxu0 %v3555
  %3658 = vmatprep.subr.bf16.mxu0 %v3560
  %3659 = vmatpush1.bf16.msra.mxu0 %v3559
  %3660 = vmatprep.subr.bf16.mxu0 %v3564
  %3661 = vmatpush1.bf16.msra.mxu0 %v3563
  %3662 = vmatprep.subr.bf16.mxu0 %v3568
  %3663 = vmatpush1.bf16.msra.mxu0 %v3567
  %3664 = vmatprep.subr.bf16.mxu0 %v3572
  %3665 = vmatpush1.bf16.msra.mxu0 %v3571
  %3666 = vmatprep.subr.bf16.mxu0 %v3576
  %3667 = vmatpush1.bf16.msra.mxu0 %v3575
  %3668 = vmatprep.subr.bf16.mxu0 %v3580
  %3669 = vmatpush1.bf16.msra.mxu0 %v3579
  %3670 = vmatprep.subr.bf16.mxu0 0
  %3671 = vmatpush1.bf16.msra.mxu0 0
  %3672 = vmatprep.subr.bf16.mxu0 0
  %3673 = vmatpush1.bf16.msra.mxu0 0
  %3674 = vmatprep.subr.bf16.mxu0 0
  %3675 = vmatpush1.bf16.msra.mxu0 0
  %3676 = vmatprep.subr.bf16.mxu0 0
  %3677 = vmatpush1.bf16.msra.mxu0 0
  %3678 = vmatprep.subr.bf16.mxu0 0
  %3679 = vmatpush1.bf16.msra.mxu0 0
  %3680 = vmatprep.subr.bf16.mxu0 0
  %3681 = vmatpush1.bf16.msra.mxu0 0
  %3682 = vmatprep.subr.bf16.mxu0 0
  %3683 = vmatpush1.bf16.msra.mxu0 0
  %3684 = vmatprep.subr.bf16.mxu0 0
  %3685 = vmatpush1.bf16.msra.mxu0 0
  %3686 = vmatprep.mubr.bf16.mxu0 0
  %3687 = vmatmul.mubr.bf16.gmra.mrb[0].mxu0 %v3451
  %v3688 = vpop.f32.mrb[0].mxu0
  %v3689 = vadd.f32 0.0, %v3688
  %v3690 = vpop.f32.mrb[0].mxu0
  %v3691 = vadd.f32 0.0, %v3690
  %v3692 = vpop.f32.mrb[0].mxu0
  %v3693 = vpop.f32.mrb[0].mxu0
  %3694 = vdwg.mxu0
  %v3699 = vrot.slane %v3648, 6
  %v3700 = vrot.slane %v3650, 6
  %v3701 = vrot.slane %v3689, 6
  %v3702 = vrot.slane %v3691, 6
  %v3707 = vadd.f32 %v3413, %v3699
  %v3708 = vadd.f32 %v3414, %v3700
  %v3709 = vadd.f32 %v3415, %v3701
  %v3710 = vadd.f32 %v3416, %v3702
  %v3711 = vmul.f32 %v3409, 0.5
  %v3712 = vtanh.pop %v3711
  %v3713 = vmul.f32 %v3712, 0.5
  %v3714 = vadd.f32 %v3713, 0.5
  %v3715 = vmul.f32 %v3410, 0.5
  %v3716 = vtanh.pop %v3715
  %v3717 = vmul.f32 %v3716, 0.5
  %v3718 = vadd.f32 %v3717, 0.5
  %v3719 = vtanh.pop %v3411
  %v3720 = vmul.f32 %v3412, 0.5
  %v3721 = vtanh.pop %v3720
  %v3722 = vmul.f32 %v3721, 0.5
  %v3723 = vadd.f32 %v3722, 0.5
  %v3725 = vrot.slane %v3089, 6
  %v3727 = vmul.f32 %v3718, %v3725
  %v3728 = vmul.f32 %v3714, %v3719
  %v3729 = vadd.f32 %v3727, %v3728
  %v3730 = vtanh.pop %v3729
  %v3731 = vmul.f32 %v3723, %v3730
  %v3732 = vmul.f32 %v3707, 0.5
  %v3733 = vtanh.pop %v3732
  %v3734 = vmul.f32 %v3733, 0.5
  %v3735 = vadd.f32 %v3734, 0.5
  %v3736 = vmul.f32 %v3708, 0.5
  %v3737 = vtanh.pop %v3736
  %v3738 = vmul.f32 %v3737, 0.5
  %v3739 = vadd.f32 %v3738, 0.5
  %v3740 = vtanh.pop %v3709
  %v3741 = vmul.f32 %v3710, 0.5
  %v3742 = vtanh.pop %v3741
  %v3743 = vmul.f32 %v3742, 0.5
  %v3744 = vadd.f32 %v3743, 0.5
  %v3746 = vrot.slane %v3110, 2
  %v3748 = vmul.f32 %v3739, %v3746
  %v3749 = vmul.f32 %v3735, %v3740
  %v3750 = vadd.f32 %v3748, %v3749
  %v3751 = vtanh.pop %v3750
  %v3752 = vmul.f32 %v3744, %v3751
  %3753 = vst [vmem:[#allocation4] sm:$0x30] %v3731
  %3754 = vst [vmem:[#allocation5 + $0x8] sm:$0xc] %v3752
  %v3755 = vld [vmem:[#allocation2] sm:$0xc0]
  %v3756 = vld [vmem:[#allocation2 + $0x8] sm:$0xc0]
  %v3757 = vld [vmem:[#allocation2 + $0x10] sm:$0xc0]
  %v3758 = vld [vmem:[#allocation2 + $0x18] sm:$0xc0]
  %v3759 = vpack.c.bf16 %v3731, %v3731
  %v3760 = vld [vmem:[%s3] sm:$0xff]
  %v3761 = vld [vmem:[%s3 + $0x8] sm:$0xff]
  %v3762 = vld [vmem:[%s3 + $0x10] sm:$0xff]
  %v3763 = vld [vmem:[%s3 + $0x18] sm:$0xff]
  %v3764 = vld [vmem:[%s3 + $0x20] sm:$0xff]
  %v3765 = vld [vmem:[%s3 + $0x28] sm:$0xff]
  %v3766 = vld [vmem:[%s3 + $0x30] sm:$0xff]
  %v3767 = vld [vmem:[%s3 + $0x38] sm:$0xff]
  %v3768 = vld [vmem:[%s3 + $0x40] sm:$0xff]
  %v3769 = vld [vmem:[%s3 + $0x48] sm:$0xff]
  %v3770 = vld [vmem:[%s3 + $0x50] sm:$0xff]
  %v3771 = vld [vmem:[%s3 + $0x58] sm:$0xff]
  %v3772 = vld [vmem:[%s3 + $0x60] sm:$0xff]
  %v3773 = vld [vmem:[%s3 + $0x68] sm:$0xff]
  %v3774 = vld [vmem:[%s3 + $0x70] sm:$0xff]
  %v3775 = vld [vmem:[%s3 + $0x78] sm:$0xff]
  %v3776 = vld [vmem:[%s3 + $0x80] sm:$0xff]
  %v3777 = vld [vmem:[%s3 + $0x88] sm:$0xff]
  %v3778 = vld [vmem:[%s3 + $0x90] sm:$0xff]
  %v3779 = vld [vmem:[%s3 + $0x98] sm:$0xff]
  %v3780 = vld [vmem:[%s3 + $0xa0] sm:$0xff]
  %v3781 = vld [vmem:[%s3 + $0xa8] sm:$0xff]
  %v3782 = vld [vmem:[%s3 + $0xb0] sm:$0xff]
  %v3783 = vld [vmem:[%s3 + $0xb8] sm:$0xff]
  %v3784 = vld [vmem:[%s3 + $0xc0] sm:$0xff]
  %v3785 = vld [vmem:[%s3 + $0xc8] sm:$0xff]
  %v3786 = vld [vmem:[%s3 + $0xd0] sm:$0xff]
  %v3787 = vld [vmem:[%s3 + $0xd8] sm:$0xff]
  %v3788 = vld [vmem:[%s3 + $0xe0] sm:$0xff]
  %v3789 = vld [vmem:[%s3 + $0xe8] sm:$0xff]
  %v3790 = vld [vmem:[%s3 + $0xf0] sm:$0xff]
  %v3791 = vld [vmem:[%s3 + $0xf8] sm:$0xff]
  %v3793 = vrot.slane %v3759, 2
  %v3827 = vunpack.c.l.b16 %v3760
  %v3828 = vunpack.c.h.b16 %v3760
  %v3829 = vunpack.c.l.b16 %v3761
  %v3830 = vunpack.c.h.b16 %v3761
  %v3831 = vunpack.c.l.b16 %v3762
  %v3832 = vunpack.c.h.b16 %v3762
  %v3833 = vunpack.c.l.b16 %v3763
  %v3834 = vunpack.c.h.b16 %v3763
  %v3835 = vunpack.c.l.b16 %v3764
  %v3836 = vunpack.c.h.b16 %v3764
  %v3837 = vunpack.c.l.b16 %v3765
  %v3838 = vunpack.c.h.b16 %v3765
  %v3839 = vunpack.c.l.b16 %v3766
  %v3840 = vunpack.c.h.b16 %v3766
  %v3841 = vunpack.c.l.b16 %v3767
  %v3842 = vunpack.c.h.b16 %v3767
  %v3843 = vunpack.c.l.b16 %v3768
  %v3844 = vunpack.c.h.b16 %v3768
  %v3845 = vunpack.c.l.b16 %v3769
  %v3846 = vunpack.c.h.b16 %v3769
  %v3847 = vunpack.c.l.b16 %v3770
  %v3848 = vunpack.c.h.b16 %v3770
  %v3849 = vunpack.c.l.b16 %v3771
  %v3850 = vunpack.c.h.b16 %v3771
  %v3851 = vunpack.c.l.b16 %v3772
  %v3852 = vunpack.c.h.b16 %v3772
  %v3853 = vunpack.c.l.b16 %v3773
  %v3854 = vunpack.c.h.b16 %v3773
  %v3855 = vunpack.c.l.b16 %v3774
  %v3856 = vunpack.c.h.b16 %v3774
  %v3857 = vunpack.c.l.b16 %v3775
  %v3858 = vunpack.c.h.b16 %v3775
  %v3859 = vunpack.c.l.b16 %v3776
  %v3860 = vunpack.c.h.b16 %v3776
  %v3861 = vunpack.c.l.b16 %v3777
  %v3862 = vunpack.c.h.b16 %v3777
  %v3863 = vunpack.c.l.b16 %v3778
  %v3864 = vunpack.c.h.b16 %v3778
  %v3865 = vunpack.c.l.b16 %v3779
  %v3866 = vunpack.c.h.b16 %v3779
  %v3867 = vunpack.c.l.b16 %v3780
  %v3868 = vunpack.c.h.b16 %v3780
  %v3869 = vunpack.c.l.b16 %v3781
  %v3870 = vunpack.c.h.b16 %v3781
  %v3871 = vunpack.c.l.b16 %v3782
  %v3872 = vunpack.c.h.b16 %v3782
  %v3873 = vunpack.c.l.b16 %v3783
  %v3874 = vunpack.c.h.b16 %v3783
  %v3875 = vunpack.c.l.b16 %v3784
  %v3876 = vunpack.c.h.b16 %v3784
  %v3877 = vunpack.c.l.b16 %v3785
  %v3878 = vunpack.c.h.b16 %v3785
  %v3879 = vunpack.c.l.b16 %v3786
  %v3880 = vunpack.c.h.b16 %v3786
  %v3881 = vunpack.c.l.b16 %v3787
  %v3882 = vunpack.c.h.b16 %v3787
  %v3883 = vunpack.c.l.b16 %v3788
  %v3884 = vunpack.c.h.b16 %v3788
  %v3885 = vunpack.c.l.b16 %v3789
  %v3886 = vunpack.c.h.b16 %v3789
  %v3887 = vunpack.c.l.b16 %v3790
  %v3888 = vunpack.c.h.b16 %v3790
  %v3889 = vunpack.c.l.b16 %v3791
  %v3890 = vunpack.c.h.b16 %v3791
  %v3891 = vpack.c.b16 %v3831, %v3827
  %v3892 = vpack.c.b16 %v3832, %v3828
  %v3893 = vpack.c.b16 %v3833, %v3829
  %v3894 = vpack.c.b16 %v3834, %v3830
  %v3895 = vpack.c.b16 %v3839, %v3835
  %v3896 = vpack.c.b16 %v3840, %v3836
  %v3897 = vpack.c.b16 %v3841, %v3837
  %v3898 = vpack.c.b16 %v3842, %v3838
  %v3899 = vpack.c.b16 %v3847, %v3843
  %v3900 = vpack.c.b16 %v3848, %v3844
  %v3901 = vpack.c.b16 %v3849, %v3845
  %v3902 = vpack.c.b16 %v3850, %v3846
  %v3903 = vpack.c.b16 %v3855, %v3851
  %v3904 = vpack.c.b16 %v3856, %v3852
  %v3905 = vpack.c.b16 %v3857, %v3853
  %v3906 = vpack.c.b16 %v3858, %v3854
  %v3907 = vpack.c.b16 %v3863, %v3859
  %v3908 = vpack.c.b16 %v3864, %v3860
  %v3909 = vpack.c.b16 %v3865, %v3861
  %v3910 = vpack.c.b16 %v3866, %v3862
  %v3911 = vpack.c.b16 %v3871, %v3867
  %v3912 = vpack.c.b16 %v3872, %v3868
  %v3913 = vpack.c.b16 %v3873, %v3869
  %v3914 = vpack.c.b16 %v3874, %v3870
  %v3915 = vpack.c.b16 %v3879, %v3875
  %v3916 = vpack.c.b16 %v3880, %v3876
  %v3917 = vpack.c.b16 %v3881, %v3877
  %v3918 = vpack.c.b16 %v3882, %v3878
  %v3919 = vpack.c.b16 %v3887, %v3883
  %v3920 = vpack.c.b16 %v3888, %v3884
  %v3921 = vpack.c.b16 %v3889, %v3885
  %v3922 = vpack.c.b16 %v3890, %v3886
  %3955 = vmatprep.subr.bf16.mxu0 %v3892
  %3956 = vmatpush1.bf16.msra.mxu0 %v3891
  %3957 = vmatprep.subr.bf16.mxu0 %v3896
  %3958 = vmatpush1.bf16.msra.mxu0 %v3895
  %3959 = vmatprep.subr.bf16.mxu0 %v3900
  %3960 = vmatpush1.bf16.msra.mxu0 %v3899
  %3961 = vmatprep.subr.bf16.mxu0 %v3904
  %3962 = vmatpush1.bf16.msra.mxu0 %v3903
  %3963 = vmatprep.subr.bf16.mxu0 %v3908
  %3964 = vmatpush1.bf16.msra.mxu0 %v3907
  %3965 = vmatprep.subr.bf16.mxu0 %v3912
  %3966 = vmatpush1.bf16.msra.mxu0 %v3911
  %3967 = vmatprep.subr.bf16.mxu0 %v3916
  %3968 = vmatpush1.bf16.msra.mxu0 %v3915
  %3969 = vmatprep.subr.bf16.mxu0 %v3920
  %3970 = vmatpush1.bf16.msra.mxu0 %v3919
  %3971 = vmatprep.subr.bf16.mxu0 0
  %3972 = vmatpush1.bf16.msra.mxu0 0
  %3973 = vmatprep.subr.bf16.mxu0 0
  %3974 = vmatpush1.bf16.msra.mxu0 0
  %3975 = vmatprep.subr.bf16.mxu0 0
  %3976 = vmatpush1.bf16.msra.mxu0 0
  %3977 = vmatprep.subr.bf16.mxu0 0
  %3978 = vmatpush1.bf16.msra.mxu0 0
  %3979 = vmatprep.subr.bf16.mxu0 0
  %3980 = vmatpush1.bf16.msra.mxu0 0
  %3981 = vmatprep.subr.bf16.mxu0 0
  %3982 = vmatpush1.bf16.msra.mxu0 0
  %3983 = vmatprep.subr.bf16.mxu0 0
  %3984 = vmatpush1.bf16.msra.mxu0 0
  %3985 = vmatprep.subr.bf16.mxu0 0
  %3986 = vmatpush1.bf16.msra.mxu0 0
  %3987 = vmatprep.mubr.bf16.mxu0 0
  %3988 = vmatmul.mubr.bf16.gmra.mrb[0].mxu0 %v3793
  %v3989 = vpop.f32.mrb[0].mxu0
  %v3990 = vadd.f32 0.0, %v3989
  %v3991 = vpop.f32.mrb[0].mxu0
  %v3992 = vadd.f32 0.0, %v3991
  %v3993 = vpop.f32.mrb[0].mxu0
  %v3994 = vpop.f32.mrb[0].mxu0
  %3995 = vdwg.mxu0
  %3996 = vmatprep.subr.bf16.mxu0 %v3894
  %3997 = vmatpush1.bf16.msra.mxu0 %v3893
  %3998 = vmatprep.subr.bf16.mxu0 %v3898
  %3999 = vmatpush1.bf16.msra.mxu0 %v3897
  %4000 = vmatprep.subr.bf16.mxu0 %v3902
  %4001 = vmatpush1.bf16.msra.mxu0 %v3901
  %4002 = vmatprep.subr.bf16.mxu0 %v3906
  %4003 = vmatpush1.bf16.msra.mxu0 %v3905
  %4004 = vmatprep.subr.bf16.mxu0 %v3910
  %4005 = vmatpush1.bf16.msra.mxu0 %v3909
  %4006 = vmatprep.subr.bf16.mxu0 %v3914
  %4007 = vmatpush1.bf16.msra.mxu0 %v3913
  %4008 = vmatprep.subr.bf16.mxu0 %v3918
  %4009 = vmatpush1.bf16.msra.mxu0 %v3917
  %4010 = vmatprep.subr.bf16.mxu0 %v3922
  %4011 = vmatpush1.bf16.msra.mxu0 %v3921
  %4012 = vmatprep.subr.bf16.mxu0 0
  %4013 = vmatpush1.bf16.msra.mxu0 0
  %4014 = vmatprep.subr.bf16.mxu0 0
  %4015 = vmatpush1.bf16.msra.mxu0 0
  %4016 = vmatprep.subr.bf16.mxu0 0
  %4017 = vmatpush1.bf16.msra.mxu0 0
  %4018 = vmatprep.subr.bf16.mxu0 0
  %4019 = vmatpush1.bf16.msra.mxu0 0
  %4020 = vmatprep.subr.bf16.mxu0 0
  %4021 = vmatpush1.bf16.msra.mxu0 0
  %4022 = vmatprep.subr.bf16.mxu0 0
  %4023 = vmatpush1.bf16.msra.mxu0 0
  %4024 = vmatprep.subr.bf16.mxu0 0
  %4025 = vmatpush1.bf16.msra.mxu0 0
  %4026 = vmatprep.subr.bf16.mxu0 0
  %4027 = vmatpush1.bf16.msra.mxu0 0
  %4028 = vmatprep.mubr.bf16.mxu0 0
  %4029 = vmatmul.mubr.bf16.gmra.mrb[0].mxu0 %v3793
  %v4030 = vpop.f32.mrb[0].mxu0
  %v4031 = vadd.f32 0.0, %v4030
  %v4032 = vpop.f32.mrb[0].mxu0
  %v4033 = vadd.f32 0.0, %v4032
  %v4034 = vpop.f32.mrb[0].mxu0
  %v4035 = vpop.f32.mrb[0].mxu0
  %4036 = vdwg.mxu0
  %v4041 = vrot.slane %v3990, 2
  %v4042 = vrot.slane %v3992, 2
  %v4043 = vrot.slane %v4031, 2
  %v4044 = vrot.slane %v4033, 2
  %v4049 = vadd.f32 %v3755, %v4041
  %v4050 = vadd.f32 %v3756, %v4042
  %v4051 = vadd.f32 %v3757, %v4043
  %v4052 = vadd.f32 %v3758, %v4044
  %v4053 = vld [vmem:[#allocation3 + $0x20] sm:$0x3]
  %v4054 = vld [vmem:[#allocation3 + $0x28] sm:$0x3]
  %v4055 = vld [vmem:[#allocation3 + $0x30] sm:$0x3]
  %v4056 = vld [vmem:[#allocation3 + $0x38] sm:$0x3]
  %v4057 = vpack.c.bf16 %v3752, %v3752
  %v4058 = vld [vmem:[%s6] sm:$0xff]
  %v4059 = vld [vmem:[%s6 + $0x8] sm:$0xff]
  %v4060 = vld [vmem:[%s6 + $0x10] sm:$0xff]
  %v4061 = vld [vmem:[%s6 + $0x18] sm:$0xff]
  %v4062 = vld [vmem:[%s6 + $0x20] sm:$0xff]
  %v4063 = vld [vmem:[%s6 + $0x28] sm:$0xff]
  %v4064 = vld [vmem:[%s6 + $0x30] sm:$0xff]
  %v4065 = vld [vmem:[%s6 + $0x38] sm:$0xff]
  %v4066 = vld [vmem:[%s6 + $0x40] sm:$0xff]
  %v4067 = vld [vmem:[%s6 + $0x48] sm:$0xff]
  %v4068 = vld [vmem:[%s6 + $0x50] sm:$0xff]
  %v4069 = vld [vmem:[%s6 + $0x58] sm:$0xff]
  %v4070 = vld [vmem:[%s6 + $0x60] sm:$0xff]
  %v4071 = vld [vmem:[%s6 + $0x68] sm:$0xff]
  %v4072 = vld [vmem:[%s6 + $0x70] sm:$0xff]
  %v4073 = vld [vmem:[%s6 + $0x78] sm:$0xff]
  %v4074 = vld [vmem:[%s6 + $0x80] sm:$0xff]
  %v4075 = vld [vmem:[%s6 + $0x88] sm:$0xff]
  %v4076 = vld [vmem:[%s6 + $0x90] sm:$0xff]
  %v4077 = vld [vmem:[%s6 + $0x98] sm:$0xff]
  %v4078 = vld [vmem:[%s6 + $0xa0] sm:$0xff]
  %v4079 = vld [vmem:[%s6 + $0xa8] sm:$0xff]
  %v4080 = vld [vmem:[%s6 + $0xb0] sm:$0xff]
  %v4081 = vld [vmem:[%s6 + $0xb8] sm:$0xff]
  %v4082 = vld [vmem:[%s6 + $0xc0] sm:$0xff]
  %v4083 = vld [vmem:[%s6 + $0xc8] sm:$0xff]
  %v4084 = vld [vmem:[%s6 + $0xd0] sm:$0xff]
  %v4085 = vld [vmem:[%s6 + $0xd8] sm:$0xff]
  %v4086 = vld [vmem:[%s6 + $0xe0] sm:$0xff]
  %v4087 = vld [vmem:[%s6 + $0xe8] sm:$0xff]
  %v4088 = vld [vmem:[%s6 + $0xf0] sm:$0xff]
  %v4089 = vld [vmem:[%s6 + $0xf8] sm:$0xff]
  %v4091 = vrot.slane %v4057, 1
  %v4125 = vunpack.c.l.b16 %v4058
  %v4126 = vunpack.c.h.b16 %v4058
  %v4127 = vunpack.c.l.b16 %v4059
  %v4128 = vunpack.c.h.b16 %v4059
  %v4129 = vunpack.c.l.b16 %v4060
  %v4130 = vunpack.c.h.b16 %v4060
  %v4131 = vunpack.c.l.b16 %v4061
  %v4132 = vunpack.c.h.b16 %v4061
  %v4133 = vunpack.c.l.b16 %v4062
  %v4134 = vunpack.c.h.b16 %v4062
  %v4135 = vunpack.c.l.b16 %v4063
  %v4136 = vunpack.c.h.b16 %v4063
  %v4137 = vunpack.c.l.b16 %v4064
  %v4138 = vunpack.c.h.b16 %v4064
  %v4139 = vunpack.c.l.b16 %v4065
  %v4140 = vunpack.c.h.b16 %v4065
  %v4141 = vunpack.c.l.b16 %v4066
  %v4142 = vunpack.c.h.b16 %v4066
  %v4143 = vunpack.c.l.b16 %v4067
  %v4144 = vunpack.c.h.b16 %v4067
  %v4145 = vunpack.c.l.b16 %v4068
  %v4146 = vunpack.c.h.b16 %v4068
  %v4147 = vunpack.c.l.b16 %v4069
  %v4148 = vunpack.c.h.b16 %v4069
  %v4149 = vunpack.c.l.b16 %v4070
  %v4150 = vunpack.c.h.b16 %v4070
  %v4151 = vunpack.c.l.b16 %v4071
  %v4152 = vunpack.c.h.b16 %v4071
  %v4153 = vunpack.c.l.b16 %v4072
  %v4154 = vunpack.c.h.b16 %v4072
  %v4155 = vunpack.c.l.b16 %v4073
  %v4156 = vunpack.c.h.b16 %v4073
  %v4157 = vunpack.c.l.b16 %v4074
  %v4158 = vunpack.c.h.b16 %v4074
  %v4159 = vunpack.c.l.b16 %v4075
  %v4160 = vunpack.c.h.b16 %v4075
  %v4161 = vunpack.c.l.b16 %v4076
  %v4162 = vunpack.c.h.b16 %v4076
  %v4163 = vunpack.c.l.b16 %v4077
  %v4164 = vunpack.c.h.b16 %v4077
  %v4165 = vunpack.c.l.b16 %v4078
  %v4166 = vunpack.c.h.b16 %v4078
  %v4167 = vunpack.c.l.b16 %v4079
  %v4168 = vunpack.c.h.b16 %v4079
  %v4169 = vunpack.c.l.b16 %v4080
  %v4170 = vunpack.c.h.b16 %v4080
  %v4171 = vunpack.c.l.b16 %v4081
  %v4172 = vunpack.c.h.b16 %v4081
  %v4173 = vunpack.c.l.b16 %v4082
  %v4174 = vunpack.c.h.b16 %v4082
  %v4175 = vunpack.c.l.b16 %v4083
  %v4176 = vunpack.c.h.b16 %v4083
  %v4177 = vunpack.c.l.b16 %v4084
  %v4178 = vunpack.c.h.b16 %v4084
  %v4179 = vunpack.c.l.b16 %v4085
  %v4180 = vunpack.c.h.b16 %v4085
  %v4181 = vunpack.c.l.b16 %v4086
  %v4182 = vunpack.c.h.b16 %v4086
  %v4183 = vunpack.c.l.b16 %v4087
  %v4184 = vunpack.c.h.b16 %v4087
  %v4185 = vunpack.c.l.b16 %v4088
  %v4186 = vunpack.c.h.b16 %v4088
  %v4187 = vunpack.c.l.b16 %v4089
  %v4188 = vunpack.c.h.b16 %v4089
  %v4189 = vpack.c.b16 %v4129, %v4125
  %v4190 = vpack.c.b16 %v4130, %v4126
  %v4191 = vpack.c.b16 %v4131, %v4127
  %v4192 = vpack.c.b16 %v4132, %v4128
  %v4193 = vpack.c.b16 %v4137, %v4133
  %v4194 = vpack.c.b16 %v4138, %v4134
  %v4195 = vpack.c.b16 %v4139, %v4135
  %v4196 = vpack.c.b16 %v4140, %v4136
  %v4197 = vpack.c.b16 %v4145, %v4141
  %v4198 = vpack.c.b16 %v4146, %v4142
  %v4199 = vpack.c.b16 %v4147, %v4143
  %v4200 = vpack.c.b16 %v4148, %v4144
  %v4201 = vpack.c.b16 %v4153, %v4149
  %v4202 = vpack.c.b16 %v4154, %v4150
  %v4203 = vpack.c.b16 %v4155, %v4151
  %v4204 = vpack.c.b16 %v4156, %v4152
  %v4205 = vpack.c.b16 %v4161, %v4157
  %v4206 = vpack.c.b16 %v4162, %v4158
  %v4207 = vpack.c.b16 %v4163, %v4159
  %v4208 = vpack.c.b16 %v4164, %v4160
  %v4209 = vpack.c.b16 %v4169, %v4165
  %v4210 = vpack.c.b16 %v4170, %v4166
  %v4211 = vpack.c.b16 %v4171, %v4167
  %v4212 = vpack.c.b16 %v4172, %v4168
  %v4213 = vpack.c.b16 %v4177, %v4173
  %v4214 = vpack.c.b16 %v4178, %v4174
  %v4215 = vpack.c.b16 %v4179, %v4175
  %v4216 = vpack.c.b16 %v4180, %v4176
  %v4217 = vpack.c.b16 %v4185, %v4181
  %v4218 = vpack.c.b16 %v4186, %v4182
  %v4219 = vpack.c.b16 %v4187, %v4183
  %v4220 = vpack.c.b16 %v4188, %v4184
  %4253 = vmatprep.subr.bf16.mxu0 %v4190
  %4254 = vmatpush1.bf16.msra.mxu0 %v4189
  %4255 = vmatprep.subr.bf16.mxu0 %v4194
  %4256 = vmatpush1.bf16.msra.mxu0 %v4193
  %4257 = vmatprep.subr.bf16.mxu0 %v4198
  %4258 = vmatpush1.bf16.msra.mxu0 %v4197
  %4259 = vmatprep.subr.bf16.mxu0 %v4202
  %4260 = vmatpush1.bf16.msra.mxu0 %v4201
  %4261 = vmatprep.subr.bf16.mxu0 %v4206
  %4262 = vmatpush1.bf16.msra.mxu0 %v4205
  %4263 = vmatprep.subr.bf16.mxu0 %v4210
  %4264 = vmatpush1.bf16.msra.mxu0 %v4209
  %4265 = vmatprep.subr.bf16.mxu0 %v4214
  %4266 = vmatpush1.bf16.msra.mxu0 %v4213
  %4267 = vmatprep.subr.bf16.mxu0 %v4218
  %4268 = vmatpush1.bf16.msra.mxu0 %v4217
  %4269 = vmatprep.subr.bf16.mxu0 0
  %4270 = vmatpush1.bf16.msra.mxu0 0
  %4271 = vmatprep.subr.bf16.mxu0 0
  %4272 = vmatpush1.bf16.msra.mxu0 0
  %4273 = vmatprep.subr.bf16.mxu0 0
  %4274 = vmatpush1.bf16.msra.mxu0 0
  %4275 = vmatprep.subr.bf16.mxu0 0
  %4276 = vmatpush1.bf16.msra.mxu0 0
  %4277 = vmatprep.subr.bf16.mxu0 0
  %4278 = vmatpush1.bf16.msra.mxu0 0
  %4279 = vmatprep.subr.bf16.mxu0 0
  %4280 = vmatpush1.bf16.msra.mxu0 0
  %4281 = vmatprep.subr.bf16.mxu0 0
  %4282 = vmatpush1.bf16.msra.mxu0 0
  %4283 = vmatprep.subr.bf16.mxu0 0
  %4284 = vmatpush1.bf16.msra.mxu0 0
  %4285 = vmatprep.mubr.bf16.mxu0 0
  %4286 = vmatmul.mubr.bf16.gmra.mrb[0].mxu0 %v4091
  %v4287 = vpop.f32.mrb[0].mxu0
  %v4288 = vadd.f32 0.0, %v4287
  %v4289 = vpop.f32.mrb[0].mxu0
  %v4290 = vadd.f32 0.0, %v4289
  %v4291 = vpop.f32.mrb[0].mxu0
  %v4292 = vpop.f32.mrb[0].mxu0
  %4293 = vdwg.mxu0
  %4294 = vmatprep.subr.bf16.mxu0 %v4192
  %4295 = vmatpush1.bf16.msra.mxu0 %v4191
  %4296 = vmatprep.subr.bf16.mxu0 %v4196
  %4297 = vmatpush1.bf16.msra.mxu0 %v4195
  %4298 = vmatprep.subr.bf16.mxu0 %v4200
  %4299 = vmatpush1.bf16.msra.mxu0 %v4199
  %4300 = vmatprep.subr.bf16.mxu0 %v4204
  %4301 = vmatpush1.bf16.msra.mxu0 %v4203
  %4302 = vmatprep.subr.bf16.mxu0 %v4208
  %4303 = vmatpush1.bf16.msra.mxu0 %v4207
  %4304 = vmatprep.subr.bf16.mxu0 %v4212
  %4305 = vmatpush1.bf16.msra.mxu0 %v4211
  %4306 = vmatprep.subr.bf16.mxu0 %v4216
  %4307 = vmatpush1.bf16.msra.mxu0 %v4215
  %4308 = vmatprep.subr.bf16.mxu0 %v4220
  %4309 = vmatpush1.bf16.msra.mxu0 %v4219
  %4310 = vmatprep.subr.bf16.mxu0 0
  %4311 = vmatpush1.bf16.msra.mxu0 0
  %4312 = vmatprep.subr.bf16.mxu0 0
  %4313 = vmatpush1.bf16.msra.mxu0 0
  %4314 = vmatprep.subr.bf16.mxu0 0
  %4315 = vmatpush1.bf16.msra.mxu0 0
  %4316 = vmatprep.subr.bf16.mxu0 0
  %4317 = vmatpush1.bf16.msra.mxu0 0
  %4318 = vmatprep.subr.bf16.mxu0 0
  %4319 = vmatpush1.bf16.msra.mxu0 0
  %4320 = vmatprep.subr.bf16.mxu0 0
  %4321 = vmatpush1.bf16.msra.mxu0 0
  %4322 = vmatprep.subr.bf16.mxu0 0
  %4323 = vmatpush1.bf16.msra.mxu0 0
  %4324 = vmatprep.subr.bf16.mxu0 0
  %4325 = vmatpush1.bf16.msra.mxu0 0
  %4326 = vmatprep.mubr.bf16.mxu0 0
  %4327 = vmatmul.mubr.bf16.gmra.mrb[0].mxu0 %v4091
  %v4328 = vpop.f32.mrb[0].mxu0
  %v4329 = vadd.f32 0.0, %v4328
  %v4330 = vpop.f32.mrb[0].mxu0
  %v4331 = vadd.f32 0.0, %v4330
  %v4332 = vpop.f32.mrb[0].mxu0
  %v4333 = vpop.f32.mrb[0].mxu0
  %4334 = vdwg.mxu0
  %v4335 = vadd.f32 %v4053, %v4288
  %v4336 = vadd.f32 %v4054, %v4290
  %v4337 = vadd.f32 %v4055, %v4329
  %v4338 = vadd.f32 %v4056, %v4331
  %v4339 = vmul.f32 %v4049, 0.5
  %v4340 = vtanh.pop %v4339
  %v4341 = vmul.f32 %v4340, 0.5
  %v4342 = vadd.f32 %v4341, 0.5
  %v4343 = vmul.f32 %v4050, 0.5
  %v4344 = vtanh.pop %v4343
  %v4345 = vmul.f32 %v4344, 0.5
  %v4346 = vadd.f32 %v4345, 0.5
  %v4347 = vtanh.pop %v4051
  %v4348 = vmul.f32 %v4052, 0.5
  %v4349 = vtanh.pop %v4348
  %v4350 = vmul.f32 %v4349, 0.5
  %v4351 = vadd.f32 %v4350, 0.5
  %v4353 = vrot.slane %v3729, 6
  %v4355 = vmul.f32 %v4346, %v4353
  %v4356 = vmul.f32 %v4342, %v4347
  %v4357 = vadd.f32 %v4355, %v4356
  %v4358 = vtanh.pop %v4357
  %v4359 = vmul.f32 %v4351, %v4358
  %v4360 = vmul.f32 %v4335, 0.5
  %v4361 = vtanh.pop %v4360
  %v4362 = vmul.f32 %v4361, 0.5
  %v4363 = vadd.f32 %v4362, 0.5
  %v4364 = vmul.f32 %v4336, 0.5
  %v4365 = vtanh.pop %v4364
  %v4366 = vmul.f32 %v4365, 0.5
  %v4367 = vadd.f32 %v4366, 0.5
  %v4368 = vtanh.pop %v4337
  %v4369 = vmul.f32 %v4338, 0.5
  %v4370 = vtanh.pop %v4369
  %v4371 = vmul.f32 %v4370, 0.5
  %v4372 = vadd.f32 %v4371, 0.5
  %v4374 = vrot.slane %v3750, 2
  %v4376 = vmul.f32 %v4367, %v4374
  %v4377 = vmul.f32 %v4363, %v4368
  %v4378 = vadd.f32 %v4376, %v4377
  %v4379 = vtanh.pop %v4378
  %v4380 = vmul.f32 %v4372, %v4379
  %4381 = vst [vmem:[#allocation4] sm:$0xc0] %v4359
  %4382 = vst [vmem:[#allocation5 + $0x8] sm:$0x3] %v4380
  %v4383 = vld [vmem:[#allocation2 + $0x20] sm:$0x3]
  %v4384 = vld [vmem:[#allocation2 + $0x28] sm:$0x3]
  %v4385 = vld [vmem:[#allocation2 + $0x30] sm:$0x3]
  %v4386 = vld [vmem:[#allocation2 + $0x38] sm:$0x3]
  %v4387 = vpack.c.bf16 %v4359, %v4359
  %v4388 = vld [vmem:[%s3] sm:$0xff]
  %v4389 = vld [vmem:[%s3 + $0x8] sm:$0xff]
  %v4390 = vld [vmem:[%s3 + $0x10] sm:$0xff]
  %v4391 = vld [vmem:[%s3 + $0x18] sm:$0xff]
  %v4392 = vld [vmem:[%s3 + $0x20] sm:$0xff]
  %v4393 = vld [vmem:[%s3 + $0x28] sm:$0xff]
  %v4394 = vld [vmem:[%s3 + $0x30] sm:$0xff]
  %v4395 = vld [vmem:[%s3 + $0x38] sm:$0xff]
  %v4396 = vld [vmem:[%s3 + $0x40] sm:$0xff]
  %v4397 = vld [vmem:[%s3 + $0x48] sm:$0xff]
  %v4398 = vld [vmem:[%s3 + $0x50] sm:$0xff]
  %v4399 = vld [vmem:[%s3 + $0x58] sm:$0xff]
  %v4400 = vld [vmem:[%s3 + $0x60] sm:$0xff]
  %v4401 = vld [vmem:[%s3 + $0x68] sm:$0xff]
  %v4402 = vld [vmem:[%s3 + $0x70] sm:$0xff]
  %v4403 = vld [vmem:[%s3 + $0x78] sm:$0xff]
  %v4404 = vld [vmem:[%s3 + $0x80] sm:$0xff]
  %v4405 = vld [vmem:[%s3 + $0x88] sm:$0xff]
  %v4406 = vld [vmem:[%s3 + $0x90] sm:$0xff]
  %v4407 = vld [vmem:[%s3 + $0x98] sm:$0xff]
  %v4408 = vld [vmem:[%s3 + $0xa0] sm:$0xff]
  %v4409 = vld [vmem:[%s3 + $0xa8] sm:$0xff]
  %v4410 = vld [vmem:[%s3 + $0xb0] sm:$0xff]
  %v4411 = vld [vmem:[%s3 + $0xb8] sm:$0xff]
  %v4412 = vld [vmem:[%s3 + $0xc0] sm:$0xff]
  %v4413 = vld [vmem:[%s3 + $0xc8] sm:$0xff]
  %v4414 = vld [vmem:[%s3 + $0xd0] sm:$0xff]
  %v4415 = vld [vmem:[%s3 + $0xd8] sm:$0xff]
  %v4416 = vld [vmem:[%s3 + $0xe0] sm:$0xff]
  %v4417 = vld [vmem:[%s3 + $0xe8] sm:$0xff]
  %v4418 = vld [vmem:[%s3 + $0xf0] sm:$0xff]
  %v4419 = vld [vmem:[%s3 + $0xf8] sm:$0xff]
  %v4421 = vrot.slane %v4387, 3
  %v4455 = vunpack.c.l.b16 %v4388
  %v4456 = vunpack.c.h.b16 %v4388
  %v4457 = vunpack.c.l.b16 %v4389
  %v4458 = vunpack.c.h.b16 %v4389
  %v4459 = vunpack.c.l.b16 %v4390
  %v4460 = vunpack.c.h.b16 %v4390
  %v4461 = vunpack.c.l.b16 %v4391
  %v4462 = vunpack.c.h.b16 %v4391
  %v4463 = vunpack.c.l.b16 %v4392
  %v4464 = vunpack.c.h.b16 %v4392
  %v4465 = vunpack.c.l.b16 %v4393
  %v4466 = vunpack.c.h.b16 %v4393
  %v4467 = vunpack.c.l.b16 %v4394
  %v4468 = vunpack.c.h.b16 %v4394
  %v4469 = vunpack.c.l.b16 %v4395
  %v4470 = vunpack.c.h.b16 %v4395
  %v4471 = vunpack.c.l.b16 %v4396
  %v4472 = vunpack.c.h.b16 %v4396
  %v4473 = vunpack.c.l.b16 %v4397
  %v4474 = vunpack.c.h.b16 %v4397
  %v4475 = vunpack.c.l.b16 %v4398
  %v4476 = vunpack.c.h.b16 %v4398
  %v4477 = vunpack.c.l.b16 %v4399
  %v4478 = vunpack.c.h.b16 %v4399
  %v4479 = vunpack.c.l.b16 %v4400
  %v4480 = vunpack.c.h.b16 %v4400
  %v4481 = vunpack.c.l.b16 %v4401
  %v4482 = vunpack.c.h.b16 %v4401
  %v4483 = vunpack.c.l.b16 %v4402
  %v4484 = vunpack.c.h.b16 %v4402
  %v4485 = vunpack.c.l.b16 %v4403
  %v4486 = vunpack.c.h.b16 %v4403
  %v4487 = vunpack.c.l.b16 %v4404
  %v4488 = vunpack.c.h.b16 %v4404
  %v4489 = vunpack.c.l.b16 %v4405
  %v4490 = vunpack.c.h.b16 %v4405
  %v4491 = vunpack.c.l.b16 %v4406
  %v4492 = vunpack.c.h.b16 %v4406
  %v4493 = vunpack.c.l.b16 %v4407
  %v4494 = vunpack.c.h.b16 %v4407
  %v4495 = vunpack.c.l.b16 %v4408
  %v4496 = vunpack.c.h.b16 %v4408
  %v4497 = vunpack.c.l.b16 %v4409
  %v4498 = vunpack.c.h.b16 %v4409
  %v4499 = vunpack.c.l.b16 %v4410
  %v4500 = vunpack.c.h.b16 %v4410
  %v4501 = vunpack.c.l.b16 %v4411
  %v4502 = vunpack.c.h.b16 %v4411
  %v4503 = vunpack.c.l.b16 %v4412
  %v4504 = vunpack.c.h.b16 %v4412
  %v4505 = vunpack.c.l.b16 %v4413
  %v4506 = vunpack.c.h.b16 %v4413
  %v4507 = vunpack.c.l.b16 %v4414
  %v4508 = vunpack.c.h.b16 %v4414
  %v4509 = vunpack.c.l.b16 %v4415
  %v4510 = vunpack.c.h.b16 %v4415
  %v4511 = vunpack.c.l.b16 %v4416
  %v4512 = vunpack.c.h.b16 %v4416
  %v4513 = vunpack.c.l.b16 %v4417
  %v4514 = vunpack.c.h.b16 %v4417
  %v4515 = vunpack.c.l.b16 %v4418
  %v4516 = vunpack.c.h.b16 %v4418
  %v4517 = vunpack.c.l.b16 %v4419
  %v4518 = vunpack.c.h.b16 %v4419
  %v4519 = vpack.c.b16 %v4459, %v4455
  %v4520 = vpack.c.b16 %v4460, %v4456
  %v4521 = vpack.c.b16 %v4461, %v4457
  %v4522 = vpack.c.b16 %v4462, %v4458
  %v4523 = vpack.c.b16 %v4467, %v4463
  %v4524 = vpack.c.b16 %v4468, %v4464
  %v4525 = vpack.c.b16 %v4469, %v4465
  %v4526 = vpack.c.b16 %v4470, %v4466
  %v4527 = vpack.c.b16 %v4475, %v4471
  %v4528 = vpack.c.b16 %v4476, %v4472
  %v4529 = vpack.c.b16 %v4477, %v4473
  %v4530 = vpack.c.b16 %v4478, %v4474
  %v4531 = vpack.c.b16 %v4483, %v4479
  %v4532 = vpack.c.b16 %v4484, %v4480
  %v4533 = vpack.c.b16 %v4485, %v4481
  %v4534 = vpack.c.b16 %v4486, %v4482
  %v4535 = vpack.c.b16 %v4491, %v4487
  %v4536 = vpack.c.b16 %v4492, %v4488
  %v4537 = vpack.c.b16 %v4493, %v4489
  %v4538 = vpack.c.b16 %v4494, %v4490
  %v4539 = vpack.c.b16 %v4499, %v4495
  %v4540 = vpack.c.b16 %v4500, %v4496
  %v4541 = vpack.c.b16 %v4501, %v4497
  %v4542 = vpack.c.b16 %v4502, %v4498
  %v4543 = vpack.c.b16 %v4507, %v4503
  %v4544 = vpack.c.b16 %v4508, %v4504
  %v4545 = vpack.c.b16 %v4509, %v4505
  %v4546 = vpack.c.b16 %v4510, %v4506
  %v4547 = vpack.c.b16 %v4515, %v4511
  %v4548 = vpack.c.b16 %v4516, %v4512
  %v4549 = vpack.c.b16 %v4517, %v4513
  %v4550 = vpack.c.b16 %v4518, %v4514
  %4583 = vmatprep.subr.bf16.mxu0 %v4520
  %4584 = vmatpush1.bf16.msra.mxu0 %v4519
  %4585 = vmatprep.subr.bf16.mxu0 %v4524
  %4586 = vmatpush1.bf16.msra.mxu0 %v4523
  %4587 = vmatprep.subr.bf16.mxu0 %v4528
  %4588 = vmatpush1.bf16.msra.mxu0 %v4527
  %4589 = vmatprep.subr.bf16.mxu0 %v4532
  %4590 = vmatpush1.bf16.msra.mxu0 %v4531
  %4591 = vmatprep.subr.bf16.mxu0 %v4536
  %4592 = vmatpush1.bf16.msra.mxu0 %v4535
  %4593 = vmatprep.subr.bf16.mxu0 %v4540
  %4594 = vmatpush1.bf16.msra.mxu0 %v4539
  %4595 = vmatprep.subr.bf16.mxu0 %v4544
  %4596 = vmatpush1.bf16.msra.mxu0 %v4543
  %4597 = vmatprep.subr.bf16.mxu0 %v4548
  %4598 = vmatpush1.bf16.msra.mxu0 %v4547
  %4599 = vmatprep.subr.bf16.mxu0 0
  %4600 = vmatpush1.bf16.msra.mxu0 0
  %4601 = vmatprep.subr.bf16.mxu0 0
  %4602 = vmatpush1.bf16.msra.mxu0 0
  %4603 = vmatprep.subr.bf16.mxu0 0
  %4604 = vmatpush1.bf16.msra.mxu0 0
  %4605 = vmatprep.subr.bf16.mxu0 0
  %4606 = vmatpush1.bf16.msra.mxu0 0
  %4607 = vmatprep.subr.bf16.mxu0 0
  %4608 = vmatpush1.bf16.msra.mxu0 0
  %4609 = vmatprep.subr.bf16.mxu0 0
  %4610 = vmatpush1.bf16.msra.mxu0 0
  %4611 = vmatprep.subr.bf16.mxu0 0
  %4612 = vmatpush1.bf16.msra.mxu0 0
  %4613 = vmatprep.subr.bf16.mxu0 0
  %4614 = vmatpush1.bf16.msra.mxu0 0
  %4615 = vmatprep.mubr.bf16.mxu0 0
  %4616 = vmatmul.mubr.bf16.gmra.mrb[0].mxu0 %v4421
  %v4617 = vpop.f32.mrb[0].mxu0
  %v4618 = vadd.f32 0.0, %v4617
  %v4619 = vpop.f32.mrb[0].mxu0
  %v4620 = vadd.f32 0.0, %v4619
  %v4621 = vpop.f32.mrb[0].mxu0
  %v4622 = vpop.f32.mrb[0].mxu0
  %4623 = vdwg.mxu0
  %4624 = vmatprep.subr.bf16.mxu0 %v4522
  %4625 = vmatpush1.bf16.msra.mxu0 %v4521
  %4626 = vmatprep.subr.bf16.mxu0 %v4526
  %4627 = vmatpush1.bf16.msra.mxu0 %v4525
  %4628 = vmatprep.subr.bf16.mxu0 %v4530
  %4629 = vmatpush1.bf16.msra.mxu0 %v4529
  %4630 = vmatprep.subr.bf16.mxu0 %v4534
  %4631 = vmatpush1.bf16.msra.mxu0 %v4533
  %4632 = vmatprep.subr.bf16.mxu0 %v4538
  %4633 = vmatpush1.bf16.msra.mxu0 %v4537
  %4634 = vmatprep.subr.bf16.mxu0 %v4542
  %4635 = vmatpush1.bf16.msra.mxu0 %v4541
  %4636 = vmatprep.subr.bf16.mxu0 %v4546
  %4637 = vmatpush1.bf16.msra.mxu0 %v4545
  %4638 = vmatprep.subr.bf16.mxu0 %v4550
  %4639 = vmatpush1.bf16.msra.mxu0 %v4549
  %4640 = vmatprep.subr.bf16.mxu0 0
  %4641 = vmatpush1.bf16.msra.mxu0 0
  %4642 = vmatprep.subr.bf16.mxu0 0
  %4643 = vmatpush1.bf16.msra.mxu0 0
  %4644 = vmatprep.subr.bf16.mxu0 0
  %4645 = vmatpush1.bf16.msra.mxu0 0
  %4646 = vmatprep.subr.bf16.mxu0 0
  %4647 = vmatpush1.bf16.msra.mxu0 0
  %4648 = vmatprep.subr.bf16.mxu0 0
  %4649 = vmatpush1.bf16.msra.mxu0 0
  %4650 = vmatprep.subr.bf16.mxu0 0
  %4651 = vmatpush1.bf16.msra.mxu0 0
  %4652 = vmatprep.subr.bf16.mxu0 0
  %4653 = vmatpush1.bf16.msra.mxu0 0
  %4654 = vmatprep.subr.bf16.mxu0 0
  %4655 = vmatpush1.bf16.msra.mxu0 0
  %4656 = vmatprep.mubr.bf16.mxu0 0
  %4657 = vmatmul.mubr.bf16.gmra.mrb[0].mxu0 %v4421
  %v4658 = vpop.f32.mrb[0].mxu0
  %v4659 = vadd.f32 0.0, %v4658
  %v4660 = vpop.f32.mrb[0].mxu0
  %v4661 = vadd.f32 0.0, %v4660
  %v4662 = vpop.f32.mrb[0].mxu0
  %v4663 = vpop.f32.mrb[0].mxu0
  %4664 = vdwg.mxu0
  %v4665 = vadd.f32 %v4383, %v4618
  %v4666 = vadd.f32 %v4384, %v4620
  %v4667 = vadd.f32 %v4385, %v4659
  %v4668 = vadd.f32 %v4386, %v4661
  %v4669 = vld [vmem:[#allocation3] sm:$0xc0]
  %v4670 = vld [vmem:[#allocation3 + $0x8] sm:$0xc0]
  %v4671 = vld [vmem:[#allocation3 + $0x10] sm:$0xc0]
  %v4672 = vld [vmem:[#allocation3 + $0x18] sm:$0xc0]
  %v4673 = vpack.c.bf16 %v4380, %v4380
  %v4674 = vld [vmem:[%s6] sm:$0xff]
  %v4675 = vld [vmem:[%s6 + $0x8] sm:$0xff]
  %v4676 = vld [vmem:[%s6 + $0x10] sm:$0xff]
  %v4677 = vld [vmem:[%s6 + $0x18] sm:$0xff]
  %v4678 = vld [vmem:[%s6 + $0x20] sm:$0xff]
  %v4679 = vld [vmem:[%s6 + $0x28] sm:$0xff]
  %v4680 = vld [vmem:[%s6 + $0x30] sm:$0xff]
  %v4681 = vld [vmem:[%s6 + $0x38] sm:$0xff]
  %v4682 = vld [vmem:[%s6 + $0x40] sm:$0xff]
  %v4683 = vld [vmem:[%s6 + $0x48] sm:$0xff]
  %v4684 = vld [vmem:[%s6 + $0x50] sm:$0xff]
  %v4685 = vld [vmem:[%s6 + $0x58] sm:$0xff]
  %v4686 = vld [vmem:[%s6 + $0x60] sm:$0xff]
  %v4687 = vld [vmem:[%s6 + $0x68] sm:$0xff]
  %v4688 = vld [vmem:[%s6 + $0x70] sm:$0xff]
  %v4689 = vld [vmem:[%s6 + $0x78] sm:$0xff]
  %v4690 = vld [vmem:[%s6 + $0x80] sm:$0xff]
  %v4691 = vld [vmem:[%s6 + $0x88] sm:$0xff]
  %v4692 = vld [vmem:[%s6 + $0x90] sm:$0xff]
  %v4693 = vld [vmem:[%s6 + $0x98] sm:$0xff]
  %v4694 = vld [vmem:[%s6 + $0xa0] sm:$0xff]
  %v4695 = vld [vmem:[%s6 + $0xa8] sm:$0xff]
  %v4696 = vld [vmem:[%s6 + $0xb0] sm:$0xff]
  %v4697 = vld [vmem:[%s6 + $0xb8] sm:$0xff]
  %v4698 = vld [vmem:[%s6 + $0xc0] sm:$0xff]
  %v4699 = vld [vmem:[%s6 + $0xc8] sm:$0xff]
  %v4700 = vld [vmem:[%s6 + $0xd0] sm:$0xff]
  %v4701 = vld [vmem:[%s6 + $0xd8] sm:$0xff]
  %v4702 = vld [vmem:[%s6 + $0xe0] sm:$0xff]
  %v4703 = vld [vmem:[%s6 + $0xe8] sm:$0xff]
  %v4704 = vld [vmem:[%s6 + $0xf0] sm:$0xff]
  %v4705 = vld [vmem:[%s6 + $0xf8] sm:$0xff]
  %v4738 = vunpack.c.l.b16 %v4674
  %v4739 = vunpack.c.h.b16 %v4674
  %v4740 = vunpack.c.l.b16 %v4675
  %v4741 = vunpack.c.h.b16 %v4675
  %v4742 = vunpack.c.l.b16 %v4676
  %v4743 = vunpack.c.h.b16 %v4676
  %v4744 = vunpack.c.l.b16 %v4677
  %v4745 = vunpack.c.h.b16 %v4677
  %v4746 = vunpack.c.l.b16 %v4678
  %v4747 = vunpack.c.h.b16 %v4678
  %v4748 = vunpack.c.l.b16 %v4679
  %v4749 = vunpack.c.h.b16 %v4679
  %v4750 = vunpack.c.l.b16 %v4680
  %v4751 = vunpack.c.h.b16 %v4680
  %v4752 = vunpack.c.l.b16 %v4681
  %v4753 = vunpack.c.h.b16 %v4681
  %v4754 = vunpack.c.l.b16 %v4682
  %v4755 = vunpack.c.h.b16 %v4682
  %v4756 = vunpack.c.l.b16 %v4683
  %v4757 = vunpack.c.h.b16 %v4683
  %v4758 = vunpack.c.l.b16 %v4684
  %v4759 = vunpack.c.h.b16 %v4684
  %v4760 = vunpack.c.l.b16 %v4685
  %v4761 = vunpack.c.h.b16 %v4685
  %v4762 = vunpack.c.l.b16 %v4686
  %v4763 = vunpack.c.h.b16 %v4686
  %v4764 = vunpack.c.l.b16 %v4687
  %v4765 = vunpack.c.h.b16 %v4687
  %v4766 = vunpack.c.l.b16 %v4688
  %v4767 = vunpack.c.h.b16 %v4688
  %v4768 = vunpack.c.l.b16 %v4689
  %v4769 = vunpack.c.h.b16 %v4689
  %v4770 = vunpack.c.l.b16 %v4690
  %v4771 = vunpack.c.h.b16 %v4690
  %v4772 = vunpack.c.l.b16 %v4691
  %v4773 = vunpack.c.h.b16 %v4691
  %v4774 = vunpack.c.l.b16 %v4692
  %v4775 = vunpack.c.h.b16 %v4692
  %v4776 = vunpack.c.l.b16 %v4693
  %v4777 = vunpack.c.h.b16 %v4693
  %v4778 = vunpack.c.l.b16 %v4694
  %v4779 = vunpack.c.h.b16 %v4694
  %v4780 = vunpack.c.l.b16 %v4695
  %v4781 = vunpack.c.h.b16 %v4695
  %v4782 = vunpack.c.l.b16 %v4696
  %v4783 = vunpack.c.h.b16 %v4696
  %v4784 = vunpack.c.l.b16 %v4697
  %v4785 = vunpack.c.h.b16 %v4697
  %v4786 = vunpack.c.l.b16 %v4698
  %v4787 = vunpack.c.h.b16 %v4698
  %v4788 = vunpack.c.l.b16 %v4699
  %v4789 = vunpack.c.h.b16 %v4699
  %v4790 = vunpack.c.l.b16 %v4700
  %v4791 = vunpack.c.h.b16 %v4700
  %v4792 = vunpack.c.l.b16 %v4701
  %v4793 = vunpack.c.h.b16 %v4701
  %v4794 = vunpack.c.l.b16 %v4702
  %v4795 = vunpack.c.h.b16 %v4702
  %v4796 = vunpack.c.l.b16 %v4703
  %v4797 = vunpack.c.h.b16 %v4703
  %v4798 = vunpack.c.l.b16 %v4704
  %v4799 = vunpack.c.h.b16 %v4704
  %v4800 = vunpack.c.l.b16 %v4705
  %v4801 = vunpack.c.h.b16 %v4705
  %v4802 = vpack.c.b16 %v4742, %v4738
  %v4803 = vpack.c.b16 %v4743, %v4739
  %v4804 = vpack.c.b16 %v4744, %v4740
  %v4805 = vpack.c.b16 %v4745, %v4741
  %v4806 = vpack.c.b16 %v4750, %v4746
  %v4807 = vpack.c.b16 %v4751, %v4747
  %v4808 = vpack.c.b16 %v4752, %v4748
  %v4809 = vpack.c.b16 %v4753, %v4749
  %v4810 = vpack.c.b16 %v4758, %v4754
  %v4811 = vpack.c.b16 %v4759, %v4755
  %v4812 = vpack.c.b16 %v4760, %v4756
  %v4813 = vpack.c.b16 %v4761, %v4757
  %v4814 = vpack.c.b16 %v4766, %v4762
  %v4815 = vpack.c.b16 %v4767, %v4763
  %v4816 = vpack.c.b16 %v4768, %v4764
  %v4817 = vpack.c.b16 %v4769, %v4765
  %v4818 = vpack.c.b16 %v4774, %v4770
  %v4819 = vpack.c.b16 %v4775, %v4771
  %v4820 = vpack.c.b16 %v4776, %v4772
  %v4821 = vpack.c.b16 %v4777, %v4773
  %v4822 = vpack.c.b16 %v4782, %v4778
  %v4823 = vpack.c.b16 %v4783, %v4779
  %v4824 = vpack.c.b16 %v4784, %v4780
  %v4825 = vpack.c.b16 %v4785, %v4781
  %v4826 = vpack.c.b16 %v4790, %v4786
  %v4827 = vpack.c.b16 %v4791, %v4787
  %v4828 = vpack.c.b16 %v4792, %v4788
  %v4829 = vpack.c.b16 %v4793, %v4789
  %v4830 = vpack.c.b16 %v4798, %v4794
  %v4831 = vpack.c.b16 %v4799, %v4795
  %v4832 = vpack.c.b16 %v4800, %v4796
  %v4833 = vpack.c.b16 %v4801, %v4797
  %4866 = vmatprep.subr.bf16.mxu0 %v4803
  %4867 = vmatpush1.bf16.msra.mxu0 %v4802
  %4868 = vmatprep.subr.bf16.mxu0 %v4807
  %4869 = vmatpush1.bf16.msra.mxu0 %v4806
  %4870 = vmatprep.subr.bf16.mxu0 %v4811
  %4871 = vmatpush1.bf16.msra.mxu0 %v4810
  %4872 = vmatprep.subr.bf16.mxu0 %v4815
  %4873 = vmatpush1.bf16.msra.mxu0 %v4814
  %4874 = vmatprep.subr.bf16.mxu0 %v4819
  %4875 = vmatpush1.bf16.msra.mxu0 %v4818
  %4876 = vmatprep.subr.bf16.mxu0 %v4823
  %4877 = vmatpush1.bf16.msra.mxu0 %v4822
  %4878 = vmatprep.subr.bf16.mxu0 %v4827
  %4879 = vmatpush1.bf16.msra.mxu0 %v4826
  %4880 = vmatprep.subr.bf16.mxu0 %v4831
  %4881 = vmatpush1.bf16.msra.mxu0 %v4830
  %4882 = vmatprep.subr.bf16.mxu0 0
  %4883 = vmatpush1.bf16.msra.mxu0 0
  %4884 = vmatprep.subr.bf16.mxu0 0
  %4885 = vmatpush1.bf16.msra.mxu0 0
  %4886 = vmatprep.subr.bf16.mxu0 0
  %4887 = vmatpush1.bf16.msra.mxu0 0
  %4888 = vmatprep.subr.bf16.mxu0 0
  %4889 = vmatpush1.bf16.msra.mxu0 0
  %4890 = vmatprep.subr.bf16.mxu0 0
  %4891 = vmatpush1.bf16.msra.mxu0 0
  %4892 = vmatprep.subr.bf16.mxu0 0
  %4893 = vmatpush1.bf16.msra.mxu0 0
  %4894 = vmatprep.subr.bf16.mxu0 0
  %4895 = vmatpush1.bf16.msra.mxu0 0
  %4896 = vmatprep.subr.bf16.mxu0 0
  %4897 = vmatpush1.bf16.msra.mxu0 0
  %4898 = vmatprep.mubr.bf16.mxu0 0
  %4899 = vmatmul.mubr.bf16.gmra.mrb[0].mxu0 %v4673
  %v4900 = vpop.f32.mrb[0].mxu0
  %v4901 = vadd.f32 0.0, %v4900
  %v4902 = vpop.f32.mrb[0].mxu0
  %v4903 = vadd.f32 0.0, %v4902
  %v4904 = vpop.f32.mrb[0].mxu0
  %v4905 = vpop.f32.mrb[0].mxu0
  %4906 = vdwg.mxu0
  %4907 = vmatprep.subr.bf16.mxu0 %v4805
  %4908 = vmatpush1.bf16.msra.mxu0 %v4804
  %4909 = vmatprep.subr.bf16.mxu0 %v4809
  %4910 = vmatpush1.bf16.msra.mxu0 %v4808
  %4911 = vmatprep.subr.bf16.mxu0 %v4813
  %4912 = vmatpush1.bf16.msra.mxu0 %v4812
  %4913 = vmatprep.subr.bf16.mxu0 %v4817
  %4914 = vmatpush1.bf16.msra.mxu0 %v4816
  %4915 = vmatprep.subr.bf16.mxu0 %v4821
  %4916 = vmatpush1.bf16.msra.mxu0 %v4820
  %4917 = vmatprep.subr.bf16.mxu0 %v4825
  %4918 = vmatpush1.bf16.msra.mxu0 %v4824
  %4919 = vmatprep.subr.bf16.mxu0 %v4829
  %4920 = vmatpush1.bf16.msra.mxu0 %v4828
  %4921 = vmatprep.subr.bf16.mxu0 %v4833
  %4922 = vmatpush1.bf16.msra.mxu0 %v4832
  %4923 = vmatprep.subr.bf16.mxu0 0
  %4924 = vmatpush1.bf16.msra.mxu0 0
  %4925 = vmatprep.subr.bf16.mxu0 0
  %4926 = vmatpush1.bf16.msra.mxu0 0
  %4927 = vmatprep.subr.bf16.mxu0 0
  %4928 = vmatpush1.bf16.msra.mxu0 0
  %4929 = vmatprep.subr.bf16.mxu0 0
  %4930 = vmatpush1.bf16.msra.mxu0 0
  %4931 = vmatprep.subr.bf16.mxu0 0
  %4932 = vmatpush1.bf16.msra.mxu0 0
  %4933 = vmatprep.subr.bf16.mxu0 0
  %4934 = vmatpush1.bf16.msra.mxu0 0
  %4935 = vmatprep.subr.bf16.mxu0 0
  %4936 = vmatpush1.bf16.msra.mxu0 0
  %4937 = vmatprep.subr.bf16.mxu0 0
  %4938 = vmatpush1.bf16.msra.mxu0 0
  %4939 = vmatprep.mubr.bf16.mxu0 0
  %4940 = vmatmul.mubr.bf16.gmra.mrb[0].mxu0 %v4673
  %v4941 = vpop.f32.mrb[0].mxu0
  %v4942 = vadd.f32 0.0, %v4941
  %v4943 = vpop.f32.mrb[0].mxu0
  %v4944 = vadd.f32 0.0, %v4943
  %v4945 = vpop.f32.mrb[0].mxu0
  %v4946 = vpop.f32.mrb[0].mxu0
  %4947 = vdwg.mxu0
  %v4952 = vrot.slane %v4901, 2
  %v4953 = vrot.slane %v4903, 2
  %v4954 = vrot.slane %v4942, 2
  %v4955 = vrot.slane %v4944, 2
  %v4960 = vadd.f32 %v4669, %v4952
  %v4961 = vadd.f32 %v4670, %v4953
  %v4962 = vadd.f32 %v4671, %v4954
  %v4963 = vadd.f32 %v4672, %v4955
  %v4964 = vmul.f32 %v4665, 0.5
  %v4965 = vtanh.pop %v4964
  %v4966 = vmul.f32 %v4965, 0.5
  %v4967 = vadd.f32 %v4966, 0.5
  %v4968 = vmul.f32 %v4666, 0.5
  %v4969 = vtanh.pop %v4968
  %v4970 = vmul.f32 %v4969, 0.5
  %v4971 = vadd.f32 %v4970, 0.5
  %v4972 = vtanh.pop %v4667
  %v4973 = vmul.f32 %v4668, 0.5
  %v4974 = vtanh.pop %v4973
  %v4975 = vmul.f32 %v4974, 0.5
  %v4976 = vadd.f32 %v4975, 0.5
  %v4978 = vrot.slane %v4357, 6
  %v4980 = vmul.f32 %v4971, %v4978
  %v4981 = vmul.f32 %v4967, %v4972
  %v4982 = vadd.f32 %v4980, %v4981
  %v4983 = vtanh.pop %v4982
  %v4984 = vmul.f32 %v4976, %v4983
  %v4985 = vmul.f32 %v4960, 0.5
  %v4986 = vtanh.pop %v4985
  %v4987 = vmul.f32 %v4986, 0.5
  %v4988 = vadd.f32 %v4987, 0.5
  %v4989 = vmul.f32 %v4961, 0.5
  %v4990 = vtanh.pop %v4989
  %v4991 = vmul.f32 %v4990, 0.5
  %v4992 = vadd.f32 %v4991, 0.5
  %v4993 = vtanh.pop %v4962
  %v4994 = vmul.f32 %v4963, 0.5
  %v4995 = vtanh.pop %v4994
  %v4996 = vmul.f32 %v4995, 0.5
  %v4997 = vadd.f32 %v4996, 0.5
  %v4999 = vrot.slane %v4378, 2
  %v5001 = vmul.f32 %v4992, %v4999
  %v5002 = vmul.f32 %v4988, %v4993
  %v5003 = vadd.f32 %v5001, %v5002
  %v5004 = vtanh.pop %v5003
  %v5005 = vmul.f32 %v4997, %v5004
  %5006 = vst [vmem:[#allocation4 + $0x8] sm:$0x3] %v4984
  %5007 = vst [vmem:[#allocation5] sm:$0xc0] %v5005
  %v5008 = vld [vmem:[#allocation2 + $0x20] sm:$0xc]
  %v5009 = vld [vmem:[#allocation2 + $0x28] sm:$0xc]
  %v5010 = vld [vmem:[#allocation2 + $0x30] sm:$0xc]
  %v5011 = vld [vmem:[#allocation2 + $0x38] sm:$0xc]
  %v5012 = vpack.c.bf16 %v4984, %v4984
  %v5013 = vld [vmem:[%s3] sm:$0xff]
  %v5014 = vld [vmem:[%s3 + $0x8] sm:$0xff]
  %v5015 = vld [vmem:[%s3 + $0x10] sm:$0xff]
  %v5016 = vld [vmem:[%s3 + $0x18] sm:$0xff]
  %v5017 = vld [vmem:[%s3 + $0x20] sm:$0xff]
  %v5018 = vld [vmem:[%s3 + $0x28] sm:$0xff]
  %v5019 = vld [vmem:[%s3 + $0x30] sm:$0xff]
  %v5020 = vld [vmem:[%s3 + $0x38] sm:$0xff]
  %v5021 = vld [vmem:[%s3 + $0x40] sm:$0xff]
  %v5022 = vld [vmem:[%s3 + $0x48] sm:$0xff]
  %v5023 = vld [vmem:[%s3 + $0x50] sm:$0xff]
  %v5024 = vld [vmem:[%s3 + $0x58] sm:$0xff]
  %v5025 = vld [vmem:[%s3 + $0x60] sm:$0xff]
  %v5026 = vld [vmem:[%s3 + $0x68] sm:$0xff]
  %v5027 = vld [vmem:[%s3 + $0x70] sm:$0xff]
  %v5028 = vld [vmem:[%s3 + $0x78] sm:$0xff]
  %v5029 = vld [vmem:[%s3 + $0x80] sm:$0xff]
  %v5030 = vld [vmem:[%s3 + $0x88] sm:$0xff]
  %v5031 = vld [vmem:[%s3 + $0x90] sm:$0xff]
  %v5032 = vld [vmem:[%s3 + $0x98] sm:$0xff]
  %v5033 = vld [vmem:[%s3 + $0xa0] sm:$0xff]
  %v5034 = vld [vmem:[%s3 + $0xa8] sm:$0xff]
  %v5035 = vld [vmem:[%s3 + $0xb0] sm:$0xff]
  %v5036 = vld [vmem:[%s3 + $0xb8] sm:$0xff]
  %v5037 = vld [vmem:[%s3 + $0xc0] sm:$0xff]
  %v5038 = vld [vmem:[%s3 + $0xc8] sm:$0xff]
  %v5039 = vld [vmem:[%s3 + $0xd0] sm:$0xff]
  %v5040 = vld [vmem:[%s3 + $0xd8] sm:$0xff]
  %v5041 = vld [vmem:[%s3 + $0xe0] sm:$0xff]
  %v5042 = vld [vmem:[%s3 + $0xe8] sm:$0xff]
  %v5043 = vld [vmem:[%s3 + $0xf0] sm:$0xff]
  %v5044 = vld [vmem:[%s3 + $0xf8] sm:$0xff]
  %v5077 = vunpack.c.l.b16 %v5013
  %v5078 = vunpack.c.h.b16 %v5013
  %v5079 = vunpack.c.l.b16 %v5014
  %v5080 = vunpack.c.h.b16 %v5014
  %v5081 = vunpack.c.l.b16 %v5015
  %v5082 = vunpack.c.h.b16 %v5015
  %v5083 = vunpack.c.l.b16 %v5016
  %v5084 = vunpack.c.h.b16 %v5016
  %v5085 = vunpack.c.l.b16 %v5017
  %v5086 = vunpack.c.h.b16 %v5017
  %v5087 = vunpack.c.l.b16 %v5018
  %v5088 = vunpack.c.h.b16 %v5018
  %v5089 = vunpack.c.l.b16 %v5019
  %v5090 = vunpack.c.h.b16 %v5019
  %v5091 = vunpack.c.l.b16 %v5020
  %v5092 = vunpack.c.h.b16 %v5020
  %v5093 = vunpack.c.l.b16 %v5021
  %v5094 = vunpack.c.h.b16 %v5021
  %v5095 = vunpack.c.l.b16 %v5022
  %v5096 = vunpack.c.h.b16 %v5022
  %v5097 = vunpack.c.l.b16 %v5023
  %v5098 = vunpack.c.h.b16 %v5023
  %v5099 = vunpack.c.l.b16 %v5024
  %v5100 = vunpack.c.h.b16 %v5024
  %v5101 = vunpack.c.l.b16 %v5025
  %v5102 = vunpack.c.h.b16 %v5025
  %v5103 = vunpack.c.l.b16 %v5026
  %v5104 = vunpack.c.h.b16 %v5026
  %v5105 = vunpack.c.l.b16 %v5027
  %v5106 = vunpack.c.h.b16 %v5027
  %v5107 = vunpack.c.l.b16 %v5028
  %v5108 = vunpack.c.h.b16 %v5028
  %v5109 = vunpack.c.l.b16 %v5029
  %v5110 = vunpack.c.h.b16 %v5029
  %v5111 = vunpack.c.l.b16 %v5030
  %v5112 = vunpack.c.h.b16 %v5030
  %v5113 = vunpack.c.l.b16 %v5031
  %v5114 = vunpack.c.h.b16 %v5031
  %v5115 = vunpack.c.l.b16 %v5032
  %v5116 = vunpack.c.h.b16 %v5032
  %v5117 = vunpack.c.l.b16 %v5033
  %v5118 = vunpack.c.h.b16 %v5033
  %v5119 = vunpack.c.l.b16 %v5034
  %v5120 = vunpack.c.h.b16 %v5034
  %v5121 = vunpack.c.l.b16 %v5035
  %v5122 = vunpack.c.h.b16 %v5035
  %v5123 = vunpack.c.l.b16 %v5036
  %v5124 = vunpack.c.h.b16 %v5036
  %v5125 = vunpack.c.l.b16 %v5037
  %v5126 = vunpack.c.h.b16 %v5037
  %v5127 = vunpack.c.l.b16 %v5038
  %v5128 = vunpack.c.h.b16 %v5038
  %v5129 = vunpack.c.l.b16 %v5039
  %v5130 = vunpack.c.h.b16 %v5039
  %v5131 = vunpack.c.l.b16 %v5040
  %v5132 = vunpack.c.h.b16 %v5040
  %v5133 = vunpack.c.l.b16 %v5041
  %v5134 = vunpack.c.h.b16 %v5041
  %v5135 = vunpack.c.l.b16 %v5042
  %v5136 = vunpack.c.h.b16 %v5042
  %v5137 = vunpack.c.l.b16 %v5043
  %v5138 = vunpack.c.h.b16 %v5043
  %v5139 = vunpack.c.l.b16 %v5044
  %v5140 = vunpack.c.h.b16 %v5044
  %v5141 = vpack.c.b16 %v5081, %v5077
  %v5142 = vpack.c.b16 %v5082, %v5078
  %v5143 = vpack.c.b16 %v5083, %v5079
  %v5144 = vpack.c.b16 %v5084, %v5080
  %v5145 = vpack.c.b16 %v5089, %v5085
  %v5146 = vpack.c.b16 %v5090, %v5086
  %v5147 = vpack.c.b16 %v5091, %v5087
  %v5148 = vpack.c.b16 %v5092, %v5088
  %v5149 = vpack.c.b16 %v5097, %v5093
  %v5150 = vpack.c.b16 %v5098, %v5094
  %v5151 = vpack.c.b16 %v5099, %v5095
  %v5152 = vpack.c.b16 %v5100, %v5096
  %v5153 = vpack.c.b16 %v5105, %v5101
  %v5154 = vpack.c.b16 %v5106, %v5102
  %v5155 = vpack.c.b16 %v5107, %v5103
  %v5156 = vpack.c.b16 %v5108, %v5104
  %v5157 = vpack.c.b16 %v5113, %v5109
  %v5158 = vpack.c.b16 %v5114, %v5110
  %v5159 = vpack.c.b16 %v5115, %v5111
  %v5160 = vpack.c.b16 %v5116, %v5112
  %v5161 = vpack.c.b16 %v5121, %v5117
  %v5162 = vpack.c.b16 %v5122, %v5118
  %v5163 = vpack.c.b16 %v5123, %v5119
  %v5164 = vpack.c.b16 %v5124, %v5120
  %v5165 = vpack.c.b16 %v5129, %v5125
  %v5166 = vpack.c.b16 %v5130, %v5126
  %v5167 = vpack.c.b16 %v5131, %v5127
  %v5168 = vpack.c.b16 %v5132, %v5128
  %v5169 = vpack.c.b16 %v5137, %v5133
  %v5170 = vpack.c.b16 %v5138, %v5134
  %v5171 = vpack.c.b16 %v5139, %v5135
  %v5172 = vpack.c.b16 %v5140, %v5136
  %5205 = vmatprep.subr.bf16.mxu0 %v5142
  %5206 = vmatpush1.bf16.msra.mxu0 %v5141
  %5207 = vmatprep.subr.bf16.mxu0 %v5146
  %5208 = vmatpush1.bf16.msra.mxu0 %v5145
  %5209 = vmatprep.subr.bf16.mxu0 %v5150
  %5210 = vmatpush1.bf16.msra.mxu0 %v5149
  %5211 = vmatprep.subr.bf16.mxu0 %v5154
  %5212 = vmatpush1.bf16.msra.mxu0 %v5153
  %5213 = vmatprep.subr.bf16.mxu0 %v5158
  %5214 = vmatpush1.bf16.msra.mxu0 %v5157
  %5215 = vmatprep.subr.bf16.mxu0 %v5162
  %5216 = vmatpush1.bf16.msra.mxu0 %v5161
  %5217 = vmatprep.subr.bf16.mxu0 %v5166
  %5218 = vmatpush1.bf16.msra.mxu0 %v5165
  %5219 = vmatprep.subr.bf16.mxu0 %v5170
  %5220 = vmatpush1.bf16.msra.mxu0 %v5169
  %5221 = vmatprep.subr.bf16.mxu0 0
  %5222 = vmatpush1.bf16.msra.mxu0 0
  %5223 = vmatprep.subr.bf16.mxu0 0
  %5224 = vmatpush1.bf16.msra.mxu0 0
  %5225 = vmatprep.subr.bf16.mxu0 0
  %5226 = vmatpush1.bf16.msra.mxu0 0
  %5227 = vmatprep.subr.bf16.mxu0 0
  %5228 = vmatpush1.bf16.msra.mxu0 0
  %5229 = vmatprep.subr.bf16.mxu0 0
  %5230 = vmatpush1.bf16.msra.mxu0 0
  %5231 = vmatprep.subr.bf16.mxu0 0
  %5232 = vmatpush1.bf16.msra.mxu0 0
  %5233 = vmatprep.subr.bf16.mxu0 0
  %5234 = vmatpush1.bf16.msra.mxu0 0
  %5235 = vmatprep.subr.bf16.mxu0 0
  %5236 = vmatpush1.bf16.msra.mxu0 0
  %5237 = vmatprep.mubr.bf16.mxu0 0
  %5238 = vmatmul.mubr.bf16.gmra.mrb[0].mxu0 %v5012
  %v5239 = vpop.f32.mrb[0].mxu0
  %v5240 = vadd.f32 0.0, %v5239
  %v5241 = vpop.f32.mrb[0].mxu0
  %v5242 = vadd.f32 0.0, %v5241
  %v5243 = vpop.f32.mrb[0].mxu0
  %v5244 = vpop.f32.mrb[0].mxu0
  %5245 = vdwg.mxu0
  %5246 = vmatprep.subr.bf16.mxu0 %v5144
  %5247 = vmatpush1.bf16.msra.mxu0 %v5143
  %5248 = vmatprep.subr.bf16.mxu0 %v5148
  %5249 = vmatpush1.bf16.msra.mxu0 %v5147
  %5250 = vmatprep.subr.bf16.mxu0 %v5152
  %5251 = vmatpush1.bf16.msra.mxu0 %v5151
  %5252 = vmatprep.subr.bf16.mxu0 %v5156
  %5253 = vmatpush1.bf16.msra.mxu0 %v5155
  %5254 = vmatprep.subr.bf16.mxu0 %v5160
  %5255 = vmatpush1.bf16.msra.mxu0 %v5159
  %5256 = vmatprep.subr.bf16.mxu0 %v5164
  %5257 = vmatpush1.bf16.msra.mxu0 %v5163
  %5258 = vmatprep.subr.bf16.mxu0 %v5168
  %5259 = vmatpush1.bf16.msra.mxu0 %v5167
  %5260 = vmatprep.subr.bf16.mxu0 %v5172
  %5261 = vmatpush1.bf16.msra.mxu0 %v5171
  %5262 = vmatprep.subr.bf16.mxu0 0
  %5263 = vmatpush1.bf16.msra.mxu0 0
  %5264 = vmatprep.subr.bf16.mxu0 0
  %5265 = vmatpush1.bf16.msra.mxu0 0
  %5266 = vmatprep.subr.bf16.mxu0 0
  %5267 = vmatpush1.bf16.msra.mxu0 0
  %5268 = vmatprep.subr.bf16.mxu0 0
  %5269 = vmatpush1.bf16.msra.mxu0 0
  %5270 = vmatprep.subr.bf16.mxu0 0
  %5271 = vmatpush1.bf16.msra.mxu0 0
  %5272 = vmatprep.subr.bf16.mxu0 0
  %5273 = vmatpush1.bf16.msra.mxu0 0
  %5274 = vmatprep.subr.bf16.mxu0 0
  %5275 = vmatpush1.bf16.msra.mxu0 0
  %5276 = vmatprep.subr.bf16.mxu0 0
  %5277 = vmatpush1.bf16.msra.mxu0 0
  %5278 = vmatprep.mubr.bf16.mxu0 0
  %5279 = vmatmul.mubr.bf16.gmra.mrb[0].mxu0 %v5012
  %v5280 = vpop.f32.mrb[0].mxu0
  %v5281 = vadd.f32 0.0, %v5280
  %v5282 = vpop.f32.mrb[0].mxu0
  %v5283 = vadd.f32 0.0, %v5282
  %v5284 = vpop.f32.mrb[0].mxu0
  %v5285 = vpop.f32.mrb[0].mxu0
  %5286 = vdwg.mxu0
  %v5291 = vrot.slane %v5240, 6
  %v5292 = vrot.slane %v5242, 6
  %v5293 = vrot.slane %v5281, 6
  %v5294 = vrot.slane %v5283, 6
  %v5299 = vadd.f32 %v5008, %v5291
  %v5300 = vadd.f32 %v5009, %v5292
  %v5301 = vadd.f32 %v5010, %v5293
  %v5302 = vadd.f32 %v5011, %v5294
  %v5303 = vld [vmem:[#allocation3] sm:$0x30]
  %v5304 = vld [vmem:[#allocation3 + $0x8] sm:$0x30]
  %v5305 = vld [vmem:[#allocation3 + $0x10] sm:$0x30]
  %v5306 = vld [vmem:[#allocation3 + $0x18] sm:$0x30]
  %v5307 = vpack.c.bf16 %v5005, %v5005
  %v5308 = vld [vmem:[%s6] sm:$0xff]
  %v5309 = vld [vmem:[%s6 + $0x8] sm:$0xff]
  %v5310 = vld [vmem:[%s6 + $0x10] sm:$0xff]
  %v5311 = vld [vmem:[%s6 + $0x18] sm:$0xff]
  %v5312 = vld [vmem:[%s6 + $0x20] sm:$0xff]
  %v5313 = vld [vmem:[%s6 + $0x28] sm:$0xff]
  %v5314 = vld [vmem:[%s6 + $0x30] sm:$0xff]
  %v5315 = vld [vmem:[%s6 + $0x38] sm:$0xff]
  %v5316 = vld [vmem:[%s6 + $0x40] sm:$0xff]
  %v5317 = vld [vmem:[%s6 + $0x48] sm:$0xff]
  %v5318 = vld [vmem:[%s6 + $0x50] sm:$0xff]
  %v5319 = vld [vmem:[%s6 + $0x58] sm:$0xff]
  %v5320 = vld [vmem:[%s6 + $0x60] sm:$0xff]
  %v5321 = vld [vmem:[%s6 + $0x68] sm:$0xff]
  %v5322 = vld [vmem:[%s6 + $0x70] sm:$0xff]
  %v5323 = vld [vmem:[%s6 + $0x78] sm:$0xff]
  %v5324 = vld [vmem:[%s6 + $0x80] sm:$0xff]
  %v5325 = vld [vmem:[%s6 + $0x88] sm:$0xff]
  %v5326 = vld [vmem:[%s6 + $0x90] sm:$0xff]
  %v5327 = vld [vmem:[%s6 + $0x98] sm:$0xff]
  %v5328 = vld [vmem:[%s6 + $0xa0] sm:$0xff]
  %v5329 = vld [vmem:[%s6 + $0xa8] sm:$0xff]
  %v5330 = vld [vmem:[%s6 + $0xb0] sm:$0xff]
  %v5331 = vld [vmem:[%s6 + $0xb8] sm:$0xff]
  %v5332 = vld [vmem:[%s6 + $0xc0] sm:$0xff]
  %v5333 = vld [vmem:[%s6 + $0xc8] sm:$0xff]
  %v5334 = vld [vmem:[%s6 + $0xd0] sm:$0xff]
  %v5335 = vld [vmem:[%s6 + $0xd8] sm:$0xff]
  %v5336 = vld [vmem:[%s6 + $0xe0] sm:$0xff]
  %v5337 = vld [vmem:[%s6 + $0xe8] sm:$0xff]
  %v5338 = vld [vmem:[%s6 + $0xf0] sm:$0xff]
  %v5339 = vld [vmem:[%s6 + $0xf8] sm:$0xff]
  %v5341 = vrot.slane %v5307, 3
  %v5375 = vunpack.c.l.b16 %v5308
  %v5376 = vunpack.c.h.b16 %v5308
  %v5377 = vunpack.c.l.b16 %v5309
  %v5378 = vunpack.c.h.b16 %v5309
  %v5379 = vunpack.c.l.b16 %v5310
  %v5380 = vunpack.c.h.b16 %v5310
  %v5381 = vunpack.c.l.b16 %v5311
  %v5382 = vunpack.c.h.b16 %v5311
  %v5383 = vunpack.c.l.b16 %v5312
  %v5384 = vunpack.c.h.b16 %v5312
  %v5385 = vunpack.c.l.b16 %v5313
  %v5386 = vunpack.c.h.b16 %v5313
  %v5387 = vunpack.c.l.b16 %v5314
  %v5388 = vunpack.c.h.b16 %v5314
  %v5389 = vunpack.c.l.b16 %v5315
  %v5390 = vunpack.c.h.b16 %v5315
  %v5391 = vunpack.c.l.b16 %v5316
  %v5392 = vunpack.c.h.b16 %v5316
  %v5393 = vunpack.c.l.b16 %v5317
  %v5394 = vunpack.c.h.b16 %v5317
  %v5395 = vunpack.c.l.b16 %v5318
  %v5396 = vunpack.c.h.b16 %v5318
  %v5397 = vunpack.c.l.b16 %v5319
  %v5398 = vunpack.c.h.b16 %v5319
  %v5399 = vunpack.c.l.b16 %v5320
  %v5400 = vunpack.c.h.b16 %v5320
  %v5401 = vunpack.c.l.b16 %v5321
  %v5402 = vunpack.c.h.b16 %v5321
  %v5403 = vunpack.c.l.b16 %v5322
  %v5404 = vunpack.c.h.b16 %v5322
  %v5405 = vunpack.c.l.b16 %v5323
  %v5406 = vunpack.c.h.b16 %v5323
  %v5407 = vunpack.c.l.b16 %v5324
  %v5408 = vunpack.c.h.b16 %v5324
  %v5409 = vunpack.c.l.b16 %v5325
  %v5410 = vunpack.c.h.b16 %v5325
  %v5411 = vunpack.c.l.b16 %v5326
  %v5412 = vunpack.c.h.b16 %v5326
  %v5413 = vunpack.c.l.b16 %v5327
  %v5414 = vunpack.c.h.b16 %v5327
  %v5415 = vunpack.c.l.b16 %v5328
  %v5416 = vunpack.c.h.b16 %v5328
  %v5417 = vunpack.c.l.b16 %v5329
  %v5418 = vunpack.c.h.b16 %v5329
  %v5419 = vunpack.c.l.b16 %v5330
  %v5420 = vunpack.c.h.b16 %v5330
  %v5421 = vunpack.c.l.b16 %v5331
  %v5422 = vunpack.c.h.b16 %v5331
  %v5423 = vunpack.c.l.b16 %v5332
  %v5424 = vunpack.c.h.b16 %v5332
  %v5425 = vunpack.c.l.b16 %v5333
  %v5426 = vunpack.c.h.b16 %v5333
  %v5427 = vunpack.c.l.b16 %v5334
  %v5428 = vunpack.c.h.b16 %v5334
  %v5429 = vunpack.c.l.b16 %v5335
  %v5430 = vunpack.c.h.b16 %v5335
  %v5431 = vunpack.c.l.b16 %v5336
  %v5432 = vunpack.c.h.b16 %v5336
  %v5433 = vunpack.c.l.b16 %v5337
  %v5434 = vunpack.c.h.b16 %v5337
  %v5435 = vunpack.c.l.b16 %v5338
  %v5436 = vunpack.c.h.b16 %v5338
  %v5437 = vunpack.c.l.b16 %v5339
  %v5438 = vunpack.c.h.b16 %v5339
  %v5439 = vpack.c.b16 %v5379, %v5375
  %v5440 = vpack.c.b16 %v5380, %v5376
  %v5441 = vpack.c.b16 %v5381, %v5377
  %v5442 = vpack.c.b16 %v5382, %v5378
  %v5443 = vpack.c.b16 %v5387, %v5383
  %v5444 = vpack.c.b16 %v5388, %v5384
  %v5445 = vpack.c.b16 %v5389, %v5385
  %v5446 = vpack.c.b16 %v5390, %v5386
  %v5447 = vpack.c.b16 %v5395, %v5391
  %v5448 = vpack.c.b16 %v5396, %v5392
  %v5449 = vpack.c.b16 %v5397, %v5393
  %v5450 = vpack.c.b16 %v5398, %v5394
  %v5451 = vpack.c.b16 %v5403, %v5399
  %v5452 = vpack.c.b16 %v5404, %v5400
  %v5453 = vpack.c.b16 %v5405, %v5401
  %v5454 = vpack.c.b16 %v5406, %v5402
  %v5455 = vpack.c.b16 %v5411, %v5407
  %v5456 = vpack.c.b16 %v5412, %v5408
  %v5457 = vpack.c.b16 %v5413, %v5409
  %v5458 = vpack.c.b16 %v5414, %v5410
  %v5459 = vpack.c.b16 %v5419, %v5415
  %v5460 = vpack.c.b16 %v5420, %v5416
  %v5461 = vpack.c.b16 %v5421, %v5417
  %v5462 = vpack.c.b16 %v5422, %v5418
  %v5463 = vpack.c.b16 %v5427, %v5423
  %v5464 = vpack.c.b16 %v5428, %v5424
  %v5465 = vpack.c.b16 %v5429, %v5425
  %v5466 = vpack.c.b16 %v5430, %v5426
  %v5467 = vpack.c.b16 %v5435, %v5431
  %v5468 = vpack.c.b16 %v5436, %v5432
  %v5469 = vpack.c.b16 %v5437, %v5433
  %v5470 = vpack.c.b16 %v5438, %v5434
  %5503 = vmatprep.subr.bf16.mxu0 %v5440
  %5504 = vmatpush1.bf16.msra.mxu0 %v5439
  %5505 = vmatprep.subr.bf16.mxu0 %v5444
  %5506 = vmatpush1.bf16.msra.mxu0 %v5443
  %5507 = vmatprep.subr.bf16.mxu0 %v5448
  %5508 = vmatpush1.bf16.msra.mxu0 %v5447
  %5509 = vmatprep.subr.bf16.mxu0 %v5452
  %5510 = vmatpush1.bf16.msra.mxu0 %v5451
  %5511 = vmatprep.subr.bf16.mxu0 %v5456
  %5512 = vmatpush1.bf16.msra.mxu0 %v5455
  %5513 = vmatprep.subr.bf16.mxu0 %v5460
  %5514 = vmatpush1.bf16.msra.mxu0 %v5459
  %5515 = vmatprep.subr.bf16.mxu0 %v5464
  %5516 = vmatpush1.bf16.msra.mxu0 %v5463
  %5517 = vmatprep.subr.bf16.mxu0 %v5468
  %5518 = vmatpush1.bf16.msra.mxu0 %v5467
  %5519 = vmatprep.subr.bf16.mxu0 0
  %5520 = vmatpush1.bf16.msra.mxu0 0
  %5521 = vmatprep.subr.bf16.mxu0 0
  %5522 = vmatpush1.bf16.msra.mxu0 0
  %5523 = vmatprep.subr.bf16.mxu0 0
  %5524 = vmatpush1.bf16.msra.mxu0 0
  %5525 = vmatprep.subr.bf16.mxu0 0
  %5526 = vmatpush1.bf16.msra.mxu0 0
  %5527 = vmatprep.subr.bf16.mxu0 0
  %5528 = vmatpush1.bf16.msra.mxu0 0
  %5529 = vmatprep.subr.bf16.mxu0 0
  %5530 = vmatpush1.bf16.msra.mxu0 0
  %5531 = vmatprep.subr.bf16.mxu0 0
  %5532 = vmatpush1.bf16.msra.mxu0 0
  %5533 = vmatprep.subr.bf16.mxu0 0
  %5534 = vmatpush1.bf16.msra.mxu0 0
  %5535 = vmatprep.mubr.bf16.mxu0 0
  %5536 = vmatmul.mubr.bf16.gmra.mrb[0].mxu0 %v5341
  %v5537 = vpop.f32.mrb[0].mxu0
  %v5538 = vadd.f32 0.0, %v5537
  %v5539 = vpop.f32.mrb[0].mxu0
  %v5540 = vadd.f32 0.0, %v5539
  %v5541 = vpop.f32.mrb[0].mxu0
  %v5542 = vpop.f32.mrb[0].mxu0
  %5543 = vdwg.mxu0
  %5544 = vmatprep.subr.bf16.mxu0 %v5442
  %5545 = vmatpush1.bf16.msra.mxu0 %v5441
  %5546 = vmatprep.subr.bf16.mxu0 %v5446
  %5547 = vmatpush1.bf16.msra.mxu0 %v5445
  %5548 = vmatprep.subr.bf16.mxu0 %v5450
  %5549 = vmatpush1.bf16.msra.mxu0 %v5449
  %5550 = vmatprep.subr.bf16.mxu0 %v5454
  %5551 = vmatpush1.bf16.msra.mxu0 %v5453
  %5552 = vmatprep.subr.bf16.mxu0 %v5458
  %5553 = vmatpush1.bf16.msra.mxu0 %v5457
  %5554 = vmatprep.subr.bf16.mxu0 %v5462
  %5555 = vmatpush1.bf16.msra.mxu0 %v5461
  %5556 = vmatprep.subr.bf16.mxu0 %v5466
  %5557 = vmatpush1.bf16.msra.mxu0 %v5465
  %5558 = vmatprep.subr.bf16.mxu0 %v5470
  %5559 = vmatpush1.bf16.msra.mxu0 %v5469
  %5560 = vmatprep.subr.bf16.mxu0 0
  %5561 = vmatpush1.bf16.msra.mxu0 0
  %5562 = vmatprep.subr.bf16.mxu0 0
  %5563 = vmatpush1.bf16.msra.mxu0 0
  %5564 = vmatprep.subr.bf16.mxu0 0
  %5565 = vmatpush1.bf16.msra.mxu0 0
  %5566 = vmatprep.subr.bf16.mxu0 0
  %5567 = vmatpush1.bf16.msra.mxu0 0
  %5568 = vmatprep.subr.bf16.mxu0 0
  %5569 = vmatpush1.bf16.msra.mxu0 0
  %5570 = vmatprep.subr.bf16.mxu0 0
  %5571 = vmatpush1.bf16.msra.mxu0 0
  %5572 = vmatprep.subr.bf16.mxu0 0
  %5573 = vmatpush1.bf16.msra.mxu0 0
  %5574 = vmatprep.subr.bf16.mxu0 0
  %5575 = vmatpush1.bf16.msra.mxu0 0
  %5576 = vmatprep.mubr.bf16.mxu0 0
  %5577 = vmatmul.mubr.bf16.gmra.mrb[0].mxu0 %v5341
  %v5578 = vpop.f32.mrb[0].mxu0
  %v5579 = vadd.f32 0.0, %v5578
  %v5580 = vpop.f32.mrb[0].mxu0
  %v5581 = vadd.f32 0.0, %v5580
  %v5582 = vpop.f32.mrb[0].mxu0
  %v5583 = vpop.f32.mrb[0].mxu0
  %5584 = vdwg.mxu0
  %v5589 = vrot.slane %v5538, 4
  %v5590 = vrot.slane %v5540, 4
  %v5591 = vrot.slane %v5579, 4
  %v5592 = vrot.slane %v5581, 4
  %v5597 = vadd.f32 %v5303, %v5589
  %v5598 = vadd.f32 %v5304, %v5590
  %v5599 = vadd.f32 %v5305, %v5591
  %v5600 = vadd.f32 %v5306, %v5592
  %v5601 = vmul.f32 %v5299, 0.5
  %v5602 = vtanh.pop %v5601
  %v5603 = vmul.f32 %v5602, 0.5
  %v5604 = vadd.f32 %v5603, 0.5
  %v5605 = vmul.f32 %v5300, 0.5
  %v5606 = vtanh.pop %v5605
  %v5607 = vmul.f32 %v5606, 0.5
  %v5608 = vadd.f32 %v5607, 0.5
  %v5609 = vtanh.pop %v5301
  %v5610 = vmul.f32 %v5302, 0.5
  %v5611 = vtanh.pop %v5610
  %v5612 = vmul.f32 %v5611, 0.5
  %v5613 = vadd.f32 %v5612, 0.5
  %v5615 = vrot.slane %v4982, 6
  %v5617 = vmul.f32 %v5608, %v5615
  %v5618 = vmul.f32 %v5604, %v5609
  %v5619 = vadd.f32 %v5617, %v5618
  %v5620 = vtanh.pop %v5619
  %v5621 = vmul.f32 %v5613, %v5620
  %v5622 = vmul.f32 %v5597, 0.5
  %v5623 = vtanh.pop %v5622
  %v5624 = vmul.f32 %v5623, 0.5
  %v5625 = vadd.f32 %v5624, 0.5
  %v5626 = vmul.f32 %v5598, 0.5
  %v5627 = vtanh.pop %v5626
  %v5628 = vmul.f32 %v5627, 0.5
  %v5629 = vadd.f32 %v5628, 0.5
  %v5630 = vtanh.pop %v5599
  %v5631 = vmul.f32 %v5600, 0.5
  %v5632 = vtanh.pop %v5631
  %v5633 = vmul.f32 %v5632, 0.5
  %v5634 = vadd.f32 %v5633, 0.5
  %v5636 = vrot.slane %v5003, 2
  %v5638 = vmul.f32 %v5629, %v5636
  %v5639 = vmul.f32 %v5625, %v5630
  %v5640 = vadd.f32 %v5638, %v5639
  %v5641 = vtanh.pop %v5640
  %v5642 = vmul.f32 %v5634, %v5641
  %5643 = vst [vmem:[#allocation4 + $0x8] sm:$0xc] %v5621
  %5644 = vst [vmem:[#allocation5] sm:$0x30] %v5642
  %v5645 = vld [vmem:[#allocation2 + $0x20] sm:$0x30]
  %v5646 = vld [vmem:[#allocation2 + $0x28] sm:$0x30]
  %v5647 = vld [vmem:[#allocation2 + $0x30] sm:$0x30]
  %v5648 = vld [vmem:[#allocation2 + $0x38] sm:$0x30]
  %v5649 = vpack.c.bf16 %v5621, %v5621
  %v5650 = vld [vmem:[%s3] sm:$0xff]
  %v5651 = vld [vmem:[%s3 + $0x8] sm:$0xff]
  %v5652 = vld [vmem:[%s3 + $0x10] sm:$0xff]
  %v5653 = vld [vmem:[%s3 + $0x18] sm:$0xff]
  %v5654 = vld [vmem:[%s3 + $0x20] sm:$0xff]
  %v5655 = vld [vmem:[%s3 + $0x28] sm:$0xff]
  %v5656 = vld [vmem:[%s3 + $0x30] sm:$0xff]
  %v5657 = vld [vmem:[%s3 + $0x38] sm:$0xff]
  %v5658 = vld [vmem:[%s3 + $0x40] sm:$0xff]
  %v5659 = vld [vmem:[%s3 + $0x48] sm:$0xff]
  %v5660 = vld [vmem:[%s3 + $0x50] sm:$0xff]
  %v5661 = vld [vmem:[%s3 + $0x58] sm:$0xff]
  %v5662 = vld [vmem:[%s3 + $0x60] sm:$0xff]
  %v5663 = vld [vmem:[%s3 + $0x68] sm:$0xff]
  %v5664 = vld [vmem:[%s3 + $0x70] sm:$0xff]
  %v5665 = vld [vmem:[%s3 + $0x78] sm:$0xff]
  %v5666 = vld [vmem:[%s3 + $0x80] sm:$0xff]
  %v5667 = vld [vmem:[%s3 + $0x88] sm:$0xff]
  %v5668 = vld [vmem:[%s3 + $0x90] sm:$0xff]
  %v5669 = vld [vmem:[%s3 + $0x98] sm:$0xff]
  %v5670 = vld [vmem:[%s3 + $0xa0] sm:$0xff]
  %v5671 = vld [vmem:[%s3 + $0xa8] sm:$0xff]
  %v5672 = vld [vmem:[%s3 + $0xb0] sm:$0xff]
  %v5673 = vld [vmem:[%s3 + $0xb8] sm:$0xff]
  %v5674 = vld [vmem:[%s3 + $0xc0] sm:$0xff]
  %v5675 = vld [vmem:[%s3 + $0xc8] sm:$0xff]
  %v5676 = vld [vmem:[%s3 + $0xd0] sm:$0xff]
  %v5677 = vld [vmem:[%s3 + $0xd8] sm:$0xff]
  %v5678 = vld [vmem:[%s3 + $0xe0] sm:$0xff]
  %v5679 = vld [vmem:[%s3 + $0xe8] sm:$0xff]
  %v5680 = vld [vmem:[%s3 + $0xf0] sm:$0xff]
  %v5681 = vld [vmem:[%s3 + $0xf8] sm:$0xff]
  %v5683 = vrot.slane %v5649, 1
  %v5717 = vunpack.c.l.b16 %v5650
  %v5718 = vunpack.c.h.b16 %v5650
  %v5719 = vunpack.c.l.b16 %v5651
  %v5720 = vunpack.c.h.b16 %v5651
  %v5721 = vunpack.c.l.b16 %v5652
  %v5722 = vunpack.c.h.b16 %v5652
  %v5723 = vunpack.c.l.b16 %v5653
  %v5724 = vunpack.c.h.b16 %v5653
  %v5725 = vunpack.c.l.b16 %v5654
  %v5726 = vunpack.c.h.b16 %v5654
  %v5727 = vunpack.c.l.b16 %v5655
  %v5728 = vunpack.c.h.b16 %v5655
  %v5729 = vunpack.c.l.b16 %v5656
  %v5730 = vunpack.c.h.b16 %v5656
  %v5731 = vunpack.c.l.b16 %v5657
  %v5732 = vunpack.c.h.b16 %v5657
  %v5733 = vunpack.c.l.b16 %v5658
  %v5734 = vunpack.c.h.b16 %v5658
  %v5735 = vunpack.c.l.b16 %v5659
  %v5736 = vunpack.c.h.b16 %v5659
  %v5737 = vunpack.c.l.b16 %v5660
  %v5738 = vunpack.c.h.b16 %v5660
  %v5739 = vunpack.c.l.b16 %v5661
  %v5740 = vunpack.c.h.b16 %v5661
  %v5741 = vunpack.c.l.b16 %v5662
  %v5742 = vunpack.c.h.b16 %v5662
  %v5743 = vunpack.c.l.b16 %v5663
  %v5744 = vunpack.c.h.b16 %v5663
  %v5745 = vunpack.c.l.b16 %v5664
  %v5746 = vunpack.c.h.b16 %v5664
  %v5747 = vunpack.c.l.b16 %v5665
  %v5748 = vunpack.c.h.b16 %v5665
  %v5749 = vunpack.c.l.b16 %v5666
  %v5750 = vunpack.c.h.b16 %v5666
  %v5751 = vunpack.c.l.b16 %v5667
  %v5752 = vunpack.c.h.b16 %v5667
  %v5753 = vunpack.c.l.b16 %v5668
  %v5754 = vunpack.c.h.b16 %v5668
  %v5755 = vunpack.c.l.b16 %v5669
  %v5756 = vunpack.c.h.b16 %v5669
  %v5757 = vunpack.c.l.b16 %v5670
  %v5758 = vunpack.c.h.b16 %v5670
  %v5759 = vunpack.c.l.b16 %v5671
  %v5760 = vunpack.c.h.b16 %v5671
  %v5761 = vunpack.c.l.b16 %v5672
  %v5762 = vunpack.c.h.b16 %v5672
  %v5763 = vunpack.c.l.b16 %v5673
  %v5764 = vunpack.c.h.b16 %v5673
  %v5765 = vunpack.c.l.b16 %v5674
  %v5766 = vunpack.c.h.b16 %v5674
  %v5767 = vunpack.c.l.b16 %v5675
  %v5768 = vunpack.c.h.b16 %v5675
  %v5769 = vunpack.c.l.b16 %v5676
  %v5770 = vunpack.c.h.b16 %v5676
  %v5771 = vunpack.c.l.b16 %v5677
  %v5772 = vunpack.c.h.b16 %v5677
  %v5773 = vunpack.c.l.b16 %v5678
  %v5774 = vunpack.c.h.b16 %v5678
  %v5775 = vunpack.c.l.b16 %v5679
  %v5776 = vunpack.c.h.b16 %v5679
  %v5777 = vunpack.c.l.b16 %v5680
  %v5778 = vunpack.c.h.b16 %v5680
  %v5779 = vunpack.c.l.b16 %v5681
  %v5780 = vunpack.c.h.b16 %v5681
  %v5781 = vpack.c.b16 %v5721, %v5717
  %v5782 = vpack.c.b16 %v5722, %v5718
  %v5783 = vpack.c.b16 %v5723, %v5719
  %v5784 = vpack.c.b16 %v5724, %v5720
  %v5785 = vpack.c.b16 %v5729, %v5725
  %v5786 = vpack.c.b16 %v5730, %v5726
  %v5787 = vpack.c.b16 %v5731, %v5727
  %v5788 = vpack.c.b16 %v5732, %v5728
  %v5789 = vpack.c.b16 %v5737, %v5733
  %v5790 = vpack.c.b16 %v5738, %v5734
  %v5791 = vpack.c.b16 %v5739, %v5735
  %v5792 = vpack.c.b16 %v5740, %v5736
  %v5793 = vpack.c.b16 %v5745, %v5741
  %v5794 = vpack.c.b16 %v5746, %v5742
  %v5795 = vpack.c.b16 %v5747, %v5743
  %v5796 = vpack.c.b16 %v5748, %v5744
  %v5797 = vpack.c.b16 %v5753, %v5749
  %v5798 = vpack.c.b16 %v5754, %v5750
  %v5799 = vpack.c.b16 %v5755, %v5751
  %v5800 = vpack.c.b16 %v5756, %v5752
  %v5801 = vpack.c.b16 %v5761, %v5757
  %v5802 = vpack.c.b16 %v5762, %v5758
  %v5803 = vpack.c.b16 %v5763, %v5759
  %v5804 = vpack.c.b16 %v5764, %v5760
  %v5805 = vpack.c.b16 %v5769, %v5765
  %v5806 = vpack.c.b16 %v5770, %v5766
  %v5807 = vpack.c.b16 %v5771, %v5767
  %v5808 = vpack.c.b16 %v5772, %v5768
  %v5809 = vpack.c.b16 %v5777, %v5773
  %v5810 = vpack.c.b16 %v5778, %v5774
  %v5811 = vpack.c.b16 %v5779, %v5775
  %v5812 = vpack.c.b16 %v5780, %v5776
  %5845 = vmatprep.subr.bf16.mxu0 %v5782
  %5846 = vmatpush1.bf16.msra.mxu0 %v5781
  %5847 = vmatprep.subr.bf16.mxu0 %v5786
  %5848 = vmatpush1.bf16.msra.mxu0 %v5785
  %5849 = vmatprep.subr.bf16.mxu0 %v5790
  %5850 = vmatpush1.bf16.msra.mxu0 %v5789
  %5851 = vmatprep.subr.bf16.mxu0 %v5794
  %5852 = vmatpush1.bf16.msra.mxu0 %v5793
  %5853 = vmatprep.subr.bf16.mxu0 %v5798
  %5854 = vmatpush1.bf16.msra.mxu0 %v5797
  %5855 = vmatprep.subr.bf16.mxu0 %v5802
  %5856 = vmatpush1.bf16.msra.mxu0 %v5801
  %5857 = vmatprep.subr.bf16.mxu0 %v5806
  %5858 = vmatpush1.bf16.msra.mxu0 %v5805
  %5859 = vmatprep.subr.bf16.mxu0 %v5810
  %5860 = vmatpush1.bf16.msra.mxu0 %v5809
  %5861 = vmatprep.subr.bf16.mxu0 0
  %5862 = vmatpush1.bf16.msra.mxu0 0
  %5863 = vmatprep.subr.bf16.mxu0 0
  %5864 = vmatpush1.bf16.msra.mxu0 0
  %5865 = vmatprep.subr.bf16.mxu0 0
  %5866 = vmatpush1.bf16.msra.mxu0 0
  %5867 = vmatprep.subr.bf16.mxu0 0
  %5868 = vmatpush1.bf16.msra.mxu0 0
  %5869 = vmatprep.subr.bf16.mxu0 0
  %5870 = vmatpush1.bf16.msra.mxu0 0
  %5871 = vmatprep.subr.bf16.mxu0 0
  %5872 = vmatpush1.bf16.msra.mxu0 0
  %5873 = vmatprep.subr.bf16.mxu0 0
  %5874 = vmatpush1.bf16.msra.mxu0 0
  %5875 = vmatprep.subr.bf16.mxu0 0
  %5876 = vmatpush1.bf16.msra.mxu0 0
  %5877 = vmatprep.mubr.bf16.mxu0 0
  %5878 = vmatmul.mubr.bf16.gmra.mrb[0].mxu0 %v5683
  %v5879 = vpop.f32.mrb[0].mxu0
  %v5880 = vadd.f32 0.0, %v5879
  %v5881 = vpop.f32.mrb[0].mxu0
  %v5882 = vadd.f32 0.0, %v5881
  %v5883 = vpop.f32.mrb[0].mxu0
  %v5884 = vpop.f32.mrb[0].mxu0
  %5885 = vdwg.mxu0
  %5886 = vmatprep.subr.bf16.mxu0 %v5784
  %5887 = vmatpush1.bf16.msra.mxu0 %v5783
  %5888 = vmatprep.subr.bf16.mxu0 %v5788
  %5889 = vmatpush1.bf16.msra.mxu0 %v5787
  %5890 = vmatprep.subr.bf16.mxu0 %v5792
  %5891 = vmatpush1.bf16.msra.mxu0 %v5791
  %5892 = vmatprep.subr.bf16.mxu0 %v5796
  %5893 = vmatpush1.bf16.msra.mxu0 %v5795
  %5894 = vmatprep.subr.bf16.mxu0 %v5800
  %5895 = vmatpush1.bf16.msra.mxu0 %v5799
  %5896 = vmatprep.subr.bf16.mxu0 %v5804
  %5897 = vmatpush1.bf16.msra.mxu0 %v5803
  %5898 = vmatprep.subr.bf16.mxu0 %v5808
  %5899 = vmatpush1.bf16.msra.mxu0 %v5807
  %5900 = vmatprep.subr.bf16.mxu0 %v5812
  %5901 = vmatpush1.bf16.msra.mxu0 %v5811
  %5902 = vmatprep.subr.bf16.mxu0 0
  %5903 = vmatpush1.bf16.msra.mxu0 0
  %5904 = vmatprep.subr.bf16.mxu0 0
  %5905 = vmatpush1.bf16.msra.mxu0 0
  %5906 = vmatprep.subr.bf16.mxu0 0
  %5907 = vmatpush1.bf16.msra.mxu0 0
  %5908 = vmatprep.subr.bf16.mxu0 0
  %5909 = vmatpush1.bf16.msra.mxu0 0
  %5910 = vmatprep.subr.bf16.mxu0 0
  %5911 = vmatpush1.bf16.msra.mxu0 0
  %5912 = vmatprep.subr.bf16.mxu0 0
  %5913 = vmatpush1.bf16.msra.mxu0 0
  %5914 = vmatprep.subr.bf16.mxu0 0
  %5915 = vmatpush1.bf16.msra.mxu0 0
  %5916 = vmatprep.subr.bf16.mxu0 0
  %5917 = vmatpush1.bf16.msra.mxu0 0
  %5918 = vmatprep.mubr.bf16.mxu0 0
  %5919 = vmatmul.mubr.bf16.gmra.mrb[0].mxu0 %v5683
  %v5920 = vpop.f32.mrb[0].mxu0
  %v5921 = vadd.f32 0.0, %v5920
  %v5922 = vpop.f32.mrb[0].mxu0
  %v5923 = vadd.f32 0.0, %v5922
  %v5924 = vpop.f32.mrb[0].mxu0
  %v5925 = vpop.f32.mrb[0].mxu0
  %5926 = vdwg.mxu0
  %v5931 = vrot.slane %v5880, 4
  %v5932 = vrot.slane %v5882, 4
  %v5933 = vrot.slane %v5921, 4
  %v5934 = vrot.slane %v5923, 4
  %v5939 = vadd.f32 %v5645, %v5931
  %v5940 = vadd.f32 %v5646, %v5932
  %v5941 = vadd.f32 %v5647, %v5933
  %v5942 = vadd.f32 %v5648, %v5934
  %v5943 = vld [vmem:[#allocation3] sm:$0xc]
  %v5944 = vld [vmem:[#allocation3 + $0x8] sm:$0xc]
  %v5945 = vld [vmem:[#allocation3 + $0x10] sm:$0xc]
  %v5946 = vld [vmem:[#allocation3 + $0x18] sm:$0xc]
  %v5947 = vpack.c.bf16 %v5642, %v5642
  %v5948 = vld [vmem:[%s6] sm:$0xff]
  %v5949 = vld [vmem:[%s6 + $0x8] sm:$0xff]
  %v5950 = vld [vmem:[%s6 + $0x10] sm:$0xff]
  %v5951 = vld [vmem:[%s6 + $0x18] sm:$0xff]
  %v5952 = vld [vmem:[%s6 + $0x20] sm:$0xff]
  %v5953 = vld [vmem:[%s6 + $0x28] sm:$0xff]
  %v5954 = vld [vmem:[%s6 + $0x30] sm:$0xff]
  %v5955 = vld [vmem:[%s6 + $0x38] sm:$0xff]
  %v5956 = vld [vmem:[%s6 + $0x40] sm:$0xff]
  %v5957 = vld [vmem:[%s6 + $0x48] sm:$0xff]
  %v5958 = vld [vmem:[%s6 + $0x50] sm:$0xff]
  %v5959 = vld [vmem:[%s6 + $0x58] sm:$0xff]
  %v5960 = vld [vmem:[%s6 + $0x60] sm:$0xff]
  %v5961 = vld [vmem:[%s6 + $0x68] sm:$0xff]
  %v5962 = vld [vmem:[%s6 + $0x70] sm:$0xff]
  %v5963 = vld [vmem:[%s6 + $0x78] sm:$0xff]
  %v5964 = vld [vmem:[%s6 + $0x80] sm:$0xff]
  %v5965 = vld [vmem:[%s6 + $0x88] sm:$0xff]
  %v5966 = vld [vmem:[%s6 + $0x90] sm:$0xff]
  %v5967 = vld [vmem:[%s6 + $0x98] sm:$0xff]
  %v5968 = vld [vmem:[%s6 + $0xa0] sm:$0xff]
  %v5969 = vld [vmem:[%s6 + $0xa8] sm:$0xff]
  %v5970 = vld [vmem:[%s6 + $0xb0] sm:$0xff]
  %v5971 = vld [vmem:[%s6 + $0xb8] sm:$0xff]
  %v5972 = vld [vmem:[%s6 + $0xc0] sm:$0xff]
  %v5973 = vld [vmem:[%s6 + $0xc8] sm:$0xff]
  %v5974 = vld [vmem:[%s6 + $0xd0] sm:$0xff]
  %v5975 = vld [vmem:[%s6 + $0xd8] sm:$0xff]
  %v5976 = vld [vmem:[%s6 + $0xe0] sm:$0xff]
  %v5977 = vld [vmem:[%s6 + $0xe8] sm:$0xff]
  %v5978 = vld [vmem:[%s6 + $0xf0] sm:$0xff]
  %v5979 = vld [vmem:[%s6 + $0xf8] sm:$0xff]
  %v5981 = vrot.slane %v5947, 2
  %v6015 = vunpack.c.l.b16 %v5948
  %v6016 = vunpack.c.h.b16 %v5948
  %v6017 = vunpack.c.l.b16 %v5949
  %v6018 = vunpack.c.h.b16 %v5949
  %v6019 = vunpack.c.l.b16 %v5950
  %v6020 = vunpack.c.h.b16 %v5950
  %v6021 = vunpack.c.l.b16 %v5951
  %v6022 = vunpack.c.h.b16 %v5951
  %v6023 = vunpack.c.l.b16 %v5952
  %v6024 = vunpack.c.h.b16 %v5952
  %v6025 = vunpack.c.l.b16 %v5953
  %v6026 = vunpack.c.h.b16 %v5953
  %v6027 = vunpack.c.l.b16 %v5954
  %v6028 = vunpack.c.h.b16 %v5954
  %v6029 = vunpack.c.l.b16 %v5955
  %v6030 = vunpack.c.h.b16 %v5955
  %v6031 = vunpack.c.l.b16 %v5956
  %v6032 = vunpack.c.h.b16 %v5956
  %v6033 = vunpack.c.l.b16 %v5957
  %v6034 = vunpack.c.h.b16 %v5957
  %v6035 = vunpack.c.l.b16 %v5958
  %v6036 = vunpack.c.h.b16 %v5958
  %v6037 = vunpack.c.l.b16 %v5959
  %v6038 = vunpack.c.h.b16 %v5959
  %v6039 = vunpack.c.l.b16 %v5960
  %v6040 = vunpack.c.h.b16 %v5960
  %v6041 = vunpack.c.l.b16 %v5961
  %v6042 = vunpack.c.h.b16 %v5961
  %v6043 = vunpack.c.l.b16 %v5962
  %v6044 = vunpack.c.h.b16 %v5962
  %v6045 = vunpack.c.l.b16 %v5963
  %v6046 = vunpack.c.h.b16 %v5963
  %v6047 = vunpack.c.l.b16 %v5964
  %v6048 = vunpack.c.h.b16 %v5964
  %v6049 = vunpack.c.l.b16 %v5965
  %v6050 = vunpack.c.h.b16 %v5965
  %v6051 = vunpack.c.l.b16 %v5966
  %v6052 = vunpack.c.h.b16 %v5966
  %v6053 = vunpack.c.l.b16 %v5967
  %v6054 = vunpack.c.h.b16 %v5967
  %v6055 = vunpack.c.l.b16 %v5968
  %v6056 = vunpack.c.h.b16 %v5968
  %v6057 = vunpack.c.l.b16 %v5969
  %v6058 = vunpack.c.h.b16 %v5969
  %v6059 = vunpack.c.l.b16 %v5970
  %v6060 = vunpack.c.h.b16 %v5970
  %v6061 = vunpack.c.l.b16 %v5971
  %v6062 = vunpack.c.h.b16 %v5971
  %v6063 = vunpack.c.l.b16 %v5972
  %v6064 = vunpack.c.h.b16 %v5972
  %v6065 = vunpack.c.l.b16 %v5973
  %v6066 = vunpack.c.h.b16 %v5973
  %v6067 = vunpack.c.l.b16 %v5974
  %v6068 = vunpack.c.h.b16 %v5974
  %v6069 = vunpack.c.l.b16 %v5975
  %v6070 = vunpack.c.h.b16 %v5975
  %v6071 = vunpack.c.l.b16 %v5976
  %v6072 = vunpack.c.h.b16 %v5976
  %v6073 = vunpack.c.l.b16 %v5977
  %v6074 = vunpack.c.h.b16 %v5977
  %v6075 = vunpack.c.l.b16 %v5978
  %v6076 = vunpack.c.h.b16 %v5978
  %v6077 = vunpack.c.l.b16 %v5979
  %v6078 = vunpack.c.h.b16 %v5979
  %v6079 = vpack.c.b16 %v6019, %v6015
  %v6080 = vpack.c.b16 %v6020, %v6016
  %v6081 = vpack.c.b16 %v6021, %v6017
  %v6082 = vpack.c.b16 %v6022, %v6018
  %v6083 = vpack.c.b16 %v6027, %v6023
  %v6084 = vpack.c.b16 %v6028, %v6024
  %v6085 = vpack.c.b16 %v6029, %v6025
  %v6086 = vpack.c.b16 %v6030, %v6026
  %v6087 = vpack.c.b16 %v6035, %v6031
  %v6088 = vpack.c.b16 %v6036, %v6032
  %v6089 = vpack.c.b16 %v6037, %v6033
  %v6090 = vpack.c.b16 %v6038, %v6034
  %v6091 = vpack.c.b16 %v6043, %v6039
  %v6092 = vpack.c.b16 %v6044, %v6040
  %v6093 = vpack.c.b16 %v6045, %v6041
  %v6094 = vpack.c.b16 %v6046, %v6042
  %v6095 = vpack.c.b16 %v6051, %v6047
  %v6096 = vpack.c.b16 %v6052, %v6048
  %v6097 = vpack.c.b16 %v6053, %v6049
  %v6098 = vpack.c.b16 %v6054, %v6050
  %v6099 = vpack.c.b16 %v6059, %v6055
  %v6100 = vpack.c.b16 %v6060, %v6056
  %v6101 = vpack.c.b16 %v6061, %v6057
  %v6102 = vpack.c.b16 %v6062, %v6058
  %v6103 = vpack.c.b16 %v6067, %v6063
  %v6104 = vpack.c.b16 %v6068, %v6064
  %v6105 = vpack.c.b16 %v6069, %v6065
  %v6106 = vpack.c.b16 %v6070, %v6066
  %v6107 = vpack.c.b16 %v6075, %v6071
  %v6108 = vpack.c.b16 %v6076, %v6072
  %v6109 = vpack.c.b16 %v6077, %v6073
  %v6110 = vpack.c.b16 %v6078, %v6074
  %6143 = vmatprep.subr.bf16.mxu0 %v6080
  %6144 = vmatpush1.bf16.msra.mxu0 %v6079
  %6145 = vmatprep.subr.bf16.mxu0 %v6084
  %6146 = vmatpush1.bf16.msra.mxu0 %v6083
  %6147 = vmatprep.subr.bf16.mxu0 %v6088
  %6148 = vmatpush1.bf16.msra.mxu0 %v6087
  %6149 = vmatprep.subr.bf16.mxu0 %v6092
  %6150 = vmatpush1.bf16.msra.mxu0 %v6091
  %6151 = vmatprep.subr.bf16.mxu0 %v6096
  %6152 = vmatpush1.bf16.msra.mxu0 %v6095
  %6153 = vmatprep.subr.bf16.mxu0 %v6100
  %6154 = vmatpush1.bf16.msra.mxu0 %v6099
  %6155 = vmatprep.subr.bf16.mxu0 %v6104
  %6156 = vmatpush1.bf16.msra.mxu0 %v6103
  %6157 = vmatprep.subr.bf16.mxu0 %v6108
  %6158 = vmatpush1.bf16.msra.mxu0 %v6107
  %6159 = vmatprep.subr.bf16.mxu0 0
  %6160 = vmatpush1.bf16.msra.mxu0 0
  %6161 = vmatprep.subr.bf16.mxu0 0
  %6162 = vmatpush1.bf16.msra.mxu0 0
  %6163 = vmatprep.subr.bf16.mxu0 0
  %6164 = vmatpush1.bf16.msra.mxu0 0
  %6165 = vmatprep.subr.bf16.mxu0 0
  %6166 = vmatpush1.bf16.msra.mxu0 0
  %6167 = vmatprep.subr.bf16.mxu0 0
  %6168 = vmatpush1.bf16.msra.mxu0 0
  %6169 = vmatprep.subr.bf16.mxu0 0
  %6170 = vmatpush1.bf16.msra.mxu0 0
  %6171 = vmatprep.subr.bf16.mxu0 0
  %6172 = vmatpush1.bf16.msra.mxu0 0
  %6173 = vmatprep.subr.bf16.mxu0 0
  %6174 = vmatpush1.bf16.msra.mxu0 0
  %6175 = vmatprep.mubr.bf16.mxu0 0
  %6176 = vmatmul.mubr.bf16.gmra.mrb[0].mxu0 %v5981
  %v6177 = vpop.f32.mrb[0].mxu0
  %v6178 = vadd.f32 0.0, %v6177
  %v6179 = vpop.f32.mrb[0].mxu0
  %v6180 = vadd.f32 0.0, %v6179
  %v6181 = vpop.f32.mrb[0].mxu0
  %v6182 = vpop.f32.mrb[0].mxu0
  %6183 = vdwg.mxu0
  %6184 = vmatprep.subr.bf16.mxu0 %v6082
  %6185 = vmatpush1.bf16.msra.mxu0 %v6081
  %6186 = vmatprep.subr.bf16.mxu0 %v6086
  %6187 = vmatpush1.bf16.msra.mxu0 %v6085
  %6188 = vmatprep.subr.bf16.mxu0 %v6090
  %6189 = vmatpush1.bf16.msra.mxu0 %v6089
  %6190 = vmatprep.subr.bf16.mxu0 %v6094
  %6191 = vmatpush1.bf16.msra.mxu0 %v6093
  %6192 = vmatprep.subr.bf16.mxu0 %v6098
  %6193 = vmatpush1.bf16.msra.mxu0 %v6097
  %6194 = vmatprep.subr.bf16.mxu0 %v6102
  %6195 = vmatpush1.bf16.msra.mxu0 %v6101
  %6196 = vmatprep.subr.bf16.mxu0 %v6106
  %6197 = vmatpush1.bf16.msra.mxu0 %v6105
  %6198 = vmatprep.subr.bf16.mxu0 %v6110
  %6199 = vmatpush1.bf16.msra.mxu0 %v6109
  %6200 = vmatprep.subr.bf16.mxu0 0
  %6201 = vmatpush1.bf16.msra.mxu0 0
  %6202 = vmatprep.subr.bf16.mxu0 0
  %6203 = vmatpush1.bf16.msra.mxu0 0
  %6204 = vmatprep.subr.bf16.mxu0 0
  %6205 = vmatpush1.bf16.msra.mxu0 0
  %6206 = vmatprep.subr.bf16.mxu0 0
  %6207 = vmatpush1.bf16.msra.mxu0 0
  %6208 = vmatprep.subr.bf16.mxu0 0
  %6209 = vmatpush1.bf16.msra.mxu0 0
  %6210 = vmatprep.subr.bf16.mxu0 0
  %6211 = vmatpush1.bf16.msra.mxu0 0
  %6212 = vmatprep.subr.bf16.mxu0 0
  %6213 = vmatpush1.bf16.msra.mxu0 0
  %6214 = vmatprep.subr.bf16.mxu0 0
  %6215 = vmatpush1.bf16.msra.mxu0 0
  %6216 = vmatprep.mubr.bf16.mxu0 0
  %6217 = vmatmul.mubr.bf16.gmra.mrb[0].mxu0 %v5981
  %v6218 = vpop.f32.mrb[0].mxu0
  %v6219 = vadd.f32 0.0, %v6218
  %v6220 = vpop.f32.mrb[0].mxu0
  %v6221 = vadd.f32 0.0, %v6220
  %v6222 = vpop.f32.mrb[0].mxu0
  %v6223 = vpop.f32.mrb[0].mxu0
  %6224 = vdwg.mxu0
  %v6229 = vrot.slane %v6178, 6
  %v6230 = vrot.slane %v6180, 6
  %v6231 = vrot.slane %v6219, 6
  %v6232 = vrot.slane %v6221, 6
  %v6237 = vadd.f32 %v5943, %v6229
  %v6238 = vadd.f32 %v5944, %v6230
  %v6239 = vadd.f32 %v5945, %v6231
  %v6240 = vadd.f32 %v5946, %v6232
  %v6241 = vmul.f32 %v5939, 0.5
  %v6242 = vtanh.pop %v6241
  %v6243 = vmul.f32 %v6242, 0.5
  %v6244 = vadd.f32 %v6243, 0.5
  %v6245 = vmul.f32 %v5940, 0.5
  %v6246 = vtanh.pop %v6245
  %v6247 = vmul.f32 %v6246, 0.5
  %v6248 = vadd.f32 %v6247, 0.5
  %v6249 = vtanh.pop %v5941
  %v6250 = vmul.f32 %v5942, 0.5
  %v6251 = vtanh.pop %v6250
  %v6252 = vmul.f32 %v6251, 0.5
  %v6253 = vadd.f32 %v6252, 0.5
  %v6255 = vrot.slane %v5619, 6
  %v6257 = vmul.f32 %v6248, %v6255
  %v6258 = vmul.f32 %v6244, %v6249
  %v6259 = vadd.f32 %v6257, %v6258
  %v6260 = vtanh.pop %v6259
  %v6261 = vmul.f32 %v6253, %v6260
  %v6262 = vmul.f32 %v6237, 0.5
  %v6263 = vtanh.pop %v6262
  %v6264 = vmul.f32 %v6263, 0.5
  %v6265 = vadd.f32 %v6264, 0.5
  %v6266 = vmul.f32 %v6238, 0.5
  %v6267 = vtanh.pop %v6266
  %v6268 = vmul.f32 %v6267, 0.5
  %v6269 = vadd.f32 %v6268, 0.5
  %v6270 = vtanh.pop %v6239
  %v6271 = vmul.f32 %v6240, 0.5
  %v6272 = vtanh.pop %v6271
  %v6273 = vmul.f32 %v6272, 0.5
  %v6274 = vadd.f32 %v6273, 0.5
  %v6276 = vrot.slane %v5640, 2
  %v6278 = vmul.f32 %v6269, %v6276
  %v6279 = vmul.f32 %v6265, %v6270
  %v6280 = vadd.f32 %v6278, %v6279
  %v6281 = vtanh.pop %v6280
  %v6282 = vmul.f32 %v6274, %v6281
  %6283 = vst [vmem:[#allocation4 + $0x8] sm:$0x30] %v6261
  %6284 = vst [vmem:[#allocation5] sm:$0xc] %v6282
  %v6285 = vld [vmem:[#allocation2 + $0x20] sm:$0xc0]
  %v6286 = vld [vmem:[#allocation2 + $0x28] sm:$0xc0]
  %v6287 = vld [vmem:[#allocation2 + $0x30] sm:$0xc0]
  %v6288 = vld [vmem:[#allocation2 + $0x38] sm:$0xc0]
  %v6289 = vpack.c.bf16 %v6261, %v6261
  %v6290 = vld [vmem:[%s3] sm:$0xff]
  %v6291 = vld [vmem:[%s3 + $0x8] sm:$0xff]
  %v6292 = vld [vmem:[%s3 + $0x10] sm:$0xff]
  %v6293 = vld [vmem:[%s3 + $0x18] sm:$0xff]
  %v6294 = vld [vmem:[%s3 + $0x20] sm:$0xff]
  %v6295 = vld [vmem:[%s3 + $0x28] sm:$0xff]
  %v6296 = vld [vmem:[%s3 + $0x30] sm:$0xff]
  %v6297 = vld [vmem:[%s3 + $0x38] sm:$0xff]
  %v6298 = vld [vmem:[%s3 + $0x40] sm:$0xff]
  %v6299 = vld [vmem:[%s3 + $0x48] sm:$0xff]
  %v6300 = vld [vmem:[%s3 + $0x50] sm:$0xff]
  %v6301 = vld [vmem:[%s3 + $0x58] sm:$0xff]
  %v6302 = vld [vmem:[%s3 + $0x60] sm:$0xff]
  %v6303 = vld [vmem:[%s3 + $0x68] sm:$0xff]
  %v6304 = vld [vmem:[%s3 + $0x70] sm:$0xff]
  %v6305 = vld [vmem:[%s3 + $0x78] sm:$0xff]
  %v6306 = vld [vmem:[%s3 + $0x80] sm:$0xff]
  %v6307 = vld [vmem:[%s3 + $0x88] sm:$0xff]
  %v6308 = vld [vmem:[%s3 + $0x90] sm:$0xff]
  %v6309 = vld [vmem:[%s3 + $0x98] sm:$0xff]
  %v6310 = vld [vmem:[%s3 + $0xa0] sm:$0xff]
  %v6311 = vld [vmem:[%s3 + $0xa8] sm:$0xff]
  %v6312 = vld [vmem:[%s3 + $0xb0] sm:$0xff]
  %v6313 = vld [vmem:[%s3 + $0xb8] sm:$0xff]
  %v6314 = vld [vmem:[%s3 + $0xc0] sm:$0xff]
  %v6315 = vld [vmem:[%s3 + $0xc8] sm:$0xff]
  %v6316 = vld [vmem:[%s3 + $0xd0] sm:$0xff]
  %v6317 = vld [vmem:[%s3 + $0xd8] sm:$0xff]
  %v6318 = vld [vmem:[%s3 + $0xe0] sm:$0xff]
  %v6319 = vld [vmem:[%s3 + $0xe8] sm:$0xff]
  %v6320 = vld [vmem:[%s3 + $0xf0] sm:$0xff]
  %v6321 = vld [vmem:[%s3 + $0xf8] sm:$0xff]
  %v6323 = vrot.slane %v6289, 2
  %v6357 = vunpack.c.l.b16 %v6290
  %v6358 = vunpack.c.h.b16 %v6290
  %v6359 = vunpack.c.l.b16 %v6291
  %v6360 = vunpack.c.h.b16 %v6291
  %v6361 = vunpack.c.l.b16 %v6292
  %v6362 = vunpack.c.h.b16 %v6292
  %v6363 = vunpack.c.l.b16 %v6293
  %v6364 = vunpack.c.h.b16 %v6293
  %v6365 = vunpack.c.l.b16 %v6294
  %v6366 = vunpack.c.h.b16 %v6294
  %v6367 = vunpack.c.l.b16 %v6295
  %v6368 = vunpack.c.h.b16 %v6295
  %v6369 = vunpack.c.l.b16 %v6296
  %v6370 = vunpack.c.h.b16 %v6296
  %v6371 = vunpack.c.l.b16 %v6297
  %v6372 = vunpack.c.h.b16 %v6297
  %v6373 = vunpack.c.l.b16 %v6298
  %v6374 = vunpack.c.h.b16 %v6298
  %v6375 = vunpack.c.l.b16 %v6299
  %v6376 = vunpack.c.h.b16 %v6299
  %v6377 = vunpack.c.l.b16 %v6300
  %v6378 = vunpack.c.h.b16 %v6300
  %v6379 = vunpack.c.l.b16 %v6301
  %v6380 = vunpack.c.h.b16 %v6301
  %v6381 = vunpack.c.l.b16 %v6302
  %v6382 = vunpack.c.h.b16 %v6302
  %v6383 = vunpack.c.l.b16 %v6303
  %v6384 = vunpack.c.h.b16 %v6303
  %v6385 = vunpack.c.l.b16 %v6304
  %v6386 = vunpack.c.h.b16 %v6304
  %v6387 = vunpack.c.l.b16 %v6305
  %v6388 = vunpack.c.h.b16 %v6305
  %v6389 = vunpack.c.l.b16 %v6306
  %v6390 = vunpack.c.h.b16 %v6306
  %v6391 = vunpack.c.l.b16 %v6307
  %v6392 = vunpack.c.h.b16 %v6307
  %v6393 = vunpack.c.l.b16 %v6308
  %v6394 = vunpack.c.h.b16 %v6308
  %v6395 = vunpack.c.l.b16 %v6309
  %v6396 = vunpack.c.h.b16 %v6309
  %v6397 = vunpack.c.l.b16 %v6310
  %v6398 = vunpack.c.h.b16 %v6310
  %v6399 = vunpack.c.l.b16 %v6311
  %v6400 = vunpack.c.h.b16 %v6311
  %v6401 = vunpack.c.l.b16 %v6312
  %v6402 = vunpack.c.h.b16 %v6312
  %v6403 = vunpack.c.l.b16 %v6313
  %v6404 = vunpack.c.h.b16 %v6313
  %v6405 = vunpack.c.l.b16 %v6314
  %v6406 = vunpack.c.h.b16 %v6314
  %v6407 = vunpack.c.l.b16 %v6315
  %v6408 = vunpack.c.h.b16 %v6315
  %v6409 = vunpack.c.l.b16 %v6316
  %v6410 = vunpack.c.h.b16 %v6316
  %v6411 = vunpack.c.l.b16 %v6317
  %v6412 = vunpack.c.h.b16 %v6317
  %v6413 = vunpack.c.l.b16 %v6318
  %v6414 = vunpack.c.h.b16 %v6318
  %v6415 = vunpack.c.l.b16 %v6319
  %v6416 = vunpack.c.h.b16 %v6319
  %v6417 = vunpack.c.l.b16 %v6320
  %v6418 = vunpack.c.h.b16 %v6320
  %v6419 = vunpack.c.l.b16 %v6321
  %v6420 = vunpack.c.h.b16 %v6321
  %v6421 = vpack.c.b16 %v6361, %v6357
  %v6422 = vpack.c.b16 %v6362, %v6358
  %v6423 = vpack.c.b16 %v6363, %v6359
  %v6424 = vpack.c.b16 %v6364, %v6360
  %v6425 = vpack.c.b16 %v6369, %v6365
  %v6426 = vpack.c.b16 %v6370, %v6366
  %v6427 = vpack.c.b16 %v6371, %v6367
  %v6428 = vpack.c.b16 %v6372, %v6368
  %v6429 = vpack.c.b16 %v6377, %v6373
  %v6430 = vpack.c.b16 %v6378, %v6374
  %v6431 = vpack.c.b16 %v6379, %v6375
  %v6432 = vpack.c.b16 %v6380, %v6376
  %v6433 = vpack.c.b16 %v6385, %v6381
  %v6434 = vpack.c.b16 %v6386, %v6382
  %v6435 = vpack.c.b16 %v6387, %v6383
  %v6436 = vpack.c.b16 %v6388, %v6384
  %v6437 = vpack.c.b16 %v6393, %v6389
  %v6438 = vpack.c.b16 %v6394, %v6390
  %v6439 = vpack.c.b16 %v6395, %v6391
  %v6440 = vpack.c.b16 %v6396, %v6392
  %v6441 = vpack.c.b16 %v6401, %v6397
  %v6442 = vpack.c.b16 %v6402, %v6398
  %v6443 = vpack.c.b16 %v6403, %v6399
  %v6444 = vpack.c.b16 %v6404, %v6400
  %v6445 = vpack.c.b16 %v6409, %v6405
  %v6446 = vpack.c.b16 %v6410, %v6406
  %v6447 = vpack.c.b16 %v6411, %v6407
  %v6448 = vpack.c.b16 %v6412, %v6408
  %v6449 = vpack.c.b16 %v6417, %v6413
  %v6450 = vpack.c.b16 %v6418, %v6414
  %v6451 = vpack.c.b16 %v6419, %v6415
  %v6452 = vpack.c.b16 %v6420, %v6416
  %6485 = vmatprep.subr.bf16.mxu0 %v6422
  %6486 = vmatpush1.bf16.msra.mxu0 %v6421
  %6487 = vmatprep.subr.bf16.mxu0 %v6426
  %6488 = vmatpush1.bf16.msra.mxu0 %v6425
  %6489 = vmatprep.subr.bf16.mxu0 %v6430
  %6490 = vmatpush1.bf16.msra.mxu0 %v6429
  %6491 = vmatprep.subr.bf16.mxu0 %v6434
  %6492 = vmatpush1.bf16.msra.mxu0 %v6433
  %6493 = vmatprep.subr.bf16.mxu0 %v6438
  %6494 = vmatpush1.bf16.msra.mxu0 %v6437
  %6495 = vmatprep.subr.bf16.mxu0 %v6442
  %6496 = vmatpush1.bf16.msra.mxu0 %v6441
  %6497 = vmatprep.subr.bf16.mxu0 %v6446
  %6498 = vmatpush1.bf16.msra.mxu0 %v6445
  %6499 = vmatprep.subr.bf16.mxu0 %v6450
  %6500 = vmatpush1.bf16.msra.mxu0 %v6449
  %6501 = vmatprep.subr.bf16.mxu0 0
  %6502 = vmatpush1.bf16.msra.mxu0 0
  %6503 = vmatprep.subr.bf16.mxu0 0
  %6504 = vmatpush1.bf16.msra.mxu0 0
  %6505 = vmatprep.subr.bf16.mxu0 0
  %6506 = vmatpush1.bf16.msra.mxu0 0
  %6507 = vmatprep.subr.bf16.mxu0 0
  %6508 = vmatpush1.bf16.msra.mxu0 0
  %6509 = vmatprep.subr.bf16.mxu0 0
  %6510 = vmatpush1.bf16.msra.mxu0 0
  %6511 = vmatprep.subr.bf16.mxu0 0
  %6512 = vmatpush1.bf16.msra.mxu0 0
  %6513 = vmatprep.subr.bf16.mxu0 0
  %6514 = vmatpush1.bf16.msra.mxu0 0
  %6515 = vmatprep.subr.bf16.mxu0 0
  %6516 = vmatpush1.bf16.msra.mxu0 0
  %6517 = vmatprep.mubr.bf16.mxu0 0
  %6518 = vmatmul.mubr.bf16.gmra.mrb[0].mxu0 %v6323
  %v6519 = vpop.f32.mrb[0].mxu0
  %v6520 = vadd.f32 0.0, %v6519
  %v6521 = vpop.f32.mrb[0].mxu0
  %v6522 = vadd.f32 0.0, %v6521
  %v6523 = vpop.f32.mrb[0].mxu0
  %v6524 = vpop.f32.mrb[0].mxu0
  %6525 = vdwg.mxu0
  %6526 = vmatprep.subr.bf16.mxu0 %v6424
  %6527 = vmatpush1.bf16.msra.mxu0 %v6423
  %6528 = vmatprep.subr.bf16.mxu0 %v6428
  %6529 = vmatpush1.bf16.msra.mxu0 %v6427
  %6530 = vmatprep.subr.bf16.mxu0 %v6432
  %6531 = vmatpush1.bf16.msra.mxu0 %v6431
  %6532 = vmatprep.subr.bf16.mxu0 %v6436
  %6533 = vmatpush1.bf16.msra.mxu0 %v6435
  %6534 = vmatprep.subr.bf16.mxu0 %v6440
  %6535 = vmatpush1.bf16.msra.mxu0 %v6439
  %6536 = vmatprep.subr.bf16.mxu0 %v6444
  %6537 = vmatpush1.bf16.msra.mxu0 %v6443
  %6538 = vmatprep.subr.bf16.mxu0 %v6448
  %6539 = vmatpush1.bf16.msra.mxu0 %v6447
  %6540 = vmatprep.subr.bf16.mxu0 %v6452
  %6541 = vmatpush1.bf16.msra.mxu0 %v6451
  %6542 = vmatprep.subr.bf16.mxu0 0
  %6543 = vmatpush1.bf16.msra.mxu0 0
  %6544 = vmatprep.subr.bf16.mxu0 0
  %6545 = vmatpush1.bf16.msra.mxu0 0
  %6546 = vmatprep.subr.bf16.mxu0 0
  %6547 = vmatpush1.bf16.msra.mxu0 0
  %6548 = vmatprep.subr.bf16.mxu0 0
  %6549 = vmatpush1.bf16.msra.mxu0 0
  %6550 = vmatprep.subr.bf16.mxu0 0
  %6551 = vmatpush1.bf16.msra.mxu0 0
  %6552 = vmatprep.subr.bf16.mxu0 0
  %6553 = vmatpush1.bf16.msra.mxu0 0
  %6554 = vmatprep.subr.bf16.mxu0 0
  %6555 = vmatpush1.bf16.msra.mxu0 0
  %6556 = vmatprep.subr.bf16.mxu0 0
  %6557 = vmatpush1.bf16.msra.mxu0 0
  %6558 = vmatprep.mubr.bf16.mxu0 0
  %6559 = vmatmul.mubr.bf16.gmra.mrb[0].mxu0 %v6323
  %v6560 = vpop.f32.mrb[0].mxu0
  %v6561 = vadd.f32 0.0, %v6560
  %v6562 = vpop.f32.mrb[0].mxu0
  %v6563 = vadd.f32 0.0, %v6562
  %v6564 = vpop.f32.mrb[0].mxu0
  %v6565 = vpop.f32.mrb[0].mxu0
  %6566 = vdwg.mxu0
  %v6571 = vrot.slane %v6520, 2
  %v6572 = vrot.slane %v6522, 2
  %v6573 = vrot.slane %v6561, 2
  %v6574 = vrot.slane %v6563, 2
  %v6579 = vadd.f32 %v6285, %v6571
  %v6580 = vadd.f32 %v6286, %v6572
  %v6581 = vadd.f32 %v6287, %v6573
  %v6582 = vadd.f32 %v6288, %v6574
  %v6583 = vld [vmem:[#allocation3] sm:$0x3]
  %v6584 = vld [vmem:[#allocation3 + $0x8] sm:$0x3]
  %v6585 = vld [vmem:[#allocation3 + $0x10] sm:$0x3]
  %v6586 = vld [vmem:[#allocation3 + $0x18] sm:$0x3]
  %v6587 = vpack.c.bf16 %v6282, %v6282
  %v6588 = vld [vmem:[%s6] sm:$0xff]
  %v6589 = vld [vmem:[%s6 + $0x8] sm:$0xff]
  %v6590 = vld [vmem:[%s6 + $0x10] sm:$0xff]
  %v6591 = vld [vmem:[%s6 + $0x18] sm:$0xff]
  %v6592 = vld [vmem:[%s6 + $0x20] sm:$0xff]
  %v6593 = vld [vmem:[%s6 + $0x28] sm:$0xff]
  %v6594 = vld [vmem:[%s6 + $0x30] sm:$0xff]
  %v6595 = vld [vmem:[%s6 + $0x38] sm:$0xff]
  %v6596 = vld [vmem:[%s6 + $0x40] sm:$0xff]
  %v6597 = vld [vmem:[%s6 + $0x48] sm:$0xff]
  %v6598 = vld [vmem:[%s6 + $0x50] sm:$0xff]
  %v6599 = vld [vmem:[%s6 + $0x58] sm:$0xff]
  %v6600 = vld [vmem:[%s6 + $0x60] sm:$0xff]
  %v6601 = vld [vmem:[%s6 + $0x68] sm:$0xff]
  %v6602 = vld [vmem:[%s6 + $0x70] sm:$0xff]
  %v6603 = vld [vmem:[%s6 + $0x78] sm:$0xff]
  %v6604 = vld [vmem:[%s6 + $0x80] sm:$0xff]
  %v6605 = vld [vmem:[%s6 + $0x88] sm:$0xff]
  %v6606 = vld [vmem:[%s6 + $0x90] sm:$0xff]
  %v6607 = vld [vmem:[%s6 + $0x98] sm:$0xff]
  %v6608 = vld [vmem:[%s6 + $0xa0] sm:$0xff]
  %v6609 = vld [vmem:[%s6 + $0xa8] sm:$0xff]
  %v6610 = vld [vmem:[%s6 + $0xb0] sm:$0xff]
  %v6611 = vld [vmem:[%s6 + $0xb8] sm:$0xff]
  %v6612 = vld [vmem:[%s6 + $0xc0] sm:$0xff]
  %v6613 = vld [vmem:[%s6 + $0xc8] sm:$0xff]
  %v6614 = vld [vmem:[%s6 + $0xd0] sm:$0xff]
  %v6615 = vld [vmem:[%s6 + $0xd8] sm:$0xff]
  %v6616 = vld [vmem:[%s6 + $0xe0] sm:$0xff]
  %v6617 = vld [vmem:[%s6 + $0xe8] sm:$0xff]
  %v6618 = vld [vmem:[%s6 + $0xf0] sm:$0xff]
  %v6619 = vld [vmem:[%s6 + $0xf8] sm:$0xff]
  %v6621 = vrot.slane %v6587, 1
  %v6655 = vunpack.c.l.b16 %v6588
  %v6656 = vunpack.c.h.b16 %v6588
  %v6657 = vunpack.c.l.b16 %v6589
  %v6658 = vunpack.c.h.b16 %v6589
  %v6659 = vunpack.c.l.b16 %v6590
  %v6660 = vunpack.c.h.b16 %v6590
  %v6661 = vunpack.c.l.b16 %v6591
  %v6662 = vunpack.c.h.b16 %v6591
  %v6663 = vunpack.c.l.b16 %v6592
  %v6664 = vunpack.c.h.b16 %v6592
  %v6665 = vunpack.c.l.b16 %v6593
  %v6666 = vunpack.c.h.b16 %v6593
  %v6667 = vunpack.c.l.b16 %v6594
  %v6668 = vunpack.c.h.b16 %v6594
  %v6669 = vunpack.c.l.b16 %v6595
  %v6670 = vunpack.c.h.b16 %v6595
  %v6671 = vunpack.c.l.b16 %v6596
  %v6672 = vunpack.c.h.b16 %v6596
  %v6673 = vunpack.c.l.b16 %v6597
  %v6674 = vunpack.c.h.b16 %v6597
  %v6675 = vunpack.c.l.b16 %v6598
  %v6676 = vunpack.c.h.b16 %v6598
  %v6677 = vunpack.c.l.b16 %v6599
  %v6678 = vunpack.c.h.b16 %v6599
  %v6679 = vunpack.c.l.b16 %v6600
  %v6680 = vunpack.c.h.b16 %v6600
  %v6681 = vunpack.c.l.b16 %v6601
  %v6682 = vunpack.c.h.b16 %v6601
  %v6683 = vunpack.c.l.b16 %v6602
  %v6684 = vunpack.c.h.b16 %v6602
  %v6685 = vunpack.c.l.b16 %v6603
  %v6686 = vunpack.c.h.b16 %v6603
  %v6687 = vunpack.c.l.b16 %v6604
  %v6688 = vunpack.c.h.b16 %v6604
  %v6689 = vunpack.c.l.b16 %v6605
  %v6690 = vunpack.c.h.b16 %v6605
  %v6691 = vunpack.c.l.b16 %v6606
  %v6692 = vunpack.c.h.b16 %v6606
  %v6693 = vunpack.c.l.b16 %v6607
  %v6694 = vunpack.c.h.b16 %v6607
  %v6695 = vunpack.c.l.b16 %v6608
  %v6696 = vunpack.c.h.b16 %v6608
  %v6697 = vunpack.c.l.b16 %v6609
  %v6698 = vunpack.c.h.b16 %v6609
  %v6699 = vunpack.c.l.b16 %v6610
  %v6700 = vunpack.c.h.b16 %v6610
  %v6701 = vunpack.c.l.b16 %v6611
  %v6702 = vunpack.c.h.b16 %v6611
  %v6703 = vunpack.c.l.b16 %v6612
  %v6704 = vunpack.c.h.b16 %v6612
  %v6705 = vunpack.c.l.b16 %v6613
  %v6706 = vunpack.c.h.b16 %v6613
  %v6707 = vunpack.c.l.b16 %v6614
  %v6708 = vunpack.c.h.b16 %v6614
  %v6709 = vunpack.c.l.b16 %v6615
  %v6710 = vunpack.c.h.b16 %v6615
  %v6711 = vunpack.c.l.b16 %v6616
  %v6712 = vunpack.c.h.b16 %v6616
  %v6713 = vunpack.c.l.b16 %v6617
  %v6714 = vunpack.c.h.b16 %v6617
  %v6715 = vunpack.c.l.b16 %v6618
  %v6716 = vunpack.c.h.b16 %v6618
  %v6717 = vunpack.c.l.b16 %v6619
  %v6718 = vunpack.c.h.b16 %v6619
  %v6719 = vpack.c.b16 %v6659, %v6655
  %v6720 = vpack.c.b16 %v6660, %v6656
  %v6721 = vpack.c.b16 %v6661, %v6657
  %v6722 = vpack.c.b16 %v6662, %v6658
  %v6723 = vpack.c.b16 %v6667, %v6663
  %v6724 = vpack.c.b16 %v6668, %v6664
  %v6725 = vpack.c.b16 %v6669, %v6665
  %v6726 = vpack.c.b16 %v6670, %v6666
  %v6727 = vpack.c.b16 %v6675, %v6671
  %v6728 = vpack.c.b16 %v6676, %v6672
  %v6729 = vpack.c.b16 %v6677, %v6673
  %v6730 = vpack.c.b16 %v6678, %v6674
  %v6731 = vpack.c.b16 %v6683, %v6679
  %v6732 = vpack.c.b16 %v6684, %v6680
  %v6733 = vpack.c.b16 %v6685, %v6681
  %v6734 = vpack.c.b16 %v6686, %v6682
  %v6735 = vpack.c.b16 %v6691, %v6687
  %v6736 = vpack.c.b16 %v6692, %v6688
  %v6737 = vpack.c.b16 %v6693, %v6689
  %v6738 = vpack.c.b16 %v6694, %v6690
  %v6739 = vpack.c.b16 %v6699, %v6695
  %v6740 = vpack.c.b16 %v6700, %v6696
  %v6741 = vpack.c.b16 %v6701, %v6697
  %v6742 = vpack.c.b16 %v6702, %v6698
  %v6743 = vpack.c.b16 %v6707, %v6703
  %v6744 = vpack.c.b16 %v6708, %v6704
  %v6745 = vpack.c.b16 %v6709, %v6705
  %v6746 = vpack.c.b16 %v6710, %v6706
  %v6747 = vpack.c.b16 %v6715, %v6711
  %v6748 = vpack.c.b16 %v6716, %v6712
  %v6749 = vpack.c.b16 %v6717, %v6713
  %v6750 = vpack.c.b16 %v6718, %v6714
  %6783 = vmatprep.subr.bf16.mxu0 %v6720
  %6784 = vmatpush1.bf16.msra.mxu0 %v6719
  %6785 = vmatprep.subr.bf16.mxu0 %v6724
  %6786 = vmatpush1.bf16.msra.mxu0 %v6723
  %6787 = vmatprep.subr.bf16.mxu0 %v6728
  %6788 = vmatpush1.bf16.msra.mxu0 %v6727
  %6789 = vmatprep.subr.bf16.mxu0 %v6732
  %6790 = vmatpush1.bf16.msra.mxu0 %v6731
  %6791 = vmatprep.subr.bf16.mxu0 %v6736
  %6792 = vmatpush1.bf16.msra.mxu0 %v6735
  %6793 = vmatprep.subr.bf16.mxu0 %v6740
  %6794 = vmatpush1.bf16.msra.mxu0 %v6739
  %6795 = vmatprep.subr.bf16.mxu0 %v6744
  %6796 = vmatpush1.bf16.msra.mxu0 %v6743
  %6797 = vmatprep.subr.bf16.mxu0 %v6748
  %6798 = vmatpush1.bf16.msra.mxu0 %v6747
  %6799 = vmatprep.subr.bf16.mxu0 0
  %6800 = vmatpush1.bf16.msra.mxu0 0
  %6801 = vmatprep.subr.bf16.mxu0 0
  %6802 = vmatpush1.bf16.msra.mxu0 0
  %6803 = vmatprep.subr.bf16.mxu0 0
  %6804 = vmatpush1.bf16.msra.mxu0 0
  %6805 = vmatprep.subr.bf16.mxu0 0
  %6806 = vmatpush1.bf16.msra.mxu0 0
  %6807 = vmatprep.subr.bf16.mxu0 0
  %6808 = vmatpush1.bf16.msra.mxu0 0
  %6809 = vmatprep.subr.bf16.mxu0 0
  %6810 = vmatpush1.bf16.msra.mxu0 0
  %6811 = vmatprep.subr.bf16.mxu0 0
  %6812 = vmatpush1.bf16.msra.mxu0 0
  %6813 = vmatprep.subr.bf16.mxu0 0
  %6814 = vmatpush1.bf16.msra.mxu0 0
  %6815 = vmatprep.mubr.bf16.mxu0 0
  %6816 = vmatmul.mubr.bf16.gmra.mrb[0].mxu0 %v6621
  %v6817 = vpop.f32.mrb[0].mxu0
  %v6818 = vadd.f32 0.0, %v6817
  %v6819 = vpop.f32.mrb[0].mxu0
  %v6820 = vadd.f32 0.0, %v6819
  %v6821 = vpop.f32.mrb[0].mxu0
  %v6822 = vpop.f32.mrb[0].mxu0
  %6823 = vdwg.mxu0
  %6824 = vmatprep.subr.bf16.mxu0 %v6722
  %6825 = vmatpush1.bf16.msra.mxu0 %v6721
  %6826 = vmatprep.subr.bf16.mxu0 %v6726
  %6827 = vmatpush1.bf16.msra.mxu0 %v6725
  %6828 = vmatprep.subr.bf16.mxu0 %v6730
  %6829 = vmatpush1.bf16.msra.mxu0 %v6729
  %6830 = vmatprep.subr.bf16.mxu0 %v6734
  %6831 = vmatpush1.bf16.msra.mxu0 %v6733
  %6832 = vmatprep.subr.bf16.mxu0 %v6738
  %6833 = vmatpush1.bf16.msra.mxu0 %v6737
  %6834 = vmatprep.subr.bf16.mxu0 %v6742
  %6835 = vmatpush1.bf16.msra.mxu0 %v6741
  %6836 = vmatprep.subr.bf16.mxu0 %v6746
  %6837 = vmatpush1.bf16.msra.mxu0 %v6745
  %6838 = vmatprep.subr.bf16.mxu0 %v6750
  %6839 = vmatpush1.bf16.msra.mxu0 %v6749
  %6840 = vmatprep.subr.bf16.mxu0 0
  %6841 = vmatpush1.bf16.msra.mxu0 0
  %6842 = vmatprep.subr.bf16.mxu0 0
  %6843 = vmatpush1.bf16.msra.mxu0 0
  %6844 = vmatprep.subr.bf16.mxu0 0
  %6845 = vmatpush1.bf16.msra.mxu0 0
  %6846 = vmatprep.subr.bf16.mxu0 0
  %6847 = vmatpush1.bf16.msra.mxu0 0
  %6848 = vmatprep.subr.bf16.mxu0 0
  %6849 = vmatpush1.bf16.msra.mxu0 0
  %6850 = vmatprep.subr.bf16.mxu0 0
  %6851 = vmatpush1.bf16.msra.mxu0 0
  %6852 = vmatprep.subr.bf16.mxu0 0
  %6853 = vmatpush1.bf16.msra.mxu0 0
  %6854 = vmatprep.subr.bf16.mxu0 0
  %6855 = vmatpush1.bf16.msra.mxu0 0
  %6856 = vmatprep.mubr.bf16.mxu0 0
  %6857 = vmatmul.mubr.bf16.gmra.mrb[0].mxu0 %v6621
  %v6858 = vpop.f32.mrb[0].mxu0
  %v6859 = vadd.f32 0.0, %v6858
  %v6860 = vpop.f32.mrb[0].mxu0
  %v6861 = vadd.f32 0.0, %v6860
  %v6862 = vpop.f32.mrb[0].mxu0
  %v6863 = vpop.f32.mrb[0].mxu0
  %6864 = vdwg.mxu0
  %v6865 = vadd.f32 %v6583, %v6818
  %v6866 = vadd.f32 %v6584, %v6820
  %v6867 = vadd.f32 %v6585, %v6859
  %v6868 = vadd.f32 %v6586, %v6861
  %v6869 = vmul.f32 %v6579, 0.5
  %v6870 = vtanh.pop %v6869
  %v6871 = vmul.f32 %v6870, 0.5
  %v6872 = vadd.f32 %v6871, 0.5
  %v6873 = vmul.f32 %v6580, 0.5
  %v6874 = vtanh.pop %v6873
  %v6875 = vmul.f32 %v6874, 0.5
  %v6876 = vadd.f32 %v6875, 0.5
  %v6877 = vtanh.pop %v6581
  %v6878 = vmul.f32 %v6582, 0.5
  %v6879 = vtanh.pop %v6878
  %v6880 = vmul.f32 %v6879, 0.5
  %v6881 = vadd.f32 %v6880, 0.5
  %v6883 = vrot.slane %v6259, 6
  %v6885 = vmul.f32 %v6876, %v6883
  %v6886 = vmul.f32 %v6872, %v6877
  %v6887 = vadd.f32 %v6885, %v6886
  %v6888 = vtanh.pop %v6887
  %v6889 = vmul.f32 %v6881, %v6888
  %v6890 = vmul.f32 %v6865, 0.5
  %v6891 = vtanh.pop %v6890
  %v6892 = vmul.f32 %v6891, 0.5
  %v6893 = vadd.f32 %v6892, 0.5
  %v6894 = vmul.f32 %v6866, 0.5
  %v6895 = vtanh.pop %v6894
  %v6896 = vmul.f32 %v6895, 0.5
  %v6897 = vadd.f32 %v6896, 0.5
  %v6898 = vtanh.pop %v6867
  %v6899 = vmul.f32 %v6868, 0.5
  %v6900 = vtanh.pop %v6899
  %v6901 = vmul.f32 %v6900, 0.5
  %v6902 = vadd.f32 %v6901, 0.5
  %v6904 = vrot.slane %v6280, 2
  %v6906 = vmul.f32 %v6897, %v6904
  %v6907 = vmul.f32 %v6893, %v6898
  %v6908 = vadd.f32 %v6906, %v6907
  %v6909 = vtanh.pop %v6908
  %v6910 = vmul.f32 %v6902, %v6909
  %6911 = vst [vmem:[#allocation4 + $0x8] sm:$0xc0] %v6889
  %6912 = vst [vmem:[#allocation5] sm:$0x3] %v6910
  %s6913 = smul.u32 4, 16
  %s6914 = smul.u32 %s6913, 4
  %s6915 = sshll.u32 %s6914, 4
  %6916 = dma.done [#allocation12], %s6915
  %s6917 = sshll.u32 %s6914, 4
  %6918 = dma.done %s353, %s6917
  %s6919 = sshll.u32 %s6914, 4
  %6920 = dma.done %s658, %s6919
  %s6921 = sshll.u32 %s6914, 4
  %6922 = dma.done %s963, %s6921
  %s6923 = sshll.u32 %s6914, 4
  %6924 = dma.done %s1268, %s6923
  %v6925 = vld [vmem:[#allocation4] sm:$0xff]
  %v6926 = vld [vmem:[#allocation4 + $0x8] sm:$0xff]
  %v6927 = vpack.c.bf16 %v6926, %v6925
  %v6928 = vld [vmem:[#allocation5] sm:$0xff]
  %v6929 = vld [vmem:[#allocation5 + $0x8] sm:$0xff]
  %v6930 = vpack.c.bf16 %v6929, %v6928
  %v6931 = vld [vmem:[#allocation7] sm:$0xff]
  %v6932 = vld [vmem:[#allocation7 + $0x8] sm:$0xff]
  %v6933 = vld [vmem:[#allocation7 + $0x10] sm:$0xff]
  %v6934 = vld [vmem:[#allocation7 + $0x18] sm:$0xff]
  %v6935 = vld [vmem:[#allocation7 + $0x20] sm:$0xff]
  %v6936 = vld [vmem:[#allocation7 + $0x28] sm:$0xff]
  %v6937 = vld [vmem:[#allocation7 + $0x30] sm:$0xff]
  %v6938 = vld [vmem:[#allocation7 + $0x38] sm:$0xff]
  %v6939 = vld [vmem:[#allocation7 + $0x40] sm:$0xff]
  %v6940 = vld [vmem:[#allocation7 + $0x48] sm:$0xff]
  %v6941 = vld [vmem:[#allocation7 + $0x50] sm:$0xff]
  %v6942 = vld [vmem:[#allocation7 + $0x58] sm:$0xff]
  %v6943 = vld [vmem:[#allocation7 + $0x60] sm:$0xff]
  %v6944 = vld [vmem:[#allocation7 + $0x68] sm:$0xff]
  %v6945 = vld [vmem:[#allocation7 + $0x70] sm:$0xff]
  %v6946 = vld [vmem:[#allocation7 + $0x78] sm:$0xff]
  %v6947 = vld [vmem:[#allocation7 + $0x80] sm:$0xff]
  %v6948 = vld [vmem:[#allocation7 + $0x88] sm:$0xff]
  %v6949 = vld [vmem:[#allocation7 + $0x90] sm:$0xff]
  %v6950 = vld [vmem:[#allocation7 + $0x98] sm:$0xff]
  %v6951 = vld [vmem:[#allocation7 + $0xa0] sm:$0xff]
  %v6952 = vld [vmem:[#allocation7 + $0xa8] sm:$0xff]
  %v6953 = vld [vmem:[#allocation7 + $0xb0] sm:$0xff]
  %v6954 = vld [vmem:[#allocation7 + $0xb8] sm:$0xff]
  %v6955 = vld [vmem:[#allocation7 + $0xc0] sm:$0xff]
  %v6956 = vld [vmem:[#allocation7 + $0xc8] sm:$0xff]
  %v6957 = vld [vmem:[#allocation7 + $0xd0] sm:$0xff]
  %v6958 = vld [vmem:[#allocation7 + $0xd8] sm:$0xff]
  %v6959 = vld [vmem:[#allocation7 + $0xe0] sm:$0xff]
  %v6960 = vld [vmem:[#allocation7 + $0xe8] sm:$0xff]
  %v6961 = vld [vmem:[#allocation7 + $0xf0] sm:$0xff]
  %v6962 = vld [vmem:[#allocation7 + $0xf8] sm:$0xff]
  %v6963 = vld [vmem:[#allocation8] sm:$0xff]
  %v6964 = vld [vmem:[#allocation8 + $0x8] sm:$0xff]
  %v6965 = vld [vmem:[#allocation8 + $0x10] sm:$0xff]
  %v6966 = vld [vmem:[#allocation8 + $0x18] sm:$0xff]
  %v6967 = vld [vmem:[#allocation8 + $0x20] sm:$0xff]
  %v6968 = vld [vmem:[#allocation8 + $0x28] sm:$0xff]
  %v6969 = vld [vmem:[#allocation8 + $0x30] sm:$0xff]
  %v6970 = vld [vmem:[#allocation8 + $0x38] sm:$0xff]
  %v6971 = vld [vmem:[#allocation8 + $0x40] sm:$0xff]
  %v6972 = vld [vmem:[#allocation8 + $0x48] sm:$0xff]
  %v6973 = vld [vmem:[#allocation8 + $0x50] sm:$0xff]
  %v6974 = vld [vmem:[#allocation8 + $0x58] sm:$0xff]
  %v6975 = vld [vmem:[#allocation8 + $0x60] sm:$0xff]
  %v6976 = vld [vmem:[#allocation8 + $0x68] sm:$0xff]
  %v6977 = vld [vmem:[#allocation8 + $0x70] sm:$0xff]
  %v6978 = vld [vmem:[#allocation8 + $0x78] sm:$0xff]
  %v6979 = vld [vmem:[#allocation8 + $0x80] sm:$0xff]
  %v6980 = vld [vmem:[#allocation8 + $0x88] sm:$0xff]
  %v6981 = vld [vmem:[#allocation8 + $0x90] sm:$0xff]
  %v6982 = vld [vmem:[#allocation8 + $0x98] sm:$0xff]
  %v6983 = vld [vmem:[#allocation8 + $0xa0] sm:$0xff]
  %v6984 = vld [vmem:[#allocation8 + $0xa8] sm:$0xff]
  %v6985 = vld [vmem:[#allocation8 + $0xb0] sm:$0xff]
  %v6986 = vld [vmem:[#allocation8 + $0xb8] sm:$0xff]
  %v6987 = vld [vmem:[#allocation8 + $0xc0] sm:$0xff]
  %v6988 = vld [vmem:[#allocation8 + $0xc8] sm:$0xff]
  %v6989 = vld [vmem:[#allocation8 + $0xd0] sm:$0xff]
  %v6990 = vld [vmem:[#allocation8 + $0xd8] sm:$0xff]
  %v6991 = vld [vmem:[#allocation8 + $0xe0] sm:$0xff]
  %v6992 = vld [vmem:[#allocation8 + $0xe8] sm:$0xff]
  %v6993 = vld [vmem:[#allocation8 + $0xf0] sm:$0xff]
  %v6994 = vld [vmem:[#allocation8 + $0xf8] sm:$0xff]
  %6995 = vmatprep.subr.bf16.mxu0 %v6964
  %6996 = vmatpush1.bf16.msra.mxu0 %v6963
  %6997 = vmatprep.subr.bf16.mxu0 %v6968
  %6998 = vmatpush1.bf16.msra.mxu0 %v6967
  %6999 = vmatprep.subr.bf16.mxu0 %v6972
  %7000 = vmatpush1.bf16.msra.mxu0 %v6971
  %7001 = vmatprep.subr.bf16.mxu0 %v6976
  %7002 = vmatpush1.bf16.msra.mxu0 %v6975
  %7003 = vmatprep.subr.bf16.mxu0 %v6980
  %7004 = vmatpush1.bf16.msra.mxu0 %v6979
  %7005 = vmatprep.subr.bf16.mxu0 %v6984
  %7006 = vmatpush1.bf16.msra.mxu0 %v6983
  %7007 = vmatprep.subr.bf16.mxu0 %v6988
  %7008 = vmatpush1.bf16.msra.mxu0 %v6987
  %7009 = vmatprep.subr.bf16.mxu0 %v6992
  %7010 = vmatpush1.bf16.msra.mxu0 %v6991
  %7011 = vmatprep.subr.bf16.mxu0 0
  %7012 = vmatpush1.bf16.msra.mxu0 0
  %7013 = vmatprep.subr.bf16.mxu0 0
  %7014 = vmatpush1.bf16.msra.mxu0 0
  %7015 = vmatprep.subr.bf16.mxu0 0
  %7016 = vmatpush1.bf16.msra.mxu0 0
  %7017 = vmatprep.subr.bf16.mxu0 0
  %7018 = vmatpush1.bf16.msra.mxu0 0
  %7019 = vmatprep.subr.bf16.mxu0 0
  %7020 = vmatpush1.bf16.msra.mxu0 0
  %7021 = vmatprep.subr.bf16.mxu0 0
  %7022 = vmatpush1.bf16.msra.mxu0 0
  %7023 = vmatprep.subr.bf16.mxu0 0
  %7024 = vmatpush1.bf16.msra.mxu0 0
  %7025 = vmatprep.subr.bf16.mxu0 0
  %7026 = vmatpush1.bf16.msra.mxu0 0
  %7027 = vmatprep.mubr.bf16.mxu0 0
  %7028 = vmatmul.mubr.bf16.gmra.mrb[0].mxu0 %v6930
  %v7029 = vpop.f32.mrb[0].mxu0
  %v7030 = vadd.f32 0.0, %v7029
  %v7031 = vpop.f32.mrb[0].mxu0
  %v7032 = vadd.f32 0.0, %v7031
  %v7033 = vpop.f32.mrb[0].mxu0
  %v7034 = vadd.f32 0.0, %v7033
  %v7035 = vpop.f32.mrb[0].mxu0
  %v7036 = vadd.f32 0.0, %v7035
  %7037 = vdwg.mxu0
  %7038 = vmatprep.subr.bf16.mxu0 %v6966
  %7039 = vmatpush1.bf16.msra.mxu0 %v6965
  %7040 = vmatprep.subr.bf16.mxu0 %v6970
  %7041 = vmatpush1.bf16.msra.mxu0 %v6969
  %7042 = vmatprep.subr.bf16.mxu0 %v6974
  %7043 = vmatpush1.bf16.msra.mxu0 %v6973
  %7044 = vmatprep.subr.bf16.mxu0 %v6978
  %7045 = vmatpush1.bf16.msra.mxu0 %v6977
  %7046 = vmatprep.subr.bf16.mxu0 %v6982
  %7047 = vmatpush1.bf16.msra.mxu0 %v6981
  %7048 = vmatprep.subr.bf16.mxu0 %v6986
  %7049 = vmatpush1.bf16.msra.mxu0 %v6985
  %7050 = vmatprep.subr.bf16.mxu0 %v6990
  %7051 = vmatpush1.bf16.msra.mxu0 %v6989
  %7052 = vmatprep.subr.bf16.mxu0 %v6994
  %7053 = vmatpush1.bf16.msra.mxu0 %v6993
  %7054 = vmatprep.subr.bf16.mxu0 0
  %7055 = vmatpush1.bf16.msra.mxu0 0
  %7056 = vmatprep.subr.bf16.mxu0 0
  %7057 = vmatpush1.bf16.msra.mxu0 0
  %7058 = vmatprep.subr.bf16.mxu0 0
  %7059 = vmatpush1.bf16.msra.mxu0 0
  %7060 = vmatprep.subr.bf16.mxu0 0
  %7061 = vmatpush1.bf16.msra.mxu0 0
  %7062 = vmatprep.subr.bf16.mxu0 0
  %7063 = vmatpush1.bf16.msra.mxu0 0
  %7064 = vmatprep.subr.bf16.mxu0 0
  %7065 = vmatpush1.bf16.msra.mxu0 0
  %7066 = vmatprep.subr.bf16.mxu0 0
  %7067 = vmatpush1.bf16.msra.mxu0 0
  %7068 = vmatprep.subr.bf16.mxu0 0
  %7069 = vmatpush1.bf16.msra.mxu0 0
  %7070 = vmatprep.mubr.bf16.mxu0 0
  %7071 = vmatmul.mubr.bf16.gmra.mrb[0].mxu0 %v6930
  %v7072 = vpop.f32.mrb[0].mxu0
  %v7073 = vadd.f32 0.0, %v7072
  %v7074 = vpop.f32.mrb[0].mxu0
  %v7075 = vadd.f32 0.0, %v7074
  %v7076 = vpop.f32.mrb[0].mxu0
  %v7077 = vadd.f32 0.0, %v7076
  %v7078 = vpop.f32.mrb[0].mxu0
  %v7079 = vadd.f32 0.0, %v7078
  %7080 = vdwg.mxu0
  %7081 = vmatprep.subr.bf16.mxu0 %v6932
  %7082 = vmatpush1.bf16.msra.mxu0 %v6931
  %7083 = vmatprep.subr.bf16.mxu0 %v6936
  %7084 = vmatpush1.bf16.msra.mxu0 %v6935
  %7085 = vmatprep.subr.bf16.mxu0 %v6940
  %7086 = vmatpush1.bf16.msra.mxu0 %v6939
  %7087 = vmatprep.subr.bf16.mxu0 %v6944
  %7088 = vmatpush1.bf16.msra.mxu0 %v6943
  %7089 = vmatprep.subr.bf16.mxu0 %v6948
  %7090 = vmatpush1.bf16.msra.mxu0 %v6947
  %7091 = vmatprep.subr.bf16.mxu0 %v6952
  %7092 = vmatpush1.bf16.msra.mxu0 %v6951
  %7093 = vmatprep.subr.bf16.mxu0 %v6956
  %7094 = vmatpush1.bf16.msra.mxu0 %v6955
  %7095 = vmatprep.subr.bf16.mxu0 %v6960
  %7096 = vmatpush1.bf16.msra.mxu0 %v6959
  %7097 = vmatprep.subr.bf16.mxu0 0
  %7098 = vmatpush1.bf16.msra.mxu0 0
  %7099 = vmatprep.subr.bf16.mxu0 0
  %7100 = vmatpush1.bf16.msra.mxu0 0
  %7101 = vmatprep.subr.bf16.mxu0 0
  %7102 = vmatpush1.bf16.msra.mxu0 0
  %7103 = vmatprep.subr.bf16.mxu0 0
  %7104 = vmatpush1.bf16.msra.mxu0 0
  %7105 = vmatprep.subr.bf16.mxu0 0
  %7106 = vmatpush1.bf16.msra.mxu0 0
  %7107 = vmatprep.subr.bf16.mxu0 0
  %7108 = vmatpush1.bf16.msra.mxu0 0
  %7109 = vmatprep.subr.bf16.mxu0 0
  %7110 = vmatpush1.bf16.msra.mxu0 0
  %7111 = vmatprep.subr.bf16.mxu0 0
  %7112 = vmatpush1.bf16.msra.mxu0 0
  %7113 = vmatprep.mubr.bf16.mxu0 0
  %7114 = vmatmul.mubr.bf16.gmra.mrb[0].mxu0 %v6927
  %v7115 = vpop.f32.mrb[0].mxu0
  %v7116 = vadd.f32 %v7030, %v7115
  %v7117 = vpop.f32.mrb[0].mxu0
  %v7118 = vadd.f32 %v7032, %v7117
  %v7119 = vpop.f32.mrb[0].mxu0
  %v7120 = vadd.f32 %v7034, %v7119
  %v7121 = vpop.f32.mrb[0].mxu0
  %v7122 = vadd.f32 %v7036, %v7121
  %7123 = vdwg.mxu0
  %7124 = vmatprep.subr.bf16.mxu0 %v6934
  %7125 = vmatpush1.bf16.msra.mxu0 %v6933
  %7126 = vmatprep.subr.bf16.mxu0 %v6938
  %7127 = vmatpush1.bf16.msra.mxu0 %v6937
  %7128 = vmatprep.subr.bf16.mxu0 %v6942
  %7129 = vmatpush1.bf16.msra.mxu0 %v6941
  %7130 = vmatprep.subr.bf16.mxu0 %v6946
  %7131 = vmatpush1.bf16.msra.mxu0 %v6945
  %7132 = vmatprep.subr.bf16.mxu0 %v6950
  %7133 = vmatpush1.bf16.msra.mxu0 %v6949
  %7134 = vmatprep.subr.bf16.mxu0 %v6954
  %7135 = vmatpush1.bf16.msra.mxu0 %v6953
  %7136 = vmatprep.subr.bf16.mxu0 %v6958
  %7137 = vmatpush1.bf16.msra.mxu0 %v6957
  %7138 = vmatprep.subr.bf16.mxu0 %v6962
  %7139 = vmatpush1.bf16.msra.mxu0 %v6961
  %7140 = vmatprep.subr.bf16.mxu0 0
  %7141 = vmatpush1.bf16.msra.mxu0 0
  %7142 = vmatprep.subr.bf16.mxu0 0
  %7143 = vmatpush1.bf16.msra.mxu0 0
  %7144 = vmatprep.subr.bf16.mxu0 0
  %7145 = vmatpush1.bf16.msra.mxu0 0
  %7146 = vmatprep.subr.bf16.mxu0 0
  %7147 = vmatpush1.bf16.msra.mxu0 0
  %7148 = vmatprep.subr.bf16.mxu0 0
  %7149 = vmatpush1.bf16.msra.mxu0 0
  %7150 = vmatprep.subr.bf16.mxu0 0
  %7151 = vmatpush1.bf16.msra.mxu0 0
  %7152 = vmatprep.subr.bf16.mxu0 0
  %7153 = vmatpush1.bf16.msra.mxu0 0
  %7154 = vmatprep.subr.bf16.mxu0 0
  %7155 = vmatpush1.bf16.msra.mxu0 0
  %7156 = vmatprep.mubr.bf16.mxu0 0
  %7157 = vmatmul.mubr.bf16.gmra.mrb[0].mxu0 %v6927
  %v7158 = vpop.f32.mrb[0].mxu0
  %v7159 = vadd.f32 %v7073, %v7158
  %v7160 = vpop.f32.mrb[0].mxu0
  %v7161 = vadd.f32 %v7075, %v7160
  %v7162 = vpop.f32.mrb[0].mxu0
  %v7163 = vadd.f32 %v7077, %v7162
  %v7164 = vpop.f32.mrb[0].mxu0
  %v7165 = vadd.f32 %v7079, %v7164
  %7166 = vdwg.mxu0
  %v7167 = vld [vmem:[%s7] sm:$0xf]
  %v7169 = vlaneseq
  %v7170 = vshrl.u32 %v7169, 7
  %v7171 = vsub.s32 0, %v7170
  %v7172 = vrot.slane %v7167, %v7171
  %v7173 = vlaneseq
  %v7174 = vshrl.u32 %v7173, 7
  %v7175 = vsub.s32 1, %v7174
  %v7176 = vrot.slane %v7167, %v7175
  %v7177 = vlaneseq
  %v7178 = vshrl.u32 %v7177, 7
  %v7179 = vsub.s32 2, %v7178
  %v7180 = vrot.slane %v7167, %v7179
  %v7181 = vlaneseq
  %v7182 = vshrl.u32 %v7181, 7
  %v7183 = vsub.s32 3, %v7182
  %v7184 = vrot.slane %v7167, %v7183
  %v7189 = vadd.f32 %v7116, %v7172
  %v7190 = vadd.f32 %v7118, %v7176
  %v7191 = vadd.f32 %v7159, %v7180
  %v7192 = vadd.f32 %v7161, %v7184
  %v7193 = vadd.f32 %v7120, %v7172
  %v7194 = vadd.f32 %v7122, %v7176
  %v7195 = vadd.f32 %v7163, %v7180
  %v7196 = vadd.f32 %v7165, %v7184
  %7197 = vst [vmem:[#allocation6] sm:$0xff] %v7189
  %7198 = vst [vmem:[#allocation6 + $0x8] sm:$0xff] %v7190
  %7199 = vst [vmem:[#allocation6 + $0x10] sm:$0xff] %v7191
  %7200 = vst [vmem:[#allocation6 + $0x18] sm:$0xff] %v7192
  %7201 = vst [vmem:[#allocation6 + $0x20] sm:$0xff] %v7193
  %7202 = vst [vmem:[#allocation6 + $0x28] sm:$0xff] %v7194
  %7203 = vst [vmem:[#allocation6 + $0x30] sm:$0xff] %v7195
  %7204 = vst [vmem:[#allocation6 + $0x38] sm:$0xff] %v7196
  %v7205 = vld [vmem:[#allocation6] sm:$0x3]
  %v7206 = vld [vmem:[#allocation6 + $0x8] sm:$0x3]
  %v7207 = vld [vmem:[#allocation6 + $0x10] sm:$0x3]
  %v7208 = vld [vmem:[#allocation6 + $0x18] sm:$0x3]
  %v7209 = vld [vmem:[#allocation9] sm:$0xff]
  %v7210 = vld [vmem:[#allocation9 + $0x8] sm:$0xff]
  %v7211 = vld [vmem:[#allocation9 + $0x10] sm:$0xff]
  %v7212 = vld [vmem:[#allocation9 + $0x18] sm:$0xff]
  %v7213 = vld [vmem:[#allocation9 + $0x20] sm:$0xff]
  %v7214 = vld [vmem:[#allocation9 + $0x28] sm:$0xff]
  %v7215 = vld [vmem:[#allocation9 + $0x30] sm:$0xff]
  %v7216 = vld [vmem:[#allocation9 + $0x38] sm:$0xff]
  %v7217 = vld [vmem:[#allocation9 + $0x40] sm:$0xff]
  %v7218 = vld [vmem:[#allocation9 + $0x48] sm:$0xff]
  %v7219 = vld [vmem:[#allocation9 + $0x50] sm:$0xff]
  %v7220 = vld [vmem:[#allocation9 + $0x58] sm:$0xff]
  %v7221 = vld [vmem:[#allocation9 + $0x60] sm:$0xff]
  %v7222 = vld [vmem:[#allocation9 + $0x68] sm:$0xff]
  %v7223 = vld [vmem:[#allocation9 + $0x70] sm:$0xff]
  %v7224 = vld [vmem:[#allocation9 + $0x78] sm:$0xff]
  %v7225 = vld [vmem:[#allocation9 + $0x80] sm:$0xff]
  %v7226 = vld [vmem:[#allocation9 + $0x88] sm:$0xff]
  %v7227 = vld [vmem:[#allocation9 + $0x90] sm:$0xff]
  %v7228 = vld [vmem:[#allocation9 + $0x98] sm:$0xff]
  %v7229 = vld [vmem:[#allocation9 + $0xa0] sm:$0xff]
  %v7230 = vld [vmem:[#allocation9 + $0xa8] sm:$0xff]
  %v7231 = vld [vmem:[#allocation9 + $0xb0] sm:$0xff]
  %v7232 = vld [vmem:[#allocation9 + $0xb8] sm:$0xff]
  %v7233 = vld [vmem:[#allocation9 + $0xc0] sm:$0xff]
  %v7234 = vld [vmem:[#allocation9 + $0xc8] sm:$0xff]
  %v7235 = vld [vmem:[#allocation9 + $0xd0] sm:$0xff]
  %v7236 = vld [vmem:[#allocation9 + $0xd8] sm:$0xff]
  %v7237 = vld [vmem:[#allocation9 + $0xe0] sm:$0xff]
  %v7238 = vld [vmem:[#allocation9 + $0xe8] sm:$0xff]
  %v7239 = vld [vmem:[#allocation9 + $0xf0] sm:$0xff]
  %v7240 = vld [vmem:[#allocation9 + $0xf8] sm:$0xff]
  %7241 = vmatprep.subr.bf16.mxu0 %v7210
  %7242 = vmatpush1.bf16.msra.mxu0 %v7209
  %7243 = vmatprep.subr.bf16.mxu0 %v7214
  %7244 = vmatpush1.bf16.msra.mxu0 %v7213
  %7245 = vmatprep.subr.bf16.mxu0 %v7218
  %7246 = vmatpush1.bf16.msra.mxu0 %v7217
  %7247 = vmatprep.subr.bf16.mxu0 %v7222
  %7248 = vmatpush1.bf16.msra.mxu0 %v7221
  %7249 = vmatprep.subr.bf16.mxu0 %v7226
  %7250 = vmatpush1.bf16.msra.mxu0 %v7225
  %7251 = vmatprep.subr.bf16.mxu0 %v7230
  %7252 = vmatpush1.bf16.msra.mxu0 %v7229
  %7253 = vmatprep.subr.bf16.mxu0 %v7234
  %7254 = vmatpush1.bf16.msra.mxu0 %v7233
  %7255 = vmatprep.subr.bf16.mxu0 %v7238
  %7256 = vmatpush1.bf16.msra.mxu0 %v7237
  %7257 = vmatprep.subr.bf16.mxu0 0
  %7258 = vmatpush1.bf16.msra.mxu0 0
  %7259 = vmatprep.subr.bf16.mxu0 0
  %7260 = vmatpush1.bf16.msra.mxu0 0
  %7261 = vmatprep.subr.bf16.mxu0 0
  %7262 = vmatpush1.bf16.msra.mxu0 0
  %7263 = vmatprep.subr.bf16.mxu0 0
  %7264 = vmatpush1.bf16.msra.mxu0 0
  %7265 = vmatprep.subr.bf16.mxu0 0
  %7266 = vmatpush1.bf16.msra.mxu0 0
  %7267 = vmatprep.subr.bf16.mxu0 0
  %7268 = vmatpush1.bf16.msra.mxu0 0
  %7269 = vmatprep.subr.bf16.mxu0 0
  %7270 = vmatpush1.bf16.msra.mxu0 0
  %7271 = vmatprep.subr.bf16.mxu0 0
  %7272 = vmatpush1.bf16.msra.mxu0 0
  %7273 = vmatprep.mubr.bf16.mxu0 0
  %7274 = vmatmul.mubr.bf16.gmra.mrb[0].mxu0 0
  %v7275 = vpop.f32.mrb[0].mxu0
  %v7276 = vadd.f32 0.0, %v7275
  %v7277 = vpop.f32.mrb[0].mxu0
  %v7278 = vadd.f32 0.0, %v7277
  %v7279 = vpop.f32.mrb[0].mxu0
  %v7280 = vpop.f32.mrb[0].mxu0
  %7281 = vdwg.mxu0
  %7282 = vmatprep.subr.bf16.mxu0 %v7212
  %7283 = vmatpush1.bf16.msra.mxu0 %v7211
  %7284 = vmatprep.subr.bf16.mxu0 %v7216
  %7285 = vmatpush1.bf16.msra.mxu0 %v7215
  %7286 = vmatprep.subr.bf16.mxu0 %v7220
  %7287 = vmatpush1.bf16.msra.mxu0 %v7219
  %7288 = vmatprep.subr.bf16.mxu0 %v7224
  %7289 = vmatpush1.bf16.msra.mxu0 %v7223
  %7290 = vmatprep.subr.bf16.mxu0 %v7228
  %7291 = vmatpush1.bf16.msra.mxu0 %v7227
  %7292 = vmatprep.subr.bf16.mxu0 %v7232
  %7293 = vmatpush1.bf16.msra.mxu0 %v7231
  %7294 = vmatprep.subr.bf16.mxu0 %v7236
  %7295 = vmatpush1.bf16.msra.mxu0 %v7235
  %7296 = vmatprep.subr.bf16.mxu0 %v7240
  %7297 = vmatpush1.bf16.msra.mxu0 %v7239
  %7298 = vmatprep.subr.bf16.mxu0 0
  %7299 = vmatpush1.bf16.msra.mxu0 0
  %7300 = vmatprep.subr.bf16.mxu0 0
  %7301 = vmatpush1.bf16.msra.mxu0 0
  %7302 = vmatprep.subr.bf16.mxu0 0
  %7303 = vmatpush1.bf16.msra.mxu0 0
  %7304 = vmatprep.subr.bf16.mxu0 0
  %7305 = vmatpush1.bf16.msra.mxu0 0
  %7306 = vmatprep.subr.bf16.mxu0 0
  %7307 = vmatpush1.bf16.msra.mxu0 0
  %7308 = vmatprep.subr.bf16.mxu0 0
  %7309 = vmatpush1.bf16.msra.mxu0 0
  %7310 = vmatprep.subr.bf16.mxu0 0
  %7311 = vmatpush1.bf16.msra.mxu0 0
  %7312 = vmatprep.subr.bf16.mxu0 0
  %7313 = vmatpush1.bf16.msra.mxu0 0
  %7314 = vmatprep.mubr.bf16.mxu0 0
  %7315 = vmatmul.mubr.bf16.gmra.mrb[0].mxu0 0
  %v7316 = vpop.f32.mrb[0].mxu0
  %v7317 = vadd.f32 0.0, %v7316
  %v7318 = vpop.f32.mrb[0].mxu0
  %v7319 = vadd.f32 0.0, %v7318
  %v7320 = vpop.f32.mrb[0].mxu0
  %v7321 = vpop.f32.mrb[0].mxu0
  %7322 = vdwg.mxu0
  %v7323 = vadd.f32 %v7205, %v7276
  %v7324 = vadd.f32 %v7206, %v7278
  %v7325 = vadd.f32 %v7207, %v7317
  %v7326 = vadd.f32 %v7208, %v7319
  %v7327 = vmul.f32 %v7323, 0.5
  %v7328 = vtanh.pop %v7327
  %v7329 = vmul.f32 %v7328, 0.5
  %v7330 = vadd.f32 %v7329, 0.5
  %v7331 = vmul.f32 %v7324, 0.5
  %v7332 = vtanh.pop %v7331
  %v7333 = vmul.f32 %v7332, 0.5
  %v7334 = vadd.f32 %v7333, 0.5
  %v7335 = vtanh.pop %v7325
  %v7336 = vmul.f32 %v7326, 0.5
  %v7337 = vtanh.pop %v7336
  %v7338 = vmul.f32 %v7337, 0.5
  %v7339 = vadd.f32 %v7338, 0.5
  %v7340 = vmul.f32 %v7334, 0.0
  %v7341 = vmul.f32 %v7330, %v7335
  %v7342 = vadd.f32 %v7340, %v7341
  %v7343 = vtanh.pop %v7342
  %v7344 = vmul.f32 %v7339, %v7343
  %v7345 = vld [vmem:[#allocation6] sm:$0xc]
  %v7346 = vld [vmem:[#allocation6 + $0x8] sm:$0xc]
  %v7347 = vld [vmem:[#allocation6 + $0x10] sm:$0xc]
  %v7348 = vld [vmem:[#allocation6 + $0x18] sm:$0xc]
  %v7349 = vpack.c.bf16 %v7344, %v7344
  %7350 = vmatprep.subr.bf16.mxu0 %v7210
  %7351 = vmatpush1.bf16.msra.mxu0 %v7209
  %7352 = vmatprep.subr.bf16.mxu0 %v7214
  %7353 = vmatpush1.bf16.msra.mxu0 %v7213
  %7354 = vmatprep.subr.bf16.mxu0 %v7218
  %7355 = vmatpush1.bf16.msra.mxu0 %v7217
  %7356 = vmatprep.subr.bf16.mxu0 %v7222
  %7357 = vmatpush1.bf16.msra.mxu0 %v7221
  %7358 = vmatprep.subr.bf16.mxu0 %v7226
  %7359 = vmatpush1.bf16.msra.mxu0 %v7225
  %7360 = vmatprep.subr.bf16.mxu0 %v7230
  %7361 = vmatpush1.bf16.msra.mxu0 %v7229
  %7362 = vmatprep.subr.bf16.mxu0 %v7234
  %7363 = vmatpush1.bf16.msra.mxu0 %v7233
  %7364 = vmatprep.subr.bf16.mxu0 %v7238
  %7365 = vmatpush1.bf16.msra.mxu0 %v7237
  %7366 = vmatprep.subr.bf16.mxu0 0
  %7367 = vmatpush1.bf16.msra.mxu0 0
  %7368 = vmatprep.subr.bf16.mxu0 0
  %7369 = vmatpush1.bf16.msra.mxu0 0
  %7370 = vmatprep.subr.bf16.mxu0 0
  %7371 = vmatpush1.bf16.msra.mxu0 0
  %7372 = vmatprep.subr.bf16.mxu0 0
  %7373 = vmatpush1.bf16.msra.mxu0 0
  %7374 = vmatprep.subr.bf16.mxu0 0
  %7375 = vmatpush1.bf16.msra.mxu0 0
  %7376 = vmatprep.subr.bf16.mxu0 0
  %7377 = vmatpush1.bf16.msra.mxu0 0
  %7378 = vmatprep.subr.bf16.mxu0 0
  %7379 = vmatpush1.bf16.msra.mxu0 0
  %7380 = vmatprep.subr.bf16.mxu0 0
  %7381 = vmatpush1.bf16.msra.mxu0 0
  %7382 = vmatprep.mubr.bf16.mxu0 0
  %7383 = vmatmul.mubr.bf16.gmra.mrb[0].mxu0 %v7349
  %v7384 = vpop.f32.mrb[0].mxu0
  %v7385 = vadd.f32 0.0, %v7384
  %v7386 = vpop.f32.mrb[0].mxu0
  %v7387 = vadd.f32 0.0, %v7386
  %v7388 = vpop.f32.mrb[0].mxu0
  %v7389 = vpop.f32.mrb[0].mxu0
  %7390 = vdwg.mxu0
  %7391 = vmatprep.subr.bf16.mxu0 %v7212
  %7392 = vmatpush1.bf16.msra.mxu0 %v7211
  %7393 = vmatprep.subr.bf16.mxu0 %v7216
  %7394 = vmatpush1.bf16.msra.mxu0 %v7215
  %7395 = vmatprep.subr.bf16.mxu0 %v7220
  %7396 = vmatpush1.bf16.msra.mxu0 %v7219
  %7397 = vmatprep.subr.bf16.mxu0 %v7224
  %7398 = vmatpush1.bf16.msra.mxu0 %v7223
  %7399 = vmatprep.subr.bf16.mxu0 %v7228
  %7400 = vmatpush1.bf16.msra.mxu0 %v7227
  %7401 = vmatprep.subr.bf16.mxu0 %v7232
  %7402 = vmatpush1.bf16.msra.mxu0 %v7231
  %7403 = vmatprep.subr.bf16.mxu0 %v7236
  %7404 = vmatpush1.bf16.msra.mxu0 %v7235
  %7405 = vmatprep.subr.bf16.mxu0 %v7240
  %7406 = vmatpush1.bf16.msra.mxu0 %v7239
  %7407 = vmatprep.subr.bf16.mxu0 0
  %7408 = vmatpush1.bf16.msra.mxu0 0
  %7409 = vmatprep.subr.bf16.mxu0 0
  %7410 = vmatpush1.bf16.msra.mxu0 0
  %7411 = vmatprep.subr.bf16.mxu0 0
  %7412 = vmatpush1.bf16.msra.mxu0 0
  %7413 = vmatprep.subr.bf16.mxu0 0
  %7414 = vmatpush1.bf16.msra.mxu0 0
  %7415 = vmatprep.subr.bf16.mxu0 0
  %7416 = vmatpush1.bf16.msra.mxu0 0
  %7417 = vmatprep.subr.bf16.mxu0 0
  %7418 = vmatpush1.bf16.msra.mxu0 0
  %7419 = vmatprep.subr.bf16.mxu0 0
  %7420 = vmatpush1.bf16.msra.mxu0 0
  %7421 = vmatprep.subr.bf16.mxu0 0
  %7422 = vmatpush1.bf16.msra.mxu0 0
  %7423 = vmatprep.mubr.bf16.mxu0 0
  %7424 = vmatmul.mubr.bf16.gmra.mrb[0].mxu0 %v7349
  %v7425 = vpop.f32.mrb[0].mxu0
  %v7426 = vadd.f32 0.0, %v7425
  %v7427 = vpop.f32.mrb[0].mxu0
  %v7428 = vadd.f32 0.0, %v7427
  %v7429 = vpop.f32.mrb[0].mxu0
  %v7430 = vpop.f32.mrb[0].mxu0
  %7431 = vdwg.mxu0
  %v7436 = vrot.slane %v7385, 6
  %v7437 = vrot.slane %v7387, 6
  %v7438 = vrot.slane %v7426, 6
  %v7439 = vrot.slane %v7428, 6
  %v7444 = vadd.f32 %v7345, %v7436
  %v7445 = vadd.f32 %v7346, %v7437
  %v7446 = vadd.f32 %v7347, %v7438
  %v7447 = vadd.f32 %v7348, %v7439
  %v7448 = vmul.f32 %v7444, 0.5
  %v7449 = vtanh.pop %v7448
  %v7450 = vmul.f32 %v7449, 0.5
  %v7451 = vadd.f32 %v7450, 0.5
  %v7452 = vmul.f32 %v7445, 0.5
  %v7453 = vtanh.pop %v7452
  %v7454 = vmul.f32 %v7453, 0.5
  %v7455 = vadd.f32 %v7454, 0.5
  %v7456 = vtanh.pop %v7446
  %v7457 = vmul.f32 %v7447, 0.5
  %v7458 = vtanh.pop %v7457
  %v7459 = vmul.f32 %v7458, 0.5
  %v7460 = vadd.f32 %v7459, 0.5
  %v7462 = vrot.slane %v7342, 6
  %v7464 = vmul.f32 %v7455, %v7462
  %v7465 = vmul.f32 %v7451, %v7456
  %v7466 = vadd.f32 %v7464, %v7465
  %v7467 = vtanh.pop %v7466
  %v7468 = vmul.f32 %v7460, %v7467
  %v7469 = vld [vmem:[#allocation6] sm:$0x30]
  %v7470 = vld [vmem:[#allocation6 + $0x8] sm:$0x30]
  %v7471 = vld [vmem:[#allocation6 + $0x10] sm:$0x30]
  %v7472 = vld [vmem:[#allocation6 + $0x18] sm:$0x30]
  %v7473 = vpack.c.bf16 %v7468, %v7468
  %v7475 = vrot.slane %v7473, 1
  %7477 = vmatprep.subr.bf16.mxu0 %v7210
  %7478 = vmatpush1.bf16.msra.mxu0 %v7209
  %7479 = vmatprep.subr.bf16.mxu0 %v7214
  %7480 = vmatpush1.bf16.msra.mxu0 %v7213
  %7481 = vmatprep.subr.bf16.mxu0 %v7218
  %7482 = vmatpush1.bf16.msra.mxu0 %v7217
  %7483 = vmatprep.subr.bf16.mxu0 %v7222
  %7484 = vmatpush1.bf16.msra.mxu0 %v7221
  %7485 = vmatprep.subr.bf16.mxu0 %v7226
  %7486 = vmatpush1.bf16.msra.mxu0 %v7225
  %7487 = vmatprep.subr.bf16.mxu0 %v7230
  %7488 = vmatpush1.bf16.msra.mxu0 %v7229
  %7489 = vmatprep.subr.bf16.mxu0 %v7234
  %7490 = vmatpush1.bf16.msra.mxu0 %v7233
  %7491 = vmatprep.subr.bf16.mxu0 %v7238
  %7492 = vmatpush1.bf16.msra.mxu0 %v7237
  %7493 = vmatprep.subr.bf16.mxu0 0
  %7494 = vmatpush1.bf16.msra.mxu0 0
  %7495 = vmatprep.subr.bf16.mxu0 0
  %7496 = vmatpush1.bf16.msra.mxu0 0
  %7497 = vmatprep.subr.bf16.mxu0 0
  %7498 = vmatpush1.bf16.msra.mxu0 0
  %7499 = vmatprep.subr.bf16.mxu0 0
  %7500 = vmatpush1.bf16.msra.mxu0 0
  %7501 = vmatprep.subr.bf16.mxu0 0
  %7502 = vmatpush1.bf16.msra.mxu0 0
  %7503 = vmatprep.subr.bf16.mxu0 0
  %7504 = vmatpush1.bf16.msra.mxu0 0
  %7505 = vmatprep.subr.bf16.mxu0 0
  %7506 = vmatpush1.bf16.msra.mxu0 0
  %7507 = vmatprep.subr.bf16.mxu0 0
  %7508 = vmatpush1.bf16.msra.mxu0 0
  %7509 = vmatprep.mubr.bf16.mxu0 0
  %7510 = vmatmul.mubr.bf16.gmra.mrb[0].mxu0 %v7475
  %v7511 = vpop.f32.mrb[0].mxu0
  %v7512 = vadd.f32 0.0, %v7511
  %v7513 = vpop.f32.mrb[0].mxu0
  %v7514 = vadd.f32 0.0, %v7513
  %v7515 = vpop.f32.mrb[0].mxu0
  %v7516 = vpop.f32.mrb[0].mxu0
  %7517 = vdwg.mxu0
  %7518 = vmatprep.subr.bf16.mxu0 %v7212
  %7519 = vmatpush1.bf16.msra.mxu0 %v7211
  %7520 = vmatprep.subr.bf16.mxu0 %v7216
  %7521 = vmatpush1.bf16.msra.mxu0 %v7215
  %7522 = vmatprep.subr.bf16.mxu0 %v7220
  %7523 = vmatpush1.bf16.msra.mxu0 %v7219
  %7524 = vmatprep.subr.bf16.mxu0 %v7224
  %7525 = vmatpush1.bf16.msra.mxu0 %v7223
  %7526 = vmatprep.subr.bf16.mxu0 %v7228
  %7527 = vmatpush1.bf16.msra.mxu0 %v7227
  %7528 = vmatprep.subr.bf16.mxu0 %v7232
  %7529 = vmatpush1.bf16.msra.mxu0 %v7231
  %7530 = vmatprep.subr.bf16.mxu0 %v7236
  %7531 = vmatpush1.bf16.msra.mxu0 %v7235
  %7532 = vmatprep.subr.bf16.mxu0 %v7240
  %7533 = vmatpush1.bf16.msra.mxu0 %v7239
  %7534 = vmatprep.subr.bf16.mxu0 0
  %7535 = vmatpush1.bf16.msra.mxu0 0
  %7536 = vmatprep.subr.bf16.mxu0 0
  %7537 = vmatpush1.bf16.msra.mxu0 0
  %7538 = vmatprep.subr.bf16.mxu0 0
  %7539 = vmatpush1.bf16.msra.mxu0 0
  %7540 = vmatprep.subr.bf16.mxu0 0
  %7541 = vmatpush1.bf16.msra.mxu0 0
  %7542 = vmatprep.subr.bf16.mxu0 0
  %7543 = vmatpush1.bf16.msra.mxu0 0
  %7544 = vmatprep.subr.bf16.mxu0 0
  %7545 = vmatpush1.bf16.msra.mxu0 0
  %7546 = vmatprep.subr.bf16.mxu0 0
  %7547 = vmatpush1.bf16.msra.mxu0 0
  %7548 = vmatprep.subr.bf16.mxu0 0
  %7549 = vmatpush1.bf16.msra.mxu0 0
  %7550 = vmatprep.mubr.bf16.mxu0 0
  %7551 = vmatmul.mubr.bf16.gmra.mrb[0].mxu0 %v7475
  %v7552 = vpop.f32.mrb[0].mxu0
  %v7553 = vadd.f32 0.0, %v7552
  %v7554 = vpop.f32.mrb[0].mxu0
  %v7555 = vadd.f32 0.0, %v7554
  %v7556 = vpop.f32.mrb[0].mxu0
  %v7557 = vpop.f32.mrb[0].mxu0
  %7558 = vdwg.mxu0
  %v7563 = vrot.slane %v7512, 4
  %v7564 = vrot.slane %v7514, 4
  %v7565 = vrot.slane %v7553, 4
  %v7566 = vrot.slane %v7555, 4
  %v7571 = vadd.f32 %v7469, %v7563
  %v7572 = vadd.f32 %v7470, %v7564
  %v7573 = vadd.f32 %v7471, %v7565
  %v7574 = vadd.f32 %v7472, %v7566
  %v7575 = vmul.f32 %v7571, 0.5
  %v7576 = vtanh.pop %v7575
  %v7577 = vmul.f32 %v7576, 0.5
  %v7578 = vadd.f32 %v7577, 0.5
  %v7579 = vmul.f32 %v7572, 0.5
  %v7580 = vtanh.pop %v7579
  %v7581 = vmul.f32 %v7580, 0.5
  %v7582 = vadd.f32 %v7581, 0.5
  %v7583 = vtanh.pop %v7573
  %v7584 = vmul.f32 %v7574, 0.5
  %v7585 = vtanh.pop %v7584
  %v7586 = vmul.f32 %v7585, 0.5
  %v7587 = vadd.f32 %v7586, 0.5
  %v7589 = vrot.slane %v7466, 6
  %v7591 = vmul.f32 %v7582, %v7589
  %v7592 = vmul.f32 %v7578, %v7583
  %v7593 = vadd.f32 %v7591, %v7592
  %v7594 = vtanh.pop %v7593
  %v7595 = vmul.f32 %v7587, %v7594
  %v7596 = vld [vmem:[#allocation6] sm:$0xc0]
  %v7597 = vld [vmem:[#allocation6 + $0x8] sm:$0xc0]
  %v7598 = vld [vmem:[#allocation6 + $0x10] sm:$0xc0]
  %v7599 = vld [vmem:[#allocation6 + $0x18] sm:$0xc0]
  %v7600 = vpack.c.bf16 %v7595, %v7595
  %v7602 = vrot.slane %v7600, 2
  %7604 = vmatprep.subr.bf16.mxu0 %v7210
  %7605 = vmatpush1.bf16.msra.mxu0 %v7209
  %7606 = vmatprep.subr.bf16.mxu0 %v7214
  %7607 = vmatpush1.bf16.msra.mxu0 %v7213
  %7608 = vmatprep.subr.bf16.mxu0 %v7218
  %7609 = vmatpush1.bf16.msra.mxu0 %v7217
  %7610 = vmatprep.subr.bf16.mxu0 %v7222
  %7611 = vmatpush1.bf16.msra.mxu0 %v7221
  %7612 = vmatprep.subr.bf16.mxu0 %v7226
  %7613 = vmatpush1.bf16.msra.mxu0 %v7225
  %7614 = vmatprep.subr.bf16.mxu0 %v7230
  %7615 = vmatpush1.bf16.msra.mxu0 %v7229
  %7616 = vmatprep.subr.bf16.mxu0 %v7234
  %7617 = vmatpush1.bf16.msra.mxu0 %v7233
  %7618 = vmatprep.subr.bf16.mxu0 %v7238
  %7619 = vmatpush1.bf16.msra.mxu0 %v7237
  %7620 = vmatprep.subr.bf16.mxu0 0
  %7621 = vmatpush1.bf16.msra.mxu0 0
  %7622 = vmatprep.subr.bf16.mxu0 0
  %7623 = vmatpush1.bf16.msra.mxu0 0
  %7624 = vmatprep.subr.bf16.mxu0 0
  %7625 = vmatpush1.bf16.msra.mxu0 0
  %7626 = vmatprep.subr.bf16.mxu0 0
  %7627 = vmatpush1.bf16.msra.mxu0 0
  %7628 = vmatprep.subr.bf16.mxu0 0
  %7629 = vmatpush1.bf16.msra.mxu0 0
  %7630 = vmatprep.subr.bf16.mxu0 0
  %7631 = vmatpush1.bf16.msra.mxu0 0
  %7632 = vmatprep.subr.bf16.mxu0 0
  %7633 = vmatpush1.bf16.msra.mxu0 0
  %7634 = vmatprep.subr.bf16.mxu0 0
  %7635 = vmatpush1.bf16.msra.mxu0 0
  %7636 = vmatprep.mubr.bf16.mxu0 0
  %7637 = vmatmul.mubr.bf16.gmra.mrb[0].mxu0 %v7602
  %v7638 = vpop.f32.mrb[0].mxu0
  %v7639 = vadd.f32 0.0, %v7638
  %v7640 = vpop.f32.mrb[0].mxu0
  %v7641 = vadd.f32 0.0, %v7640
  %v7642 = vpop.f32.mrb[0].mxu0
  %v7643 = vpop.f32.mrb[0].mxu0
  %7644 = vdwg.mxu0
  %7645 = vmatprep.subr.bf16.mxu0 %v7212
  %7646 = vmatpush1.bf16.msra.mxu0 %v7211
  %7647 = vmatprep.subr.bf16.mxu0 %v7216
  %7648 = vmatpush1.bf16.msra.mxu0 %v7215
  %7649 = vmatprep.subr.bf16.mxu0 %v7220
  %7650 = vmatpush1.bf16.msra.mxu0 %v7219
  %7651 = vmatprep.subr.bf16.mxu0 %v7224
  %7652 = vmatpush1.bf16.msra.mxu0 %v7223
  %7653 = vmatprep.subr.bf16.mxu0 %v7228
  %7654 = vmatpush1.bf16.msra.mxu0 %v7227
  %7655 = vmatprep.subr.bf16.mxu0 %v7232
  %7656 = vmatpush1.bf16.msra.mxu0 %v7231
  %7657 = vmatprep.subr.bf16.mxu0 %v7236
  %7658 = vmatpush1.bf16.msra.mxu0 %v7235
  %7659 = vmatprep.subr.bf16.mxu0 %v7240
  %7660 = vmatpush1.bf16.msra.mxu0 %v7239
  %7661 = vmatprep.subr.bf16.mxu0 0
  %7662 = vmatpush1.bf16.msra.mxu0 0
  %7663 = vmatprep.subr.bf16.mxu0 0
  %7664 = vmatpush1.bf16.msra.mxu0 0
  %7665 = vmatprep.subr.bf16.mxu0 0
  %7666 = vmatpush1.bf16.msra.mxu0 0
  %7667 = vmatprep.subr.bf16.mxu0 0
  %7668 = vmatpush1.bf16.msra.mxu0 0
  %7669 = vmatprep.subr.bf16.mxu0 0
  %7670 = vmatpush1.bf16.msra.mxu0 0
  %7671 = vmatprep.subr.bf16.mxu0 0
  %7672 = vmatpush1.bf16.msra.mxu0 0
  %7673 = vmatprep.subr.bf16.mxu0 0
  %7674 = vmatpush1.bf16.msra.mxu0 0
  %7675 = vmatprep.subr.bf16.mxu0 0
  %7676 = vmatpush1.bf16.msra.mxu0 0
  %7677 = vmatprep.mubr.bf16.mxu0 0
  %7678 = vmatmul.mubr.bf16.gmra.mrb[0].mxu0 %v7602
  %v7679 = vpop.f32.mrb[0].mxu0
  %v7680 = vadd.f32 0.0, %v7679
  %v7681 = vpop.f32.mrb[0].mxu0
  %v7682 = vadd.f32 0.0, %v7681
  %v7683 = vpop.f32.mrb[0].mxu0
  %v7684 = vpop.f32.mrb[0].mxu0
  %7685 = vdwg.mxu0
  %v7690 = vrot.slane %v7639, 2
  %v7691 = vrot.slane %v7641, 2
  %v7692 = vrot.slane %v7680, 2
  %v7693 = vrot.slane %v7682, 2
  %v7698 = vadd.f32 %v7596, %v7690
  %v7699 = vadd.f32 %v7597, %v7691
  %v7700 = vadd.f32 %v7598, %v7692
  %v7701 = vadd.f32 %v7599, %v7693
  %v7702 = vmul.f32 %v7698, 0.5
  %v7703 = vtanh.pop %v7702
  %v7704 = vmul.f32 %v7703, 0.5
  %v7705 = vadd.f32 %v7704, 0.5
  %v7706 = vmul.f32 %v7699, 0.5
  %v7707 = vtanh.pop %v7706
  %v7708 = vmul.f32 %v7707, 0.5
  %v7709 = vadd.f32 %v7708, 0.5
  %v7710 = vtanh.pop %v7700
  %v7711 = vmul.f32 %v7701, 0.5
  %v7712 = vtanh.pop %v7711
  %v7713 = vmul.f32 %v7712, 0.5
  %v7714 = vadd.f32 %v7713, 0.5
  %v7716 = vrot.slane %v7593, 6
  %v7718 = vmul.f32 %v7709, %v7716
  %v7719 = vmul.f32 %v7705, %v7710
  %v7720 = vadd.f32 %v7718, %v7719
  %v7721 = vtanh.pop %v7720
  %v7722 = vmul.f32 %v7714, %v7721
  %v7723 = vld [vmem:[#allocation6 + $0x20] sm:$0x3]
  %v7724 = vld [vmem:[#allocation6 + $0x28] sm:$0x3]
  %v7725 = vld [vmem:[#allocation6 + $0x30] sm:$0x3]
  %v7726 = vld [vmem:[#allocation6 + $0x38] sm:$0x3]
  %v7727 = vpack.c.bf16 %v7722, %v7722
  %v7729 = vrot.slane %v7727, 3
  %7731 = vmatprep.subr.bf16.mxu0 %v7210
  %7732 = vmatpush1.bf16.msra.mxu0 %v7209
  %7733 = vmatprep.subr.bf16.mxu0 %v7214
  %7734 = vmatpush1.bf16.msra.mxu0 %v7213
  %7735 = vmatprep.subr.bf16.mxu0 %v7218
  %7736 = vmatpush1.bf16.msra.mxu0 %v7217
  %7737 = vmatprep.subr.bf16.mxu0 %v7222
  %7738 = vmatpush1.bf16.msra.mxu0 %v7221
  %7739 = vmatprep.subr.bf16.mxu0 %v7226
  %7740 = vmatpush1.bf16.msra.mxu0 %v7225
  %7741 = vmatprep.subr.bf16.mxu0 %v7230
  %7742 = vmatpush1.bf16.msra.mxu0 %v7229
  %7743 = vmatprep.subr.bf16.mxu0 %v7234
  %7744 = vmatpush1.bf16.msra.mxu0 %v7233
  %7745 = vmatprep.subr.bf16.mxu0 %v7238
  %7746 = vmatpush1.bf16.msra.mxu0 %v7237
  %7747 = vmatprep.subr.bf16.mxu0 0
  %7748 = vmatpush1.bf16.msra.mxu0 0
  %7749 = vmatprep.subr.bf16.mxu0 0
  %7750 = vmatpush1.bf16.msra.mxu0 0
  %7751 = vmatprep.subr.bf16.mxu0 0
  %7752 = vmatpush1.bf16.msra.mxu0 0
  %7753 = vmatprep.subr.bf16.mxu0 0
  %7754 = vmatpush1.bf16.msra.mxu0 0
  %7755 = vmatprep.subr.bf16.mxu0 0
  %7756 = vmatpush1.bf16.msra.mxu0 0
  %7757 = vmatprep.subr.bf16.mxu0 0
  %7758 = vmatpush1.bf16.msra.mxu0 0
  %7759 = vmatprep.subr.bf16.mxu0 0
  %7760 = vmatpush1.bf16.msra.mxu0 0
  %7761 = vmatprep.subr.bf16.mxu0 0
  %7762 = vmatpush1.bf16.msra.mxu0 0
  %7763 = vmatprep.mubr.bf16.mxu0 0
  %7764 = vmatmul.mubr.bf16.gmra.mrb[0].mxu0 %v7729
  %v7765 = vpop.f32.mrb[0].mxu0
  %v7766 = vadd.f32 0.0, %v7765
  %v7767 = vpop.f32.mrb[0].mxu0
  %v7768 = vadd.f32 0.0, %v7767
  %v7769 = vpop.f32.mrb[0].mxu0
  %v7770 = vpop.f32.mrb[0].mxu0
  %7771 = vdwg.mxu0
  %7772 = vmatprep.subr.bf16.mxu0 %v7212
  %7773 = vmatpush1.bf16.msra.mxu0 %v7211
  %7774 = vmatprep.subr.bf16.mxu0 %v7216
  %7775 = vmatpush1.bf16.msra.mxu0 %v7215
  %7776 = vmatprep.subr.bf16.mxu0 %v7220
  %7777 = vmatpush1.bf16.msra.mxu0 %v7219
  %7778 = vmatprep.subr.bf16.mxu0 %v7224
  %7779 = vmatpush1.bf16.msra.mxu0 %v7223
  %7780 = vmatprep.subr.bf16.mxu0 %v7228
  %7781 = vmatpush1.bf16.msra.mxu0 %v7227
  %7782 = vmatprep.subr.bf16.mxu0 %v7232
  %7783 = vmatpush1.bf16.msra.mxu0 %v7231
  %7784 = vmatprep.subr.bf16.mxu0 %v7236
  %7785 = vmatpush1.bf16.msra.mxu0 %v7235
  %7786 = vmatprep.subr.bf16.mxu0 %v7240
  %7787 = vmatpush1.bf16.msra.mxu0 %v7239
  %7788 = vmatprep.subr.bf16.mxu0 0
  %7789 = vmatpush1.bf16.msra.mxu0 0
  %7790 = vmatprep.subr.bf16.mxu0 0
  %7791 = vmatpush1.bf16.msra.mxu0 0
  %7792 = vmatprep.subr.bf16.mxu0 0
  %7793 = vmatpush1.bf16.msra.mxu0 0
  %7794 = vmatprep.subr.bf16.mxu0 0
  %7795 = vmatpush1.bf16.msra.mxu0 0
  %7796 = vmatprep.subr.bf16.mxu0 0
  %7797 = vmatpush1.bf16.msra.mxu0 0
  %7798 = vmatprep.subr.bf16.mxu0 0
  %7799 = vmatpush1.bf16.msra.mxu0 0
  %7800 = vmatprep.subr.bf16.mxu0 0
  %7801 = vmatpush1.bf16.msra.mxu0 0
  %7802 = vmatprep.subr.bf16.mxu0 0
  %7803 = vmatpush1.bf16.msra.mxu0 0
  %7804 = vmatprep.mubr.bf16.mxu0 0
  %7805 = vmatmul.mubr.bf16.gmra.mrb[0].mxu0 %v7729
  %v7806 = vpop.f32.mrb[0].mxu0
  %v7807 = vadd.f32 0.0, %v7806
  %v7808 = vpop.f32.mrb[0].mxu0
  %v7809 = vadd.f32 0.0, %v7808
  %v7810 = vpop.f32.mrb[0].mxu0
  %v7811 = vpop.f32.mrb[0].mxu0
  %7812 = vdwg.mxu0
  %v7813 = vadd.f32 %v7723, %v7766
  %v7814 = vadd.f32 %v7724, %v7768
  %v7815 = vadd.f32 %v7725, %v7807
  %v7816 = vadd.f32 %v7726, %v7809
  %v7817 = vmul.f32 %v7813, 0.5
  %v7818 = vtanh.pop %v7817
  %v7819 = vmul.f32 %v7818, 0.5
  %v7820 = vadd.f32 %v7819, 0.5
  %v7821 = vmul.f32 %v7814, 0.5
  %v7822 = vtanh.pop %v7821
  %v7823 = vmul.f32 %v7822, 0.5
  %v7824 = vadd.f32 %v7823, 0.5
  %v7825 = vtanh.pop %v7815
  %v7826 = vmul.f32 %v7816, 0.5
  %v7827 = vtanh.pop %v7826
  %v7828 = vmul.f32 %v7827, 0.5
  %v7829 = vadd.f32 %v7828, 0.5
  %v7831 = vrot.slane %v7720, 6
  %v7833 = vmul.f32 %v7824, %v7831
  %v7834 = vmul.f32 %v7820, %v7825
  %v7835 = vadd.f32 %v7833, %v7834
  %v7836 = vtanh.pop %v7835
  %v7837 = vmul.f32 %v7829, %v7836
  %v7838 = vld [vmem:[#allocation6 + $0x20] sm:$0xc]
  %v7839 = vld [vmem:[#allocation6 + $0x28] sm:$0xc]
  %v7840 = vld [vmem:[#allocation6 + $0x30] sm:$0xc]
  %v7841 = vld [vmem:[#allocation6 + $0x38] sm:$0xc]
  %v7842 = vpack.c.bf16 %v7837, %v7837
  %7843 = vmatprep.subr.bf16.mxu0 %v7210
  %7844 = vmatpush1.bf16.msra.mxu0 %v7209
  %7845 = vmatprep.subr.bf16.mxu0 %v7214
  %7846 = vmatpush1.bf16.msra.mxu0 %v7213
  %7847 = vmatprep.subr.bf16.mxu0 %v7218
  %7848 = vmatpush1.bf16.msra.mxu0 %v7217
  %7849 = vmatprep.subr.bf16.mxu0 %v7222
  %7850 = vmatpush1.bf16.msra.mxu0 %v7221
  %7851 = vmatprep.subr.bf16.mxu0 %v7226
  %7852 = vmatpush1.bf16.msra.mxu0 %v7225
  %7853 = vmatprep.subr.bf16.mxu0 %v7230
  %7854 = vmatpush1.bf16.msra.mxu0 %v7229
  %7855 = vmatprep.subr.bf16.mxu0 %v7234
  %7856 = vmatpush1.bf16.msra.mxu0 %v7233
  %7857 = vmatprep.subr.bf16.mxu0 %v7238
  %7858 = vmatpush1.bf16.msra.mxu0 %v7237
  %7859 = vmatprep.subr.bf16.mxu0 0
  %7860 = vmatpush1.bf16.msra.mxu0 0
  %7861 = vmatprep.subr.bf16.mxu0 0
  %7862 = vmatpush1.bf16.msra.mxu0 0
  %7863 = vmatprep.subr.bf16.mxu0 0
  %7864 = vmatpush1.bf16.msra.mxu0 0
  %7865 = vmatprep.subr.bf16.mxu0 0
  %7866 = vmatpush1.bf16.msra.mxu0 0
  %7867 = vmatprep.subr.bf16.mxu0 0
  %7868 = vmatpush1.bf16.msra.mxu0 0
  %7869 = vmatprep.subr.bf16.mxu0 0
  %7870 = vmatpush1.bf16.msra.mxu0 0
  %7871 = vmatprep.subr.bf16.mxu0 0
  %7872 = vmatpush1.bf16.msra.mxu0 0
  %7873 = vmatprep.subr.bf16.mxu0 0
  %7874 = vmatpush1.bf16.msra.mxu0 0
  %7875 = vmatprep.mubr.bf16.mxu0 0
  %7876 = vmatmul.mubr.bf16.gmra.mrb[0].mxu0 %v7842
  %v7877 = vpop.f32.mrb[0].mxu0
  %v7878 = vadd.f32 0.0, %v7877
  %v7879 = vpop.f32.mrb[0].mxu0
  %v7880 = vadd.f32 0.0, %v7879
  %v7881 = vpop.f32.mrb[0].mxu0
  %v7882 = vpop.f32.mrb[0].mxu0
  %7883 = vdwg.mxu0
  %7884 = vmatprep.subr.bf16.mxu0 %v7212
  %7885 = vmatpush1.bf16.msra.mxu0 %v7211
  %7886 = vmatprep.subr.bf16.mxu0 %v7216
  %7887 = vmatpush1.bf16.msra.mxu0 %v7215
  %7888 = vmatprep.subr.bf16.mxu0 %v7220
  %7889 = vmatpush1.bf16.msra.mxu0 %v7219
  %7890 = vmatprep.subr.bf16.mxu0 %v7224
  %7891 = vmatpush1.bf16.msra.mxu0 %v7223
  %7892 = vmatprep.subr.bf16.mxu0 %v7228
  %7893 = vmatpush1.bf16.msra.mxu0 %v7227
  %7894 = vmatprep.subr.bf16.mxu0 %v7232
  %7895 = vmatpush1.bf16.msra.mxu0 %v7231
  %7896 = vmatprep.subr.bf16.mxu0 %v7236
  %7897 = vmatpush1.bf16.msra.mxu0 %v7235
  %7898 = vmatprep.subr.bf16.mxu0 %v7240
  %7899 = vmatpush1.bf16.msra.mxu0 %v7239
  %7900 = vmatprep.subr.bf16.mxu0 0
  %7901 = vmatpush1.bf16.msra.mxu0 0
  %7902 = vmatprep.subr.bf16.mxu0 0
  %7903 = vmatpush1.bf16.msra.mxu0 0
  %7904 = vmatprep.subr.bf16.mxu0 0
  %7905 = vmatpush1.bf16.msra.mxu0 0
  %7906 = vmatprep.subr.bf16.mxu0 0
  %7907 = vmatpush1.bf16.msra.mxu0 0
  %7908 = vmatprep.subr.bf16.mxu0 0
  %7909 = vmatpush1.bf16.msra.mxu0 0
  %7910 = vmatprep.subr.bf16.mxu0 0
  %7911 = vmatpush1.bf16.msra.mxu0 0
  %7912 = vmatprep.subr.bf16.mxu0 0
  %7913 = vmatpush1.bf16.msra.mxu0 0
  %7914 = vmatprep.subr.bf16.mxu0 0
  %7915 = vmatpush1.bf16.msra.mxu0 0
  %7916 = vmatprep.mubr.bf16.mxu0 0
  %7917 = vmatmul.mubr.bf16.gmra.mrb[0].mxu0 %v7842
  %v7918 = vpop.f32.mrb[0].mxu0
  %v7919 = vadd.f32 0.0, %v7918
  %v7920 = vpop.f32.mrb[0].mxu0
  %v7921 = vadd.f32 0.0, %v7920
  %v7922 = vpop.f32.mrb[0].mxu0
  %v7923 = vpop.f32.mrb[0].mxu0
  %7924 = vdwg.mxu0
  %v7929 = vrot.slane %v7878, 6
  %v7930 = vrot.slane %v7880, 6
  %v7931 = vrot.slane %v7919, 6
  %v7932 = vrot.slane %v7921, 6
  %v7937 = vadd.f32 %v7838, %v7929
  %v7938 = vadd.f32 %v7839, %v7930
  %v7939 = vadd.f32 %v7840, %v7931
  %v7940 = vadd.f32 %v7841, %v7932
  %v7941 = vmul.f32 %v7937, 0.5
  %v7942 = vtanh.pop %v7941
  %v7943 = vmul.f32 %v7942, 0.5
  %v7944 = vadd.f32 %v7943, 0.5
  %v7945 = vmul.f32 %v7938, 0.5
  %v7946 = vtanh.pop %v7945
  %v7947 = vmul.f32 %v7946, 0.5
  %v7948 = vadd.f32 %v7947, 0.5
  %v7949 = vtanh.pop %v7939
  %v7950 = vmul.f32 %v7940, 0.5
  %v7951 = vtanh.pop %v7950
  %v7952 = vmul.f32 %v7951, 0.5
  %v7953 = vadd.f32 %v7952, 0.5
  %v7955 = vrot.slane %v7835, 6
  %v7957 = vmul.f32 %v7948, %v7955
  %v7958 = vmul.f32 %v7944, %v7949
  %v7959 = vadd.f32 %v7957, %v7958
  %v7960 = vtanh.pop %v7959
  %v7961 = vmul.f32 %v7953, %v7960
  %v7962 = vld [vmem:[#allocation6 + $0x20] sm:$0x30]
  %v7963 = vld [vmem:[#allocation6 + $0x28] sm:$0x30]
  %v7964 = vld [vmem:[#allocation6 + $0x30] sm:$0x30]
  %v7965 = vld [vmem:[#allocation6 + $0x38] sm:$0x30]
  %v7966 = vpack.c.bf16 %v7961, %v7961
  %v7968 = vrot.slane %v7966, 1
  %7970 = vmatprep.subr.bf16.mxu0 %v7210
  %7971 = vmatpush1.bf16.msra.mxu0 %v7209
  %7972 = vmatprep.subr.bf16.mxu0 %v7214
  %7973 = vmatpush1.bf16.msra.mxu0 %v7213
  %7974 = vmatprep.subr.bf16.mxu0 %v7218
  %7975 = vmatpush1.bf16.msra.mxu0 %v7217
  %7976 = vmatprep.subr.bf16.mxu0 %v7222
  %7977 = vmatpush1.bf16.msra.mxu0 %v7221
  %7978 = vmatprep.subr.bf16.mxu0 %v7226
  %7979 = vmatpush1.bf16.msra.mxu0 %v7225
  %7980 = vmatprep.subr.bf16.mxu0 %v7230
  %7981 = vmatpush1.bf16.msra.mxu0 %v7229
  %7982 = vmatprep.subr.bf16.mxu0 %v7234
  %7983 = vmatpush1.bf16.msra.mxu0 %v7233
  %7984 = vmatprep.subr.bf16.mxu0 %v7238
  %7985 = vmatpush1.bf16.msra.mxu0 %v7237
  %7986 = vmatprep.subr.bf16.mxu0 0
  %7987 = vmatpush1.bf16.msra.mxu0 0
  %7988 = vmatprep.subr.bf16.mxu0 0
  %7989 = vmatpush1.bf16.msra.mxu0 0
  %7990 = vmatprep.subr.bf16.mxu0 0
  %7991 = vmatpush1.bf16.msra.mxu0 0
  %7992 = vmatprep.subr.bf16.mxu0 0
  %7993 = vmatpush1.bf16.msra.mxu0 0
  %7994 = vmatprep.subr.bf16.mxu0 0
  %7995 = vmatpush1.bf16.msra.mxu0 0
  %7996 = vmatprep.subr.bf16.mxu0 0
  %7997 = vmatpush1.bf16.msra.mxu0 0
  %7998 = vmatprep.subr.bf16.mxu0 0
  %7999 = vmatpush1.bf16.msra.mxu0 0
  %8000 = vmatprep.subr.bf16.mxu0 0
  %8001 = vmatpush1.bf16.msra.mxu0 0
  %8002 = vmatprep.mubr.bf16.mxu0 0
  %8003 = vmatmul.mubr.bf16.gmra.mrb[0].mxu0 %v7968
  %v8004 = vpop.f32.mrb[0].mxu0
  %v8005 = vadd.f32 0.0, %v8004
  %v8006 = vpop.f32.mrb[0].mxu0
  %v8007 = vadd.f32 0.0, %v8006
  %v8008 = vpop.f32.mrb[0].mxu0
  %v8009 = vpop.f32.mrb[0].mxu0
  %8010 = vdwg.mxu0
  %8011 = vmatprep.subr.bf16.mxu0 %v7212
  %8012 = vmatpush1.bf16.msra.mxu0 %v7211
  %8013 = vmatprep.subr.bf16.mxu0 %v7216
  %8014 = vmatpush1.bf16.msra.mxu0 %v7215
  %8015 = vmatprep.subr.bf16.mxu0 %v7220
  %8016 = vmatpush1.bf16.msra.mxu0 %v7219
  %8017 = vmatprep.subr.bf16.mxu0 %v7224
  %8018 = vmatpush1.bf16.msra.mxu0 %v7223
  %8019 = vmatprep.subr.bf16.mxu0 %v7228
  %8020 = vmatpush1.bf16.msra.mxu0 %v7227
  %8021 = vmatprep.subr.bf16.mxu0 %v7232
  %8022 = vmatpush1.bf16.msra.mxu0 %v7231
  %8023 = vmatprep.subr.bf16.mxu0 %v7236
  %8024 = vmatpush1.bf16.msra.mxu0 %v7235
  %8025 = vmatprep.subr.bf16.mxu0 %v7240
  %8026 = vmatpush1.bf16.msra.mxu0 %v7239
  %8027 = vmatprep.subr.bf16.mxu0 0
  %8028 = vmatpush1.bf16.msra.mxu0 0
  %8029 = vmatprep.subr.bf16.mxu0 0
  %8030 = vmatpush1.bf16.msra.mxu0 0
  %8031 = vmatprep.subr.bf16.mxu0 0
  %8032 = vmatpush1.bf16.msra.mxu0 0
  %8033 = vmatprep.subr.bf16.mxu0 0
  %8034 = vmatpush1.bf16.msra.mxu0 0
  %8035 = vmatprep.subr.bf16.mxu0 0
  %8036 = vmatpush1.bf16.msra.mxu0 0
  %8037 = vmatprep.subr.bf16.mxu0 0
  %8038 = vmatpush1.bf16.msra.mxu0 0
  %8039 = vmatprep.subr.bf16.mxu0 0
  %8040 = vmatpush1.bf16.msra.mxu0 0
  %8041 = vmatprep.subr.bf16.mxu0 0
  %8042 = vmatpush1.bf16.msra.mxu0 0
  %8043 = vmatprep.mubr.bf16.mxu0 0
  %8044 = vmatmul.mubr.bf16.gmra.mrb[0].mxu0 %v7968
  %v8045 = vpop.f32.mrb[0].mxu0
  %v8046 = vadd.f32 0.0, %v8045
  %v8047 = vpop.f32.mrb[0].mxu0
  %v8048 = vadd.f32 0.0, %v8047
  %v8049 = vpop.f32.mrb[0].mxu0
  %v8050 = vpop.f32.mrb[0].mxu0
  %8051 = vdwg.mxu0
  %v8056 = vrot.slane %v8005, 4
  %v8057 = vrot.slane %v8007, 4
  %v8058 = vrot.slane %v8046, 4
  %v8059 = vrot.slane %v8048, 4
  %v8064 = vadd.f32 %v7962, %v8056
  %v8065 = vadd.f32 %v7963, %v8057
  %v8066 = vadd.f32 %v7964, %v8058
  %v8067 = vadd.f32 %v7965, %v8059
  %v8068 = vmul.f32 %v8064, 0.5
  %v8069 = vtanh.pop %v8068
  %v8070 = vmul.f32 %v8069, 0.5
  %v8071 = vadd.f32 %v8070, 0.5
  %v8072 = vmul.f32 %v8065, 0.5
  %v8073 = vtanh.pop %v8072
  %v8074 = vmul.f32 %v8073, 0.5
  %v8075 = vadd.f32 %v8074, 0.5
  %v8076 = vtanh.pop %v8066
  %v8077 = vmul.f32 %v8067, 0.5
  %v8078 = vtanh.pop %v8077
  %v8079 = vmul.f32 %v8078, 0.5
  %v8080 = vadd.f32 %v8079, 0.5
  %v8082 = vrot.slane %v7959, 6
  %v8084 = vmul.f32 %v8075, %v8082
  %v8085 = vmul.f32 %v8071, %v8076
  %v8086 = vadd.f32 %v8084, %v8085
  %v8087 = vtanh.pop %v8086
  %v8088 = vmul.f32 %v8080, %v8087
  %v8089 = vld [vmem:[#allocation6 + $0x20] sm:$0xc0]
  %v8090 = vld [vmem:[#allocation6 + $0x28] sm:$0xc0]
  %v8091 = vld [vmem:[#allocation6 + $0x30] sm:$0xc0]
  %v8092 = vld [vmem:[#allocation6 + $0x38] sm:$0xc0]
  %v8093 = vpack.c.bf16 %v8088, %v8088
  %v8095 = vrot.slane %v8093, 2
  %8097 = vmatprep.subr.bf16.mxu0 %v7210
  %8098 = vmatpush1.bf16.msra.mxu0 %v7209
  %8099 = vmatprep.subr.bf16.mxu0 %v7214
  %8100 = vmatpush1.bf16.msra.mxu0 %v7213
  %8101 = vmatprep.subr.bf16.mxu0 %v7218
  %8102 = vmatpush1.bf16.msra.mxu0 %v7217
  %8103 = vmatprep.subr.bf16.mxu0 %v7222
  %8104 = vmatpush1.bf16.msra.mxu0 %v7221
  %8105 = vmatprep.subr.bf16.mxu0 %v7226
  %8106 = vmatpush1.bf16.msra.mxu0 %v7225
  %8107 = vmatprep.subr.bf16.mxu0 %v7230
  %8108 = vmatpush1.bf16.msra.mxu0 %v7229
  %8109 = vmatprep.subr.bf16.mxu0 %v7234
  %8110 = vmatpush1.bf16.msra.mxu0 %v7233
  %8111 = vmatprep.subr.bf16.mxu0 %v7238
  %8112 = vmatpush1.bf16.msra.mxu0 %v7237
  %8113 = vmatprep.subr.bf16.mxu0 0
  %8114 = vmatpush1.bf16.msra.mxu0 0
  %8115 = vmatprep.subr.bf16.mxu0 0
  %8116 = vmatpush1.bf16.msra.mxu0 0
  %8117 = vmatprep.subr.bf16.mxu0 0
  %8118 = vmatpush1.bf16.msra.mxu0 0
  %8119 = vmatprep.subr.bf16.mxu0 0
  %8120 = vmatpush1.bf16.msra.mxu0 0
  %8121 = vmatprep.subr.bf16.mxu0 0
  %8122 = vmatpush1.bf16.msra.mxu0 0
  %8123 = vmatprep.subr.bf16.mxu0 0
  %8124 = vmatpush1.bf16.msra.mxu0 0
  %8125 = vmatprep.subr.bf16.mxu0 0
  %8126 = vmatpush1.bf16.msra.mxu0 0
  %8127 = vmatprep.subr.bf16.mxu0 0
  %8128 = vmatpush1.bf16.msra.mxu0 0
  %8129 = vmatprep.mubr.bf16.mxu0 0
  %8130 = vmatmul.mubr.bf16.gmra.mrb[0].mxu0 %v8095
  %v8131 = vpop.f32.mrb[0].mxu0
  %v8132 = vadd.f32 0.0, %v8131
  %v8133 = vpop.f32.mrb[0].mxu0
  %v8134 = vadd.f32 0.0, %v8133
  %v8135 = vpop.f32.mrb[0].mxu0
  %v8136 = vpop.f32.mrb[0].mxu0
  %8137 = vdwg.mxu0
  %8138 = vmatprep.subr.bf16.mxu0 %v7212
  %8139 = vmatpush1.bf16.msra.mxu0 %v7211
  %8140 = vmatprep.subr.bf16.mxu0 %v7216
  %8141 = vmatpush1.bf16.msra.mxu0 %v7215
  %8142 = vmatprep.subr.bf16.mxu0 %v7220
  %8143 = vmatpush1.bf16.msra.mxu0 %v7219
  %8144 = vmatprep.subr.bf16.mxu0 %v7224
  %8145 = vmatpush1.bf16.msra.mxu0 %v7223
  %8146 = vmatprep.subr.bf16.mxu0 %v7228
  %8147 = vmatpush1.bf16.msra.mxu0 %v7227
  %8148 = vmatprep.subr.bf16.mxu0 %v7232
  %8149 = vmatpush1.bf16.msra.mxu0 %v7231
  %8150 = vmatprep.subr.bf16.mxu0 %v7236
  %8151 = vmatpush1.bf16.msra.mxu0 %v7235
  %8152 = vmatprep.subr.bf16.mxu0 %v7240
  %8153 = vmatpush1.bf16.msra.mxu0 %v7239
  %8154 = vmatprep.subr.bf16.mxu0 0
  %8155 = vmatpush1.bf16.msra.mxu0 0
  %8156 = vmatprep.subr.bf16.mxu0 0
  %8157 = vmatpush1.bf16.msra.mxu0 0
  %8158 = vmatprep.subr.bf16.mxu0 0
  %8159 = vmatpush1.bf16.msra.mxu0 0
  %8160 = vmatprep.subr.bf16.mxu0 0
  %8161 = vmatpush1.bf16.msra.mxu0 0
  %8162 = vmatprep.subr.bf16.mxu0 0
  %8163 = vmatpush1.bf16.msra.mxu0 0
  %8164 = vmatprep.subr.bf16.mxu0 0
  %8165 = vmatpush1.bf16.msra.mxu0 0
  %8166 = vmatprep.subr.bf16.mxu0 0
  %8167 = vmatpush1.bf16.msra.mxu0 0
  %8168 = vmatprep.subr.bf16.mxu0 0
  %8169 = vmatpush1.bf16.msra.mxu0 0
  %8170 = vmatprep.mubr.bf16.mxu0 0
  %8171 = vmatmul.mubr.bf16.gmra.mrb[0].mxu0 %v8095
  %v8172 = vpop.f32.mrb[0].mxu0
  %v8173 = vadd.f32 0.0, %v8172
  %v8174 = vpop.f32.mrb[0].mxu0
  %v8175 = vadd.f32 0.0, %v8174
  %v8176 = vpop.f32.mrb[0].mxu0
  %v8177 = vpop.f32.mrb[0].mxu0
  %8178 = vdwg.mxu0
  %v8183 = vrot.slane %v8132, 2
  %v8184 = vrot.slane %v8134, 2
  %v8185 = vrot.slane %v8173, 2
  %v8186 = vrot.slane %v8175, 2
  %v8191 = vadd.f32 %v8089, %v8183
  %v8192 = vadd.f32 %v8090, %v8184
  %v8193 = vadd.f32 %v8091, %v8185
  %v8194 = vadd.f32 %v8092, %v8186
  %v8195 = vmul.f32 %v8191, 0.5
  %v8196 = vtanh.pop %v8195
  %v8197 = vmul.f32 %v8196, 0.5
  %v8198 = vadd.f32 %v8197, 0.5
  %v8199 = vmul.f32 %v8192, 0.5
  %v8200 = vtanh.pop %v8199
  %v8201 = vmul.f32 %v8200, 0.5
  %v8202 = vadd.f32 %v8201, 0.5
  %v8203 = vtanh.pop %v8193
  %v8204 = vmul.f32 %v8194, 0.5
  %v8205 = vtanh.pop %v8204
  %v8206 = vmul.f32 %v8205, 0.5
  %v8207 = vadd.f32 %v8206, 0.5
  %v8209 = vrot.slane %v8086, 6
  %v8211 = vmul.f32 %v8202, %v8209
  %v8212 = vmul.f32 %v8198, %v8203
  %v8213 = vadd.f32 %v8211, %v8212
  %v8214 = vtanh.pop %v8213
  %v8215 = vmul.f32 %v8207, %v8214
  %v8216 = vld [vmem:[#allocation4 + $0xe] sm:$0x3]
  %v8217 = vpack.c.bf16 %v8216, %v8216
  %v8218 = vld [vmem:[#allocation10] sm:$0xff]
  %v8219 = vld [vmem:[#allocation10 + $0x8] sm:$0xff]
  %v8220 = vld [vmem:[#allocation10 + $0x10] sm:$0xff]
  %v8221 = vld [vmem:[#allocation10 + $0x18] sm:$0xff]
  %v8222 = vld [vmem:[#allocation10 + $0x20] sm:$0xff]
  %v8223 = vld [vmem:[#allocation10 + $0x28] sm:$0xff]
  %v8224 = vld [vmem:[#allocation10 + $0x30] sm:$0xff]
  %v8225 = vld [vmem:[#allocation10 + $0x38] sm:$0xff]
  %v8226 = vld [vmem:[#allocation10 + $0x40] sm:$0xff]
  %v8227 = vld [vmem:[#allocation10 + $0x48] sm:$0xff]
  %v8228 = vld [vmem:[#allocation10 + $0x50] sm:$0xff]
  %v8229 = vld [vmem:[#allocation10 + $0x58] sm:$0xff]
  %v8230 = vld [vmem:[#allocation10 + $0x60] sm:$0xff]
  %v8231 = vld [vmem:[#allocation10 + $0x68] sm:$0xff]
  %v8232 = vld [vmem:[#allocation10 + $0x70] sm:$0xff]
  %v8233 = vld [vmem:[#allocation10 + $0x78] sm:$0xff]
  %v8234 = vld [vmem:[#allocation10 + $0x80] sm:$0xff]
  %v8235 = vld [vmem:[#allocation10 + $0x88] sm:$0xff]
  %v8236 = vld [vmem:[#allocation10 + $0x90] sm:$0xff]
  %v8237 = vld [vmem:[#allocation10 + $0x98] sm:$0xff]
  %v8238 = vld [vmem:[#allocation10 + $0xa0] sm:$0xff]
  %v8239 = vld [vmem:[#allocation10 + $0xa8] sm:$0xff]
  %v8240 = vld [vmem:[#allocation10 + $0xb0] sm:$0xff]
  %v8241 = vld [vmem:[#allocation10 + $0xb8] sm:$0xff]
  %v8242 = vld [vmem:[#allocation10 + $0xc0] sm:$0xff]
  %v8243 = vld [vmem:[#allocation10 + $0xc8] sm:$0xff]
  %v8244 = vld [vmem:[#allocation10 + $0xd0] sm:$0xff]
  %v8245 = vld [vmem:[#allocation10 + $0xd8] sm:$0xff]
  %v8246 = vld [vmem:[#allocation10 + $0xe0] sm:$0xff]
  %v8247 = vld [vmem:[#allocation10 + $0xe8] sm:$0xff]
  %v8248 = vld [vmem:[#allocation10 + $0xf0] sm:$0xff]
  %v8249 = vld [vmem:[#allocation10 + $0xf8] sm:$0xff]
  %v8250 = vld [vmem:[#allocation5 + $0xe] sm:$0x3]
  %v8251 = vpack.c.bf16 %v8250, %v8250
  %v8252 = vld [vmem:[#allocation11] sm:$0xff]
  %v8253 = vld [vmem:[#allocation11 + $0x8] sm:$0xff]
  %v8254 = vld [vmem:[#allocation11 + $0x10] sm:$0xff]
  %v8255 = vld [vmem:[#allocation11 + $0x18] sm:$0xff]
  %v8256 = vld [vmem:[#allocation11 + $0x20] sm:$0xff]
  %v8257 = vld [vmem:[#allocation11 + $0x28] sm:$0xff]
  %v8258 = vld [vmem:[#allocation11 + $0x30] sm:$0xff]
  %v8259 = vld [vmem:[#allocation11 + $0x38] sm:$0xff]
  %v8260 = vld [vmem:[#allocation11 + $0x40] sm:$0xff]
  %v8261 = vld [vmem:[#allocation11 + $0x48] sm:$0xff]
  %v8262 = vld [vmem:[#allocation11 + $0x50] sm:$0xff]
  %v8263 = vld [vmem:[#allocation11 + $0x58] sm:$0xff]
  %v8264 = vld [vmem:[#allocation11 + $0x60] sm:$0xff]
  %v8265 = vld [vmem:[#allocation11 + $0x68] sm:$0xff]
  %v8266 = vld [vmem:[#allocation11 + $0x70] sm:$0xff]
  %v8267 = vld [vmem:[#allocation11 + $0x78] sm:$0xff]
  %v8268 = vld [vmem:[#allocation11 + $0x80] sm:$0xff]
  %v8269 = vld [vmem:[#allocation11 + $0x88] sm:$0xff]
  %v8270 = vld [vmem:[#allocation11 + $0x90] sm:$0xff]
  %v8271 = vld [vmem:[#allocation11 + $0x98] sm:$0xff]
  %v8272 = vld [vmem:[#allocation11 + $0xa0] sm:$0xff]
  %v8273 = vld [vmem:[#allocation11 + $0xa8] sm:$0xff]
  %v8274 = vld [vmem:[#allocation11 + $0xb0] sm:$0xff]
  %v8275 = vld [vmem:[#allocation11 + $0xb8] sm:$0xff]
  %v8276 = vld [vmem:[#allocation11 + $0xc0] sm:$0xff]
  %v8277 = vld [vmem:[#allocation11 + $0xc8] sm:$0xff]
  %v8278 = vld [vmem:[#allocation11 + $0xd0] sm:$0xff]
  %v8279 = vld [vmem:[#allocation11 + $0xd8] sm:$0xff]
  %v8280 = vld [vmem:[#allocation11 + $0xe0] sm:$0xff]
  %v8281 = vld [vmem:[#allocation11 + $0xe8] sm:$0xff]
  %v8282 = vld [vmem:[#allocation11 + $0xf0] sm:$0xff]
  %v8283 = vld [vmem:[#allocation11 + $0xf8] sm:$0xff]
  %8284 = vmatprep.subr.bf16.mxu0 %v8253
  %8285 = vmatpush1.bf16.msra.mxu0 %v8252
  %8286 = vmatprep.subr.bf16.mxu0 %v8257
  %8287 = vmatpush1.bf16.msra.mxu0 %v8256
  %8288 = vmatprep.subr.bf16.mxu0 %v8261
  %8289 = vmatpush1.bf16.msra.mxu0 %v8260
  %8290 = vmatprep.subr.bf16.mxu0 %v8265
  %8291 = vmatpush1.bf16.msra.mxu0 %v8264
  %8292 = vmatprep.subr.bf16.mxu0 %v8269
  %8293 = vmatpush1.bf16.msra.mxu0 %v8268
  %8294 = vmatprep.subr.bf16.mxu0 %v8273
  %8295 = vmatpush1.bf16.msra.mxu0 %v8272
  %8296 = vmatprep.subr.bf16.mxu0 %v8277
  %8297 = vmatpush1.bf16.msra.mxu0 %v8276
  %8298 = vmatprep.subr.bf16.mxu0 %v8281
  %8299 = vmatpush1.bf16.msra.mxu0 %v8280
  %8300 = vmatprep.subr.bf16.mxu0 0
  %8301 = vmatpush1.bf16.msra.mxu0 0
  %8302 = vmatprep.subr.bf16.mxu0 0
  %8303 = vmatpush1.bf16.msra.mxu0 0
  %8304 = vmatprep.subr.bf16.mxu0 0
  %8305 = vmatpush1.bf16.msra.mxu0 0
  %8306 = vmatprep.subr.bf16.mxu0 0
  %8307 = vmatpush1.bf16.msra.mxu0 0
  %8308 = vmatprep.subr.bf16.mxu0 0
  %8309 = vmatpush1.bf16.msra.mxu0 0
  %8310 = vmatprep.subr.bf16.mxu0 0
  %8311 = vmatpush1.bf16.msra.mxu0 0
  %8312 = vmatprep.subr.bf16.mxu0 0
  %8313 = vmatpush1.bf16.msra.mxu0 0
  %8314 = vmatprep.subr.bf16.mxu0 0
  %8315 = vmatpush1.bf16.msra.mxu0 0
  %8316 = vmatprep.mubr.bf16.mxu0 0
  %8317 = vmatmul.mubr.bf16.gmra.mrb[0].mxu0 %v8251
  %v8318 = vpop.f32.mrb[0].mxu0
  %v8319 = vadd.f32 0.0, %v8318
  %v8320 = vpop.f32.mrb[0].mxu0
  %v8321 = vadd.f32 0.0, %v8320
  %v8322 = vpop.f32.mrb[0].mxu0
  %v8323 = vpop.f32.mrb[0].mxu0
  %8324 = vdwg.mxu0
  %8325 = vmatprep.subr.bf16.mxu0 %v8255
  %8326 = vmatpush1.bf16.msra.mxu0 %v8254
  %8327 = vmatprep.subr.bf16.mxu0 %v8259
  %8328 = vmatpush1.bf16.msra.mxu0 %v8258
  %8329 = vmatprep.subr.bf16.mxu0 %v8263
  %8330 = vmatpush1.bf16.msra.mxu0 %v8262
  %8331 = vmatprep.subr.bf16.mxu0 %v8267
  %8332 = vmatpush1.bf16.msra.mxu0 %v8266
  %8333 = vmatprep.subr.bf16.mxu0 %v8271
  %8334 = vmatpush1.bf16.msra.mxu0 %v8270
  %8335 = vmatprep.subr.bf16.mxu0 %v8275
  %8336 = vmatpush1.bf16.msra.mxu0 %v8274
  %8337 = vmatprep.subr.bf16.mxu0 %v8279
  %8338 = vmatpush1.bf16.msra.mxu0 %v8278
  %8339 = vmatprep.subr.bf16.mxu0 %v8283
  %8340 = vmatpush1.bf16.msra.mxu0 %v8282
  %8341 = vmatprep.subr.bf16.mxu0 0
  %8342 = vmatpush1.bf16.msra.mxu0 0
  %8343 = vmatprep.subr.bf16.mxu0 0
  %8344 = vmatpush1.bf16.msra.mxu0 0
  %8345 = vmatprep.subr.bf16.mxu0 0
  %8346 = vmatpush1.bf16.msra.mxu0 0
  %8347 = vmatprep.subr.bf16.mxu0 0
  %8348 = vmatpush1.bf16.msra.mxu0 0
  %8349 = vmatprep.subr.bf16.mxu0 0
  %8350 = vmatpush1.bf16.msra.mxu0 0
  %8351 = vmatprep.subr.bf16.mxu0 0
  %8352 = vmatpush1.bf16.msra.mxu0 0
  %8353 = vmatprep.subr.bf16.mxu0 0
  %8354 = vmatpush1.bf16.msra.mxu0 0
  %8355 = vmatprep.subr.bf16.mxu0 0
  %8356 = vmatpush1.bf16.msra.mxu0 0
  %8357 = vmatprep.mubr.bf16.mxu0 0
  %8358 = vmatmul.mubr.bf16.gmra.mrb[0].mxu0 %v8251
  %v8359 = vpop.f32.mrb[0].mxu0
  %v8360 = vadd.f32 0.0, %v8359
  %v8361 = vpop.f32.mrb[0].mxu0
  %v8362 = vadd.f32 0.0, %v8361
  %v8363 = vpop.f32.mrb[0].mxu0
  %v8364 = vpop.f32.mrb[0].mxu0
  %8365 = vdwg.mxu0
  %8366 = vmatprep.subr.bf16.mxu0 %v8219
  %8367 = vmatpush1.bf16.msra.mxu0 %v8218
  %8368 = vmatprep.subr.bf16.mxu0 %v8223
  %8369 = vmatpush1.bf16.msra.mxu0 %v8222
  %8370 = vmatprep.subr.bf16.mxu0 %v8227
  %8371 = vmatpush1.bf16.msra.mxu0 %v8226
  %8372 = vmatprep.subr.bf16.mxu0 %v8231
  %8373 = vmatpush1.bf16.msra.mxu0 %v8230
  %8374 = vmatprep.subr.bf16.mxu0 %v8235
  %8375 = vmatpush1.bf16.msra.mxu0 %v8234
  %8376 = vmatprep.subr.bf16.mxu0 %v8239
  %8377 = vmatpush1.bf16.msra.mxu0 %v8238
  %8378 = vmatprep.subr.bf16.mxu0 %v8243
  %8379 = vmatpush1.bf16.msra.mxu0 %v8242
  %8380 = vmatprep.subr.bf16.mxu0 %v8247
  %8381 = vmatpush1.bf16.msra.mxu0 %v8246
  %8382 = vmatprep.subr.bf16.mxu0 0
  %8383 = vmatpush1.bf16.msra.mxu0 0
  %8384 = vmatprep.subr.bf16.mxu0 0
  %8385 = vmatpush1.bf16.msra.mxu0 0
  %8386 = vmatprep.subr.bf16.mxu0 0
  %8387 = vmatpush1.bf16.msra.mxu0 0
  %8388 = vmatprep.subr.bf16.mxu0 0
  %8389 = vmatpush1.bf16.msra.mxu0 0
  %8390 = vmatprep.subr.bf16.mxu0 0
  %8391 = vmatpush1.bf16.msra.mxu0 0
  %8392 = vmatprep.subr.bf16.mxu0 0
  %8393 = vmatpush1.bf16.msra.mxu0 0
  %8394 = vmatprep.subr.bf16.mxu0 0
  %8395 = vmatpush1.bf16.msra.mxu0 0
  %8396 = vmatprep.subr.bf16.mxu0 0
  %8397 = vmatpush1.bf16.msra.mxu0 0
  %8398 = vmatprep.mubr.bf16.mxu0 0
  %8399 = vmatmul.mubr.bf16.gmra.mrb[0].mxu0 %v8217
  %v8400 = vpop.f32.mrb[0].mxu0
  %v8401 = vadd.f32 %v8319, %v8400
  %v8402 = vpop.f32.mrb[0].mxu0
  %v8403 = vadd.f32 %v8321, %v8402
  %v8404 = vpop.f32.mrb[0].mxu0
  %v8405 = vpop.f32.mrb[0].mxu0
  %8406 = vdwg.mxu0
  %8407 = vmatprep.subr.bf16.mxu0 %v8221
  %8408 = vmatpush1.bf16.msra.mxu0 %v8220
  %8409 = vmatprep.subr.bf16.mxu0 %v8225
  %8410 = vmatpush1.bf16.msra.mxu0 %v8224
  %8411 = vmatprep.subr.bf16.mxu0 %v8229
  %8412 = vmatpush1.bf16.msra.mxu0 %v8228
  %8413 = vmatprep.subr.bf16.mxu0 %v8233
  %8414 = vmatpush1.bf16.msra.mxu0 %v8232
  %8415 = vmatprep.subr.bf16.mxu0 %v8237
  %8416 = vmatpush1.bf16.msra.mxu0 %v8236
  %8417 = vmatprep.subr.bf16.mxu0 %v8241
  %8418 = vmatpush1.bf16.msra.mxu0 %v8240
  %8419 = vmatprep.subr.bf16.mxu0 %v8245
  %8420 = vmatpush1.bf16.msra.mxu0 %v8244
  %8421 = vmatprep.subr.bf16.mxu0 %v8249
  %8422 = vmatpush1.bf16.msra.mxu0 %v8248
  %8423 = vmatprep.subr.bf16.mxu0 0
  %8424 = vmatpush1.bf16.msra.mxu0 0
  %8425 = vmatprep.subr.bf16.mxu0 0
  %8426 = vmatpush1.bf16.msra.mxu0 0
  %8427 = vmatprep.subr.bf16.mxu0 0
  %8428 = vmatpush1.bf16.msra.mxu0 0
  %8429 = vmatprep.subr.bf16.mxu0 0
  %8430 = vmatpush1.bf16.msra.mxu0 0
  %8431 = vmatprep.subr.bf16.mxu0 0
  %8432 = vmatpush1.bf16.msra.mxu0 0
  %8433 = vmatprep.subr.bf16.mxu0 0
  %8434 = vmatpush1.bf16.msra.mxu0 0
  %8435 = vmatprep.subr.bf16.mxu0 0
  %8436 = vmatpush1.bf16.msra.mxu0 0
  %8437 = vmatprep.subr.bf16.mxu0 0
  %8438 = vmatpush1.bf16.msra.mxu0 0
  %8439 = vmatprep.mubr.bf16.mxu0 0
  %8440 = vmatmul.mubr.bf16.gmra.mrb[0].mxu0 %v8217
  %v8441 = vpop.f32.mrb[0].mxu0
  %v8442 = vadd.f32 %v8360, %v8441
  %v8443 = vpop.f32.mrb[0].mxu0
  %v8444 = vadd.f32 %v8362, %v8443
  %v8445 = vpop.f32.mrb[0].mxu0
  %v8446 = vpop.f32.mrb[0].mxu0
  %8447 = vdwg.mxu0
  %v8448 = vld [vmem:[%s8] sm:$0xf]
  %v8450 = vlaneseq
  %v8451 = vshrl.u32 %v8450, 7
  %v8452 = vsub.s32 0, %v8451
  %v8453 = vrot.slane %v8448, %v8452
  %v8454 = vlaneseq
  %v8455 = vshrl.u32 %v8454, 7
  %v8456 = vsub.s32 1, %v8455
  %v8457 = vrot.slane %v8448, %v8456
  %v8458 = vlaneseq
  %v8459 = vshrl.u32 %v8458, 7
  %v8460 = vsub.s32 2, %v8459
  %v8461 = vrot.slane %v8448, %v8460
  %v8462 = vlaneseq
  %v8463 = vshrl.u32 %v8462, 7
  %v8464 = vsub.s32 3, %v8463
  %v8465 = vrot.slane %v8448, %v8464
  %v8470 = vadd.f32 %v8401, %v8453
  %v8471 = vadd.f32 %v8403, %v8457
  %v8472 = vadd.f32 %v8442, %v8461
  %v8473 = vadd.f32 %v8444, %v8465
  %v8474 = vmul.f32 %v8470, 0.5
  %v8475 = vtanh.pop %v8474
  %v8476 = vmul.f32 %v8475, 0.5
  %v8477 = vadd.f32 %v8476, 0.5
  %v8478 = vmul.f32 %v8471, 0.5
  %v8479 = vtanh.pop %v8478
  %v8480 = vmul.f32 %v8479, 0.5
  %v8481 = vadd.f32 %v8480, 0.5
  %v8482 = vtanh.pop %v8472
  %v8483 = vmul.f32 %v8473, 0.5
  %v8484 = vtanh.pop %v8483
  %v8485 = vmul.f32 %v8484, 0.5
  %v8486 = vadd.f32 %v8485, 0.5
  %v8487 = vmul.f32 %v8481, 0.0
  %v8488 = vmul.f32 %v8477, %v8482
  %v8489 = vadd.f32 %v8487, %v8488
  %v8490 = vtanh.pop %v8489
  %v8491 = vmul.f32 %v8486, %v8490
  %v8492 = vpack.c.bf16 %v8215, %v8215
  %v8493 = vld [vmem:[%s9] sm:$0xf]
  %v8494 = vld [vmem:[%s9 + $0x4] sm:$0xf]
  %v8495 = vld [vmem:[%s9 + $0x8] sm:$0xf]
  %v8496 = vld [vmem:[%s9 + $0xc] sm:$0xf]
  %v8497 = vld [vmem:[%s9 + $0x10] sm:$0xf]
  %v8498 = vld [vmem:[%s9 + $0x14] sm:$0xf]
  %v8499 = vld [vmem:[%s9 + $0x18] sm:$0xf]
  %v8500 = vld [vmem:[%s9 + $0x1c] sm:$0xf]
  %v8501 = vld [vmem:[%s9 + $0x20] sm:$0xf]
  %v8502 = vld [vmem:[%s9 + $0x24] sm:$0xf]
  %v8503 = vld [vmem:[%s9 + $0x28] sm:$0xf]
  %v8504 = vld [vmem:[%s9 + $0x2c] sm:$0xf]
  %v8505 = vld [vmem:[%s9 + $0x30] sm:$0xf]
  %v8506 = vld [vmem:[%s9 + $0x34] sm:$0xf]
  %v8507 = vld [vmem:[%s9 + $0x38] sm:$0xf]
  %v8508 = vld [vmem:[%s9 + $0x3c] sm:$0xf]
  %v8509 = vpack.c.bf16 %v8491, %v8491
  %v8510 = vld [vmem:[%s10] sm:$0xf]
  %v8511 = vld [vmem:[%s10 + $0x4] sm:$0xf]
  %v8512 = vld [vmem:[%s10 + $0x8] sm:$0xf]
  %v8513 = vld [vmem:[%s10 + $0xc] sm:$0xf]
  %v8514 = vld [vmem:[%s10 + $0x10] sm:$0xf]
  %v8515 = vld [vmem:[%s10 + $0x14] sm:$0xf]
  %v8516 = vld [vmem:[%s10 + $0x18] sm:$0xf]
  %v8517 = vld [vmem:[%s10 + $0x1c] sm:$0xf]
  %v8518 = vld [vmem:[%s10 + $0x20] sm:$0xf]
  %v8519 = vld [vmem:[%s10 + $0x24] sm:$0xf]
  %v8520 = vld [vmem:[%s10 + $0x28] sm:$0xf]
  %v8521 = vld [vmem:[%s10 + $0x2c] sm:$0xf]
  %v8522 = vld [vmem:[%s10 + $0x30] sm:$0xf]
  %v8523 = vld [vmem:[%s10 + $0x34] sm:$0xf]
  %v8524 = vld [vmem:[%s10 + $0x38] sm:$0xf]
  %v8525 = vld [vmem:[%s10 + $0x3c] sm:$0xf]
  %v8542 = vunpack.c.l.b16 %v8510
  %v8543 = vunpack.c.l.b16 %v8511
  %v8544 = vunpack.c.l.b16 %v8512
  %v8545 = vunpack.c.l.b16 %v8513
  %v8546 = vunpack.c.l.b16 %v8514
  %v8547 = vunpack.c.l.b16 %v8515
  %v8548 = vunpack.c.l.b16 %v8516
  %v8549 = vunpack.c.l.b16 %v8517
  %v8550 = vunpack.c.l.b16 %v8518
  %v8551 = vunpack.c.l.b16 %v8519
  %v8552 = vunpack.c.l.b16 %v8520
  %v8553 = vunpack.c.l.b16 %v8521
  %v8554 = vunpack.c.l.b16 %v8522
  %v8555 = vunpack.c.l.b16 %v8523
  %v8556 = vunpack.c.l.b16 %v8524
  %v8557 = vunpack.c.l.b16 %v8525
  %v8558 = vpack.c.b16 %v8543, %v8542
  %v8559 = vpack.c.b16 %v8545, %v8544
  %v8560 = vpack.c.b16 %v8547, %v8546
  %v8561 = vpack.c.b16 %v8549, %v8548
  %v8562 = vpack.c.b16 %v8551, %v8550
  %v8563 = vpack.c.b16 %v8553, %v8552
  %v8564 = vpack.c.b16 %v8555, %v8554
  %v8565 = vpack.c.b16 %v8557, %v8556
  %8574 = vmatprep.subr.bf16.mxu0 0
  %8575 = vmatpush1.bf16.msra.mxu0 %v8558
  %8576 = vmatprep.subr.bf16.mxu0 0
  %8577 = vmatpush1.bf16.msra.mxu0 %v8559
  %8578 = vmatprep.subr.bf16.mxu0 0
  %8579 = vmatpush1.bf16.msra.mxu0 %v8560
  %8580 = vmatprep.subr.bf16.mxu0 0
  %8581 = vmatpush1.bf16.msra.mxu0 %v8561
  %8582 = vmatprep.subr.bf16.mxu0 0
  %8583 = vmatpush1.bf16.msra.mxu0 %v8562
  %8584 = vmatprep.subr.bf16.mxu0 0
  %8585 = vmatpush1.bf16.msra.mxu0 %v8563
  %8586 = vmatprep.subr.bf16.mxu0 0
  %8587 = vmatpush1.bf16.msra.mxu0 %v8564
  %8588 = vmatprep.subr.bf16.mxu0 0
  %8589 = vmatpush1.bf16.msra.mxu0 %v8565
  %8590 = vmatprep.subr.bf16.mxu0 0
  %8591 = vmatpush1.bf16.msra.mxu0 0
  %8592 = vmatprep.subr.bf16.mxu0 0
  %8593 = vmatpush1.bf16.msra.mxu0 0
  %8594 = vmatprep.subr.bf16.mxu0 0
  %8595 = vmatpush1.bf16.msra.mxu0 0
  %8596 = vmatprep.subr.bf16.mxu0 0
  %8597 = vmatpush1.bf16.msra.mxu0 0
  %8598 = vmatprep.subr.bf16.mxu0 0
  %8599 = vmatpush1.bf16.msra.mxu0 0
  %8600 = vmatprep.subr.bf16.mxu0 0
  %8601 = vmatpush1.bf16.msra.mxu0 0
  %8602 = vmatprep.subr.bf16.mxu0 0
  %8603 = vmatpush1.bf16.msra.mxu0 0
  %8604 = vmatprep.subr.bf16.mxu0 0
  %8605 = vmatpush1.bf16.msra.mxu0 0
  %8606 = vmatprep.mubr.bf16.mxu0 0
  %8607 = vmatmul.mubr.bf16.gmra.mrb[0].mxu0 %v8509
  %v8608 = vpop.f32.mrb[0].mxu0
  %v8609 = vadd.f32 0.0, %v8608
  %v8610 = vpop.f32.mrb[0].mxu0
  %v8611 = vpop.f32.mrb[0].mxu0
  %v8612 = vpop.f32.mrb[0].mxu0
  %8613 = vdwg.mxu0
  %v8615 = vrot.slane %v8492, 3
  %v8633 = vunpack.c.l.b16 %v8493
  %v8634 = vunpack.c.l.b16 %v8494
  %v8635 = vunpack.c.l.b16 %v8495
  %v8636 = vunpack.c.l.b16 %v8496
  %v8637 = vunpack.c.l.b16 %v8497
  %v8638 = vunpack.c.l.b16 %v8498
  %v8639 = vunpack.c.l.b16 %v8499
  %v8640 = vunpack.c.l.b16 %v8500
  %v8641 = vunpack.c.l.b16 %v8501
  %v8642 = vunpack.c.l.b16 %v8502
  %v8643 = vunpack.c.l.b16 %v8503
  %v8644 = vunpack.c.l.b16 %v8504
  %v8645 = vunpack.c.l.b16 %v8505
  %v8646 = vunpack.c.l.b16 %v8506
  %v8647 = vunpack.c.l.b16 %v8507
  %v8648 = vunpack.c.l.b16 %v8508
  %v8649 = vpack.c.b16 %v8634, %v8633
  %v8650 = vpack.c.b16 %v8636, %v8635
  %v8651 = vpack.c.b16 %v8638, %v8637
  %v8652 = vpack.c.b16 %v8640, %v8639
  %v8653 = vpack.c.b16 %v8642, %v8641
  %v8654 = vpack.c.b16 %v8644, %v8643
  %v8655 = vpack.c.b16 %v8646, %v8645
  %v8656 = vpack.c.b16 %v8648, %v8647
  %8665 = vmatprep.subr.bf16.mxu0 0
  %8666 = vmatpush1.bf16.msra.mxu0 %v8649
  %8667 = vmatprep.subr.bf16.mxu0 0
  %8668 = vmatpush1.bf16.msra.mxu0 %v8650
  %8669 = vmatprep.subr.bf16.mxu0 0
  %8670 = vmatpush1.bf16.msra.mxu0 %v8651
  %8671 = vmatprep.subr.bf16.mxu0 0
  %8672 = vmatpush1.bf16.msra.mxu0 %v8652
  %8673 = vmatprep.subr.bf16.mxu0 0
  %8674 = vmatpush1.bf16.msra.mxu0 %v8653
  %8675 = vmatprep.subr.bf16.mxu0 0
  %8676 = vmatpush1.bf16.msra.mxu0 %v8654
  %8677 = vmatprep.subr.bf16.mxu0 0
  %8678 = vmatpush1.bf16.msra.mxu0 %v8655
  %8679 = vmatprep.subr.bf16.mxu0 0
  %8680 = vmatpush1.bf16.msra.mxu0 %v8656
  %8681 = vmatprep.subr.bf16.mxu0 0
  %8682 = vmatpush1.bf16.msra.mxu0 0
  %8683 = vmatprep.subr.bf16.mxu0 0
  %8684 = vmatpush1.bf16.msra.mxu0 0
  %8685 = vmatprep.subr.bf16.mxu0 0
  %8686 = vmatpush1.bf16.msra.mxu0 0
  %8687 = vmatprep.subr.bf16.mxu0 0
  %8688 = vmatpush1.bf16.msra.mxu0 0
  %8689 = vmatprep.subr.bf16.mxu0 0
  %8690 = vmatpush1.bf16.msra.mxu0 0
  %8691 = vmatprep.subr.bf16.mxu0 0
  %8692 = vmatpush1.bf16.msra.mxu0 0
  %8693 = vmatprep.subr.bf16.mxu0 0
  %8694 = vmatpush1.bf16.msra.mxu0 0
  %8695 = vmatprep.subr.bf16.mxu0 0
  %8696 = vmatpush1.bf16.msra.mxu0 0
  %8697 = vmatprep.mubr.bf16.mxu0 0
  %8698 = vmatmul.mubr.bf16.gmra.mrb[0].mxu0 %v8615
  %v8699 = vpop.f32.mrb[0].mxu0
  %v8700 = vadd.f32 %v8609, %v8699
  %v8701 = vpop.f32.mrb[0].mxu0
  %v8702 = vpop.f32.mrb[0].mxu0
  %v8703 = vpop.f32.mrb[0].mxu0
  %8704 = vdwg.mxu0
  %v8705 = vld [vmem:[#allocation13] sm:$0x1]
  %v8707 = vlaneseq
  %v8708 = vshrl.u32 %v8707, 7
  %v8709 = vsub.s32 0, %v8708
  %v8710 = vrot.slane %v8705, %v8709
  %v8712 = vadd.f32 %v8700, %v8710
  %vm8713 = vcmask 1024
  %8714 = vst.msk [vmem:[%s17] sm:$0x3] %vm8713, %v8712
  // Predicated region
  $region235: #{lstm_model.1} parent=0 // pred_check
    _
  $region236: #{lstm_model.1} parent=0 // pred_check_branch
    %8716 = sbr.rel (0) target = $region238
  $region237: #{lstm_model.1} parent=0 // pred_region
    _
  $region238: #{lstm_model.1} parent=0 // pred_fallthru
    _
  // Predicated region
  $region239: #{lstm_model.1} parent=0 // pred_check
    _
  $region240: #{lstm_model.1} parent=0 // pred_check_branch
    %8718 = sbr.rel (0) target = $region242
  $region241: #{lstm_model.1} parent=0 // pred_region
    _
  $region242: #{lstm_model.1} parent=0 // pred_fallthru
    _
  %8719 = vsyncmov [#allocation12]
  %s8720 = vpop.sfrf %8719
  %p8721 = scmp.eq.s32.totalorder %s8720, 0
  %p8722 = pneg %p8721
  %8724 = shalt.err (%p8722)
  %s8725 = scalar_lea.sflag [#allocation12], 1
  %8726 = vsyncmov %s8725
  %s8727 = vpop.sfrf %8726
  %p8728 = scmp.eq.s32.totalorder %s8727, 0
  %p8729 = pneg %p8728
  %8731 = shalt.err (%p8729)
  %s8732 = scalar_lea.sflag [#allocation12], 2
  %8733 = vsyncmov %s8732
  %s8734 = vpop.sfrf %8733
  %p8735 = scmp.eq.s32.totalorder %s8734, 0
  %p8736 = pneg %p8735
  %8738 = shalt.err (%p8736)
  %s8739 = scalar_lea.sflag [#allocation12], 3
  %8740 = vsyncmov %s8739
  %s8741 = vpop.sfrf %8740
  %p8742 = scmp.eq.s32.totalorder %s8741, 0
  %p8743 = pneg %p8742
  %8745 = shalt.err (%p8743)
  %s8746 = scalar_lea.sflag [#allocation12], 4
  %8747 = vsyncmov %s8746
  %s8748 = vpop.sfrf %8747
  %p8749 = scmp.eq.s32.totalorder %s8748, 0
  %p8750 = pneg %p8749
  %8752 = shalt.err (%p8750)

</llo_original>
